<compile_context>
chip_gen: v7x
topology: tpu7x:2x2x1
jax: 0.10.0
libtpu: 0.0.40
codegen_flags: <defaults>
</compile_context>

<pallas_src>
import functools

import jax
import jax.numpy as jnp
from jax.experimental import pallas as pl
from jax.experimental.pallas import tpu as pltpu


# ------------------------------------------------------------------
# small helpers
# ------------------------------------------------------------------
def _round_up(x, m):
    return ((x + m - 1) // m) * m


def _pick_tile(dim, max_tile, align):
    """Largest tile <= max_tile that divides dim and is `align`-aligned
    (the full dim is always a legal block, used as fallback)."""
    if dim <= max_tile:
        return dim
    for t in range(max_tile, 0, -1):
        if dim % t == 0 and t % align == 0:
            return t
    return dim


# ------------------------------------------------------------------
# matmul kernels: bf16 x bf16 -> f32 accum -> (bias) (ReLU / dual) epilogue
# ------------------------------------------------------------------
def _mm_single_kernel(*refs, relu, has_bias, dual):
    """Whole-K in one tile: no scratch, compute + epilogue in one shot."""
    a_ref, b_ref = refs[0], refs[1]
    idx = 2
    bias_ref = None
    if has_bias:
        bias_ref = refs[idx]
        idx += 1
    out_refs = refs[idx:]

    acc = jnp.dot(a_ref[...], b_ref[...], preferred_element_type=jnp.float32)
    if has_bias:
        acc = acc + bias_ref[...]
    if dual:
        out_refs[0][...] = acc.astype(out_refs[0].dtype)            # fea
        out_refs[1][...] = jnp.maximum(acc, 0.0).astype(out_refs[1].dtype)
    else:
        if relu:
            acc = jnp.maximum(acc, 0.0)
        out_refs[0][...] = acc.astype(out_refs[0].dtype)


def _mm_accum_kernel(*refs, relu, has_bias, dual):
    """K-tiled: f32 VMEM accumulator, init/finalize gated with pl.when."""
    a_ref, b_ref = refs[0], refs[1]
    idx = 2
    bias_ref = None
    if has_bias:
        bias_ref = refs[idx]
        idx += 1
    n_out = 2 if dual else 1
    out_refs = refs[idx:idx + n_out]
    acc_ref = refs[idx + n_out]

    @pl.when(pl.program_id(2) == 0)
    def _init():
        acc_ref[...] = jnp.zeros_like(acc_ref)

    acc_ref[...] += jnp.dot(a_ref[...], b_ref[...],
                            preferred_element_type=jnp.float32)

    @pl.when(pl.program_id(2) == pl.num_programs(2) - 1)
    def _fin():
        acc = acc_ref[...]
        if has_bias:
            acc = acc + bias_ref[...]
        if dual:
            out_refs[0][...] = acc.astype(out_refs[0].dtype)        # fea
            out_refs[1][...] = jnp.maximum(acc, 0.0).astype(out_refs[1].dtype)
        else:
            if relu:
                acc = jnp.maximum(acc, 0.0)
            out_refs[0][...] = acc.astype(out_refs[0].dtype)


def pallas_matmul(a, b, bias=None, relu=False, dual=False,
                  out_dtype=jnp.bfloat16, out2_dtype=jnp.bfloat16):
    """C = A @ B (+bias) (+ReLU / dual(fea, relu(fea))).  A:(M,K) B:(K,N)."""
    M, K = a.shape
    K2, N = b.shape
    assert K == K2, (a.shape, b.shape)

    tm = _pick_tile(M, 512, 8)
    tn = _pick_tile(N, 256, 128)
    tk = _pick_tile(K, 1024, 128)
    gk = K // tk
    has_bias = bias is not None

    args = [a, b]
    if has_bias:
        args.append(bias.reshape(1, N).astype(jnp.float32))

    if dual:
        out_shape = (jax.ShapeDtypeStruct((M, N), out_dtype),
                     jax.ShapeDtypeStruct((M, N), out2_dtype))
        out_bytes = M * N * (jnp.dtype(out_dtype).itemsize
                             + jnp.dtype(out2_dtype).itemsize)
    else:
        out_shape = jax.ShapeDtypeStruct((M, N), out_dtype)
        out_bytes = M * N * jnp.dtype(out_dtype).itemsize

    cost = pl.CostEstimate(
        flops=2 * M * N * K,
        transcendentals=0,
        bytes_accessed=(M * K * a.dtype.itemsize
                        + K * N * b.dtype.itemsize + out_bytes))

    if gk == 1:
        # Scratch-free fast path: whole K resident, purely parallel 2-D grid.
        kernel = functools.partial(_mm_single_kernel, relu=relu,
                                   has_bias=has_bias, dual=dual)
        in_specs = [pl.BlockSpec((tm, K), lambda i, j: (i, 0)),
                    pl.BlockSpec((K, tn), lambda i, j: (0, j))]
        if has_bias:
            in_specs.append(pl.BlockSpec((1, tn), lambda i, j: (0, j)))
        out_blk = pl.BlockSpec((tm, tn), lambda i, j: (i, j))
        grid_spec = pltpu.PrefetchScalarGridSpec(
            num_scalar_prefetch=0,
            grid=(M // tm, N // tn),
            in_specs=in_specs,
            out_specs=(out_blk, out_blk) if dual else out_blk)
        semantics = ("parallel", "parallel")
    else:
        kernel = functools.partial(_mm_accum_kernel, relu=relu,
                                   has_bias=has_bias, dual=dual)
        in_specs = [pl.BlockSpec((tm, tk), lambda i, j, k: (i, k)),
                    pl.BlockSpec((tk, tn), lambda i, j, k: (k, j))]
        if has_bias:
            in_specs.append(pl.BlockSpec((1, tn), lambda i, j, k: (0, j)))
        out_blk = pl.BlockSpec((tm, tn), lambda i, j, k: (i, j))
        grid_spec = pltpu.PrefetchScalarGridSpec(
            num_scalar_prefetch=0,
            grid=(M // tm, N // tn, gk),
            in_specs=in_specs,
            out_specs=(out_blk, out_blk) if dual else out_blk,
            scratch_shapes=[pltpu.VMEM((tm, tn), jnp.float32)])
        semantics = ("parallel", "parallel", "arbitrary")

    return pl.pallas_call(
        kernel,
        out_shape=out_shape,
        grid_spec=grid_spec,
        compiler_params=pltpu.CompilerParams(dimension_semantics=semantics),
        cost_estimate=cost,
    )(*args)


# ------------------------------------------------------------------
# MaxPool2d(2,2): single-read kernel.
# Input (N,H,W,C) is viewed (contiguous reshape) as (N*Ho, 2, Wo, 2*C); the
# 2x2 max is a row-pair max followed by an aligned lane-half max (C is a
# 128-multiple, so both halves are lane-aligned).
# ------------------------------------------------------------------
def _maxpool_kernel(x_ref, o_ref, *, c):
    top = x_ref[:, 0, :, :]                   # (tb, Wo, 2c)
    bot = x_ref[:, 1, :, :]
    m = jnp.maximum(top, bot)
    o_ref[...] = jnp.maximum(m[:, :, :c], m[:, :, c:])


def pallas_maxpool2x2(x_nhwc):
    N, H, W, C = x_nhwc.shape
    Ho, Wo = H // 2, W // 2
    xr = x_nhwc.reshape(N * Ho, 2, Wo, 2 * C)          # contiguous view reshape
    M1 = N * Ho
    tb = _pick_tile(M1, 256, 1)
    out = pl.pallas_call(
        functools.partial(_maxpool_kernel, c=C),
        out_shape=jax.ShapeDtypeStruct((M1, Wo, C), x_nhwc.dtype),
        grid_spec=pltpu.PrefetchScalarGridSpec(
            num_scalar_prefetch=0,
            grid=(M1 // tb,),
            in_specs=[pl.BlockSpec((tb, 2, Wo, 2 * C),
                                   lambda i: (i, 0, 0, 0))],
            out_specs=pl.BlockSpec((tb, Wo, C), lambda i: (i, 0, 0))),
        compiler_params=pltpu.CompilerParams(
            dimension_semantics=("parallel",)),
    )(xr)
    return out.reshape(N, Ho, Wo, C)


# ------------------------------------------------------------------
# Conv = im2col (glue, bf16, true-channel slice) + tiled Pallas matmul+ReLU
# ------------------------------------------------------------------
def _im2col(x_nhwc, c_true, k, pad):
    N, H, W, C = x_nhwc.shape
    x = x_nhwc[..., :c_true] if c_true < C else x_nhwc   # drop zero pad channels
    xp = jnp.pad(x, ((0, 0), (pad, pad), (pad, pad), (0, 0)))
    Ho = H + 2 * pad - k + 1
    Wo = W + 2 * pad - k + 1
    patches = [xp[:, i:i + Ho, j:j + Wo, :] for i in range(k) for j in range(k)]
    cols = jnp.concatenate(patches, axis=-1)             # (N,Ho,Wo,k*k*c_true)
    return cols.reshape(N * Ho * Wo, k * k * c_true), Ho, Wo


def conv2d_relu(x_nhwc, w_mat, *, c_in, k, pad):
    """stride=1, no bias; w_mat is matmul-ready (KP, NP) bf16 (pre-padded)."""
    cols, Ho, Wo = _im2col(x_nhwc, c_in, k, pad)
    kp = w_mat.shape[0]
    kt = cols.shape[1]
    if kt < kp:                                          # zero-pad K (free in accum)
        cols = jnp.pad(cols, ((0, 0), (0, kp - kt)))
    out = pallas_matmul(cols, w_mat, relu=True, out_dtype=jnp.bfloat16)
    n = x_nhwc.shape[0]
    return out.reshape(n, Ho, Wo, w_mat.shape[1])        # padded channels are 0


# ------------------------------------------------------------------
# Deterministic parameter initialization (matmul-ready weights built ONCE)
# ------------------------------------------------------------------
def make_gabor_weights(out_channels, in_channels, k):
    half = (k - 1) / 2.0
    ys, xs = jnp.meshgrid(jnp.arange(k, dtype=jnp.float32) - half,
                          jnp.arange(k, dtype=jnp.float32) - half,
                          indexing="ij")
    o = jnp.arange(out_channels, dtype=jnp.float32)
    theta = (jnp.pi * o / out_channels)[:, None, None]
    lam = (3.0 + (o % 4))[:, None, None]
    sigma, gamma = 2.5, 0.5
    x_t = xs[None] * jnp.cos(theta) + ys[None] * jnp.sin(theta)
    y_t = -xs[None] * jnp.sin(theta) + ys[None] * jnp.cos(theta)
    g = jnp.exp(-(x_t ** 2 + (gamma * y_t) ** 2) / (2.0 * sigma ** 2)) \
        * jnp.cos(2.0 * jnp.pi * x_t / lam)
    w = jnp.broadcast_to(g[:, None, :, :],
                         (out_channels, in_channels, k, k)) / float(in_channels)
    return w.astype(jnp.float32)


def _conv_w_to_mat(w_oihw):
    """(Cout, Cin, kh, kw) -> (KP, NP) bf16 with K order (kh, kw, cin)."""
    cout, cin, kh, kw = w_oihw.shape
    k_true = kh * kw * cin
    w2 = jnp.transpose(w_oihw, (2, 3, 1, 0)).reshape(k_true, cout)
    kp = _round_up(k_true, 512 if k_true > 512 else 128)
    np_ = _round_up(cout, 128)
    w2 = jnp.pad(w2, ((0, kp - k_true), (0, np_ - cout)))
    return w2.astype(jnp.bfloat16)


def init_params(key, channel):
    c = channel
    keys = jax.random.split(key, 6)

    def conv_w(k_, cout, cin, ks):
        fan_in = cin * ks * ks
        return jax.random.normal(k_, (cout, cin, ks, ks), jnp.float32) / jnp.sqrt(fan_in)

    def linear(k_, cin, cout):
        kw_, kb = jax.random.split(k_)
        bound = 1.0 / jnp.sqrt(cin)
        w = jax.random.uniform(kw_, (cout, cin), jnp.float32, -bound, bound)
        b = jax.random.uniform(kb, (cout,), jnp.float32, -bound, bound)
        return w, b

    gabor = make_gabor_weights(10 * c, 1, 7)
    conv2 = conv_w(keys[1], 20 * c, 10 * c, 7)
    conv3 = conv_w(keys[2], 40 * c, 20 * c, 7)
    conv4 = conv_w(keys[3], 80 * c, 40 * c, 7)
    fc1_w, fc1_b = linear(keys[4], 80 * c, 1024)
    fc2_w, fc2_b = linear(keys[5], 1024, 10)

    # fc weights pre-transposed to (in, out), input dim zero-padded to match the
    # padded conv4 feature width; fc2 outputs padded 10 -> 128 for lane-dense stores.
    np4 = _round_up(80 * c, 128)
    fc1_mat = jnp.zeros((np4, 1024), jnp.float32).at[:80 * c, :].set(fc1_w.T)
    np_out = _round_up(10, 128)
    fc2_mat = jnp.zeros((1024, np_out), jnp.float32).at[:, :10].set(fc2_w.T)
    fc2_b_pad = jnp.zeros((np_out,), jnp.float32).at[:10].set(fc2_b)

    return {
        "conv1_wmat": _conv_w_to_mat(gabor),
        "conv2_wmat": _conv_w_to_mat(conv2),
        "conv3_wmat": _conv_w_to_mat(conv3),
        "conv4_wmat": _conv_w_to_mat(conv4),
        "fc1_wmat": fc1_mat.astype(jnp.bfloat16),
        "fc1_b": fc1_b,
        "fc2_wmat": fc2_mat.astype(jnp.bfloat16),
        "fc2_b": fc2_b_pad,
    }


# ------------------------------------------------------------------
# Full forward pass (mirrors Gabor_CNN7.forward, eval mode)
# ------------------------------------------------------------------
def gabor_cnn7_forward(x_nchw, params, channel):
    c = channel
    x = jnp.transpose(x_nchw, (0, 2, 3, 1)).astype(jnp.bfloat16)       # NHWC bf16
    x = conv2d_relu(x, params["conv1_wmat"], c_in=1, k=7, pad=3)       # Gabor + ReLU
    x = conv2d_relu(x, params["conv2_wmat"], c_in=10 * c, k=7, pad=3)  # Conv + ReLU
    x = pallas_maxpool2x2(x)                                           # MaxPool 2x2
    x = conv2d_relu(x, params["conv3_wmat"], c_in=20 * c, k=7, pad=3)  # Conv + ReLU
    x = pallas_maxpool2x2(x)                                           # MaxPool 2x2
    x = conv2d_relu(x, params["conv4_wmat"], c_in=40 * c, k=7, pad=0)  # 7x7 -> 1x1
    n = x.shape[0]
    feat = x.reshape(n, -1)          # (n, pad(80c,128)); padded channels are 0
    # fc1: fused matmul + bias, emits fea (f32) and relu(fea) (bf16) in one pass.
    fea, act = pallas_matmul(feat, params["fc1_wmat"], bias=params["fc1_b"],
                             dual=True, out_dtype=jnp.float32,
                             out2_dtype=jnp.bfloat16)
    # Dropout(p=0.5) is identity in eval mode.
    out = pallas_matmul(act, params["fc2_wmat"], bias=params["fc2_b"],
                        out_dtype=jnp.float32)[:, :10]
    return out, fea


if __name__ == "__main__":
    channel = 2                      # small but structurally faithful (80*c features)
    batch = 2
    key = jax.random.PRNGKey(0)
    kx, kp = jax.random.split(key)
    # MNIST-like input: 28x28 is required so the final 7x7/pad=0 conv -> 1x1.
    x = jax.random.normal(kx, (batch, 1, 28, 28), jnp.float32)
    params = init_params(kp, channel)

    fwd = jax.jit(functools.partial(gabor_cnn7_forward, channel=channel))
    out, fea = fwd(x, params)
    jax.block_until_ready((out, fea))

    assert out.shape == (batch, 10), out.shape
    assert fea.shape == (batch, 1024), fea.shape
    assert jnp.all(jnp.isfinite(out)) and jnp.all(jnp.isfinite(fea))
    print("KERNEL_OK")
</pallas_src>

<mosaic_0001>
module attributes {stable_mosaic.version = 11 : i64} {
  func.func @_mm_single_kernel(%arg0: i32, %arg1: i32, %arg2: memref<392x128xbf16, #tpu.memory_space<vmem>>, %arg3: memref<128x128xbf16, #tpu.memory_space<vmem>>, %arg4: memref<392x128xbf16, #tpu.memory_space<vmem>>) attributes {dimension_semantics = [#tpu.dimension_semantics<parallel>, #tpu.dimension_semantics<parallel>], iteration_bounds = array<i64: 4, 1>, scalar_prefetch = 0 : i64, scratch_operands = 0 : i64, tpu.core_type = #tpu.core_type<tc>, window_params = [{transform_indices = @transform_0, window_bounds = array<i64: 392, 128>}, {transform_indices = @transform_1, window_bounds = array<i64: 128, 128>}, {transform_indices = @transform_2, window_bounds = array<i64: 392, 128>}]} {
    %c0 = arith.constant 0 : index
    %c0_0 = arith.constant 0 : index
    %0 = vector.load %arg2[%c0, %c0_0] : memref<392x128xbf16, #tpu.memory_space<vmem>>, vector<392x128xbf16>
    %c0_1 = arith.constant 0 : index
    %c0_2 = arith.constant 0 : index
    %1 = vector.load %arg3[%c0_1, %c0_2] : memref<128x128xbf16, #tpu.memory_space<vmem>>, vector<128x128xbf16>
    %cst = arith.constant dense<0.000000e+00> : vector<392x128xf32>
    %2 = tpu.matmul %0, %1, %cst {dimension_numbers = #tpu.dot_dimension_numbers<[1], [0], [0], [1], [0, 0, 1, 1], [], []>} : vector<392x128xbf16>, vector<128x128xbf16>, vector<392x128xf32> -> vector<392x128xf32>
    %cst_3 = arith.constant 0.000000e+00 : f32
    %3 = vector.broadcast %cst_3 : f32 to vector<392x128xf32>
    %4 = arith.maximumf %2, %3 : vector<392x128xf32>
    %5 = arith.truncf %4 : vector<392x128xf32> to vector<392x128xbf16>
    %c0_4 = arith.constant 0 : index
    %c0_5 = arith.constant 0 : index
    %6 = vector.load %arg4[%c0_4, %c0_5] : memref<392x128xbf16, #tpu.memory_space<vmem>>, vector<392x128xbf16>
    tpu.vector_store %arg4[%c0_4, %c0_5], %5 {strides = array<i32>} : memref<392x128xbf16, #tpu.memory_space<vmem>>, vector<392x128xbf16>,
    return
  }
  func.func @transform_0(%arg0: i32, %arg1: i32) -> (i32, i32) {
    %c0_i32 = arith.constant 0 : i32
    %c0_i32_0 = arith.constant 0 : i32
    return %arg0, %c0_i32 : i32, i32
  }
  func.func @transform_1(%arg0: i32, %arg1: i32) -> (i32, i32) {
    %c0_i32 = arith.constant 0 : i32
    %c0_i32_0 = arith.constant 0 : i32
    return %c0_i32, %arg1 : i32, i32
  }
  func.func @transform_2(%arg0: i32, %arg1: i32) -> (i32, i32) {
    %c0_i32 = arith.constant 0 : i32
    return %arg0, %arg1 : i32, i32
  }
}

module attributes {stable_mosaic.version = 11 : i64} {
  func.func @_mm_single_kernel(%arg0: i32, %arg1: i32, %arg2: memref<392x1024xbf16, #tpu.memory_space<vmem>>, %arg3: memref<1024x128xbf16, #tpu.memory_space<vmem>>, %arg4: memref<392x128xbf16, #tpu.memory_space<vmem>>) attributes {dimension_semantics = [#tpu.dimension_semantics<parallel>, #tpu.dimension_semantics<parallel>], iteration_bounds = array<i64: 4, 1>, scalar_prefetch = 0 : i64, scratch_operands = 0 : i64, tpu.core_type = #tpu.core_type<tc>, window_params = [{transform_indices = @transform_0, window_bounds = array<i64: 392, 1024>}, {transform_indices = @transform_1, window_bounds = array<i64: 1024, 128>}, {transform_indices = @transform_2, window_bounds = array<i64: 392, 128>}]} {
    %c0 = arith.constant 0 : index
    %c0_0 = arith.constant 0 : index
    %0 = vector.load %arg2[%c0, %c0_0] : memref<392x1024xbf16, #tpu.memory_space<vmem>>, vector<392x1024xbf16>
    %c0_1 = arith.constant 0 : index
    %c0_2 = arith.constant 0 : index
    %1 = vector.load %arg3[%c0_1, %c0_2] : memref<1024x128xbf16, #tpu.memory_space<vmem>>, vector<1024x128xbf16>
    %cst = arith.constant dense<0.000000e+00> : vector<392x128xf32>
    %2 = tpu.matmul %0, %1, %cst {dimension_numbers = #tpu.dot_dimension_numbers<[1], [0], [0], [1], [0, 0, 1, 1], [], []>} : vector<392x1024xbf16>, vector<1024x128xbf16>, vector<392x128xf32> -> vector<392x128xf32>
    %cst_3 = arith.constant 0.000000e+00 : f32
    %3 = vector.broadcast %cst_3 : f32 to vector<392x128xf32>
    %4 = arith.maximumf %2, %3 : vector<392x128xf32>
    %5 = arith.truncf %4 : vector<392x128xf32> to vector<392x128xbf16>
    %c0_4 = arith.constant 0 : index
    %c0_5 = arith.constant 0 : index
    %6 = vector.load %arg4[%c0_4, %c0_5] : memref<392x128xbf16, #tpu.memory_space<vmem>>, vector<392x128xbf16>
    tpu.vector_store %arg4[%c0_4, %c0_5], %5 {strides = array<i32>} : memref<392x128xbf16, #tpu.memory_space<vmem>>, vector<392x128xbf16>,
    return
  }
  func.func @transform_0(%arg0: i32, %arg1: i32) -> (i32, i32) {
    %c0_i32 = arith.constant 0 : i32
    %c0_i32_0 = arith.constant 0 : i32
    return %arg0, %c0_i32 : i32, i32
  }
  func.func @transform_1(%arg0: i32, %arg1: i32) -> (i32, i32) {
    %c0_i32 = arith.constant 0 : i32
    %c0_i32_0 = arith.constant 0 : i32
    return %c0_i32, %arg1 : i32, i32
  }
  func.func @transform_2(%arg0: i32, %arg1: i32) -> (i32, i32) {
    %c0_i32 = arith.constant 0 : i32
    return %arg0, %arg1 : i32, i32
  }
}

module attributes {stable_mosaic.version = 11 : i64} {
  func.func @_maxpool_kernel(%arg0: i32, %arg1: memref<28x2x14x256xbf16, #tpu.memory_space<vmem>>, %arg2: memref<28x14x128xbf16, #tpu.memory_space<vmem>>) attributes {dimension_semantics = [#tpu.dimension_semantics<parallel>], iteration_bounds = array<i64: 1>, scalar_prefetch = 0 : i64, scratch_operands = 0 : i64, tpu.core_type = #tpu.core_type<tc>, window_params = [{transform_indices = @transform_0, window_bounds = array<i64: 28, 2, 14, 256>}, {transform_indices = @transform_1, window_bounds = array<i64: 28, 14, 128>}]} {
    %c0 = arith.constant 0 : index
    %c0_0 = arith.constant 0 : index
    %c0_1 = arith.constant 0 : index
    %c0_2 = arith.constant 0 : index
    %0 = vector.load %arg1[%c0, %c0_0, %c0_1, %c0_2] : memref<28x2x14x256xbf16, #tpu.memory_space<vmem>>, vector<28x1x14x256xbf16>
    %1 = vector.shape_cast %0 : vector<28x1x14x256xbf16> to vector<28x14x256xbf16>
    %c0_3 = arith.constant 0 : index
    %c1 = arith.constant 1 : index
    %c0_4 = arith.constant 0 : index
    %c0_5 = arith.constant 0 : index
    %2 = vector.load %arg1[%c0_3, %c1, %c0_4, %c0_5] : memref<28x2x14x256xbf16, #tpu.memory_space<vmem>>, vector<28x1x14x256xbf16>
    %3 = vector.shape_cast %2 : vector<28x1x14x256xbf16> to vector<28x14x256xbf16>
    %4 = arith.maximumf %1, %3 : vector<28x14x256xbf16>
    %5 = vector.extract_strided_slice %4 {offsets = [0, 0, 0], sizes = [28, 14, 128], strides = [1, 1, 1]} : vector<28x14x256xbf16> to vector<28x14x128xbf16>
    %6 = vector.extract_strided_slice %4 {offsets = [0, 0, 128], sizes = [28, 14, 128], strides = [1, 1, 1]} : vector<28x14x256xbf16> to vector<28x14x128xbf16>
    %7 = arith.maximumf %5, %6 : vector<28x14x128xbf16>
    %c0_6 = arith.constant 0 : index
    %c0_7 = arith.constant 0 : index
    %c0_8 = arith.constant 0 : index
    %8 = vector.load %arg2[%c0_6, %c0_7, %c0_8] : memref<28x14x128xbf16, #tpu.memory_space<vmem>>, vector<28x14x128xbf16>
    tpu.vector_store %arg2[%c0_6, %c0_7, %c0_8], %7 {strides = array<i32>} : memref<28x14x128xbf16, #tpu.memory_space<vmem>>, vector<28x14x128xbf16>,
    return
  }
  func.func @transform_0(%arg0: i32) -> (i32, i32, i32, i32) {
    %c0_i32 = arith.constant 0 : i32
    %c0_i32_0 = arith.constant 0 : i32
    %c0_i32_1 = arith.constant 0 : i32
    %c0_i32_2 = arith.constant 0 : i32
    return %arg0, %c0_i32, %c0_i32_0, %c0_i32_1 : i32, i32, i32, i32
  }
  func.func @transform_1(%arg0: i32) -> (i32, i32, i32) {
    %c0_i32 = arith.constant 0 : i32
    %c0_i32_0 = arith.constant 0 : i32
    %c0_i32_1 = arith.constant 0 : i32
    return %arg0, %c0_i32, %c0_i32_0 : i32, i32, i32
  }
}

module attributes {stable_mosaic.version = 11 : i64} {
  func.func @_mm_accum_kernel(%arg0: i32, %arg1: i32, %arg2: i32, %arg3: memref<392x1024xbf16, #tpu.memory_space<vmem>>, %arg4: memref<1024x128xbf16, #tpu.memory_space<vmem>>, %arg5: memref<392x128xbf16, #tpu.memory_space<vmem>>, %arg6: memref<392x128xf32, #tpu.memory_space<vmem>>) attributes {dimension_semantics = [#tpu.dimension_semantics<parallel>, #tpu.dimension_semantics<parallel>, #tpu.dimension_semantics<arbitrary>], iteration_bounds = array<i64: 1, 1, 2>, scalar_prefetch = 0 : i64, scratch_operands = 1 : i64, tpu.core_type = #tpu.core_type<tc>, window_params = [{transform_indices = @transform_0, window_bounds = array<i64: 392, 1024>}, {transform_indices = @transform_1, window_bounds = array<i64: 1024, 128>}, {transform_indices = @transform_2, window_bounds = array<i64: 392, 128>}]} {
    %c0_i32 = arith.constant 0 : i32
    %0 = arith.cmpi eq, %arg2, %c0_i32 : i32
    %1 = arith.extui %0 : i1 to i32
    %c0_i32_0 = arith.constant 0 : i32
    %2 = arith.cmpi ne, %1, %c0_i32_0 : i32
    scf.if %2 {
      %cst_9 = arith.constant 0.000000e+00 : f32
      %12 = vector.broadcast %cst_9 : f32 to vector<392x128xf32>
      %c0_10 = arith.constant 0 : index
      %c0_11 = arith.constant 0 : index
      %13 = vector.load %arg6[%c0_10, %c0_11] : memref<392x128xf32, #tpu.memory_space<vmem>>, vector<392x128xf32>
      tpu.vector_store %arg6[%c0_10, %c0_11], %12 {strides = array<i32>} : memref<392x128xf32, #tpu.memory_space<vmem>>, vector<392x128xf32>,
    } else {
    }
    %c0 = arith.constant 0 : index
    %c0_1 = arith.constant 0 : index
    %3 = vector.load %arg6[%c0, %c0_1] : memref<392x128xf32, #tpu.memory_space<vmem>>, vector<392x128xf32>
    %c0_2 = arith.constant 0 : index
    %c0_3 = arith.constant 0 : index
    %4 = vector.load %arg3[%c0_2, %c0_3] : memref<392x1024xbf16, #tpu.memory_space<vmem>>, vector<392x1024xbf16>
    %c0_4 = arith.constant 0 : index
    %c0_5 = arith.constant 0 : index
    %5 = vector.load %arg4[%c0_4, %c0_5] : memref<1024x128xbf16, #tpu.memory_space<vmem>>, vector<1024x128xbf16>
    %cst = arith.constant dense<0.000000e+00> : vector<392x128xf32>
    %6 = tpu.matmul %4, %5, %cst {dimension_numbers = #tpu.dot_dimension_numbers<[1], [0], [0], [1], [0, 0, 1, 1], [], []>} : vector<392x1024xbf16>, vector<1024x128xbf16>, vector<392x128xf32> -> vector<392x128xf32>
    %7 = arith.addf %3, %6 : vector<392x128xf32>
    %c0_6 = arith.constant 0 : index
    %c0_7 = arith.constant 0 : index
    %8 = vector.load %arg6[%c0_6, %c0_7] : memref<392x128xf32, #tpu.memory_space<vmem>>, vector<392x128xf32>
    tpu.vector_store %arg6[%c0_6, %c0_7], %7 {strides = array<i32>} : memref<392x128xf32, #tpu.memory_space<vmem>>, vector<392x128xf32>,
    %c1_i32 = arith.constant 1 : i32
    %9 = arith.cmpi eq, %arg2, %c1_i32 : i32
    %10 = arith.extui %9 : i1 to i32
    %c0_i32_8 = arith.constant 0 : i32
    %11 = arith.cmpi ne, %10, %c0_i32_8 : i32
    scf.if %11 {
      %c0_9 = arith.constant 0 : index
      %c0_10 = arith.constant 0 : index
      %12 = vector.load %arg6[%c0_9, %c0_10] : memref<392x128xf32, #tpu.memory_space<vmem>>, vector<392x128xf32>
      %cst_11 = arith.constant 0.000000e+00 : f32
      %13 = vector.broadcast %cst_11 : f32 to vector<392x128xf32>
      %14 = arith.maximumf %12, %13 : vector<392x128xf32>
      %15 = arith.truncf %14 : vector<392x128xf32> to vector<392x128xbf16>
      %c0_12 = arith.constant 0 : index
      %c0_13 = arith.constant 0 : index
      %16 = vector.load %arg5[%c0_12, %c0_13] : memref<392x128xbf16, #tpu.memory_space<vmem>>, vector<392x128xbf16>
      tpu.vector_store %arg5[%c0_12, %c0_13], %15 {strides = array<i32>} : memref<392x128xbf16, #tpu.memory_space<vmem>>, vector<392x128xbf16>,
    } else {
    }
    return
  }
  func.func @transform_0(%arg0: i32, %arg1: i32, %arg2: i32) -> (i32, i32) {
    %c0_i32 = arith.constant 0 : i32
    return %arg0, %arg2 : i32, i32
  }
  func.func @transform_1(%arg0: i32, %arg1: i32, %arg2: i32) -> (i32, i32) {
    %c0_i32 = arith.constant 0 : i32
    return %arg2, %arg1 : i32, i32
  }
  func.func @transform_2(%arg0: i32, %arg1: i32, %arg2: i32) -> (i32, i32) {
    %c0_i32 = arith.constant 0 : i32
    return %arg0, %arg1 : i32, i32
  }
}

module attributes {stable_mosaic.version = 11 : i64} {
  func.func @_maxpool_kernel(%arg0: i32, %arg1: memref<14x2x7x256xbf16, #tpu.memory_space<vmem>>, %arg2: memref<14x7x128xbf16, #tpu.memory_space<vmem>>) attributes {dimension_semantics = [#tpu.dimension_semantics<parallel>], iteration_bounds = array<i64: 1>, scalar_prefetch = 0 : i64, scratch_operands = 0 : i64, tpu.core_type = #tpu.core_type<tc>, window_params = [{transform_indices = @transform_0, window_bounds = array<i64: 14, 2, 7, 256>}, {transform_indices = @transform_1, window_bounds = array<i64: 14, 7, 128>}]} {
    %c0 = arith.constant 0 : index
    %c0_0 = arith.constant 0 : index
    %c0_1 = arith.constant 0 : index
    %c0_2 = arith.constant 0 : index
    %0 = vector.load %arg1[%c0, %c0_0, %c0_1, %c0_2] : memref<14x2x7x256xbf16, #tpu.memory_space<vmem>>, vector<14x1x7x256xbf16>
    %1 = vector.shape_cast %0 : vector<14x1x7x256xbf16> to vector<14x7x256xbf16>
    %c0_3 = arith.constant 0 : index
    %c1 = arith.constant 1 : index
    %c0_4 = arith.constant 0 : index
    %c0_5 = arith.constant 0 : index
    %2 = vector.load %arg1[%c0_3, %c1, %c0_4, %c0_5] : memref<14x2x7x256xbf16, #tpu.memory_space<vmem>>, vector<14x1x7x256xbf16>
    %3 = vector.shape_cast %2 : vector<14x1x7x256xbf16> to vector<14x7x256xbf16>
    %4 = arith.maximumf %1, %3 : vector<14x7x256xbf16>
    %5 = vector.extract_strided_slice %4 {offsets = [0, 0, 0], sizes = [14, 7, 128], strides = [1, 1, 1]} : vector<14x7x256xbf16> to vector<14x7x128xbf16>
    %6 = vector.extract_strided_slice %4 {offsets = [0, 0, 128], sizes = [14, 7, 128], strides = [1, 1, 1]} : vector<14x7x256xbf16> to vector<14x7x128xbf16>
    %7 = arith.maximumf %5, %6 : vector<14x7x128xbf16>
    %c0_6 = arith.constant 0 : index
    %c0_7 = arith.constant 0 : index
    %c0_8 = arith.constant 0 : index
    %8 = vector.load %arg2[%c0_6, %c0_7, %c0_8] : memref<14x7x128xbf16, #tpu.memory_space<vmem>>, vector<14x7x128xbf16>
    tpu.vector_store %arg2[%c0_6, %c0_7, %c0_8], %7 {strides = array<i32>} : memref<14x7x128xbf16, #tpu.memory_space<vmem>>, vector<14x7x128xbf16>,
    return
  }
  func.func @transform_0(%arg0: i32) -> (i32, i32, i32, i32) {
    %c0_i32 = arith.constant 0 : i32
    %c0_i32_0 = arith.constant 0 : i32
    %c0_i32_1 = arith.constant 0 : i32
    %c0_i32_2 = arith.constant 0 : i32
    return %arg0, %c0_i32, %c0_i32_0, %c0_i32_1 : i32, i32, i32, i32
  }
  func.func @transform_1(%arg0: i32) -> (i32, i32, i32) {
    %c0_i32 = arith.constant 0 : i32
    %c0_i32_0 = arith.constant 0 : i32
    %c0_i32_1 = arith.constant 0 : i32
    return %arg0, %c0_i32, %c0_i32_0 : i32, i32, i32
  }
}

module attributes {stable_mosaic.version = 11 : i64} {
  func.func @_mm_accum_kernel(%arg0: i32, %arg1: i32, %arg2: i32, %arg3: memref<2x1024xbf16, #tpu.memory_space<vmem>>, %arg4: memref<1024x256xbf16, #tpu.memory_space<vmem>>, %arg5: memref<2x256xbf16, #tpu.memory_space<vmem>>, %arg6: memref<2x256xf32, #tpu.memory_space<vmem>>) attributes {dimension_semantics = [#tpu.dimension_semantics<parallel>, #tpu.dimension_semantics<parallel>, #tpu.dimension_semantics<arbitrary>], iteration_bounds = array<i64: 1, 1, 4>, scalar_prefetch = 0 : i64, scratch_operands = 1 : i64, tpu.core_type = #tpu.core_type<tc>, window_params = [{transform_indices = @transform_0, window_bounds = array<i64: 2, 1024>}, {transform_indices = @transform_1, window_bounds = array<i64: 1024, 256>}, {transform_indices = @transform_2, window_bounds = array<i64: 2, 256>}]} {
    %c0_i32 = arith.constant 0 : i32
    %0 = arith.cmpi eq, %arg2, %c0_i32 : i32
    %1 = arith.extui %0 : i1 to i32
    %c0_i32_0 = arith.constant 0 : i32
    %2 = arith.cmpi ne, %1, %c0_i32_0 : i32
    scf.if %2 {
      %cst_9 = arith.constant 0.000000e+00 : f32
      %12 = vector.broadcast %cst_9 : f32 to vector<2x256xf32>
      %c0_10 = arith.constant 0 : index
      %c0_11 = arith.constant 0 : index
      %13 = vector.load %arg6[%c0_10, %c0_11] : memref<2x256xf32, #tpu.memory_space<vmem>>, vector<2x256xf32>
      tpu.vector_store %arg6[%c0_10, %c0_11], %12 {strides = array<i32>} : memref<2x256xf32, #tpu.memory_space<vmem>>, vector<2x256xf32>,
    } else {
    }
    %c0 = arith.constant 0 : index
    %c0_1 = arith.constant 0 : index
    %3 = vector.load %arg6[%c0, %c0_1] : memref<2x256xf32, #tpu.memory_space<vmem>>, vector<2x256xf32>
    %c0_2 = arith.constant 0 : index
    %c0_3 = arith.constant 0 : index
    %4 = vector.load %arg3[%c0_2, %c0_3] : memref<2x1024xbf16, #tpu.memory_space<vmem>>, vector<2x1024xbf16>
    %c0_4 = arith.constant 0 : index
    %c0_5 = arith.constant 0 : index
    %5 = vector.load %arg4[%c0_4, %c0_5] : memref<1024x256xbf16, #tpu.memory_space<vmem>>, vector<1024x256xbf16>
    %cst = arith.constant dense<0.000000e+00> : vector<2x256xf32>
    %6 = tpu.matmul %4, %5, %cst {dimension_numbers = #tpu.dot_dimension_numbers<[1], [0], [0], [1], [0, 0, 1, 1], [], []>} : vector<2x1024xbf16>, vector<1024x256xbf16>, vector<2x256xf32> -> vector<2x256xf32>
    %7 = arith.addf %3, %6 : vector<2x256xf32>
    %c0_6 = arith.constant 0 : index
    %c0_7 = arith.constant 0 : index
    %8 = vector.load %arg6[%c0_6, %c0_7] : memref<2x256xf32, #tpu.memory_space<vmem>>, vector<2x256xf32>
    tpu.vector_store %arg6[%c0_6, %c0_7], %7 {strides = array<i32>} : memref<2x256xf32, #tpu.memory_space<vmem>>, vector<2x256xf32>,
    %c3_i32 = arith.constant 3 : i32
    %9 = arith.cmpi eq, %arg2, %c3_i32 : i32
    %10 = arith.extui %9 : i1 to i32
    %c0_i32_8 = arith.constant 0 : i32
    %11 = arith.cmpi ne, %10, %c0_i32_8 : i32
    scf.if %11 {
      %c0_9 = arith.constant 0 : index
      %c0_10 = arith.constant 0 : index
      %12 = vector.load %arg6[%c0_9, %c0_10] : memref<2x256xf32, #tpu.memory_space<vmem>>, vector<2x256xf32>
      %cst_11 = arith.constant 0.000000e+00 : f32
      %13 = vector.broadcast %cst_11 : f32 to vector<2x256xf32>
      %14 = arith.maximumf %12, %13 : vector<2x256xf32>
      %15 = arith.truncf %14 : vector<2x256xf32> to vector<2x256xbf16>
      %c0_12 = arith.constant 0 : index
      %c0_13 = arith.constant 0 : index
      %16 = vector.load %arg5[%c0_12, %c0_13] : memref<2x256xbf16, #tpu.memory_space<vmem>>, vector<2x256xbf16>
      tpu.vector_store %arg5[%c0_12, %c0_13], %15 {strides = array<i32>} : memref<2x256xbf16, #tpu.memory_space<vmem>>, vector<2x256xbf16>,
    } else {
    }
    return
  }
  func.func @transform_0(%arg0: i32, %arg1: i32, %arg2: i32) -> (i32, i32) {
    %c0_i32 = arith.constant 0 : i32
    return %arg0, %arg2 : i32, i32
  }
  func.func @transform_1(%arg0: i32, %arg1: i32, %arg2: i32) -> (i32, i32) {
    %c0_i32 = arith.constant 0 : i32
    return %arg2, %arg1 : i32, i32
  }
  func.func @transform_2(%arg0: i32, %arg1: i32, %arg2: i32) -> (i32, i32) {
    %c0_i32 = arith.constant 0 : i32
    return %arg0, %arg1 : i32, i32
  }
}

module attributes {stable_mosaic.version = 11 : i64} {
  func.func @_mm_single_kernel(%arg0: i32, %arg1: i32, %arg2: memref<2x256xbf16, #tpu.memory_space<vmem>>, %arg3: memref<256x256xbf16, #tpu.memory_space<vmem>>, %arg4: memref<1x256xf32, #tpu.memory_space<vmem>>, %arg5: memref<2x256xf32, #tpu.memory_space<vmem>>, %arg6: memref<2x256xbf16, #tpu.memory_space<vmem>>) attributes {dimension_semantics = [#tpu.dimension_semantics<parallel>, #tpu.dimension_semantics<parallel>], iteration_bounds = array<i64: 1, 4>, scalar_prefetch = 0 : i64, scratch_operands = 0 : i64, tpu.core_type = #tpu.core_type<tc>, window_params = [{transform_indices = @transform_0, window_bounds = array<i64: 2, 256>}, {transform_indices = @transform_1, window_bounds = array<i64: 256, 256>}, {transform_indices = @transform_2, window_bounds = array<i64: 1, 256>}, {transform_indices = @transform_3, window_bounds = array<i64: 2, 256>}, {transform_indices = @transform_4, window_bounds = array<i64: 2, 256>}]} {
    %c0 = arith.constant 0 : index
    %c0_0 = arith.constant 0 : index
    %0 = vector.load %arg2[%c0, %c0_0] : memref<2x256xbf16, #tpu.memory_space<vmem>>, vector<2x256xbf16>
    %c0_1 = arith.constant 0 : index
    %c0_2 = arith.constant 0 : index
    %1 = vector.load %arg3[%c0_1, %c0_2] : memref<256x256xbf16, #tpu.memory_space<vmem>>, vector<256x256xbf16>
    %cst = arith.constant dense<0.000000e+00> : vector<2x256xf32>
    %2 = tpu.matmul %0, %1, %cst {dimension_numbers = #tpu.dot_dimension_numbers<[1], [0], [0], [1], [0, 0, 1, 1], [], []>} : vector<2x256xbf16>, vector<256x256xbf16>, vector<2x256xf32> -> vector<2x256xf32>
    %c0_3 = arith.constant 0 : index
    %c0_4 = arith.constant 0 : index
    %3 = vector.load %arg4[%c0_3, %c0_4] : memref<1x256xf32, #tpu.memory_space<vmem>>, vector<1x256xf32>
    %4 = vector.broadcast %3 : vector<1x256xf32> to vector<2x256xf32>
    %5 = arith.addf %2, %4 : vector<2x256xf32>
    %c0_5 = arith.constant 0 : index
    %c0_6 = arith.constant 0 : index
    %6 = vector.load %arg5[%c0_5, %c0_6] : memref<2x256xf32, #tpu.memory_space<vmem>>, vector<2x256xf32>
    tpu.vector_store %arg5[%c0_5, %c0_6], %5 {strides = array<i32>} : memref<2x256xf32, #tpu.memory_space<vmem>>, vector<2x256xf32>,
    %cst_7 = arith.constant 0.000000e+00 : f32
    %7 = vector.broadcast %cst_7 : f32 to vector<2x256xf32>
    %8 = arith.maximumf %5, %7 : vector<2x256xf32>
    %9 = arith.truncf %8 : vector<2x256xf32> to vector<2x256xbf16>
    %c0_8 = arith.constant 0 : index
    %c0_9 = arith.constant 0 : index
    %10 = vector.load %arg6[%c0_8, %c0_9] : memref<2x256xbf16, #tpu.memory_space<vmem>>, vector<2x256xbf16>
    tpu.vector_store %arg6[%c0_8, %c0_9], %9 {strides = array<i32>} : memref<2x256xbf16, #tpu.memory_space<vmem>>, vector<2x256xbf16>,
    return
  }
  func.func @transform_0(%arg0: i32, %arg1: i32) -> (i32, i32) {
    %c0_i32 = arith.constant 0 : i32
    %c0_i32_0 = arith.constant 0 : i32
    return %arg0, %c0_i32 : i32, i32
  }
  func.func @transform_1(%arg0: i32, %arg1: i32) -> (i32, i32) {
    %c0_i32 = arith.constant 0 : i32
    %c0_i32_0 = arith.constant 0 : i32
    return %c0_i32, %arg1 : i32, i32
  }
  func.func @transform_2(%arg0: i32, %arg1: i32) -> (i32, i32) {
    %c0_i32 = arith.constant 0 : i32
    %c0_i32_0 = arith.constant 0 : i32
    return %c0_i32, %arg1 : i32, i32
  }
  func.func @transform_3(%arg0: i32, %arg1: i32) -> (i32, i32) {
    %c0_i32 = arith.constant 0 : i32
    return %arg0, %arg1 : i32, i32
  }
  func.func @transform_4(%arg0: i32, %arg1: i32) -> (i32, i32) {
    %c0_i32 = arith.constant 0 : i32
    return %arg0, %arg1 : i32, i32
  }
}

module attributes {stable_mosaic.version = 11 : i64} {
  func.func @_mm_single_kernel(%arg0: i32, %arg1: i32, %arg2: memref<2x1024xbf16, #tpu.memory_space<vmem>>, %arg3: memref<1024x128xbf16, #tpu.memory_space<vmem>>, %arg4: memref<1x128xf32, #tpu.memory_space<vmem>>, %arg5: memref<2x128xf32, #tpu.memory_space<vmem>>) attributes {dimension_semantics = [#tpu.dimension_semantics<parallel>, #tpu.dimension_semantics<parallel>], iteration_bounds = array<i64: 1, 1>, scalar_prefetch = 0 : i64, scratch_operands = 0 : i64, tpu.core_type = #tpu.core_type<tc>, window_params = [{transform_indices = @transform_0, window_bounds = array<i64: 2, 1024>}, {transform_indices = @transform_1, window_bounds = array<i64: 1024, 128>}, {transform_indices = @transform_2, window_bounds = array<i64: 1, 128>}, {transform_indices = @transform_3, window_bounds = array<i64: 2, 128>}]} {
    %c0 = arith.constant 0 : index
    %c0_0 = arith.constant 0 : index
    %0 = vector.load %arg2[%c0, %c0_0] : memref<2x1024xbf16, #tpu.memory_space<vmem>>, vector<2x1024xbf16>
    %c0_1 = arith.constant 0 : index
    %c0_2 = arith.constant 0 : index
    %1 = vector.load %arg3[%c0_1, %c0_2] : memref<1024x128xbf16, #tpu.memory_space<vmem>>, vector<1024x128xbf16>
    %cst = arith.constant dense<0.000000e+00> : vector<2x128xf32>
    %2 = tpu.matmul %0, %1, %cst {dimension_numbers = #tpu.dot_dimension_numbers<[1], [0], [0], [1], [0, 0, 1, 1], [], []>} : vector<2x1024xbf16>, vector<1024x128xbf16>, vector<2x128xf32> -> vector<2x128xf32>
    %c0_3 = arith.constant 0 : index
    %c0_4 = arith.constant 0 : index
    %3 = vector.load %arg4[%c0_3, %c0_4] : memref<1x128xf32, #tpu.memory_space<vmem>>, vector<1x128xf32>
    %4 = vector.broadcast %3 : vector<1x128xf32> to vector<2x128xf32>
    %5 = arith.addf %2, %4 : vector<2x128xf32>
    %c0_5 = arith.constant 0 : index
    %c0_6 = arith.constant 0 : index
    %6 = vector.load %arg5[%c0_5, %c0_6] : memref<2x128xf32, #tpu.memory_space<vmem>>, vector<2x128xf32>
    tpu.vector_store %arg5[%c0_5, %c0_6], %5 {strides = array<i32>} : memref<2x128xf32, #tpu.memory_space<vmem>>, vector<2x128xf32>,
    return
  }
  func.func @transform_0(%arg0: i32, %arg1: i32) -> (i32, i32) {
    %c0_i32 = arith.constant 0 : i32
    %c0_i32_0 = arith.constant 0 : i32
    return %arg0, %c0_i32 : i32, i32
  }
  func.func @transform_1(%arg0: i32, %arg1: i32) -> (i32, i32) {
    %c0_i32 = arith.constant 0 : i32
    %c0_i32_0 = arith.constant 0 : i32
    return %c0_i32, %arg1 : i32, i32
  }
  func.func @transform_2(%arg0: i32, %arg1: i32) -> (i32, i32) {
    %c0_i32 = arith.constant 0 : i32
    %c0_i32_0 = arith.constant 0 : i32
    return %c0_i32, %arg1 : i32, i32
  }
  func.func @transform_3(%arg0: i32, %arg1: i32) -> (i32, i32) {
    %c0_i32 = arith.constant 0 : i32
    return %arg0, %arg1 : i32, i32
  }
}

</mosaic_0001>

<llo_original>
// kernel: gabor_cnn7_forward.8
$region0: #{gabor_cnn7_forward.8}
  #allocation0 [shape = 'u32[]', space=smem, size = 0x4, offset = 0x4, fixed_abs, tag = 'smem constant byte address 0x4 - core index']
  #allocation1 [shape = 'u32[144,128]{1,0:T(1,128)}', space=vmem, size = 0x12000, scoped, tag = 'internal scratch']
  %s0 = inlined_call_operand.vmem [shape: bf16[1568,128], index: 0, kind: input, shape index: {}]
  %s1 = inlined_call_operand.vmem [shape: bf16[128,128], index: 1, kind: input, shape index: {}]
  %s2 = inlined_call_operand.vmem [shape: bf16[1568,128], index: 2, kind: output, shape index: {}]
  %s3 = sld [smem:[#allocation0]]
  $region41: #{gabor_cnn7_forward.8} parent=0
    _
  %s5 = ssub.s32 1, %s3
  %s6 = scalar_select 0, %s5, %s3
  loop: start=0, step=1, limit=6
  $region2: #{gabor_cnn7_forward.8} parent=0 // loop_pre_header
    _
  $region3: #{gabor_cnn7_forward.8} parent=0 // loop_header
    %s8 = sphi 0, %s12
    %p9 = scmp.ge.s32.totalorder %s8, 6
    %s15 = sphi 0, %s27
    %s16 = sphi 0, %s23
    %s17 = sphi 0, %s15
    %s18 = sphi 0, %s16
    %s19 = sphi 0, %s17
    %s20 = sphi 0, %s18
    %s30 = sphi 0, %s32
    %s33 = sphi 0, %s30
    %s34 = sphi 0, %s33
    %s50 = sphi 0, %s34
    %s56 = sphi 0, %s58
    %s59 = sphi 0, %s56
    %s60 = sphi 0, %s59
    %s76 = sphi 0, %s60
    %s84 = sphi 0, %s86
    %s87 = sphi 0, %s84
    %s88 = sphi 0, %s87
    %s104 = sphi 0, %s88
  $region4: #{gabor_cnn7_forward.8} parent=0 // loop_header_branch
    %11 = sbr.rel (%p9) target = $region8
  $region5: #{gabor_cnn7_forward.8} parent=0 // loop_body
    %s13 = ssub.s32 %s8, 1
    %s14 = ssub.s32 %s8, 2
    %s21 = sadd.s32 1, %s16
    %p22 = scmp.ge.s32.totalorder %s21, 1
    %s23 = scalar_select %p22, 0, %s21
    %s24 = sadd.s32 1, %s15
    %s25 = scalar_select %p22, %s24, %s15
    %p26 = scmp.ge.s32.totalorder %s25, 4
    %s27 = scalar_select %p26, 0, %s25
    %s28 = ssub.s32 %s15, %s27
    %p29 = scmp.eq.s32.totalorder %s28, 0
    %s31 = sadd.s32 %s30, 1
    %s32 = scalar_select %p29, %s30, %s31
    %p35 = pneg %p29
    %p36 = scmp.eq.s32.totalorder %s8, 3
    %p37 = por %p35, %p36
    %p38 = scmp.ne.s32.totalorder %s30, %s33
    %p39 = scmp.eq.s32.totalorder %s8, 0
    %p40 = por %p38, %p39
    %p41 = scmp.ne.s32.totalorder %s30, %s33
    %p42 = scmp.eq.s32.totalorder %s13, 3
    %p43 = por %p41, %p42
    %p44 = scmp.ne.s32.totalorder %s33, %s34
    %p45 = scmp.eq.s32.totalorder %s13, 0
    %p46 = por %p44, %p45
    %p47 = scmp.ne.s32.totalorder %s33, %s34
    %p48 = scmp.eq.s32.totalorder %s14, 3
    %p49 = por %p47, %p48
    %p51 = scmp.ne.s32.totalorder %s34, %s50
    %p52 = scmp.eq.s32.totalorder %s14, 0
    %p53 = por %p51, %p52
    %s54 = ssub.s32 %s16, %s23
    %p55 = scmp.eq.s32.totalorder %s54, 0
    %s57 = sadd.s32 %s56, 1
    %s58 = scalar_select %p55, %s56, %s57
    %p61 = pneg %p55
    %p62 = scmp.eq.s32.totalorder %s8, 3
    %p63 = por %p61, %p62
    %p64 = scmp.ne.s32.totalorder %s56, %s59
    %p65 = scmp.eq.s32.totalorder %s8, 0
    %p66 = por %p64, %p65
    %p67 = scmp.ne.s32.totalorder %s56, %s59
    %p68 = scmp.eq.s32.totalorder %s13, 3
    %p69 = por %p67, %p68
    %p70 = scmp.ne.s32.totalorder %s59, %s60
    %p71 = scmp.eq.s32.totalorder %s13, 0
    %p72 = por %p70, %p71
    %p73 = scmp.ne.s32.totalorder %s59, %s60
    %p74 = scmp.eq.s32.totalorder %s14, 3
    %p75 = por %p73, %p74
    %p77 = scmp.ne.s32.totalorder %s60, %s76
    %p78 = scmp.eq.s32.totalorder %s14, 0
    %p79 = por %p77, %p78
    %s80 = ssub.s32 %s15, %s27
    %s81 = ssub.s32 %s16, %s23
    %s82 = sor.u32 %s80, %s81
    %p83 = scmp.eq.s32.totalorder %s82, 0
    %s85 = sadd.s32 %s84, 1
    %s86 = scalar_select %p83, %s84, %s85
    %p89 = pneg %p83
    %p90 = scmp.eq.s32.totalorder %s8, 3
    %p91 = por %p89, %p90
    %p92 = scmp.ne.s32.totalorder %s84, %s87
    %p93 = scmp.eq.s32.totalorder %s8, 0
    %p94 = por %p92, %p93
    %p95 = scmp.ne.s32.totalorder %s84, %s87
    %p96 = scmp.eq.s32.totalorder %s13, 3
    %p97 = por %p95, %p96
    %p98 = scmp.ne.s32.totalorder %s87, %s88
    %p99 = scmp.eq.s32.totalorder %s13, 0
    %p100 = por %p98, %p99
    %p101 = scmp.ne.s32.totalorder %s87, %s88
    %p102 = scmp.eq.s32.totalorder %s14, 3
    %p103 = por %p101, %p102
    %p105 = scmp.ne.s32.totalorder %s88, %s104
    %p106 = scmp.eq.s32.totalorder %s14, 0
    %p107 = por %p105, %p106
    %p108 = scmp.le.s32.totalorder 1, %s8
    %p109 = scmp.lt.s32.totalorder %s8, 5
    %p110 = pnand %p108, %p109
    %p111 = pneg %p110
    // Predicated region
    $region9: #{gabor_cnn7_forward.8} parent=5 // pred_check
      _
    $region10: #{gabor_cnn7_forward.8} parent=5 // pred_check_branch
      %113 = sbr.rel (%p110) target = $region12
    $region11: #{gabor_cnn7_forward.8} parent=5 // pred_region
      %s114 = ssub.s32 %s8, 1
      // Predicated region
      $region13: #{gabor_cnn7_forward.8} parent=11 // pred_check
        %p115 = pneg %p72
      $region14: #{gabor_cnn7_forward.8} parent=11 // pred_check_branch
        %117 = sbr.rel (%p115) target = $region16
      $region15: #{gabor_cnn7_forward.8} parent=11 // pred_region
        %p118 = scmp.lt.s32.totalorder %s18, 0
        %s119 = scalar_select %p118, %s18, 0
        %s120 = smul.addr %s119, 4
        %s121 = scalar_lea.vmem %s1, %s120
      $region16: #{gabor_cnn7_forward.8} parent=11 // pred_fallthru
        _
    $region12: #{gabor_cnn7_forward.8} parent=5 // pred_fallthru
      _
    %p122 = scmp.lt.s32.totalorder %s8, 4
    // Predicated region
    $region17: #{gabor_cnn7_forward.8} parent=5 // pred_check
      %p123 = pneg %p122
    $region18: #{gabor_cnn7_forward.8} parent=5 // pred_check_branch
      %125 = sbr.rel (%p123) target = $region20
    $region19: #{gabor_cnn7_forward.8} parent=5 // pred_region
      // Predicated region
      $region21: #{gabor_cnn7_forward.8} parent=19 // pred_check
        %p126 = pneg %p40
      $region22: #{gabor_cnn7_forward.8} parent=19 // pred_check_branch
        %128 = sbr.rel (%p126) target = $region24
      $region23: #{gabor_cnn7_forward.8} parent=19 // pred_region
        %s129 = smul.u32 49, %s15
        %p130 = scmp.lt.s32.totalorder %s129, 195
        %s131 = scalar_select %p130, %s129, 195
        %s132 = smul.addr %s131, 4
        %s133 = scalar_lea.vmem %s0, %s132
        %s134 = smul.u32 49, %s15
      $region24: #{gabor_cnn7_forward.8} parent=19 // pred_fallthru
        _
    $region20: #{gabor_cnn7_forward.8} parent=5 // pred_fallthru
      _
    %p135 = scmp.le.s32.totalorder 1, %s8
    %p136 = scmp.lt.s32.totalorder %s8, 5
    %p137 = pnand %p135, %p136
    %p138 = pneg %p137
    // Predicated region
    $region25: #{gabor_cnn7_forward.8} parent=5 // pred_check
      _
    $region26: #{gabor_cnn7_forward.8} parent=5 // pred_check_branch
      %140 = sbr.rel (%p137) target = $region28
    $region27: #{gabor_cnn7_forward.8} parent=5 // pred_region
      %s141 = ssub.s32 %s8, 1
      %s142 = smul.u32 49, %s17
      %p143 = scmp.lt.s32.totalorder %s142, 195
      %s144 = scalar_select %p143, %s142, 195
      %s145 = smul.addr %s144, 4
      %s146 = scalar_lea.vmem %s0, %s145
      %p147 = pneg %p46
      %p148 = pneg %p43
      %p149 = scmp.lt.s32.totalorder %s18, 0
      %s150 = scalar_select %p149, %s18, 0
      %s151 = smul.addr %s150, 4
      %s152 = scalar_lea.vmem %s1, %s151
      %p153 = pneg %p72
      %p154 = pneg %p69
      %p155 = pneg %p100
      %p156 = pneg %p97
      %s157 = smul.u32 49, %s17
      %p158 = scmp.lt.s32.totalorder %s157, 195
      %s159 = scalar_select %p158, %s157, 195
      %p160 = scmp.lt.s32.totalorder %s18, 0
      %s161 = scalar_select %p160, %s18, 0
      %s162 = sadd.s32 %s161, %s159
      %s163 = smul.addr %s162, 4
      %s164 = scalar_lea.vmem %s2, %s163
      %s165 = smul.u32 49, %s17
      %p166 = scmp.lt.s32.totalorder %s165, 195
      %s167 = scalar_select %p166, %s165, 195
      %s168 = smul.addr %s167, 4
      %s169 = scalar_lea.vmem %s0, %s168
      %s170 = smul.u32 49, %s17
      %p171 = scmp.lt.s32.totalorder %s18, 0
      %s172 = scalar_select %p171, %s18, 0
      %s173 = smul.addr %s172, 4
      %s174 = scalar_lea.vmem %s1, %s173
      %s175 = smul.u32 49, %s17
      %p176 = scmp.lt.s32.totalorder %s175, 195
      %s177 = scalar_select %p176, %s175, 195
      %p178 = scmp.lt.s32.totalorder %s18, 0
      %s179 = scalar_select %p178, %s18, 0
      %s180 = sadd.s32 %s179, %s177
      %s181 = smul.addr %s180, 4
      %s182 = scalar_lea.vmem %s2, %s181
      %s183 = smul.u32 49, %s17
      %v185 = vld [vmem:[%s169] sm:$0xf]
      %v186 = vld [vmem:[%s169 + $0x4] sm:$0xf]
      %v187 = vld [vmem:[%s169 + $0x8] sm:$0xf]
      %v188 = vld [vmem:[%s169 + $0xc] sm:$0xf]
      %v189 = vld [vmem:[%s169 + $0x10] sm:$0xf]
      %v190 = vld [vmem:[%s169 + $0x14] sm:$0xf]
      %v191 = vld [vmem:[%s169 + $0x18] sm:$0xf]
      %v192 = vld [vmem:[%s169 + $0x1c] sm:$0xf]
      %v193 = vld [vmem:[%s169 + $0x20] sm:$0xf]
      %v194 = vld [vmem:[%s169 + $0x24] sm:$0xf]
      %v195 = vld [vmem:[%s169 + $0x28] sm:$0xf]
      %v196 = vld [vmem:[%s169 + $0x2c] sm:$0xf]
      %v197 = vld [vmem:[%s169 + $0x30] sm:$0xf]
      %v198 = vld [vmem:[%s169 + $0x34] sm:$0xf]
      %v199 = vld [vmem:[%s169 + $0x38] sm:$0xf]
      %v200 = vld [vmem:[%s169 + $0x3c] sm:$0xf]
      %v201 = vld [vmem:[%s169 + $0x40] sm:$0xf]
      %v202 = vld [vmem:[%s169 + $0x44] sm:$0xf]
      %v203 = vld [vmem:[%s169 + $0x48] sm:$0xf]
      %v204 = vld [vmem:[%s169 + $0x4c] sm:$0xf]
      %v205 = vld [vmem:[%s169 + $0x50] sm:$0xf]
      %v206 = vld [vmem:[%s169 + $0x54] sm:$0xf]
      %v207 = vld [vmem:[%s169 + $0x58] sm:$0xf]
      %v208 = vld [vmem:[%s169 + $0x5c] sm:$0xf]
      %v209 = vld [vmem:[%s169 + $0x60] sm:$0xf]
      %v210 = vld [vmem:[%s169 + $0x64] sm:$0xf]
      %v211 = vld [vmem:[%s169 + $0x68] sm:$0xf]
      %v212 = vld [vmem:[%s169 + $0x6c] sm:$0xf]
      %v213 = vld [vmem:[%s169 + $0x70] sm:$0xf]
      %v214 = vld [vmem:[%s169 + $0x74] sm:$0xf]
      %v215 = vld [vmem:[%s169 + $0x78] sm:$0xf]
      %v216 = vld [vmem:[%s169 + $0x7c] sm:$0xf]
      %v217 = vld [vmem:[%s169 + $0x80] sm:$0xf]
      %v218 = vld [vmem:[%s169 + $0x84] sm:$0xf]
      %v219 = vld [vmem:[%s169 + $0x88] sm:$0xf]
      %v220 = vld [vmem:[%s169 + $0x8c] sm:$0xf]
      %v221 = vld [vmem:[%s169 + $0x90] sm:$0xf]
      %v222 = vld [vmem:[%s169 + $0x94] sm:$0xf]
      %v223 = vld [vmem:[%s169 + $0x98] sm:$0xf]
      %v224 = vld [vmem:[%s169 + $0x9c] sm:$0xf]
      %v225 = vld [vmem:[%s169 + $0xa0] sm:$0xf]
      %v226 = vld [vmem:[%s169 + $0xa4] sm:$0xf]
      %v227 = vld [vmem:[%s169 + $0xa8] sm:$0xf]
      %v228 = vld [vmem:[%s169 + $0xac] sm:$0xf]
      %v229 = vld [vmem:[%s169 + $0xb0] sm:$0xf]
      %v230 = vld [vmem:[%s169 + $0xb4] sm:$0xf]
      %v231 = vld [vmem:[%s169 + $0xb8] sm:$0xf]
      %v232 = vld [vmem:[%s169 + $0xbc] sm:$0xf]
      %v233 = vld [vmem:[%s169 + $0xc0] sm:$0xf]
      %v234 = vld [vmem:[%s174] sm:$0xf]
      %v235 = vld [vmem:[%s174 + $0x4] sm:$0xf]
      %v236 = vld [vmem:[%s174 + $0x8] sm:$0xf]
      %v237 = vld [vmem:[%s174 + $0xc] sm:$0xf]
      %v238 = vld [vmem:[%s174 + $0x10] sm:$0xf]
      %v239 = vld [vmem:[%s174 + $0x14] sm:$0xf]
      %v240 = vld [vmem:[%s174 + $0x18] sm:$0xf]
      %v241 = vld [vmem:[%s174 + $0x1c] sm:$0xf]
      %v242 = vld [vmem:[%s174 + $0x20] sm:$0xf]
      %v243 = vld [vmem:[%s174 + $0x24] sm:$0xf]
      %v244 = vld [vmem:[%s174 + $0x28] sm:$0xf]
      %v245 = vld [vmem:[%s174 + $0x2c] sm:$0xf]
      %v246 = vld [vmem:[%s174 + $0x30] sm:$0xf]
      %v247 = vld [vmem:[%s174 + $0x34] sm:$0xf]
      %v248 = vld [vmem:[%s174 + $0x38] sm:$0xf]
      %v249 = vld [vmem:[%s174 + $0x3c] sm:$0xf]
      %v299 = vunpack.c.l.b16 %v185
      %v300 = vunpack.c.l.b16 %v186
      %v301 = vunpack.c.l.b16 %v187
      %v302 = vunpack.c.l.b16 %v188
      %v303 = vunpack.c.l.b16 %v189
      %v304 = vunpack.c.l.b16 %v190
      %v305 = vunpack.c.l.b16 %v191
      %v306 = vunpack.c.l.b16 %v192
      %v307 = vunpack.c.l.b16 %v193
      %v308 = vunpack.c.l.b16 %v194
      %v309 = vunpack.c.l.b16 %v195
      %v310 = vunpack.c.l.b16 %v196
      %v311 = vunpack.c.l.b16 %v197
      %v312 = vunpack.c.l.b16 %v198
      %v313 = vunpack.c.l.b16 %v199
      %v314 = vunpack.c.l.b16 %v200
      %v315 = vunpack.c.l.b16 %v201
      %v316 = vunpack.c.l.b16 %v202
      %v317 = vunpack.c.l.b16 %v203
      %v318 = vunpack.c.l.b16 %v204
      %v319 = vunpack.c.l.b16 %v205
      %v320 = vunpack.c.l.b16 %v206
      %v321 = vunpack.c.l.b16 %v207
      %v322 = vunpack.c.l.b16 %v208
      %v323 = vunpack.c.l.b16 %v209
      %v324 = vunpack.c.l.b16 %v210
      %v325 = vunpack.c.l.b16 %v211
      %v326 = vunpack.c.l.b16 %v212
      %v327 = vunpack.c.l.b16 %v213
      %v328 = vunpack.c.l.b16 %v214
      %v329 = vunpack.c.l.b16 %v215
      %v330 = vunpack.c.l.b16 %v216
      %v331 = vunpack.c.l.b16 %v217
      %v332 = vunpack.c.l.b16 %v218
      %v333 = vunpack.c.l.b16 %v219
      %v334 = vunpack.c.l.b16 %v220
      %v335 = vunpack.c.l.b16 %v221
      %v336 = vunpack.c.l.b16 %v222
      %v337 = vunpack.c.l.b16 %v223
      %v338 = vunpack.c.l.b16 %v224
      %v339 = vunpack.c.l.b16 %v225
      %v340 = vunpack.c.l.b16 %v226
      %v341 = vunpack.c.l.b16 %v227
      %v342 = vunpack.c.l.b16 %v228
      %v343 = vunpack.c.l.b16 %v229
      %v344 = vunpack.c.l.b16 %v230
      %v345 = vunpack.c.l.b16 %v231
      %v346 = vunpack.c.l.b16 %v232
      %v347 = vunpack.c.l.b16 %v233
      %v348 = vpack.c.b16 %v300, %v299
      %v349 = vpack.c.b16 %v302, %v301
      %v350 = vpack.c.b16 %v304, %v303
      %v351 = vpack.c.b16 %v306, %v305
      %v352 = vpack.c.b16 %v308, %v307
      %v353 = vpack.c.b16 %v310, %v309
      %v354 = vpack.c.b16 %v312, %v311
      %v355 = vpack.c.b16 %v314, %v313
      %v356 = vpack.c.b16 %v316, %v315
      %v357 = vpack.c.b16 %v318, %v317
      %v358 = vpack.c.b16 %v320, %v319
      %v359 = vpack.c.b16 %v322, %v321
      %v360 = vpack.c.b16 %v324, %v323
      %v361 = vpack.c.b16 %v326, %v325
      %v362 = vpack.c.b16 %v328, %v327
      %v363 = vpack.c.b16 %v330, %v329
      %v364 = vpack.c.b16 %v332, %v331
      %v365 = vpack.c.b16 %v334, %v333
      %v366 = vpack.c.b16 %v336, %v335
      %v367 = vpack.c.b16 %v338, %v337
      %v368 = vpack.c.b16 %v340, %v339
      %v369 = vpack.c.b16 %v342, %v341
      %v370 = vpack.c.b16 %v344, %v343
      %v371 = vpack.c.b16 %v346, %v345
      %v372 = vpack.c.b16 %v347, %v347
      %v414 = vunpack.c.l.b16 %v234
      %v415 = vunpack.c.l.b16 %v235
      %v416 = vunpack.c.l.b16 %v236
      %v417 = vunpack.c.l.b16 %v237
      %v418 = vunpack.c.l.b16 %v238
      %v419 = vunpack.c.l.b16 %v239
      %v420 = vunpack.c.l.b16 %v240
      %v421 = vunpack.c.l.b16 %v241
      %v422 = vunpack.c.l.b16 %v242
      %v423 = vunpack.c.l.b16 %v243
      %v424 = vunpack.c.l.b16 %v244
      %v425 = vunpack.c.l.b16 %v245
      %v426 = vunpack.c.l.b16 %v246
      %v427 = vunpack.c.l.b16 %v247
      %v428 = vunpack.c.l.b16 %v248
      %v429 = vunpack.c.l.b16 %v249
      %v430 = vpack.c.b16 %v415, %v414
      %v431 = vpack.c.b16 %v417, %v416
      %v432 = vpack.c.b16 %v419, %v418
      %v433 = vpack.c.b16 %v421, %v420
      %v434 = vpack.c.b16 %v423, %v422
      %v435 = vpack.c.b16 %v425, %v424
      %v436 = vpack.c.b16 %v427, %v426
      %v437 = vpack.c.b16 %v429, %v428
      %446 = vmatprep.subr.bf16.mxu0 0
      %447 = vmatpush1.bf16.msra.mxu0 %v430
      %448 = vmatprep.subr.bf16.mxu0 0
      %449 = vmatpush1.bf16.msra.mxu0 %v431
      %450 = vmatprep.subr.bf16.mxu0 0
      %451 = vmatpush1.bf16.msra.mxu0 %v432
      %452 = vmatprep.subr.bf16.mxu0 0
      %453 = vmatpush1.bf16.msra.mxu0 %v433
      %454 = vmatprep.subr.bf16.mxu0 0
      %455 = vmatpush1.bf16.msra.mxu0 %v434
      %456 = vmatprep.subr.bf16.mxu0 0
      %457 = vmatpush1.bf16.msra.mxu0 %v435
      %458 = vmatprep.subr.bf16.mxu0 0
      %459 = vmatpush1.bf16.msra.mxu0 %v436
      %460 = vmatprep.subr.bf16.mxu0 0
      %461 = vmatpush1.bf16.msra.mxu0 %v437
      %462 = vmatprep.subr.bf16.mxu0 0
      %463 = vmatpush1.bf16.msra.mxu0 0
      %464 = vmatprep.subr.bf16.mxu0 0
      %465 = vmatpush1.bf16.msra.mxu0 0
      %466 = vmatprep.subr.bf16.mxu0 0
      %467 = vmatpush1.bf16.msra.mxu0 0
      %468 = vmatprep.subr.bf16.mxu0 0
      %469 = vmatpush1.bf16.msra.mxu0 0
      %470 = vmatprep.subr.bf16.mxu0 0
      %471 = vmatpush1.bf16.msra.mxu0 0
      %472 = vmatprep.subr.bf16.mxu0 0
      %473 = vmatpush1.bf16.msra.mxu0 0
      %474 = vmatprep.subr.bf16.mxu0 0
      %475 = vmatpush1.bf16.msra.mxu0 0
      %476 = vmatprep.subr.bf16.mxu0 0
      %477 = vmatpush1.bf16.msra.mxu0 0
      %478 = vmatprep.mubr.bf16.mxu0 0
      %479 = vmatmul.mubr.bf16.gmra.mrb[0].mxu0 %v348
      %v480 = vpop.f32.mrb[0].mxu0
      %v481 = vadd.f32 0.0, %v480
      %v482 = vpop.f32.mrb[0].mxu0
      %v483 = vpop.f32.mrb[0].mxu0
      %v484 = vadd.f32 0.0, %v483
      %v485 = vpop.f32.mrb[0].mxu0
      %486 = vmatprep.mubr.bf16.mxu0 0
      %487 = vmatmul.mubr.bf16.gmra.mrb[0].mxu0 %v349
      %v488 = vpop.f32.mrb[0].mxu0
      %v489 = vadd.f32 0.0, %v488
      %v490 = vpop.f32.mrb[0].mxu0
      %v491 = vpop.f32.mrb[0].mxu0
      %v492 = vadd.f32 0.0, %v491
      %v493 = vpop.f32.mrb[0].mxu0
      %494 = vmatprep.mubr.bf16.mxu0 0
      %495 = vmatmul.mubr.bf16.gmra.mrb[0].mxu0 %v350
      %v496 = vpop.f32.mrb[0].mxu0
      %v497 = vadd.f32 0.0, %v496
      %v498 = vpop.f32.mrb[0].mxu0
      %v499 = vpop.f32.mrb[0].mxu0
      %v500 = vadd.f32 0.0, %v499
      %v501 = vpop.f32.mrb[0].mxu0
      %502 = vmatprep.mubr.bf16.mxu0 0
      %503 = vmatmul.mubr.bf16.gmra.mrb[0].mxu0 %v351
      %v504 = vpop.f32.mrb[0].mxu0
      %v505 = vadd.f32 0.0, %v504
      %v506 = vpop.f32.mrb[0].mxu0
      %v507 = vpop.f32.mrb[0].mxu0
      %v508 = vadd.f32 0.0, %v507
      %v509 = vpop.f32.mrb[0].mxu0
      %510 = vmatprep.mubr.bf16.mxu0 0
      %511 = vmatmul.mubr.bf16.gmra.mrb[0].mxu0 %v352
      %v512 = vpop.f32.mrb[0].mxu0
      %v513 = vadd.f32 0.0, %v512
      %v514 = vpop.f32.mrb[0].mxu0
      %v515 = vpop.f32.mrb[0].mxu0
      %v516 = vadd.f32 0.0, %v515
      %v517 = vpop.f32.mrb[0].mxu0
      %518 = vmatprep.mubr.bf16.mxu0 0
      %519 = vmatmul.mubr.bf16.gmra.mrb[0].mxu0 %v353
      %v520 = vpop.f32.mrb[0].mxu0
      %v521 = vadd.f32 0.0, %v520
      %v522 = vpop.f32.mrb[0].mxu0
      %v523 = vpop.f32.mrb[0].mxu0
      %v524 = vadd.f32 0.0, %v523
      %v525 = vpop.f32.mrb[0].mxu0
      %526 = vmatprep.mubr.bf16.mxu0 0
      %527 = vmatmul.mubr.bf16.gmra.mrb[0].mxu0 %v354
      %v528 = vpop.f32.mrb[0].mxu0
      %v529 = vadd.f32 0.0, %v528
      %v530 = vpop.f32.mrb[0].mxu0
      %v531 = vpop.f32.mrb[0].mxu0
      %v532 = vadd.f32 0.0, %v531
      %v533 = vpop.f32.mrb[0].mxu0
      %534 = vmatprep.mubr.bf16.mxu0 0
      %535 = vmatmul.mubr.bf16.gmra.mrb[0].mxu0 %v355
      %v536 = vpop.f32.mrb[0].mxu0
      %v537 = vadd.f32 0.0, %v536
      %v538 = vpop.f32.mrb[0].mxu0
      %v539 = vpop.f32.mrb[0].mxu0
      %v540 = vadd.f32 0.0, %v539
      %v541 = vpop.f32.mrb[0].mxu0
      %542 = vmatprep.mubr.bf16.mxu0 0
      %543 = vmatmul.mubr.bf16.gmra.mrb[0].mxu0 %v356
      %v544 = vpop.f32.mrb[0].mxu0
      %v545 = vadd.f32 0.0, %v544
      %v546 = vpop.f32.mrb[0].mxu0
      %v547 = vpop.f32.mrb[0].mxu0
      %v548 = vadd.f32 0.0, %v547
      %v549 = vpop.f32.mrb[0].mxu0
      %550 = vmatprep.mubr.bf16.mxu0 0
      %551 = vmatmul.mubr.bf16.gmra.mrb[0].mxu0 %v357
      %v552 = vpop.f32.mrb[0].mxu0
      %v553 = vadd.f32 0.0, %v552
      %v554 = vpop.f32.mrb[0].mxu0
      %v555 = vpop.f32.mrb[0].mxu0
      %v556 = vadd.f32 0.0, %v555
      %v557 = vpop.f32.mrb[0].mxu0
      %558 = vmatprep.mubr.bf16.mxu0 0
      %559 = vmatmul.mubr.bf16.gmra.mrb[0].mxu0 %v358
      %v560 = vpop.f32.mrb[0].mxu0
      %v561 = vadd.f32 0.0, %v560
      %v562 = vpop.f32.mrb[0].mxu0
      %v563 = vpop.f32.mrb[0].mxu0
      %v564 = vadd.f32 0.0, %v563
      %v565 = vpop.f32.mrb[0].mxu0
      %566 = vmatprep.mubr.bf16.mxu0 0
      %567 = vmatmul.mubr.bf16.gmra.mrb[0].mxu0 %v359
      %v568 = vpop.f32.mrb[0].mxu0
      %v569 = vadd.f32 0.0, %v568
      %v570 = vpop.f32.mrb[0].mxu0
      %v571 = vpop.f32.mrb[0].mxu0
      %v572 = vadd.f32 0.0, %v571
      %v573 = vpop.f32.mrb[0].mxu0
      %574 = vmatprep.mubr.bf16.mxu0 0
      %575 = vmatmul.mubr.bf16.gmra.mrb[0].mxu0 %v360
      %v576 = vpop.f32.mrb[0].mxu0
      %v577 = vadd.f32 0.0, %v576
      %v578 = vpop.f32.mrb[0].mxu0
      %v579 = vpop.f32.mrb[0].mxu0
      %v580 = vadd.f32 0.0, %v579
      %v581 = vpop.f32.mrb[0].mxu0
      %582 = vmatprep.mubr.bf16.mxu0 0
      %583 = vmatmul.mubr.bf16.gmra.mrb[0].mxu0 %v361
      %v584 = vpop.f32.mrb[0].mxu0
      %v585 = vadd.f32 0.0, %v584
      %v586 = vpop.f32.mrb[0].mxu0
      %v587 = vpop.f32.mrb[0].mxu0
      %v588 = vadd.f32 0.0, %v587
      %v589 = vpop.f32.mrb[0].mxu0
      %590 = vmatprep.mubr.bf16.mxu0 0
      %591 = vmatmul.mubr.bf16.gmra.mrb[0].mxu0 %v362
      %v592 = vpop.f32.mrb[0].mxu0
      %v593 = vadd.f32 0.0, %v592
      %v594 = vpop.f32.mrb[0].mxu0
      %v595 = vpop.f32.mrb[0].mxu0
      %v596 = vadd.f32 0.0, %v595
      %v597 = vpop.f32.mrb[0].mxu0
      %598 = vmatprep.mubr.bf16.mxu0 0
      %599 = vmatmul.mubr.bf16.gmra.mrb[0].mxu0 %v363
      %v600 = vpop.f32.mrb[0].mxu0
      %v601 = vadd.f32 0.0, %v600
      %v602 = vpop.f32.mrb[0].mxu0
      %v603 = vpop.f32.mrb[0].mxu0
      %v604 = vadd.f32 0.0, %v603
      %v605 = vpop.f32.mrb[0].mxu0
      %606 = vmatprep.mubr.bf16.mxu0 0
      %607 = vmatmul.mubr.bf16.gmra.mrb[0].mxu0 %v364
      %v608 = vpop.f32.mrb[0].mxu0
      %v609 = vadd.f32 0.0, %v608
      %v610 = vpop.f32.mrb[0].mxu0
      %v611 = vpop.f32.mrb[0].mxu0
      %v612 = vadd.f32 0.0, %v611
      %v613 = vpop.f32.mrb[0].mxu0
      %614 = vmatprep.mubr.bf16.mxu0 0
      %615 = vmatmul.mubr.bf16.gmra.mrb[0].mxu0 %v365
      %v616 = vpop.f32.mrb[0].mxu0
      %v617 = vadd.f32 0.0, %v616
      %v618 = vpop.f32.mrb[0].mxu0
      %v619 = vpop.f32.mrb[0].mxu0
      %v620 = vadd.f32 0.0, %v619
      %v621 = vpop.f32.mrb[0].mxu0
      %622 = vmatprep.mubr.bf16.mxu0 0
      %623 = vmatmul.mubr.bf16.gmra.mrb[0].mxu0 %v366
      %v624 = vpop.f32.mrb[0].mxu0
      %v625 = vadd.f32 0.0, %v624
      %v626 = vpop.f32.mrb[0].mxu0
      %v627 = vpop.f32.mrb[0].mxu0
      %v628 = vadd.f32 0.0, %v627
      %v629 = vpop.f32.mrb[0].mxu0
      %630 = vmatprep.mubr.bf16.mxu0 0
      %631 = vmatmul.mubr.bf16.gmra.mrb[0].mxu0 %v367
      %v632 = vpop.f32.mrb[0].mxu0
      %v633 = vadd.f32 0.0, %v632
      %v634 = vpop.f32.mrb[0].mxu0
      %v635 = vpop.f32.mrb[0].mxu0
      %v636 = vadd.f32 0.0, %v635
      %v637 = vpop.f32.mrb[0].mxu0
      %638 = vmatprep.mubr.bf16.mxu0 0
      %639 = vmatmul.mubr.bf16.gmra.mrb[0].mxu0 %v368
      %v640 = vpop.f32.mrb[0].mxu0
      %v641 = vadd.f32 0.0, %v640
      %v642 = vpop.f32.mrb[0].mxu0
      %v643 = vpop.f32.mrb[0].mxu0
      %v644 = vadd.f32 0.0, %v643
      %v645 = vpop.f32.mrb[0].mxu0
      %646 = vmatprep.mubr.bf16.mxu0 0
      %647 = vmatmul.mubr.bf16.gmra.mrb[0].mxu0 %v369
      %v648 = vpop.f32.mrb[0].mxu0
      %v649 = vadd.f32 0.0, %v648
      %v650 = vpop.f32.mrb[0].mxu0
      %v651 = vpop.f32.mrb[0].mxu0
      %v652 = vadd.f32 0.0, %v651
      %v653 = vpop.f32.mrb[0].mxu0
      %654 = vmatprep.mubr.bf16.mxu0 0
      %655 = vmatmul.mubr.bf16.gmra.mrb[0].mxu0 %v370
      %v656 = vpop.f32.mrb[0].mxu0
      %v657 = vadd.f32 0.0, %v656
      %v658 = vpop.f32.mrb[0].mxu0
      %v659 = vpop.f32.mrb[0].mxu0
      %v660 = vadd.f32 0.0, %v659
      %v661 = vpop.f32.mrb[0].mxu0
      %662 = vmatprep.mubr.bf16.mxu0 0
      %663 = vmatmul.mubr.bf16.gmra.mrb[0].mxu0 %v371
      %v664 = vpop.f32.mrb[0].mxu0
      %v665 = vadd.f32 0.0, %v664
      %v666 = vpop.f32.mrb[0].mxu0
      %v667 = vpop.f32.mrb[0].mxu0
      %v668 = vadd.f32 0.0, %v667
      %v669 = vpop.f32.mrb[0].mxu0
      %670 = vmatprep.mubr.bf16.mxu0 0
      %671 = vmatmul.mubr.bf16.gmra.mrb[0].mxu0 %v372
      %v672 = vpop.f32.mrb[0].mxu0
      %v673 = vadd.f32 0.0, %v672
      %v674 = vpop.f32.mrb[0].mxu0
      %v675 = vpop.f32.mrb[0].mxu0
      %v676 = vpop.f32.mrb[0].mxu0
      %677 = vdwg.mxu0
      %v678 = vmax.f32 %v481, 0.0
      %v679 = vmax.f32 %v484, 0.0
      %v680 = vmax.f32 %v489, 0.0
      %v681 = vmax.f32 %v492, 0.0
      %v682 = vmax.f32 %v497, 0.0
      %v683 = vmax.f32 %v500, 0.0
      %v684 = vmax.f32 %v505, 0.0
      %v685 = vmax.f32 %v508, 0.0
      %v686 = vmax.f32 %v513, 0.0
      %v687 = vmax.f32 %v516, 0.0
      %v688 = vmax.f32 %v521, 0.0
      %v689 = vmax.f32 %v524, 0.0
      %v690 = vmax.f32 %v529, 0.0
      %v691 = vmax.f32 %v532, 0.0
      %v692 = vmax.f32 %v537, 0.0
      %v693 = vmax.f32 %v540, 0.0
      %v694 = vmax.f32 %v545, 0.0
      %v695 = vmax.f32 %v548, 0.0
      %v696 = vmax.f32 %v553, 0.0
      %v697 = vmax.f32 %v556, 0.0
      %v698 = vmax.f32 %v561, 0.0
      %v699 = vmax.f32 %v564, 0.0
      %v700 = vmax.f32 %v569, 0.0
      %v701 = vmax.f32 %v572, 0.0
      %v702 = vmax.f32 %v577, 0.0
      %v703 = vmax.f32 %v580, 0.0
      %v704 = vmax.f32 %v585, 0.0
      %v705 = vmax.f32 %v588, 0.0
      %v706 = vmax.f32 %v593, 0.0
      %v707 = vmax.f32 %v596, 0.0
      %v708 = vmax.f32 %v601, 0.0
      %v709 = vmax.f32 %v604, 0.0
      %v710 = vmax.f32 %v609, 0.0
      %v711 = vmax.f32 %v612, 0.0
      %v712 = vmax.f32 %v617, 0.0
      %v713 = vmax.f32 %v620, 0.0
      %v714 = vmax.f32 %v625, 0.0
      %v715 = vmax.f32 %v628, 0.0
      %v716 = vmax.f32 %v633, 0.0
      %v717 = vmax.f32 %v636, 0.0
      %v718 = vmax.f32 %v641, 0.0
      %v719 = vmax.f32 %v644, 0.0
      %v720 = vmax.f32 %v649, 0.0
      %v721 = vmax.f32 %v652, 0.0
      %v722 = vmax.f32 %v657, 0.0
      %v723 = vmax.f32 %v660, 0.0
      %v724 = vmax.f32 %v665, 0.0
      %v725 = vmax.f32 %v668, 0.0
      %v726 = vmax.f32 %v673, 0.0
      %v727 = vpack.c.bf16 %v679, %v678
      %v728 = vpack.c.bf16 %v681, %v680
      %v729 = vpack.c.bf16 %v683, %v682
      %v730 = vpack.c.bf16 %v685, %v684
      %v731 = vpack.c.bf16 %v687, %v686
      %v732 = vpack.c.bf16 %v689, %v688
      %v733 = vpack.c.bf16 %v691, %v690
      %v734 = vpack.c.bf16 %v693, %v692
      %v735 = vpack.c.bf16 %v695, %v694
      %v736 = vpack.c.bf16 %v697, %v696
      %v737 = vpack.c.bf16 %v699, %v698
      %v738 = vpack.c.bf16 %v701, %v700
      %v739 = vpack.c.bf16 %v703, %v702
      %v740 = vpack.c.bf16 %v705, %v704
      %v741 = vpack.c.bf16 %v707, %v706
      %v742 = vpack.c.bf16 %v709, %v708
      %v743 = vpack.c.bf16 %v711, %v710
      %v744 = vpack.c.bf16 %v713, %v712
      %v745 = vpack.c.bf16 %v715, %v714
      %v746 = vpack.c.bf16 %v717, %v716
      %v747 = vpack.c.bf16 %v719, %v718
      %v748 = vpack.c.bf16 %v721, %v720
      %v749 = vpack.c.bf16 %v723, %v722
      %v750 = vpack.c.bf16 %v725, %v724
      %v751 = vpack.c.bf16 %v726, %v726
      %v777 = vunpack.c.l.b16 %v727
      %v778 = vunpack.c.h.b16 %v727
      %v779 = vunpack.c.l.b16 %v728
      %v780 = vunpack.c.h.b16 %v728
      %v781 = vunpack.c.l.b16 %v729
      %v782 = vunpack.c.h.b16 %v729
      %v783 = vunpack.c.l.b16 %v730
      %v784 = vunpack.c.h.b16 %v730
      %v785 = vunpack.c.l.b16 %v731
      %v786 = vunpack.c.h.b16 %v731
      %v787 = vunpack.c.l.b16 %v732
      %v788 = vunpack.c.h.b16 %v732
      %v789 = vunpack.c.l.b16 %v733
      %v790 = vunpack.c.h.b16 %v733
      %v791 = vunpack.c.l.b16 %v734
      %v792 = vunpack.c.h.b16 %v734
      %v793 = vunpack.c.l.b16 %v735
      %v794 = vunpack.c.h.b16 %v735
      %v795 = vunpack.c.l.b16 %v736
      %v796 = vunpack.c.h.b16 %v736
      %v797 = vunpack.c.l.b16 %v737
      %v798 = vunpack.c.h.b16 %v737
      %v799 = vunpack.c.l.b16 %v738
      %v800 = vunpack.c.h.b16 %v738
      %v801 = vunpack.c.l.b16 %v739
      %v802 = vunpack.c.h.b16 %v739
      %v803 = vunpack.c.l.b16 %v740
      %v804 = vunpack.c.h.b16 %v740
      %v805 = vunpack.c.l.b16 %v741
      %v806 = vunpack.c.h.b16 %v741
      %v807 = vunpack.c.l.b16 %v742
      %v808 = vunpack.c.h.b16 %v742
      %v809 = vunpack.c.l.b16 %v743
      %v810 = vunpack.c.h.b16 %v743
      %v811 = vunpack.c.l.b16 %v744
      %v812 = vunpack.c.h.b16 %v744
      %v813 = vunpack.c.l.b16 %v745
      %v814 = vunpack.c.h.b16 %v745
      %v815 = vunpack.c.l.b16 %v746
      %v816 = vunpack.c.h.b16 %v746
      %v817 = vunpack.c.l.b16 %v747
      %v818 = vunpack.c.h.b16 %v747
      %v819 = vunpack.c.l.b16 %v748
      %v820 = vunpack.c.h.b16 %v748
      %v821 = vunpack.c.l.b16 %v749
      %v822 = vunpack.c.h.b16 %v749
      %v823 = vunpack.c.l.b16 %v750
      %v824 = vunpack.c.h.b16 %v750
      %v825 = vunpack.c.l.b16 %v751
      %v826 = vpack.c.b16 %v777, %v777
      %v827 = vpack.c.b16 %v778, %v778
      %v828 = vpack.c.b16 %v779, %v779
      %v829 = vpack.c.b16 %v780, %v780
      %v830 = vpack.c.b16 %v781, %v781
      %v831 = vpack.c.b16 %v782, %v782
      %v832 = vpack.c.b16 %v783, %v783
      %v833 = vpack.c.b16 %v784, %v784
      %v834 = vpack.c.b16 %v785, %v785
      %v835 = vpack.c.b16 %v786, %v786
      %v836 = vpack.c.b16 %v787, %v787
      %v837 = vpack.c.b16 %v788, %v788
      %v838 = vpack.c.b16 %v789, %v789
      %v839 = vpack.c.b16 %v790, %v790
      %v840 = vpack.c.b16 %v791, %v791
      %v841 = vpack.c.b16 %v792, %v792
      %v842 = vpack.c.b16 %v793, %v793
      %v843 = vpack.c.b16 %v794, %v794
      %v844 = vpack.c.b16 %v795, %v795
      %v845 = vpack.c.b16 %v796, %v796
      %v846 = vpack.c.b16 %v797, %v797
      %v847 = vpack.c.b16 %v798, %v798
      %v848 = vpack.c.b16 %v799, %v799
      %v849 = vpack.c.b16 %v800, %v800
      %v850 = vpack.c.b16 %v801, %v801
      %v851 = vpack.c.b16 %v802, %v802
      %v852 = vpack.c.b16 %v803, %v803
      %v853 = vpack.c.b16 %v804, %v804
      %v854 = vpack.c.b16 %v805, %v805
      %v855 = vpack.c.b16 %v806, %v806
      %v856 = vpack.c.b16 %v807, %v807
      %v857 = vpack.c.b16 %v808, %v808
      %v858 = vpack.c.b16 %v809, %v809
      %v859 = vpack.c.b16 %v810, %v810
      %v860 = vpack.c.b16 %v811, %v811
      %v861 = vpack.c.b16 %v812, %v812
      %v862 = vpack.c.b16 %v813, %v813
      %v863 = vpack.c.b16 %v814, %v814
      %v864 = vpack.c.b16 %v815, %v815
      %v865 = vpack.c.b16 %v816, %v816
      %v866 = vpack.c.b16 %v817, %v817
      %v867 = vpack.c.b16 %v818, %v818
      %v868 = vpack.c.b16 %v819, %v819
      %v869 = vpack.c.b16 %v820, %v820
      %v870 = vpack.c.b16 %v821, %v821
      %v871 = vpack.c.b16 %v822, %v822
      %v872 = vpack.c.b16 %v823, %v823
      %v873 = vpack.c.b16 %v824, %v824
      %v874 = vpack.c.b16 %v825, %v825
      %924 = vst [vmem:[%s182] sm:$0xf] %v826
      %925 = vst [vmem:[%s182 + $0x4] sm:$0xf] %v827
      %926 = vst [vmem:[%s182 + $0x8] sm:$0xf] %v828
      %927 = vst [vmem:[%s182 + $0xc] sm:$0xf] %v829
      %928 = vst [vmem:[%s182 + $0x10] sm:$0xf] %v830
      %929 = vst [vmem:[%s182 + $0x14] sm:$0xf] %v831
      %930 = vst [vmem:[%s182 + $0x18] sm:$0xf] %v832
      %931 = vst [vmem:[%s182 + $0x1c] sm:$0xf] %v833
      %932 = vst [vmem:[%s182 + $0x20] sm:$0xf] %v834
      %933 = vst [vmem:[%s182 + $0x24] sm:$0xf] %v835
      %934 = vst [vmem:[%s182 + $0x28] sm:$0xf] %v836
      %935 = vst [vmem:[%s182 + $0x2c] sm:$0xf] %v837
      %936 = vst [vmem:[%s182 + $0x30] sm:$0xf] %v838
      %937 = vst [vmem:[%s182 + $0x34] sm:$0xf] %v839
      %938 = vst [vmem:[%s182 + $0x38] sm:$0xf] %v840
      %939 = vst [vmem:[%s182 + $0x3c] sm:$0xf] %v841
      %940 = vst [vmem:[%s182 + $0x40] sm:$0xf] %v842
      %941 = vst [vmem:[%s182 + $0x44] sm:$0xf] %v843
      %942 = vst [vmem:[%s182 + $0x48] sm:$0xf] %v844
      %943 = vst [vmem:[%s182 + $0x4c] sm:$0xf] %v845
      %944 = vst [vmem:[%s182 + $0x50] sm:$0xf] %v846
      %945 = vst [vmem:[%s182 + $0x54] sm:$0xf] %v847
      %946 = vst [vmem:[%s182 + $0x58] sm:$0xf] %v848
      %947 = vst [vmem:[%s182 + $0x5c] sm:$0xf] %v849
      %948 = vst [vmem:[%s182 + $0x60] sm:$0xf] %v850
      %949 = vst [vmem:[%s182 + $0x64] sm:$0xf] %v851
      %950 = vst [vmem:[%s182 + $0x68] sm:$0xf] %v852
      %951 = vst [vmem:[%s182 + $0x6c] sm:$0xf] %v853
      %952 = vst [vmem:[%s182 + $0x70] sm:$0xf] %v854
      %953 = vst [vmem:[%s182 + $0x74] sm:$0xf] %v855
      %954 = vst [vmem:[%s182 + $0x78] sm:$0xf] %v856
      %955 = vst [vmem:[%s182 + $0x7c] sm:$0xf] %v857
      %956 = vst [vmem:[%s182 + $0x80] sm:$0xf] %v858
      %957 = vst [vmem:[%s182 + $0x84] sm:$0xf] %v859
      %958 = vst [vmem:[%s182 + $0x88] sm:$0xf] %v860
      %959 = vst [vmem:[%s182 + $0x8c] sm:$0xf] %v861
      %960 = vst [vmem:[%s182 + $0x90] sm:$0xf] %v862
      %961 = vst [vmem:[%s182 + $0x94] sm:$0xf] %v863
      %962 = vst [vmem:[%s182 + $0x98] sm:$0xf] %v864
      %963 = vst [vmem:[%s182 + $0x9c] sm:$0xf] %v865
      %964 = vst [vmem:[%s182 + $0xa0] sm:$0xf] %v866
      %965 = vst [vmem:[%s182 + $0xa4] sm:$0xf] %v867
      %966 = vst [vmem:[%s182 + $0xa8] sm:$0xf] %v868
      %967 = vst [vmem:[%s182 + $0xac] sm:$0xf] %v869
      %968 = vst [vmem:[%s182 + $0xb0] sm:$0xf] %v870
      %969 = vst [vmem:[%s182 + $0xb4] sm:$0xf] %v871
      %970 = vst [vmem:[%s182 + $0xb8] sm:$0xf] %v872
      %971 = vst [vmem:[%s182 + $0xbc] sm:$0xf] %v873
      %972 = vst [vmem:[%s182 + $0xc0] sm:$0xf] %v874
      %s973 = smul.u32 49, %s17
      %p974 = scmp.lt.s32.totalorder %s973, 195
      %s975 = scalar_select %p974, %s973, 195
      %p976 = scmp.lt.s32.totalorder %s18, 0
      %s977 = scalar_select %p976, %s18, 0
      %s978 = sadd.s32 %s977, %s975
      %s979 = smul.addr %s978, 4
      %s980 = scalar_lea.vmem %s2, %s979
      // Predicated region
      $region29: #{gabor_cnn7_forward.8} parent=27 // pred_check
        %p981 = pneg %p97
      $region30: #{gabor_cnn7_forward.8} parent=27 // pred_check_branch
        %983 = sbr.rel (%p981) target = $region32
      $region31: #{gabor_cnn7_forward.8} parent=27 // pred_region
        %s984 = smul.u32 49, %s17
      $region32: #{gabor_cnn7_forward.8} parent=27 // pred_fallthru
        _
    $region28: #{gabor_cnn7_forward.8} parent=5 // pred_fallthru
      _
    %p985 = scmp.le.s32.totalorder 2, %s8
    // Predicated region
    $region33: #{gabor_cnn7_forward.8} parent=5 // pred_check
      %p986 = pneg %p985
    $region34: #{gabor_cnn7_forward.8} parent=5 // pred_check_branch
      %988 = sbr.rel (%p986) target = $region36
    $region35: #{gabor_cnn7_forward.8} parent=5 // pred_region
      %s989 = ssub.s32 %s8, 2
      // Predicated region
      $region37: #{gabor_cnn7_forward.8} parent=35 // pred_check
        %p990 = pneg %p103
      $region38: #{gabor_cnn7_forward.8} parent=35 // pred_check_branch
        %992 = sbr.rel (%p990) target = $region40
      $region39: #{gabor_cnn7_forward.8} parent=35 // pred_region
        %s993 = smul.u32 49, %s19
        %p994 = scmp.lt.s32.totalorder %s993, 195
        %s995 = scalar_select %p994, %s993, 195
        %p996 = scmp.lt.s32.totalorder %s20, 0
        %s997 = scalar_select %p996, %s20, 0
        %s998 = sadd.s32 %s997, %s995
        %s999 = smul.addr %s998, 4
        %s1000 = scalar_lea.vmem %s2, %s999
      $region40: #{gabor_cnn7_forward.8} parent=35 // pred_fallthru
        _
    $region36: #{gabor_cnn7_forward.8} parent=5 // pred_fallthru
      _
  $region6: #{gabor_cnn7_forward.8} parent=0 // loop_footer
    %s12 = sadd.s32 1, %s8
  $region7: #{gabor_cnn7_forward.8} parent=0 // loop_footer_branch
    %7 = sbr.rel target = $region3
  $region8: #{gabor_cnn7_forward.8} parent=0 // loop_exit
    _

// kernel: gabor_cnn7_forward.9
$region0: #{gabor_cnn7_forward.9}
  #allocation0 [shape = 'u32[]', space=smem, size = 0x4, offset = 0x4, fixed_abs, tag = 'smem constant byte address 0x4 - core index']
  #allocation1 [shape = 'u32[144,128]{1,0:T(1,128)}', space=vmem, size = 0x12000, scoped, tag = 'internal scratch']
  %s0 = inlined_call_operand.vmem [shape: bf16[1568,1024], index: 0, kind: input, shape index: {}]
  %s1 = inlined_call_operand.vmem [shape: bf16[1024,128], index: 1, kind: input, shape index: {}]
  %s2 = inlined_call_operand.vmem [shape: bf16[1568,128], index: 2, kind: output, shape index: {}]
  %s3 = sld [smem:[#allocation0]]
  $region41: #{gabor_cnn7_forward.9} parent=0
    _
  %s5 = ssub.s32 1, %s3
  %s6 = scalar_select 0, %s5, %s3
  loop: start=0, step=1, limit=6
  $region2: #{gabor_cnn7_forward.9} parent=0 // loop_pre_header
    _
  $region3: #{gabor_cnn7_forward.9} parent=0 // loop_header
    %s8 = sphi 0, %s12
    %p9 = scmp.ge.s32.totalorder %s8, 6
    %s15 = sphi 0, %s27
    %s16 = sphi 0, %s23
    %s17 = sphi 0, %s15
    %s18 = sphi 0, %s16
    %s19 = sphi 0, %s17
    %s20 = sphi 0, %s18
    %s30 = sphi 0, %s32
    %s33 = sphi 0, %s30
    %s34 = sphi 0, %s33
    %s50 = sphi 0, %s34
    %s56 = sphi 0, %s58
    %s59 = sphi 0, %s56
    %s60 = sphi 0, %s59
    %s76 = sphi 0, %s60
    %s84 = sphi 0, %s86
    %s87 = sphi 0, %s84
    %s88 = sphi 0, %s87
    %s104 = sphi 0, %s88
  $region4: #{gabor_cnn7_forward.9} parent=0 // loop_header_branch
    %11 = sbr.rel (%p9) target = $region8
  $region5: #{gabor_cnn7_forward.9} parent=0 // loop_body
    %s13 = ssub.s32 %s8, 1
    %s14 = ssub.s32 %s8, 2
    %s21 = sadd.s32 1, %s16
    %p22 = scmp.ge.s32.totalorder %s21, 1
    %s23 = scalar_select %p22, 0, %s21
    %s24 = sadd.s32 1, %s15
    %s25 = scalar_select %p22, %s24, %s15
    %p26 = scmp.ge.s32.totalorder %s25, 4
    %s27 = scalar_select %p26, 0, %s25
    %s28 = ssub.s32 %s15, %s27
    %p29 = scmp.eq.s32.totalorder %s28, 0
    %s31 = sadd.s32 %s30, 1
    %s32 = scalar_select %p29, %s30, %s31
    %p35 = pneg %p29
    %p36 = scmp.eq.s32.totalorder %s8, 3
    %p37 = por %p35, %p36
    %p38 = scmp.ne.s32.totalorder %s30, %s33
    %p39 = scmp.eq.s32.totalorder %s8, 0
    %p40 = por %p38, %p39
    %p41 = scmp.ne.s32.totalorder %s30, %s33
    %p42 = scmp.eq.s32.totalorder %s13, 3
    %p43 = por %p41, %p42
    %p44 = scmp.ne.s32.totalorder %s33, %s34
    %p45 = scmp.eq.s32.totalorder %s13, 0
    %p46 = por %p44, %p45
    %p47 = scmp.ne.s32.totalorder %s33, %s34
    %p48 = scmp.eq.s32.totalorder %s14, 3
    %p49 = por %p47, %p48
    %p51 = scmp.ne.s32.totalorder %s34, %s50
    %p52 = scmp.eq.s32.totalorder %s14, 0
    %p53 = por %p51, %p52
    %s54 = ssub.s32 %s16, %s23
    %p55 = scmp.eq.s32.totalorder %s54, 0
    %s57 = sadd.s32 %s56, 1
    %s58 = scalar_select %p55, %s56, %s57
    %p61 = pneg %p55
    %p62 = scmp.eq.s32.totalorder %s8, 3
    %p63 = por %p61, %p62
    %p64 = scmp.ne.s32.totalorder %s56, %s59
    %p65 = scmp.eq.s32.totalorder %s8, 0
    %p66 = por %p64, %p65
    %p67 = scmp.ne.s32.totalorder %s56, %s59
    %p68 = scmp.eq.s32.totalorder %s13, 3
    %p69 = por %p67, %p68
    %p70 = scmp.ne.s32.totalorder %s59, %s60
    %p71 = scmp.eq.s32.totalorder %s13, 0
    %p72 = por %p70, %p71
    %p73 = scmp.ne.s32.totalorder %s59, %s60
    %p74 = scmp.eq.s32.totalorder %s14, 3
    %p75 = por %p73, %p74
    %p77 = scmp.ne.s32.totalorder %s60, %s76
    %p78 = scmp.eq.s32.totalorder %s14, 0
    %p79 = por %p77, %p78
    %s80 = ssub.s32 %s15, %s27
    %s81 = ssub.s32 %s16, %s23
    %s82 = sor.u32 %s80, %s81
    %p83 = scmp.eq.s32.totalorder %s82, 0
    %s85 = sadd.s32 %s84, 1
    %s86 = scalar_select %p83, %s84, %s85
    %p89 = pneg %p83
    %p90 = scmp.eq.s32.totalorder %s8, 3
    %p91 = por %p89, %p90
    %p92 = scmp.ne.s32.totalorder %s84, %s87
    %p93 = scmp.eq.s32.totalorder %s8, 0
    %p94 = por %p92, %p93
    %p95 = scmp.ne.s32.totalorder %s84, %s87
    %p96 = scmp.eq.s32.totalorder %s13, 3
    %p97 = por %p95, %p96
    %p98 = scmp.ne.s32.totalorder %s87, %s88
    %p99 = scmp.eq.s32.totalorder %s13, 0
    %p100 = por %p98, %p99
    %p101 = scmp.ne.s32.totalorder %s87, %s88
    %p102 = scmp.eq.s32.totalorder %s14, 3
    %p103 = por %p101, %p102
    %p105 = scmp.ne.s32.totalorder %s88, %s104
    %p106 = scmp.eq.s32.totalorder %s14, 0
    %p107 = por %p105, %p106
    %p108 = scmp.le.s32.totalorder 1, %s8
    %p109 = scmp.lt.s32.totalorder %s8, 5
    %p110 = pnand %p108, %p109
    %p111 = pneg %p110
    // Predicated region
    $region9: #{gabor_cnn7_forward.9} parent=5 // pred_check
      _
    $region10: #{gabor_cnn7_forward.9} parent=5 // pred_check_branch
      %113 = sbr.rel (%p110) target = $region12
    $region11: #{gabor_cnn7_forward.9} parent=5 // pred_region
      %s114 = ssub.s32 %s8, 1
      // Predicated region
      $region13: #{gabor_cnn7_forward.9} parent=11 // pred_check
        %p115 = pneg %p72
      $region14: #{gabor_cnn7_forward.9} parent=11 // pred_check_branch
        %117 = sbr.rel (%p115) target = $region16
      $region15: #{gabor_cnn7_forward.9} parent=11 // pred_region
        %p118 = scmp.lt.s32.totalorder %s18, 0
        %s119 = scalar_select %p118, %s18, 0
        %s120 = smul.addr %s119, 4
        %s121 = scalar_lea.vmem %s1, %s120
      $region16: #{gabor_cnn7_forward.9} parent=11 // pred_fallthru
        _
    $region12: #{gabor_cnn7_forward.9} parent=5 // pred_fallthru
      _
    %p122 = scmp.lt.s32.totalorder %s8, 4
    // Predicated region
    $region17: #{gabor_cnn7_forward.9} parent=5 // pred_check
      %p123 = pneg %p122
    $region18: #{gabor_cnn7_forward.9} parent=5 // pred_check_branch
      %125 = sbr.rel (%p123) target = $region20
    $region19: #{gabor_cnn7_forward.9} parent=5 // pred_region
      // Predicated region
      $region21: #{gabor_cnn7_forward.9} parent=19 // pred_check
        %p126 = pneg %p40
      $region22: #{gabor_cnn7_forward.9} parent=19 // pred_check_branch
        %128 = sbr.rel (%p126) target = $region24
      $region23: #{gabor_cnn7_forward.9} parent=19 // pred_region
        %s129 = smul.u32 49, %s15
        %p130 = scmp.lt.s32.totalorder %s129, 195
        %s131 = scalar_select %p130, %s129, 195
        %s132 = smul.addr %s131, 8
        %s133 = smul.addr %s132, 4
        %s134 = scalar_lea.vmem %s0, %s133
        %s135 = smul.u32 49, %s15
      $region24: #{gabor_cnn7_forward.9} parent=19 // pred_fallthru
        _
    $region20: #{gabor_cnn7_forward.9} parent=5 // pred_fallthru
      _
    %p136 = scmp.le.s32.totalorder 1, %s8
    %p137 = scmp.lt.s32.totalorder %s8, 5
    %p138 = pnand %p136, %p137
    %p139 = pneg %p138
    // Predicated region
    $region25: #{gabor_cnn7_forward.9} parent=5 // pred_check
      _
    $region26: #{gabor_cnn7_forward.9} parent=5 // pred_check_branch
      %141 = sbr.rel (%p138) target = $region28
    $region27: #{gabor_cnn7_forward.9} parent=5 // pred_region
      %s142 = ssub.s32 %s8, 1
      %s143 = smul.u32 49, %s17
      %p144 = scmp.lt.s32.totalorder %s143, 195
      %s145 = scalar_select %p144, %s143, 195
      %s146 = smul.addr %s145, 8
      %s147 = smul.addr %s146, 4
      %s148 = scalar_lea.vmem %s0, %s147
      %p149 = pneg %p46
      %p150 = pneg %p43
      %p151 = scmp.lt.s32.totalorder %s18, 0
      %s152 = scalar_select %p151, %s18, 0
      %s153 = smul.addr %s152, 4
      %s154 = scalar_lea.vmem %s1, %s153
      %p155 = pneg %p72
      %p156 = pneg %p69
      %p157 = pneg %p100
      %p158 = pneg %p97
      %s159 = smul.u32 49, %s17
      %p160 = scmp.lt.s32.totalorder %s159, 195
      %s161 = scalar_select %p160, %s159, 195
      %p162 = scmp.lt.s32.totalorder %s18, 0
      %s163 = scalar_select %p162, %s18, 0
      %s164 = sadd.s32 %s163, %s161
      %s165 = smul.addr %s164, 4
      %s166 = scalar_lea.vmem %s2, %s165
      %s167 = smul.u32 49, %s17
      %p168 = scmp.lt.s32.totalorder %s167, 195
      %s169 = scalar_select %p168, %s167, 195
      %s170 = smul.addr %s169, 8
      %s171 = smul.addr %s170, 4
      %s172 = scalar_lea.vmem %s0, %s171
      %s173 = smul.u32 49, %s17
      %p174 = scmp.lt.s32.totalorder %s18, 0
      %s175 = scalar_select %p174, %s18, 0
      %s176 = smul.addr %s175, 4
      %s177 = scalar_lea.vmem %s1, %s176
      %s178 = smul.u32 49, %s17
      %p179 = scmp.lt.s32.totalorder %s178, 195
      %s180 = scalar_select %p179, %s178, 195
      %p181 = scmp.lt.s32.totalorder %s18, 0
      %s182 = scalar_select %p181, %s18, 0
      %s183 = sadd.s32 %s182, %s180
      %s184 = smul.addr %s183, 4
      %s185 = scalar_lea.vmem %s2, %s184
      %s186 = smul.u32 49, %s17
      %v188 = vld [vmem:[%s172] sm:$0xff]
      %v189 = vld [vmem:[%s172 + $0x8] sm:$0xff]
      %v190 = vld [vmem:[%s172 + $0x10] sm:$0xff]
      %v191 = vld [vmem:[%s172 + $0x18] sm:$0xff]
      %v192 = vld [vmem:[%s172 + $0x20] sm:$0xff]
      %v193 = vld [vmem:[%s172 + $0x28] sm:$0xff]
      %v194 = vld [vmem:[%s172 + $0x30] sm:$0xff]
      %v195 = vld [vmem:[%s172 + $0x38] sm:$0xff]
      %v196 = vld [vmem:[%s172 + $0x40] sm:$0xff]
      %v197 = vld [vmem:[%s172 + $0x48] sm:$0xff]
      %v198 = vld [vmem:[%s172 + $0x50] sm:$0xff]
      %v199 = vld [vmem:[%s172 + $0x58] sm:$0xff]
      %v200 = vld [vmem:[%s172 + $0x60] sm:$0xff]
      %v201 = vld [vmem:[%s172 + $0x68] sm:$0xff]
      %v202 = vld [vmem:[%s172 + $0x70] sm:$0xff]
      %v203 = vld [vmem:[%s172 + $0x78] sm:$0xff]
      %v204 = vld [vmem:[%s172 + $0x80] sm:$0xff]
      %v205 = vld [vmem:[%s172 + $0x88] sm:$0xff]
      %v206 = vld [vmem:[%s172 + $0x90] sm:$0xff]
      %v207 = vld [vmem:[%s172 + $0x98] sm:$0xff]
      %v208 = vld [vmem:[%s172 + $0xa0] sm:$0xff]
      %v209 = vld [vmem:[%s172 + $0xa8] sm:$0xff]
      %v210 = vld [vmem:[%s172 + $0xb0] sm:$0xff]
      %v211 = vld [vmem:[%s172 + $0xb8] sm:$0xff]
      %v212 = vld [vmem:[%s172 + $0xc0] sm:$0xff]
      %v213 = vld [vmem:[%s172 + $0xc8] sm:$0xff]
      %v214 = vld [vmem:[%s172 + $0xd0] sm:$0xff]
      %v215 = vld [vmem:[%s172 + $0xd8] sm:$0xff]
      %v216 = vld [vmem:[%s172 + $0xe0] sm:$0xff]
      %v217 = vld [vmem:[%s172 + $0xe8] sm:$0xff]
      %v218 = vld [vmem:[%s172 + $0xf0] sm:$0xff]
      %v219 = vld [vmem:[%s172 + $0xf8] sm:$0xff]
      %v220 = vld [vmem:[%s172 + $0x100] sm:$0xff]
      %v221 = vld [vmem:[%s172 + $0x108] sm:$0xff]
      %v222 = vld [vmem:[%s172 + $0x110] sm:$0xff]
      %v223 = vld [vmem:[%s172 + $0x118] sm:$0xff]
      %v224 = vld [vmem:[%s172 + $0x120] sm:$0xff]
      %v225 = vld [vmem:[%s172 + $0x128] sm:$0xff]
      %v226 = vld [vmem:[%s172 + $0x130] sm:$0xff]
      %v227 = vld [vmem:[%s172 + $0x138] sm:$0xff]
      %v228 = vld [vmem:[%s172 + $0x140] sm:$0xff]
      %v229 = vld [vmem:[%s172 + $0x148] sm:$0xff]
      %v230 = vld [vmem:[%s172 + $0x150] sm:$0xff]
      %v231 = vld [vmem:[%s172 + $0x158] sm:$0xff]
      %v232 = vld [vmem:[%s172 + $0x160] sm:$0xff]
      %v233 = vld [vmem:[%s172 + $0x168] sm:$0xff]
      %v234 = vld [vmem:[%s172 + $0x170] sm:$0xff]
      %v235 = vld [vmem:[%s172 + $0x178] sm:$0xff]
      %v236 = vld [vmem:[%s172 + $0x180] sm:$0xff]
      %v237 = vld [vmem:[%s172 + $0x188] sm:$0xff]
      %v238 = vld [vmem:[%s172 + $0x190] sm:$0xff]
      %v239 = vld [vmem:[%s172 + $0x198] sm:$0xff]
      %v240 = vld [vmem:[%s172 + $0x1a0] sm:$0xff]
      %v241 = vld [vmem:[%s172 + $0x1a8] sm:$0xff]
      %v242 = vld [vmem:[%s172 + $0x1b0] sm:$0xff]
      %v243 = vld [vmem:[%s172 + $0x1b8] sm:$0xff]
      %v244 = vld [vmem:[%s172 + $0x1c0] sm:$0xff]
      %v245 = vld [vmem:[%s172 + $0x1c8] sm:$0xff]
      %v246 = vld [vmem:[%s172 + $0x1d0] sm:$0xff]
      %v247 = vld [vmem:[%s172 + $0x1d8] sm:$0xff]
      %v248 = vld [vmem:[%s172 + $0x1e0] sm:$0xff]
      %v249 = vld [vmem:[%s172 + $0x1e8] sm:$0xff]
      %v250 = vld [vmem:[%s172 + $0x1f0] sm:$0xff]
      %v251 = vld [vmem:[%s172 + $0x1f8] sm:$0xff]
      %v252 = vld [vmem:[%s172 + $0x200] sm:$0xff]
      %v253 = vld [vmem:[%s172 + $0x208] sm:$0xff]
      %v254 = vld [vmem:[%s172 + $0x210] sm:$0xff]
      %v255 = vld [vmem:[%s172 + $0x218] sm:$0xff]
      %v256 = vld [vmem:[%s172 + $0x220] sm:$0xff]
      %v257 = vld [vmem:[%s172 + $0x228] sm:$0xff]
      %v258 = vld [vmem:[%s172 + $0x230] sm:$0xff]
      %v259 = vld [vmem:[%s172 + $0x238] sm:$0xff]
      %v260 = vld [vmem:[%s172 + $0x240] sm:$0xff]
      %v261 = vld [vmem:[%s172 + $0x248] sm:$0xff]
      %v262 = vld [vmem:[%s172 + $0x250] sm:$0xff]
      %v263 = vld [vmem:[%s172 + $0x258] sm:$0xff]
      %v264 = vld [vmem:[%s172 + $0x260] sm:$0xff]
      %v265 = vld [vmem:[%s172 + $0x268] sm:$0xff]
      %v266 = vld [vmem:[%s172 + $0x270] sm:$0xff]
      %v267 = vld [vmem:[%s172 + $0x278] sm:$0xff]
      %v268 = vld [vmem:[%s172 + $0x280] sm:$0xff]
      %v269 = vld [vmem:[%s172 + $0x288] sm:$0xff]
      %v270 = vld [vmem:[%s172 + $0x290] sm:$0xff]
      %v271 = vld [vmem:[%s172 + $0x298] sm:$0xff]
      %v272 = vld [vmem:[%s172 + $0x2a0] sm:$0xff]
      %v273 = vld [vmem:[%s172 + $0x2a8] sm:$0xff]
      %v274 = vld [vmem:[%s172 + $0x2b0] sm:$0xff]
      %v275 = vld [vmem:[%s172 + $0x2b8] sm:$0xff]
      %v276 = vld [vmem:[%s172 + $0x2c0] sm:$0xff]
      %v277 = vld [vmem:[%s172 + $0x2c8] sm:$0xff]
      %v278 = vld [vmem:[%s172 + $0x2d0] sm:$0xff]
      %v279 = vld [vmem:[%s172 + $0x2d8] sm:$0xff]
      %v280 = vld [vmem:[%s172 + $0x2e0] sm:$0xff]
      %v281 = vld [vmem:[%s172 + $0x2e8] sm:$0xff]
      %v282 = vld [vmem:[%s172 + $0x2f0] sm:$0xff]
      %v283 = vld [vmem:[%s172 + $0x2f8] sm:$0xff]
      %v284 = vld [vmem:[%s172 + $0x300] sm:$0xff]
      %v285 = vld [vmem:[%s172 + $0x308] sm:$0xff]
      %v286 = vld [vmem:[%s172 + $0x310] sm:$0xff]
      %v287 = vld [vmem:[%s172 + $0x318] sm:$0xff]
      %v288 = vld [vmem:[%s172 + $0x320] sm:$0xff]
      %v289 = vld [vmem:[%s172 + $0x328] sm:$0xff]
      %v290 = vld [vmem:[%s172 + $0x330] sm:$0xff]
      %v291 = vld [vmem:[%s172 + $0x338] sm:$0xff]
      %v292 = vld [vmem:[%s172 + $0x340] sm:$0xff]
      %v293 = vld [vmem:[%s172 + $0x348] sm:$0xff]
      %v294 = vld [vmem:[%s172 + $0x350] sm:$0xff]
      %v295 = vld [vmem:[%s172 + $0x358] sm:$0xff]
      %v296 = vld [vmem:[%s172 + $0x360] sm:$0xff]
      %v297 = vld [vmem:[%s172 + $0x368] sm:$0xff]
      %v298 = vld [vmem:[%s172 + $0x370] sm:$0xff]
      %v299 = vld [vmem:[%s172 + $0x378] sm:$0xff]
      %v300 = vld [vmem:[%s172 + $0x380] sm:$0xff]
      %v301 = vld [vmem:[%s172 + $0x388] sm:$0xff]
      %v302 = vld [vmem:[%s172 + $0x390] sm:$0xff]
      %v303 = vld [vmem:[%s172 + $0x398] sm:$0xff]
      %v304 = vld [vmem:[%s172 + $0x3a0] sm:$0xff]
      %v305 = vld [vmem:[%s172 + $0x3a8] sm:$0xff]
      %v306 = vld [vmem:[%s172 + $0x3b0] sm:$0xff]
      %v307 = vld [vmem:[%s172 + $0x3b8] sm:$0xff]
      %v308 = vld [vmem:[%s172 + $0x3c0] sm:$0xff]
      %v309 = vld [vmem:[%s172 + $0x3c8] sm:$0xff]
      %v310 = vld [vmem:[%s172 + $0x3d0] sm:$0xff]
      %v311 = vld [vmem:[%s172 + $0x3d8] sm:$0xff]
      %v312 = vld [vmem:[%s172 + $0x3e0] sm:$0xff]
      %v313 = vld [vmem:[%s172 + $0x3e8] sm:$0xff]
      %v314 = vld [vmem:[%s172 + $0x3f0] sm:$0xff]
      %v315 = vld [vmem:[%s172 + $0x3f8] sm:$0xff]
      %v316 = vld [vmem:[%s172 + $0x400] sm:$0xff]
      %v317 = vld [vmem:[%s172 + $0x408] sm:$0xff]
      %v318 = vld [vmem:[%s172 + $0x410] sm:$0xff]
      %v319 = vld [vmem:[%s172 + $0x418] sm:$0xff]
      %v320 = vld [vmem:[%s172 + $0x420] sm:$0xff]
      %v321 = vld [vmem:[%s172 + $0x428] sm:$0xff]
      %v322 = vld [vmem:[%s172 + $0x430] sm:$0xff]
      %v323 = vld [vmem:[%s172 + $0x438] sm:$0xff]
      %v324 = vld [vmem:[%s172 + $0x440] sm:$0xff]
      %v325 = vld [vmem:[%s172 + $0x448] sm:$0xff]
      %v326 = vld [vmem:[%s172 + $0x450] sm:$0xff]
      %v327 = vld [vmem:[%s172 + $0x458] sm:$0xff]
      %v328 = vld [vmem:[%s172 + $0x460] sm:$0xff]
      %v329 = vld [vmem:[%s172 + $0x468] sm:$0xff]
      %v330 = vld [vmem:[%s172 + $0x470] sm:$0xff]
      %v331 = vld [vmem:[%s172 + $0x478] sm:$0xff]
      %v332 = vld [vmem:[%s172 + $0x480] sm:$0xff]
      %v333 = vld [vmem:[%s172 + $0x488] sm:$0xff]
      %v334 = vld [vmem:[%s172 + $0x490] sm:$0xff]
      %v335 = vld [vmem:[%s172 + $0x498] sm:$0xff]
      %v336 = vld [vmem:[%s172 + $0x4a0] sm:$0xff]
      %v337 = vld [vmem:[%s172 + $0x4a8] sm:$0xff]
      %v338 = vld [vmem:[%s172 + $0x4b0] sm:$0xff]
      %v339 = vld [vmem:[%s172 + $0x4b8] sm:$0xff]
      %v340 = vld [vmem:[%s172 + $0x4c0] sm:$0xff]
      %v341 = vld [vmem:[%s172 + $0x4c8] sm:$0xff]
      %v342 = vld [vmem:[%s172 + $0x4d0] sm:$0xff]
      %v343 = vld [vmem:[%s172 + $0x4d8] sm:$0xff]
      %v344 = vld [vmem:[%s172 + $0x4e0] sm:$0xff]
      %v345 = vld [vmem:[%s172 + $0x4e8] sm:$0xff]
      %v346 = vld [vmem:[%s172 + $0x4f0] sm:$0xff]
      %v347 = vld [vmem:[%s172 + $0x4f8] sm:$0xff]
      %v348 = vld [vmem:[%s172 + $0x500] sm:$0xff]
      %v349 = vld [vmem:[%s172 + $0x508] sm:$0xff]
      %v350 = vld [vmem:[%s172 + $0x510] sm:$0xff]
      %v351 = vld [vmem:[%s172 + $0x518] sm:$0xff]
      %v352 = vld [vmem:[%s172 + $0x520] sm:$0xff]
      %v353 = vld [vmem:[%s172 + $0x528] sm:$0xff]
      %v354 = vld [vmem:[%s172 + $0x530] sm:$0xff]
      %v355 = vld [vmem:[%s172 + $0x538] sm:$0xff]
      %v356 = vld [vmem:[%s172 + $0x540] sm:$0xff]
      %v357 = vld [vmem:[%s172 + $0x548] sm:$0xff]
      %v358 = vld [vmem:[%s172 + $0x550] sm:$0xff]
      %v359 = vld [vmem:[%s172 + $0x558] sm:$0xff]
      %v360 = vld [vmem:[%s172 + $0x560] sm:$0xff]
      %v361 = vld [vmem:[%s172 + $0x568] sm:$0xff]
      %v362 = vld [vmem:[%s172 + $0x570] sm:$0xff]
      %v363 = vld [vmem:[%s172 + $0x578] sm:$0xff]
      %v364 = vld [vmem:[%s172 + $0x580] sm:$0xff]
      %v365 = vld [vmem:[%s172 + $0x588] sm:$0xff]
      %v366 = vld [vmem:[%s172 + $0x590] sm:$0xff]
      %v367 = vld [vmem:[%s172 + $0x598] sm:$0xff]
      %v368 = vld [vmem:[%s172 + $0x5a0] sm:$0xff]
      %v369 = vld [vmem:[%s172 + $0x5a8] sm:$0xff]
      %v370 = vld [vmem:[%s172 + $0x5b0] sm:$0xff]
      %v371 = vld [vmem:[%s172 + $0x5b8] sm:$0xff]
      %v372 = vld [vmem:[%s172 + $0x5c0] sm:$0xff]
      %v373 = vld [vmem:[%s172 + $0x5c8] sm:$0xff]
      %v374 = vld [vmem:[%s172 + $0x5d0] sm:$0xff]
      %v375 = vld [vmem:[%s172 + $0x5d8] sm:$0xff]
      %v376 = vld [vmem:[%s172 + $0x5e0] sm:$0xff]
      %v377 = vld [vmem:[%s172 + $0x5e8] sm:$0xff]
      %v378 = vld [vmem:[%s172 + $0x5f0] sm:$0xff]
      %v379 = vld [vmem:[%s172 + $0x5f8] sm:$0xff]
      %v380 = vld [vmem:[%s172 + $0x600] sm:$0xff]
      %v381 = vld [vmem:[%s172 + $0x608] sm:$0xff]
      %v382 = vld [vmem:[%s172 + $0x610] sm:$0xff]
      %v383 = vld [vmem:[%s172 + $0x618] sm:$0xff]
      %v384 = vld [vmem:[%s177] sm:$0xf]
      %v385 = vld [vmem:[%s177 + $0x4] sm:$0xf]
      %v386 = vld [vmem:[%s177 + $0x8] sm:$0xf]
      %v387 = vld [vmem:[%s177 + $0xc] sm:$0xf]
      %v388 = vld [vmem:[%s177 + $0x10] sm:$0xf]
      %v389 = vld [vmem:[%s177 + $0x14] sm:$0xf]
      %v390 = vld [vmem:[%s177 + $0x18] sm:$0xf]
      %v391 = vld [vmem:[%s177 + $0x1c] sm:$0xf]
      %v392 = vld [vmem:[%s177 + $0x20] sm:$0xf]
      %v393 = vld [vmem:[%s177 + $0x24] sm:$0xf]
      %v394 = vld [vmem:[%s177 + $0x28] sm:$0xf]
      %v395 = vld [vmem:[%s177 + $0x2c] sm:$0xf]
      %v396 = vld [vmem:[%s177 + $0x30] sm:$0xf]
      %v397 = vld [vmem:[%s177 + $0x34] sm:$0xf]
      %v398 = vld [vmem:[%s177 + $0x38] sm:$0xf]
      %v399 = vld [vmem:[%s177 + $0x3c] sm:$0xf]
      %v400 = vld [vmem:[%s177 + $0x40] sm:$0xf]
      %v401 = vld [vmem:[%s177 + $0x44] sm:$0xf]
      %v402 = vld [vmem:[%s177 + $0x48] sm:$0xf]
      %v403 = vld [vmem:[%s177 + $0x4c] sm:$0xf]
      %v404 = vld [vmem:[%s177 + $0x50] sm:$0xf]
      %v405 = vld [vmem:[%s177 + $0x54] sm:$0xf]
      %v406 = vld [vmem:[%s177 + $0x58] sm:$0xf]
      %v407 = vld [vmem:[%s177 + $0x5c] sm:$0xf]
      %v408 = vld [vmem:[%s177 + $0x60] sm:$0xf]
      %v409 = vld [vmem:[%s177 + $0x64] sm:$0xf]
      %v410 = vld [vmem:[%s177 + $0x68] sm:$0xf]
      %v411 = vld [vmem:[%s177 + $0x6c] sm:$0xf]
      %v412 = vld [vmem:[%s177 + $0x70] sm:$0xf]
      %v413 = vld [vmem:[%s177 + $0x74] sm:$0xf]
      %v414 = vld [vmem:[%s177 + $0x78] sm:$0xf]
      %v415 = vld [vmem:[%s177 + $0x7c] sm:$0xf]
      %v416 = vld [vmem:[%s177 + $0x80] sm:$0xf]
      %v417 = vld [vmem:[%s177 + $0x84] sm:$0xf]
      %v418 = vld [vmem:[%s177 + $0x88] sm:$0xf]
      %v419 = vld [vmem:[%s177 + $0x8c] sm:$0xf]
      %v420 = vld [vmem:[%s177 + $0x90] sm:$0xf]
      %v421 = vld [vmem:[%s177 + $0x94] sm:$0xf]
      %v422 = vld [vmem:[%s177 + $0x98] sm:$0xf]
      %v423 = vld [vmem:[%s177 + $0x9c] sm:$0xf]
      %v424 = vld [vmem:[%s177 + $0xa0] sm:$0xf]
      %v425 = vld [vmem:[%s177 + $0xa4] sm:$0xf]
      %v426 = vld [vmem:[%s177 + $0xa8] sm:$0xf]
      %v427 = vld [vmem:[%s177 + $0xac] sm:$0xf]
      %v428 = vld [vmem:[%s177 + $0xb0] sm:$0xf]
      %v429 = vld [vmem:[%s177 + $0xb4] sm:$0xf]
      %v430 = vld [vmem:[%s177 + $0xb8] sm:$0xf]
      %v431 = vld [vmem:[%s177 + $0xbc] sm:$0xf]
      %v432 = vld [vmem:[%s177 + $0xc0] sm:$0xf]
      %v433 = vld [vmem:[%s177 + $0xc4] sm:$0xf]
      %v434 = vld [vmem:[%s177 + $0xc8] sm:$0xf]
      %v435 = vld [vmem:[%s177 + $0xcc] sm:$0xf]
      %v436 = vld [vmem:[%s177 + $0xd0] sm:$0xf]
      %v437 = vld [vmem:[%s177 + $0xd4] sm:$0xf]
      %v438 = vld [vmem:[%s177 + $0xd8] sm:$0xf]
      %v439 = vld [vmem:[%s177 + $0xdc] sm:$0xf]
      %v440 = vld [vmem:[%s177 + $0xe0] sm:$0xf]
      %v441 = vld [vmem:[%s177 + $0xe4] sm:$0xf]
      %v442 = vld [vmem:[%s177 + $0xe8] sm:$0xf]
      %v443 = vld [vmem:[%s177 + $0xec] sm:$0xf]
      %v444 = vld [vmem:[%s177 + $0xf0] sm:$0xf]
      %v445 = vld [vmem:[%s177 + $0xf4] sm:$0xf]
      %v446 = vld [vmem:[%s177 + $0xf8] sm:$0xf]
      %v447 = vld [vmem:[%s177 + $0xfc] sm:$0xf]
      %v448 = vld [vmem:[%s177 + $0x100] sm:$0xf]
      %v449 = vld [vmem:[%s177 + $0x104] sm:$0xf]
      %v450 = vld [vmem:[%s177 + $0x108] sm:$0xf]
      %v451 = vld [vmem:[%s177 + $0x10c] sm:$0xf]
      %v452 = vld [vmem:[%s177 + $0x110] sm:$0xf]
      %v453 = vld [vmem:[%s177 + $0x114] sm:$0xf]
      %v454 = vld [vmem:[%s177 + $0x118] sm:$0xf]
      %v455 = vld [vmem:[%s177 + $0x11c] sm:$0xf]
      %v456 = vld [vmem:[%s177 + $0x120] sm:$0xf]
      %v457 = vld [vmem:[%s177 + $0x124] sm:$0xf]
      %v458 = vld [vmem:[%s177 + $0x128] sm:$0xf]
      %v459 = vld [vmem:[%s177 + $0x12c] sm:$0xf]
      %v460 = vld [vmem:[%s177 + $0x130] sm:$0xf]
      %v461 = vld [vmem:[%s177 + $0x134] sm:$0xf]
      %v462 = vld [vmem:[%s177 + $0x138] sm:$0xf]
      %v463 = vld [vmem:[%s177 + $0x13c] sm:$0xf]
      %v464 = vld [vmem:[%s177 + $0x140] sm:$0xf]
      %v465 = vld [vmem:[%s177 + $0x144] sm:$0xf]
      %v466 = vld [vmem:[%s177 + $0x148] sm:$0xf]
      %v467 = vld [vmem:[%s177 + $0x14c] sm:$0xf]
      %v468 = vld [vmem:[%s177 + $0x150] sm:$0xf]
      %v469 = vld [vmem:[%s177 + $0x154] sm:$0xf]
      %v470 = vld [vmem:[%s177 + $0x158] sm:$0xf]
      %v471 = vld [vmem:[%s177 + $0x15c] sm:$0xf]
      %v472 = vld [vmem:[%s177 + $0x160] sm:$0xf]
      %v473 = vld [vmem:[%s177 + $0x164] sm:$0xf]
      %v474 = vld [vmem:[%s177 + $0x168] sm:$0xf]
      %v475 = vld [vmem:[%s177 + $0x16c] sm:$0xf]
      %v476 = vld [vmem:[%s177 + $0x170] sm:$0xf]
      %v477 = vld [vmem:[%s177 + $0x174] sm:$0xf]
      %v478 = vld [vmem:[%s177 + $0x178] sm:$0xf]
      %v479 = vld [vmem:[%s177 + $0x17c] sm:$0xf]
      %v480 = vld [vmem:[%s177 + $0x180] sm:$0xf]
      %v481 = vld [vmem:[%s177 + $0x184] sm:$0xf]
      %v482 = vld [vmem:[%s177 + $0x188] sm:$0xf]
      %v483 = vld [vmem:[%s177 + $0x18c] sm:$0xf]
      %v484 = vld [vmem:[%s177 + $0x190] sm:$0xf]
      %v485 = vld [vmem:[%s177 + $0x194] sm:$0xf]
      %v486 = vld [vmem:[%s177 + $0x198] sm:$0xf]
      %v487 = vld [vmem:[%s177 + $0x19c] sm:$0xf]
      %v488 = vld [vmem:[%s177 + $0x1a0] sm:$0xf]
      %v489 = vld [vmem:[%s177 + $0x1a4] sm:$0xf]
      %v490 = vld [vmem:[%s177 + $0x1a8] sm:$0xf]
      %v491 = vld [vmem:[%s177 + $0x1ac] sm:$0xf]
      %v492 = vld [vmem:[%s177 + $0x1b0] sm:$0xf]
      %v493 = vld [vmem:[%s177 + $0x1b4] sm:$0xf]
      %v494 = vld [vmem:[%s177 + $0x1b8] sm:$0xf]
      %v495 = vld [vmem:[%s177 + $0x1bc] sm:$0xf]
      %v496 = vld [vmem:[%s177 + $0x1c0] sm:$0xf]
      %v497 = vld [vmem:[%s177 + $0x1c4] sm:$0xf]
      %v498 = vld [vmem:[%s177 + $0x1c8] sm:$0xf]
      %v499 = vld [vmem:[%s177 + $0x1cc] sm:$0xf]
      %v500 = vld [vmem:[%s177 + $0x1d0] sm:$0xf]
      %v501 = vld [vmem:[%s177 + $0x1d4] sm:$0xf]
      %v502 = vld [vmem:[%s177 + $0x1d8] sm:$0xf]
      %v503 = vld [vmem:[%s177 + $0x1dc] sm:$0xf]
      %v504 = vld [vmem:[%s177 + $0x1e0] sm:$0xf]
      %v505 = vld [vmem:[%s177 + $0x1e4] sm:$0xf]
      %v506 = vld [vmem:[%s177 + $0x1e8] sm:$0xf]
      %v507 = vld [vmem:[%s177 + $0x1ec] sm:$0xf]
      %v508 = vld [vmem:[%s177 + $0x1f0] sm:$0xf]
      %v509 = vld [vmem:[%s177 + $0x1f4] sm:$0xf]
      %v510 = vld [vmem:[%s177 + $0x1f8] sm:$0xf]
      %v511 = vld [vmem:[%s177 + $0x1fc] sm:$0xf]
      %v708 = vunpack.c.l.b16 %v188
      %v709 = vunpack.c.h.b16 %v188
      %v710 = vunpack.c.l.b16 %v189
      %v711 = vunpack.c.h.b16 %v189
      %v712 = vunpack.c.l.b16 %v190
      %v713 = vunpack.c.h.b16 %v190
      %v714 = vunpack.c.l.b16 %v191
      %v715 = vunpack.c.h.b16 %v191
      %v716 = vunpack.c.l.b16 %v192
      %v717 = vunpack.c.h.b16 %v192
      %v718 = vunpack.c.l.b16 %v193
      %v719 = vunpack.c.h.b16 %v193
      %v720 = vunpack.c.l.b16 %v194
      %v721 = vunpack.c.h.b16 %v194
      %v722 = vunpack.c.l.b16 %v195
      %v723 = vunpack.c.h.b16 %v195
      %v724 = vunpack.c.l.b16 %v196
      %v725 = vunpack.c.h.b16 %v196
      %v726 = vunpack.c.l.b16 %v197
      %v727 = vunpack.c.h.b16 %v197
      %v728 = vunpack.c.l.b16 %v198
      %v729 = vunpack.c.h.b16 %v198
      %v730 = vunpack.c.l.b16 %v199
      %v731 = vunpack.c.h.b16 %v199
      %v732 = vunpack.c.l.b16 %v200
      %v733 = vunpack.c.h.b16 %v200
      %v734 = vunpack.c.l.b16 %v201
      %v735 = vunpack.c.h.b16 %v201
      %v736 = vunpack.c.l.b16 %v202
      %v737 = vunpack.c.h.b16 %v202
      %v738 = vunpack.c.l.b16 %v203
      %v739 = vunpack.c.h.b16 %v203
      %v740 = vunpack.c.l.b16 %v204
      %v741 = vunpack.c.h.b16 %v204
      %v742 = vunpack.c.l.b16 %v205
      %v743 = vunpack.c.h.b16 %v205
      %v744 = vunpack.c.l.b16 %v206
      %v745 = vunpack.c.h.b16 %v206
      %v746 = vunpack.c.l.b16 %v207
      %v747 = vunpack.c.h.b16 %v207
      %v748 = vunpack.c.l.b16 %v208
      %v749 = vunpack.c.h.b16 %v208
      %v750 = vunpack.c.l.b16 %v209
      %v751 = vunpack.c.h.b16 %v209
      %v752 = vunpack.c.l.b16 %v210
      %v753 = vunpack.c.h.b16 %v210
      %v754 = vunpack.c.l.b16 %v211
      %v755 = vunpack.c.h.b16 %v211
      %v756 = vunpack.c.l.b16 %v212
      %v757 = vunpack.c.h.b16 %v212
      %v758 = vunpack.c.l.b16 %v213
      %v759 = vunpack.c.h.b16 %v213
      %v760 = vunpack.c.l.b16 %v214
      %v761 = vunpack.c.h.b16 %v214
      %v762 = vunpack.c.l.b16 %v215
      %v763 = vunpack.c.h.b16 %v215
      %v764 = vunpack.c.l.b16 %v216
      %v765 = vunpack.c.h.b16 %v216
      %v766 = vunpack.c.l.b16 %v217
      %v767 = vunpack.c.h.b16 %v217
      %v768 = vunpack.c.l.b16 %v218
      %v769 = vunpack.c.h.b16 %v218
      %v770 = vunpack.c.l.b16 %v219
      %v771 = vunpack.c.h.b16 %v219
      %v772 = vunpack.c.l.b16 %v220
      %v773 = vunpack.c.h.b16 %v220
      %v774 = vunpack.c.l.b16 %v221
      %v775 = vunpack.c.h.b16 %v221
      %v776 = vunpack.c.l.b16 %v222
      %v777 = vunpack.c.h.b16 %v222
      %v778 = vunpack.c.l.b16 %v223
      %v779 = vunpack.c.h.b16 %v223
      %v780 = vunpack.c.l.b16 %v224
      %v781 = vunpack.c.h.b16 %v224
      %v782 = vunpack.c.l.b16 %v225
      %v783 = vunpack.c.h.b16 %v225
      %v784 = vunpack.c.l.b16 %v226
      %v785 = vunpack.c.h.b16 %v226
      %v786 = vunpack.c.l.b16 %v227
      %v787 = vunpack.c.h.b16 %v227
      %v788 = vunpack.c.l.b16 %v228
      %v789 = vunpack.c.h.b16 %v228
      %v790 = vunpack.c.l.b16 %v229
      %v791 = vunpack.c.h.b16 %v229
      %v792 = vunpack.c.l.b16 %v230
      %v793 = vunpack.c.h.b16 %v230
      %v794 = vunpack.c.l.b16 %v231
      %v795 = vunpack.c.h.b16 %v231
      %v796 = vunpack.c.l.b16 %v232
      %v797 = vunpack.c.h.b16 %v232
      %v798 = vunpack.c.l.b16 %v233
      %v799 = vunpack.c.h.b16 %v233
      %v800 = vunpack.c.l.b16 %v234
      %v801 = vunpack.c.h.b16 %v234
      %v802 = vunpack.c.l.b16 %v235
      %v803 = vunpack.c.h.b16 %v235
      %v804 = vunpack.c.l.b16 %v236
      %v805 = vunpack.c.h.b16 %v236
      %v806 = vunpack.c.l.b16 %v237
      %v807 = vunpack.c.h.b16 %v237
      %v808 = vunpack.c.l.b16 %v238
      %v809 = vunpack.c.h.b16 %v238
      %v810 = vunpack.c.l.b16 %v239
      %v811 = vunpack.c.h.b16 %v239
      %v812 = vunpack.c.l.b16 %v240
      %v813 = vunpack.c.h.b16 %v240
      %v814 = vunpack.c.l.b16 %v241
      %v815 = vunpack.c.h.b16 %v241
      %v816 = vunpack.c.l.b16 %v242
      %v817 = vunpack.c.h.b16 %v242
      %v818 = vunpack.c.l.b16 %v243
      %v819 = vunpack.c.h.b16 %v243
      %v820 = vunpack.c.l.b16 %v244
      %v821 = vunpack.c.h.b16 %v244
      %v822 = vunpack.c.l.b16 %v245
      %v823 = vunpack.c.h.b16 %v245
      %v824 = vunpack.c.l.b16 %v246
      %v825 = vunpack.c.h.b16 %v246
      %v826 = vunpack.c.l.b16 %v247
      %v827 = vunpack.c.h.b16 %v247
      %v828 = vunpack.c.l.b16 %v248
      %v829 = vunpack.c.h.b16 %v248
      %v830 = vunpack.c.l.b16 %v249
      %v831 = vunpack.c.h.b16 %v249
      %v832 = vunpack.c.l.b16 %v250
      %v833 = vunpack.c.h.b16 %v250
      %v834 = vunpack.c.l.b16 %v251
      %v835 = vunpack.c.h.b16 %v251
      %v836 = vunpack.c.l.b16 %v252
      %v837 = vunpack.c.h.b16 %v252
      %v838 = vunpack.c.l.b16 %v253
      %v839 = vunpack.c.h.b16 %v253
      %v840 = vunpack.c.l.b16 %v254
      %v841 = vunpack.c.h.b16 %v254
      %v842 = vunpack.c.l.b16 %v255
      %v843 = vunpack.c.h.b16 %v255
      %v844 = vunpack.c.l.b16 %v256
      %v845 = vunpack.c.h.b16 %v256
      %v846 = vunpack.c.l.b16 %v257
      %v847 = vunpack.c.h.b16 %v257
      %v848 = vunpack.c.l.b16 %v258
      %v849 = vunpack.c.h.b16 %v258
      %v850 = vunpack.c.l.b16 %v259
      %v851 = vunpack.c.h.b16 %v259
      %v852 = vunpack.c.l.b16 %v260
      %v853 = vunpack.c.h.b16 %v260
      %v854 = vunpack.c.l.b16 %v261
      %v855 = vunpack.c.h.b16 %v261
      %v856 = vunpack.c.l.b16 %v262
      %v857 = vunpack.c.h.b16 %v262
      %v858 = vunpack.c.l.b16 %v263
      %v859 = vunpack.c.h.b16 %v263
      %v860 = vunpack.c.l.b16 %v264
      %v861 = vunpack.c.h.b16 %v264
      %v862 = vunpack.c.l.b16 %v265
      %v863 = vunpack.c.h.b16 %v265
      %v864 = vunpack.c.l.b16 %v266
      %v865 = vunpack.c.h.b16 %v266
      %v866 = vunpack.c.l.b16 %v267
      %v867 = vunpack.c.h.b16 %v267
      %v868 = vunpack.c.l.b16 %v268
      %v869 = vunpack.c.h.b16 %v268
      %v870 = vunpack.c.l.b16 %v269
      %v871 = vunpack.c.h.b16 %v269
      %v872 = vunpack.c.l.b16 %v270
      %v873 = vunpack.c.h.b16 %v270
      %v874 = vunpack.c.l.b16 %v271
      %v875 = vunpack.c.h.b16 %v271
      %v876 = vunpack.c.l.b16 %v272
      %v877 = vunpack.c.h.b16 %v272
      %v878 = vunpack.c.l.b16 %v273
      %v879 = vunpack.c.h.b16 %v273
      %v880 = vunpack.c.l.b16 %v274
      %v881 = vunpack.c.h.b16 %v274
      %v882 = vunpack.c.l.b16 %v275
      %v883 = vunpack.c.h.b16 %v275
      %v884 = vunpack.c.l.b16 %v276
      %v885 = vunpack.c.h.b16 %v276
      %v886 = vunpack.c.l.b16 %v277
      %v887 = vunpack.c.h.b16 %v277
      %v888 = vunpack.c.l.b16 %v278
      %v889 = vunpack.c.h.b16 %v278
      %v890 = vunpack.c.l.b16 %v279
      %v891 = vunpack.c.h.b16 %v279
      %v892 = vunpack.c.l.b16 %v280
      %v893 = vunpack.c.h.b16 %v280
      %v894 = vunpack.c.l.b16 %v281
      %v895 = vunpack.c.h.b16 %v281
      %v896 = vunpack.c.l.b16 %v282
      %v897 = vunpack.c.h.b16 %v282
      %v898 = vunpack.c.l.b16 %v283
      %v899 = vunpack.c.h.b16 %v283
      %v900 = vunpack.c.l.b16 %v284
      %v901 = vunpack.c.h.b16 %v284
      %v902 = vunpack.c.l.b16 %v285
      %v903 = vunpack.c.h.b16 %v285
      %v904 = vunpack.c.l.b16 %v286
      %v905 = vunpack.c.h.b16 %v286
      %v906 = vunpack.c.l.b16 %v287
      %v907 = vunpack.c.h.b16 %v287
      %v908 = vunpack.c.l.b16 %v288
      %v909 = vunpack.c.h.b16 %v288
      %v910 = vunpack.c.l.b16 %v289
      %v911 = vunpack.c.h.b16 %v289
      %v912 = vunpack.c.l.b16 %v290
      %v913 = vunpack.c.h.b16 %v290
      %v914 = vunpack.c.l.b16 %v291
      %v915 = vunpack.c.h.b16 %v291
      %v916 = vunpack.c.l.b16 %v292
      %v917 = vunpack.c.h.b16 %v292
      %v918 = vunpack.c.l.b16 %v293
      %v919 = vunpack.c.h.b16 %v293
      %v920 = vunpack.c.l.b16 %v294
      %v921 = vunpack.c.h.b16 %v294
      %v922 = vunpack.c.l.b16 %v295
      %v923 = vunpack.c.h.b16 %v295
      %v924 = vunpack.c.l.b16 %v296
      %v925 = vunpack.c.h.b16 %v296
      %v926 = vunpack.c.l.b16 %v297
      %v927 = vunpack.c.h.b16 %v297
      %v928 = vunpack.c.l.b16 %v298
      %v929 = vunpack.c.h.b16 %v298
      %v930 = vunpack.c.l.b16 %v299
      %v931 = vunpack.c.h.b16 %v299
      %v932 = vunpack.c.l.b16 %v300
      %v933 = vunpack.c.h.b16 %v300
      %v934 = vunpack.c.l.b16 %v301
      %v935 = vunpack.c.h.b16 %v301
      %v936 = vunpack.c.l.b16 %v302
      %v937 = vunpack.c.h.b16 %v302
      %v938 = vunpack.c.l.b16 %v303
      %v939 = vunpack.c.h.b16 %v303
      %v940 = vunpack.c.l.b16 %v304
      %v941 = vunpack.c.h.b16 %v304
      %v942 = vunpack.c.l.b16 %v305
      %v943 = vunpack.c.h.b16 %v305
      %v944 = vunpack.c.l.b16 %v306
      %v945 = vunpack.c.h.b16 %v306
      %v946 = vunpack.c.l.b16 %v307
      %v947 = vunpack.c.h.b16 %v307
      %v948 = vunpack.c.l.b16 %v308
      %v949 = vunpack.c.h.b16 %v308
      %v950 = vunpack.c.l.b16 %v309
      %v951 = vunpack.c.h.b16 %v309
      %v952 = vunpack.c.l.b16 %v310
      %v953 = vunpack.c.h.b16 %v310
      %v954 = vunpack.c.l.b16 %v311
      %v955 = vunpack.c.h.b16 %v311
      %v956 = vunpack.c.l.b16 %v312
      %v957 = vunpack.c.h.b16 %v312
      %v958 = vunpack.c.l.b16 %v313
      %v959 = vunpack.c.h.b16 %v313
      %v960 = vunpack.c.l.b16 %v314
      %v961 = vunpack.c.h.b16 %v314
      %v962 = vunpack.c.l.b16 %v315
      %v963 = vunpack.c.h.b16 %v315
      %v964 = vunpack.c.l.b16 %v316
      %v965 = vunpack.c.h.b16 %v316
      %v966 = vunpack.c.l.b16 %v317
      %v967 = vunpack.c.h.b16 %v317
      %v968 = vunpack.c.l.b16 %v318
      %v969 = vunpack.c.h.b16 %v318
      %v970 = vunpack.c.l.b16 %v319
      %v971 = vunpack.c.h.b16 %v319
      %v972 = vunpack.c.l.b16 %v320
      %v973 = vunpack.c.h.b16 %v320
      %v974 = vunpack.c.l.b16 %v321
      %v975 = vunpack.c.h.b16 %v321
      %v976 = vunpack.c.l.b16 %v322
      %v977 = vunpack.c.h.b16 %v322
      %v978 = vunpack.c.l.b16 %v323
      %v979 = vunpack.c.h.b16 %v323
      %v980 = vunpack.c.l.b16 %v324
      %v981 = vunpack.c.h.b16 %v324
      %v982 = vunpack.c.l.b16 %v325
      %v983 = vunpack.c.h.b16 %v325
      %v984 = vunpack.c.l.b16 %v326
      %v985 = vunpack.c.h.b16 %v326
      %v986 = vunpack.c.l.b16 %v327
      %v987 = vunpack.c.h.b16 %v327
      %v988 = vunpack.c.l.b16 %v328
      %v989 = vunpack.c.h.b16 %v328
      %v990 = vunpack.c.l.b16 %v329
      %v991 = vunpack.c.h.b16 %v329
      %v992 = vunpack.c.l.b16 %v330
      %v993 = vunpack.c.h.b16 %v330
      %v994 = vunpack.c.l.b16 %v331
      %v995 = vunpack.c.h.b16 %v331
      %v996 = vunpack.c.l.b16 %v332
      %v997 = vunpack.c.h.b16 %v332
      %v998 = vunpack.c.l.b16 %v333
      %v999 = vunpack.c.h.b16 %v333
      %v1000 = vunpack.c.l.b16 %v334
      %v1001 = vunpack.c.h.b16 %v334
      %v1002 = vunpack.c.l.b16 %v335
      %v1003 = vunpack.c.h.b16 %v335
      %v1004 = vunpack.c.l.b16 %v336
      %v1005 = vunpack.c.h.b16 %v336
      %v1006 = vunpack.c.l.b16 %v337
      %v1007 = vunpack.c.h.b16 %v337
      %v1008 = vunpack.c.l.b16 %v338
      %v1009 = vunpack.c.h.b16 %v338
      %v1010 = vunpack.c.l.b16 %v339
      %v1011 = vunpack.c.h.b16 %v339
      %v1012 = vunpack.c.l.b16 %v340
      %v1013 = vunpack.c.h.b16 %v340
      %v1014 = vunpack.c.l.b16 %v341
      %v1015 = vunpack.c.h.b16 %v341
      %v1016 = vunpack.c.l.b16 %v342
      %v1017 = vunpack.c.h.b16 %v342
      %v1018 = vunpack.c.l.b16 %v343
      %v1019 = vunpack.c.h.b16 %v343
      %v1020 = vunpack.c.l.b16 %v344
      %v1021 = vunpack.c.h.b16 %v344
      %v1022 = vunpack.c.l.b16 %v345
      %v1023 = vunpack.c.h.b16 %v345
      %v1024 = vunpack.c.l.b16 %v346
      %v1025 = vunpack.c.h.b16 %v346
      %v1026 = vunpack.c.l.b16 %v347
      %v1027 = vunpack.c.h.b16 %v347
      %v1028 = vunpack.c.l.b16 %v348
      %v1029 = vunpack.c.h.b16 %v348
      %v1030 = vunpack.c.l.b16 %v349
      %v1031 = vunpack.c.h.b16 %v349
      %v1032 = vunpack.c.l.b16 %v350
      %v1033 = vunpack.c.h.b16 %v350
      %v1034 = vunpack.c.l.b16 %v351
      %v1035 = vunpack.c.h.b16 %v351
      %v1036 = vunpack.c.l.b16 %v352
      %v1037 = vunpack.c.h.b16 %v352
      %v1038 = vunpack.c.l.b16 %v353
      %v1039 = vunpack.c.h.b16 %v353
      %v1040 = vunpack.c.l.b16 %v354
      %v1041 = vunpack.c.h.b16 %v354
      %v1042 = vunpack.c.l.b16 %v355
      %v1043 = vunpack.c.h.b16 %v355
      %v1044 = vunpack.c.l.b16 %v356
      %v1045 = vunpack.c.h.b16 %v356
      %v1046 = vunpack.c.l.b16 %v357
      %v1047 = vunpack.c.h.b16 %v357
      %v1048 = vunpack.c.l.b16 %v358
      %v1049 = vunpack.c.h.b16 %v358
      %v1050 = vunpack.c.l.b16 %v359
      %v1051 = vunpack.c.h.b16 %v359
      %v1052 = vunpack.c.l.b16 %v360
      %v1053 = vunpack.c.h.b16 %v360
      %v1054 = vunpack.c.l.b16 %v361
      %v1055 = vunpack.c.h.b16 %v361
      %v1056 = vunpack.c.l.b16 %v362
      %v1057 = vunpack.c.h.b16 %v362
      %v1058 = vunpack.c.l.b16 %v363
      %v1059 = vunpack.c.h.b16 %v363
      %v1060 = vunpack.c.l.b16 %v364
      %v1061 = vunpack.c.h.b16 %v364
      %v1062 = vunpack.c.l.b16 %v365
      %v1063 = vunpack.c.h.b16 %v365
      %v1064 = vunpack.c.l.b16 %v366
      %v1065 = vunpack.c.h.b16 %v366
      %v1066 = vunpack.c.l.b16 %v367
      %v1067 = vunpack.c.h.b16 %v367
      %v1068 = vunpack.c.l.b16 %v368
      %v1069 = vunpack.c.h.b16 %v368
      %v1070 = vunpack.c.l.b16 %v369
      %v1071 = vunpack.c.h.b16 %v369
      %v1072 = vunpack.c.l.b16 %v370
      %v1073 = vunpack.c.h.b16 %v370
      %v1074 = vunpack.c.l.b16 %v371
      %v1075 = vunpack.c.h.b16 %v371
      %v1076 = vunpack.c.l.b16 %v372
      %v1077 = vunpack.c.h.b16 %v372
      %v1078 = vunpack.c.l.b16 %v373
      %v1079 = vunpack.c.h.b16 %v373
      %v1080 = vunpack.c.l.b16 %v374
      %v1081 = vunpack.c.h.b16 %v374
      %v1082 = vunpack.c.l.b16 %v375
      %v1083 = vunpack.c.h.b16 %v375
      %v1084 = vunpack.c.l.b16 %v376
      %v1085 = vunpack.c.h.b16 %v376
      %v1086 = vunpack.c.l.b16 %v377
      %v1087 = vunpack.c.h.b16 %v377
      %v1088 = vunpack.c.l.b16 %v378
      %v1089 = vunpack.c.h.b16 %v378
      %v1090 = vunpack.c.l.b16 %v379
      %v1091 = vunpack.c.h.b16 %v379
      %v1092 = vunpack.c.l.b16 %v380
      %v1093 = vunpack.c.h.b16 %v380
      %v1094 = vunpack.c.l.b16 %v381
      %v1095 = vunpack.c.h.b16 %v381
      %v1096 = vunpack.c.l.b16 %v382
      %v1097 = vunpack.c.h.b16 %v382
      %v1098 = vunpack.c.l.b16 %v383
      %v1099 = vunpack.c.h.b16 %v383
      %v1100 = vpack.c.b16 %v716, %v708
      %v1101 = vpack.c.b16 %v717, %v709
      %v1102 = vpack.c.b16 %v718, %v710
      %v1103 = vpack.c.b16 %v719, %v711
      %v1104 = vpack.c.b16 %v720, %v712
      %v1105 = vpack.c.b16 %v721, %v713
      %v1106 = vpack.c.b16 %v722, %v714
      %v1107 = vpack.c.b16 %v723, %v715
      %v1108 = vpack.c.b16 %v732, %v724
      %v1109 = vpack.c.b16 %v733, %v725
      %v1110 = vpack.c.b16 %v734, %v726
      %v1111 = vpack.c.b16 %v735, %v727
      %v1112 = vpack.c.b16 %v736, %v728
      %v1113 = vpack.c.b16 %v737, %v729
      %v1114 = vpack.c.b16 %v738, %v730
      %v1115 = vpack.c.b16 %v739, %v731
      %v1116 = vpack.c.b16 %v748, %v740
      %v1117 = vpack.c.b16 %v749, %v741
      %v1118 = vpack.c.b16 %v750, %v742
      %v1119 = vpack.c.b16 %v751, %v743
      %v1120 = vpack.c.b16 %v752, %v744
      %v1121 = vpack.c.b16 %v753, %v745
      %v1122 = vpack.c.b16 %v754, %v746
      %v1123 = vpack.c.b16 %v755, %v747
      %v1124 = vpack.c.b16 %v764, %v756
      %v1125 = vpack.c.b16 %v765, %v757
      %v1126 = vpack.c.b16 %v766, %v758
      %v1127 = vpack.c.b16 %v767, %v759
      %v1128 = vpack.c.b16 %v768, %v760
      %v1129 = vpack.c.b16 %v769, %v761
      %v1130 = vpack.c.b16 %v770, %v762
      %v1131 = vpack.c.b16 %v771, %v763
      %v1132 = vpack.c.b16 %v780, %v772
      %v1133 = vpack.c.b16 %v781, %v773
      %v1134 = vpack.c.b16 %v782, %v774
      %v1135 = vpack.c.b16 %v783, %v775
      %v1136 = vpack.c.b16 %v784, %v776
      %v1137 = vpack.c.b16 %v785, %v777
      %v1138 = vpack.c.b16 %v786, %v778
      %v1139 = vpack.c.b16 %v787, %v779
      %v1140 = vpack.c.b16 %v796, %v788
      %v1141 = vpack.c.b16 %v797, %v789
      %v1142 = vpack.c.b16 %v798, %v790
      %v1143 = vpack.c.b16 %v799, %v791
      %v1144 = vpack.c.b16 %v800, %v792
      %v1145 = vpack.c.b16 %v801, %v793
      %v1146 = vpack.c.b16 %v802, %v794
      %v1147 = vpack.c.b16 %v803, %v795
      %v1148 = vpack.c.b16 %v812, %v804
      %v1149 = vpack.c.b16 %v813, %v805
      %v1150 = vpack.c.b16 %v814, %v806
      %v1151 = vpack.c.b16 %v815, %v807
      %v1152 = vpack.c.b16 %v816, %v808
      %v1153 = vpack.c.b16 %v817, %v809
      %v1154 = vpack.c.b16 %v818, %v810
      %v1155 = vpack.c.b16 %v819, %v811
      %v1156 = vpack.c.b16 %v828, %v820
      %v1157 = vpack.c.b16 %v829, %v821
      %v1158 = vpack.c.b16 %v830, %v822
      %v1159 = vpack.c.b16 %v831, %v823
      %v1160 = vpack.c.b16 %v832, %v824
      %v1161 = vpack.c.b16 %v833, %v825
      %v1162 = vpack.c.b16 %v834, %v826
      %v1163 = vpack.c.b16 %v835, %v827
      %v1164 = vpack.c.b16 %v844, %v836
      %v1165 = vpack.c.b16 %v845, %v837
      %v1166 = vpack.c.b16 %v846, %v838
      %v1167 = vpack.c.b16 %v847, %v839
      %v1168 = vpack.c.b16 %v848, %v840
      %v1169 = vpack.c.b16 %v849, %v841
      %v1170 = vpack.c.b16 %v850, %v842
      %v1171 = vpack.c.b16 %v851, %v843
      %v1172 = vpack.c.b16 %v860, %v852
      %v1173 = vpack.c.b16 %v861, %v853
      %v1174 = vpack.c.b16 %v862, %v854
      %v1175 = vpack.c.b16 %v863, %v855
      %v1176 = vpack.c.b16 %v864, %v856
      %v1177 = vpack.c.b16 %v865, %v857
      %v1178 = vpack.c.b16 %v866, %v858
      %v1179 = vpack.c.b16 %v867, %v859
      %v1180 = vpack.c.b16 %v876, %v868
      %v1181 = vpack.c.b16 %v877, %v869
      %v1182 = vpack.c.b16 %v878, %v870
      %v1183 = vpack.c.b16 %v879, %v871
      %v1184 = vpack.c.b16 %v880, %v872
      %v1185 = vpack.c.b16 %v881, %v873
      %v1186 = vpack.c.b16 %v882, %v874
      %v1187 = vpack.c.b16 %v883, %v875
      %v1188 = vpack.c.b16 %v892, %v884
      %v1189 = vpack.c.b16 %v893, %v885
      %v1190 = vpack.c.b16 %v894, %v886
      %v1191 = vpack.c.b16 %v895, %v887
      %v1192 = vpack.c.b16 %v896, %v888
      %v1193 = vpack.c.b16 %v897, %v889
      %v1194 = vpack.c.b16 %v898, %v890
      %v1195 = vpack.c.b16 %v899, %v891
      %v1196 = vpack.c.b16 %v908, %v900
      %v1197 = vpack.c.b16 %v909, %v901
      %v1198 = vpack.c.b16 %v910, %v902
      %v1199 = vpack.c.b16 %v911, %v903
      %v1200 = vpack.c.b16 %v912, %v904
      %v1201 = vpack.c.b16 %v913, %v905
      %v1202 = vpack.c.b16 %v914, %v906
      %v1203 = vpack.c.b16 %v915, %v907
      %v1204 = vpack.c.b16 %v924, %v916
      %v1205 = vpack.c.b16 %v925, %v917
      %v1206 = vpack.c.b16 %v926, %v918
      %v1207 = vpack.c.b16 %v927, %v919
      %v1208 = vpack.c.b16 %v928, %v920
      %v1209 = vpack.c.b16 %v929, %v921
      %v1210 = vpack.c.b16 %v930, %v922
      %v1211 = vpack.c.b16 %v931, %v923
      %v1212 = vpack.c.b16 %v940, %v932
      %v1213 = vpack.c.b16 %v941, %v933
      %v1214 = vpack.c.b16 %v942, %v934
      %v1215 = vpack.c.b16 %v943, %v935
      %v1216 = vpack.c.b16 %v944, %v936
      %v1217 = vpack.c.b16 %v945, %v937
      %v1218 = vpack.c.b16 %v946, %v938
      %v1219 = vpack.c.b16 %v947, %v939
      %v1220 = vpack.c.b16 %v956, %v948
      %v1221 = vpack.c.b16 %v957, %v949
      %v1222 = vpack.c.b16 %v958, %v950
      %v1223 = vpack.c.b16 %v959, %v951
      %v1224 = vpack.c.b16 %v960, %v952
      %v1225 = vpack.c.b16 %v961, %v953
      %v1226 = vpack.c.b16 %v962, %v954
      %v1227 = vpack.c.b16 %v963, %v955
      %v1228 = vpack.c.b16 %v972, %v964
      %v1229 = vpack.c.b16 %v973, %v965
      %v1230 = vpack.c.b16 %v974, %v966
      %v1231 = vpack.c.b16 %v975, %v967
      %v1232 = vpack.c.b16 %v976, %v968
      %v1233 = vpack.c.b16 %v977, %v969
      %v1234 = vpack.c.b16 %v978, %v970
      %v1235 = vpack.c.b16 %v979, %v971
      %v1236 = vpack.c.b16 %v988, %v980
      %v1237 = vpack.c.b16 %v989, %v981
      %v1238 = vpack.c.b16 %v990, %v982
      %v1239 = vpack.c.b16 %v991, %v983
      %v1240 = vpack.c.b16 %v992, %v984
      %v1241 = vpack.c.b16 %v993, %v985
      %v1242 = vpack.c.b16 %v994, %v986
      %v1243 = vpack.c.b16 %v995, %v987
      %v1244 = vpack.c.b16 %v1004, %v996
      %v1245 = vpack.c.b16 %v1005, %v997
      %v1246 = vpack.c.b16 %v1006, %v998
      %v1247 = vpack.c.b16 %v1007, %v999
      %v1248 = vpack.c.b16 %v1008, %v1000
      %v1249 = vpack.c.b16 %v1009, %v1001
      %v1250 = vpack.c.b16 %v1010, %v1002
      %v1251 = vpack.c.b16 %v1011, %v1003
      %v1252 = vpack.c.b16 %v1020, %v1012
      %v1253 = vpack.c.b16 %v1021, %v1013
      %v1254 = vpack.c.b16 %v1022, %v1014
      %v1255 = vpack.c.b16 %v1023, %v1015
      %v1256 = vpack.c.b16 %v1024, %v1016
      %v1257 = vpack.c.b16 %v1025, %v1017
      %v1258 = vpack.c.b16 %v1026, %v1018
      %v1259 = vpack.c.b16 %v1027, %v1019
      %v1260 = vpack.c.b16 %v1036, %v1028
      %v1261 = vpack.c.b16 %v1037, %v1029
      %v1262 = vpack.c.b16 %v1038, %v1030
      %v1263 = vpack.c.b16 %v1039, %v1031
      %v1264 = vpack.c.b16 %v1040, %v1032
      %v1265 = vpack.c.b16 %v1041, %v1033
      %v1266 = vpack.c.b16 %v1042, %v1034
      %v1267 = vpack.c.b16 %v1043, %v1035
      %v1268 = vpack.c.b16 %v1052, %v1044
      %v1269 = vpack.c.b16 %v1053, %v1045
      %v1270 = vpack.c.b16 %v1054, %v1046
      %v1271 = vpack.c.b16 %v1055, %v1047
      %v1272 = vpack.c.b16 %v1056, %v1048
      %v1273 = vpack.c.b16 %v1057, %v1049
      %v1274 = vpack.c.b16 %v1058, %v1050
      %v1275 = vpack.c.b16 %v1059, %v1051
      %v1276 = vpack.c.b16 %v1068, %v1060
      %v1277 = vpack.c.b16 %v1069, %v1061
      %v1278 = vpack.c.b16 %v1070, %v1062
      %v1279 = vpack.c.b16 %v1071, %v1063
      %v1280 = vpack.c.b16 %v1072, %v1064
      %v1281 = vpack.c.b16 %v1073, %v1065
      %v1282 = vpack.c.b16 %v1074, %v1066
      %v1283 = vpack.c.b16 %v1075, %v1067
      %v1284 = vpack.c.b16 %v1084, %v1076
      %v1285 = vpack.c.b16 %v1085, %v1077
      %v1286 = vpack.c.b16 %v1086, %v1078
      %v1287 = vpack.c.b16 %v1087, %v1079
      %v1288 = vpack.c.b16 %v1088, %v1080
      %v1289 = vpack.c.b16 %v1089, %v1081
      %v1290 = vpack.c.b16 %v1090, %v1082
      %v1291 = vpack.c.b16 %v1091, %v1083
      %v1292 = vpack.c.b16 %v1092, %v1092
      %v1293 = vpack.c.b16 %v1093, %v1093
      %v1294 = vpack.c.b16 %v1094, %v1094
      %v1295 = vpack.c.b16 %v1095, %v1095
      %v1296 = vpack.c.b16 %v1096, %v1096
      %v1297 = vpack.c.b16 %v1097, %v1097
      %v1298 = vpack.c.b16 %v1098, %v1098
      %v1299 = vpack.c.b16 %v1099, %v1099
      %v1628 = vunpack.c.l.b16 %v384
      %v1629 = vunpack.c.l.b16 %v385
      %v1630 = vunpack.c.l.b16 %v386
      %v1631 = vunpack.c.l.b16 %v387
      %v1632 = vunpack.c.l.b16 %v388
      %v1633 = vunpack.c.l.b16 %v389
      %v1634 = vunpack.c.l.b16 %v390
      %v1635 = vunpack.c.l.b16 %v391
      %v1636 = vunpack.c.l.b16 %v392
      %v1637 = vunpack.c.l.b16 %v393
      %v1638 = vunpack.c.l.b16 %v394
      %v1639 = vunpack.c.l.b16 %v395
      %v1640 = vunpack.c.l.b16 %v396
      %v1641 = vunpack.c.l.b16 %v397
      %v1642 = vunpack.c.l.b16 %v398
      %v1643 = vunpack.c.l.b16 %v399
      %v1644 = vunpack.c.l.b16 %v400
      %v1645 = vunpack.c.l.b16 %v401
      %v1646 = vunpack.c.l.b16 %v402
      %v1647 = vunpack.c.l.b16 %v403
      %v1648 = vunpack.c.l.b16 %v404
      %v1649 = vunpack.c.l.b16 %v405
      %v1650 = vunpack.c.l.b16 %v406
      %v1651 = vunpack.c.l.b16 %v407
      %v1652 = vunpack.c.l.b16 %v408
      %v1653 = vunpack.c.l.b16 %v409
      %v1654 = vunpack.c.l.b16 %v410
      %v1655 = vunpack.c.l.b16 %v411
      %v1656 = vunpack.c.l.b16 %v412
      %v1657 = vunpack.c.l.b16 %v413
      %v1658 = vunpack.c.l.b16 %v414
      %v1659 = vunpack.c.l.b16 %v415
      %v1660 = vunpack.c.l.b16 %v416
      %v1661 = vunpack.c.l.b16 %v417
      %v1662 = vunpack.c.l.b16 %v418
      %v1663 = vunpack.c.l.b16 %v419
      %v1664 = vunpack.c.l.b16 %v420
      %v1665 = vunpack.c.l.b16 %v421
      %v1666 = vunpack.c.l.b16 %v422
      %v1667 = vunpack.c.l.b16 %v423
      %v1668 = vunpack.c.l.b16 %v424
      %v1669 = vunpack.c.l.b16 %v425
      %v1670 = vunpack.c.l.b16 %v426
      %v1671 = vunpack.c.l.b16 %v427
      %v1672 = vunpack.c.l.b16 %v428
      %v1673 = vunpack.c.l.b16 %v429
      %v1674 = vunpack.c.l.b16 %v430
      %v1675 = vunpack.c.l.b16 %v431
      %v1676 = vunpack.c.l.b16 %v432
      %v1677 = vunpack.c.l.b16 %v433
      %v1678 = vunpack.c.l.b16 %v434
      %v1679 = vunpack.c.l.b16 %v435
      %v1680 = vunpack.c.l.b16 %v436
      %v1681 = vunpack.c.l.b16 %v437
      %v1682 = vunpack.c.l.b16 %v438
      %v1683 = vunpack.c.l.b16 %v439
      %v1684 = vunpack.c.l.b16 %v440
      %v1685 = vunpack.c.l.b16 %v441
      %v1686 = vunpack.c.l.b16 %v442
      %v1687 = vunpack.c.l.b16 %v443
      %v1688 = vunpack.c.l.b16 %v444
      %v1689 = vunpack.c.l.b16 %v445
      %v1690 = vunpack.c.l.b16 %v446
      %v1691 = vunpack.c.l.b16 %v447
      %v1692 = vunpack.c.l.b16 %v448
      %v1693 = vunpack.c.l.b16 %v449
      %v1694 = vunpack.c.l.b16 %v450
      %v1695 = vunpack.c.l.b16 %v451
      %v1696 = vunpack.c.l.b16 %v452
      %v1697 = vunpack.c.l.b16 %v453
      %v1698 = vunpack.c.l.b16 %v454
      %v1699 = vunpack.c.l.b16 %v455
      %v1700 = vunpack.c.l.b16 %v456
      %v1701 = vunpack.c.l.b16 %v457
      %v1702 = vunpack.c.l.b16 %v458
      %v1703 = vunpack.c.l.b16 %v459
      %v1704 = vunpack.c.l.b16 %v460
      %v1705 = vunpack.c.l.b16 %v461
      %v1706 = vunpack.c.l.b16 %v462
      %v1707 = vunpack.c.l.b16 %v463
      %v1708 = vunpack.c.l.b16 %v464
      %v1709 = vunpack.c.l.b16 %v465
      %v1710 = vunpack.c.l.b16 %v466
      %v1711 = vunpack.c.l.b16 %v467
      %v1712 = vunpack.c.l.b16 %v468
      %v1713 = vunpack.c.l.b16 %v469
      %v1714 = vunpack.c.l.b16 %v470
      %v1715 = vunpack.c.l.b16 %v471
      %v1716 = vunpack.c.l.b16 %v472
      %v1717 = vunpack.c.l.b16 %v473
      %v1718 = vunpack.c.l.b16 %v474
      %v1719 = vunpack.c.l.b16 %v475
      %v1720 = vunpack.c.l.b16 %v476
      %v1721 = vunpack.c.l.b16 %v477
      %v1722 = vunpack.c.l.b16 %v478
      %v1723 = vunpack.c.l.b16 %v479
      %v1724 = vunpack.c.l.b16 %v480
      %v1725 = vunpack.c.l.b16 %v481
      %v1726 = vunpack.c.l.b16 %v482
      %v1727 = vunpack.c.l.b16 %v483
      %v1728 = vunpack.c.l.b16 %v484
      %v1729 = vunpack.c.l.b16 %v485
      %v1730 = vunpack.c.l.b16 %v486
      %v1731 = vunpack.c.l.b16 %v487
      %v1732 = vunpack.c.l.b16 %v488
      %v1733 = vunpack.c.l.b16 %v489
      %v1734 = vunpack.c.l.b16 %v490
      %v1735 = vunpack.c.l.b16 %v491
      %v1736 = vunpack.c.l.b16 %v492
      %v1737 = vunpack.c.l.b16 %v493
      %v1738 = vunpack.c.l.b16 %v494
      %v1739 = vunpack.c.l.b16 %v495
      %v1740 = vunpack.c.l.b16 %v496
      %v1741 = vunpack.c.l.b16 %v497
      %v1742 = vunpack.c.l.b16 %v498
      %v1743 = vunpack.c.l.b16 %v499
      %v1744 = vunpack.c.l.b16 %v500
      %v1745 = vunpack.c.l.b16 %v501
      %v1746 = vunpack.c.l.b16 %v502
      %v1747 = vunpack.c.l.b16 %v503
      %v1748 = vunpack.c.l.b16 %v504
      %v1749 = vunpack.c.l.b16 %v505
      %v1750 = vunpack.c.l.b16 %v506
      %v1751 = vunpack.c.l.b16 %v507
      %v1752 = vunpack.c.l.b16 %v508
      %v1753 = vunpack.c.l.b16 %v509
      %v1754 = vunpack.c.l.b16 %v510
      %v1755 = vunpack.c.l.b16 %v511
      %v1756 = vpack.c.b16 %v1629, %v1628
      %v1757 = vpack.c.b16 %v1631, %v1630
      %v1758 = vpack.c.b16 %v1633, %v1632
      %v1759 = vpack.c.b16 %v1635, %v1634
      %v1760 = vpack.c.b16 %v1637, %v1636
      %v1761 = vpack.c.b16 %v1639, %v1638
      %v1762 = vpack.c.b16 %v1641, %v1640
      %v1763 = vpack.c.b16 %v1643, %v1642
      %v1764 = vpack.c.b16 %v1645, %v1644
      %v1765 = vpack.c.b16 %v1647, %v1646
      %v1766 = vpack.c.b16 %v1649, %v1648
      %v1767 = vpack.c.b16 %v1651, %v1650
      %v1768 = vpack.c.b16 %v1653, %v1652
      %v1769 = vpack.c.b16 %v1655, %v1654
      %v1770 = vpack.c.b16 %v1657, %v1656
      %v1771 = vpack.c.b16 %v1659, %v1658
      %v1772 = vpack.c.b16 %v1661, %v1660
      %v1773 = vpack.c.b16 %v1663, %v1662
      %v1774 = vpack.c.b16 %v1665, %v1664
      %v1775 = vpack.c.b16 %v1667, %v1666
      %v1776 = vpack.c.b16 %v1669, %v1668
      %v1777 = vpack.c.b16 %v1671, %v1670
      %v1778 = vpack.c.b16 %v1673, %v1672
      %v1779 = vpack.c.b16 %v1675, %v1674
      %v1780 = vpack.c.b16 %v1677, %v1676
      %v1781 = vpack.c.b16 %v1679, %v1678
      %v1782 = vpack.c.b16 %v1681, %v1680
      %v1783 = vpack.c.b16 %v1683, %v1682
      %v1784 = vpack.c.b16 %v1685, %v1684
      %v1785 = vpack.c.b16 %v1687, %v1686
      %v1786 = vpack.c.b16 %v1689, %v1688
      %v1787 = vpack.c.b16 %v1691, %v1690
      %v1788 = vpack.c.b16 %v1693, %v1692
      %v1789 = vpack.c.b16 %v1695, %v1694
      %v1790 = vpack.c.b16 %v1697, %v1696
      %v1791 = vpack.c.b16 %v1699, %v1698
      %v1792 = vpack.c.b16 %v1701, %v1700
      %v1793 = vpack.c.b16 %v1703, %v1702
      %v1794 = vpack.c.b16 %v1705, %v1704
      %v1795 = vpack.c.b16 %v1707, %v1706
      %v1796 = vpack.c.b16 %v1709, %v1708
      %v1797 = vpack.c.b16 %v1711, %v1710
      %v1798 = vpack.c.b16 %v1713, %v1712
      %v1799 = vpack.c.b16 %v1715, %v1714
      %v1800 = vpack.c.b16 %v1717, %v1716
      %v1801 = vpack.c.b16 %v1719, %v1718
      %v1802 = vpack.c.b16 %v1721, %v1720
      %v1803 = vpack.c.b16 %v1723, %v1722
      %v1804 = vpack.c.b16 %v1725, %v1724
      %v1805 = vpack.c.b16 %v1727, %v1726
      %v1806 = vpack.c.b16 %v1729, %v1728
      %v1807 = vpack.c.b16 %v1731, %v1730
      %v1808 = vpack.c.b16 %v1733, %v1732
      %v1809 = vpack.c.b16 %v1735, %v1734
      %v1810 = vpack.c.b16 %v1737, %v1736
      %v1811 = vpack.c.b16 %v1739, %v1738
      %v1812 = vpack.c.b16 %v1741, %v1740
      %v1813 = vpack.c.b16 %v1743, %v1742
      %v1814 = vpack.c.b16 %v1745, %v1744
      %v1815 = vpack.c.b16 %v1747, %v1746
      %v1816 = vpack.c.b16 %v1749, %v1748
      %v1817 = vpack.c.b16 %v1751, %v1750
      %v1818 = vpack.c.b16 %v1753, %v1752
      %v1819 = vpack.c.b16 %v1755, %v1754
      %1884 = vmatprep.subr.bf16.mxu0 0
      %1885 = vmatpush1.bf16.msra.mxu0 %v1756
      %1886 = vmatprep.subr.bf16.mxu0 0
      %1887 = vmatpush1.bf16.msra.mxu0 %v1757
      %1888 = vmatprep.subr.bf16.mxu0 0
      %1889 = vmatpush1.bf16.msra.mxu0 %v1758
      %1890 = vmatprep.subr.bf16.mxu0 0
      %1891 = vmatpush1.bf16.msra.mxu0 %v1759
      %1892 = vmatprep.subr.bf16.mxu0 0
      %1893 = vmatpush1.bf16.msra.mxu0 %v1760
      %1894 = vmatprep.subr.bf16.mxu0 0
      %1895 = vmatpush1.bf16.msra.mxu0 %v1761
      %1896 = vmatprep.subr.bf16.mxu0 0
      %1897 = vmatpush1.bf16.msra.mxu0 %v1762
      %1898 = vmatprep.subr.bf16.mxu0 0
      %1899 = vmatpush1.bf16.msra.mxu0 %v1763
      %1900 = vmatprep.subr.bf16.mxu0 0
      %1901 = vmatpush1.bf16.msra.mxu0 %v1764
      %1902 = vmatprep.subr.bf16.mxu0 0
      %1903 = vmatpush1.bf16.msra.mxu0 %v1765
      %1904 = vmatprep.subr.bf16.mxu0 0
      %1905 = vmatpush1.bf16.msra.mxu0 %v1766
      %1906 = vmatprep.subr.bf16.mxu0 0
      %1907 = vmatpush1.bf16.msra.mxu0 %v1767
      %1908 = vmatprep.subr.bf16.mxu0 0
      %1909 = vmatpush1.bf16.msra.mxu0 %v1768
      %1910 = vmatprep.subr.bf16.mxu0 0
      %1911 = vmatpush1.bf16.msra.mxu0 %v1769
      %1912 = vmatprep.subr.bf16.mxu0 0
      %1913 = vmatpush1.bf16.msra.mxu0 %v1770
      %1914 = vmatprep.subr.bf16.mxu0 0
      %1915 = vmatpush1.bf16.msra.mxu0 %v1771
      %1916 = vmatprep.mubr.bf16.mxu0 %v1101
      %1917 = vmatmul.mubr.bf16.gmra.mrb[0].mxu0 %v1100
      %v1918 = vpop.f32.mrb[0].mxu0
      %v1919 = vadd.f32 0.0, %v1918
      %v1920 = vpop.f32.mrb[0].mxu0
      %v1921 = vpop.f32.mrb[0].mxu0
      %v1922 = vadd.f32 0.0, %v1921
      %v1923 = vpop.f32.mrb[0].mxu0
      %1924 = vmatprep.mubr.bf16.mxu0 %v1109
      %1925 = vmatmul.mubr.bf16.gmra.mrb[0].mxu0 %v1108
      %v1926 = vpop.f32.mrb[0].mxu0
      %v1927 = vadd.f32 0.0, %v1926
      %v1928 = vpop.f32.mrb[0].mxu0
      %v1929 = vpop.f32.mrb[0].mxu0
      %v1930 = vadd.f32 0.0, %v1929
      %v1931 = vpop.f32.mrb[0].mxu0
      %1932 = vmatprep.mubr.bf16.mxu0 %v1117
      %1933 = vmatmul.mubr.bf16.gmra.mrb[0].mxu0 %v1116
      %v1934 = vpop.f32.mrb[0].mxu0
      %v1935 = vadd.f32 0.0, %v1934
      %v1936 = vpop.f32.mrb[0].mxu0
      %v1937 = vpop.f32.mrb[0].mxu0
      %v1938 = vadd.f32 0.0, %v1937
      %v1939 = vpop.f32.mrb[0].mxu0
      %1940 = vmatprep.mubr.bf16.mxu0 %v1125
      %1941 = vmatmul.mubr.bf16.gmra.mrb[0].mxu0 %v1124
      %v1942 = vpop.f32.mrb[0].mxu0
      %v1943 = vadd.f32 0.0, %v1942
      %v1944 = vpop.f32.mrb[0].mxu0
      %v1945 = vpop.f32.mrb[0].mxu0
      %v1946 = vadd.f32 0.0, %v1945
      %v1947 = vpop.f32.mrb[0].mxu0
      %1948 = vmatprep.mubr.bf16.mxu0 %v1133
      %1949 = vmatmul.mubr.bf16.gmra.mrb[0].mxu0 %v1132
      %v1950 = vpop.f32.mrb[0].mxu0
      %v1951 = vadd.f32 0.0, %v1950
      %v1952 = vpop.f32.mrb[0].mxu0
      %v1953 = vpop.f32.mrb[0].mxu0
      %v1954 = vadd.f32 0.0, %v1953
      %v1955 = vpop.f32.mrb[0].mxu0
      %1956 = vmatprep.mubr.bf16.mxu0 %v1141
      %1957 = vmatmul.mubr.bf16.gmra.mrb[0].mxu0 %v1140
      %v1958 = vpop.f32.mrb[0].mxu0
      %v1959 = vadd.f32 0.0, %v1958
      %v1960 = vpop.f32.mrb[0].mxu0
      %v1961 = vpop.f32.mrb[0].mxu0
      %v1962 = vadd.f32 0.0, %v1961
      %v1963 = vpop.f32.mrb[0].mxu0
      %1964 = vmatprep.mubr.bf16.mxu0 %v1149
      %1965 = vmatmul.mubr.bf16.gmra.mrb[0].mxu0 %v1148
      %v1966 = vpop.f32.mrb[0].mxu0
      %v1967 = vadd.f32 0.0, %v1966
      %v1968 = vpop.f32.mrb[0].mxu0
      %v1969 = vpop.f32.mrb[0].mxu0
      %v1970 = vadd.f32 0.0, %v1969
      %v1971 = vpop.f32.mrb[0].mxu0
      %1972 = vmatprep.mubr.bf16.mxu0 %v1157
      %1973 = vmatmul.mubr.bf16.gmra.mrb[0].mxu0 %v1156
      %v1974 = vpop.f32.mrb[0].mxu0
      %v1975 = vadd.f32 0.0, %v1974
      %v1976 = vpop.f32.mrb[0].mxu0
      %v1977 = vpop.f32.mrb[0].mxu0
      %v1978 = vadd.f32 0.0, %v1977
      %v1979 = vpop.f32.mrb[0].mxu0
      %1980 = vmatprep.mubr.bf16.mxu0 %v1165
      %1981 = vmatmul.mubr.bf16.gmra.mrb[0].mxu0 %v1164
      %v1982 = vpop.f32.mrb[0].mxu0
      %v1983 = vadd.f32 0.0, %v1982
      %v1984 = vpop.f32.mrb[0].mxu0
      %v1985 = vpop.f32.mrb[0].mxu0
      %v1986 = vadd.f32 0.0, %v1985
      %v1987 = vpop.f32.mrb[0].mxu0
      %1988 = vmatprep.mubr.bf16.mxu0 %v1173
      %1989 = vmatmul.mubr.bf16.gmra.mrb[0].mxu0 %v1172
      %v1990 = vpop.f32.mrb[0].mxu0
      %v1991 = vadd.f32 0.0, %v1990
      %v1992 = vpop.f32.mrb[0].mxu0
      %v1993 = vpop.f32.mrb[0].mxu0
      %v1994 = vadd.f32 0.0, %v1993
      %v1995 = vpop.f32.mrb[0].mxu0
      %1996 = vmatprep.mubr.bf16.mxu0 %v1181
      %1997 = vmatmul.mubr.bf16.gmra.mrb[0].mxu0 %v1180
      %v1998 = vpop.f32.mrb[0].mxu0
      %v1999 = vadd.f32 0.0, %v1998
      %v2000 = vpop.f32.mrb[0].mxu0
      %v2001 = vpop.f32.mrb[0].mxu0
      %v2002 = vadd.f32 0.0, %v2001
      %v2003 = vpop.f32.mrb[0].mxu0
      %2004 = vmatprep.mubr.bf16.mxu0 %v1189
      %2005 = vmatmul.mubr.bf16.gmra.mrb[0].mxu0 %v1188
      %v2006 = vpop.f32.mrb[0].mxu0
      %v2007 = vadd.f32 0.0, %v2006
      %v2008 = vpop.f32.mrb[0].mxu0
      %v2009 = vpop.f32.mrb[0].mxu0
      %v2010 = vadd.f32 0.0, %v2009
      %v2011 = vpop.f32.mrb[0].mxu0
      %2012 = vmatprep.mubr.bf16.mxu0 %v1197
      %2013 = vmatmul.mubr.bf16.gmra.mrb[0].mxu0 %v1196
      %v2014 = vpop.f32.mrb[0].mxu0
      %v2015 = vadd.f32 0.0, %v2014
      %v2016 = vpop.f32.mrb[0].mxu0
      %v2017 = vpop.f32.mrb[0].mxu0
      %v2018 = vadd.f32 0.0, %v2017
      %v2019 = vpop.f32.mrb[0].mxu0
      %2020 = vmatprep.mubr.bf16.mxu0 %v1205
      %2021 = vmatmul.mubr.bf16.gmra.mrb[0].mxu0 %v1204
      %v2022 = vpop.f32.mrb[0].mxu0
      %v2023 = vadd.f32 0.0, %v2022
      %v2024 = vpop.f32.mrb[0].mxu0
      %v2025 = vpop.f32.mrb[0].mxu0
      %v2026 = vadd.f32 0.0, %v2025
      %v2027 = vpop.f32.mrb[0].mxu0
      %2028 = vmatprep.mubr.bf16.mxu0 %v1213
      %2029 = vmatmul.mubr.bf16.gmra.mrb[0].mxu0 %v1212
      %v2030 = vpop.f32.mrb[0].mxu0
      %v2031 = vadd.f32 0.0, %v2030
      %v2032 = vpop.f32.mrb[0].mxu0
      %v2033 = vpop.f32.mrb[0].mxu0
      %v2034 = vadd.f32 0.0, %v2033
      %v2035 = vpop.f32.mrb[0].mxu0
      %2036 = vmatprep.mubr.bf16.mxu0 %v1221
      %2037 = vmatmul.mubr.bf16.gmra.mrb[0].mxu0 %v1220
      %v2038 = vpop.f32.mrb[0].mxu0
      %v2039 = vadd.f32 0.0, %v2038
      %v2040 = vpop.f32.mrb[0].mxu0
      %v2041 = vpop.f32.mrb[0].mxu0
      %v2042 = vadd.f32 0.0, %v2041
      %v2043 = vpop.f32.mrb[0].mxu0
      %2044 = vmatprep.mubr.bf16.mxu0 %v1229
      %2045 = vmatmul.mubr.bf16.gmra.mrb[0].mxu0 %v1228
      %v2046 = vpop.f32.mrb[0].mxu0
      %v2047 = vadd.f32 0.0, %v2046
      %v2048 = vpop.f32.mrb[0].mxu0
      %v2049 = vpop.f32.mrb[0].mxu0
      %v2050 = vadd.f32 0.0, %v2049
      %v2051 = vpop.f32.mrb[0].mxu0
      %2052 = vmatprep.mubr.bf16.mxu0 %v1237
      %2053 = vmatmul.mubr.bf16.gmra.mrb[0].mxu0 %v1236
      %v2054 = vpop.f32.mrb[0].mxu0
      %v2055 = vadd.f32 0.0, %v2054
      %v2056 = vpop.f32.mrb[0].mxu0
      %v2057 = vpop.f32.mrb[0].mxu0
      %v2058 = vadd.f32 0.0, %v2057
      %v2059 = vpop.f32.mrb[0].mxu0
      %2060 = vmatprep.mubr.bf16.mxu0 %v1245
      %2061 = vmatmul.mubr.bf16.gmra.mrb[0].mxu0 %v1244
      %v2062 = vpop.f32.mrb[0].mxu0
      %v2063 = vadd.f32 0.0, %v2062
      %v2064 = vpop.f32.mrb[0].mxu0
      %v2065 = vpop.f32.mrb[0].mxu0
      %v2066 = vadd.f32 0.0, %v2065
      %v2067 = vpop.f32.mrb[0].mxu0
      %2068 = vmatprep.mubr.bf16.mxu0 %v1253
      %2069 = vmatmul.mubr.bf16.gmra.mrb[0].mxu0 %v1252
      %v2070 = vpop.f32.mrb[0].mxu0
      %v2071 = vadd.f32 0.0, %v2070
      %v2072 = vpop.f32.mrb[0].mxu0
      %v2073 = vpop.f32.mrb[0].mxu0
      %v2074 = vadd.f32 0.0, %v2073
      %v2075 = vpop.f32.mrb[0].mxu0
      %2076 = vmatprep.mubr.bf16.mxu0 %v1261
      %2077 = vmatmul.mubr.bf16.gmra.mrb[0].mxu0 %v1260
      %v2078 = vpop.f32.mrb[0].mxu0
      %v2079 = vadd.f32 0.0, %v2078
      %v2080 = vpop.f32.mrb[0].mxu0
      %v2081 = vpop.f32.mrb[0].mxu0
      %v2082 = vadd.f32 0.0, %v2081
      %v2083 = vpop.f32.mrb[0].mxu0
      %2084 = vmatprep.mubr.bf16.mxu0 %v1269
      %2085 = vmatmul.mubr.bf16.gmra.mrb[0].mxu0 %v1268
      %v2086 = vpop.f32.mrb[0].mxu0
      %v2087 = vadd.f32 0.0, %v2086
      %v2088 = vpop.f32.mrb[0].mxu0
      %v2089 = vpop.f32.mrb[0].mxu0
      %v2090 = vadd.f32 0.0, %v2089
      %v2091 = vpop.f32.mrb[0].mxu0
      %2092 = vmatprep.mubr.bf16.mxu0 %v1277
      %2093 = vmatmul.mubr.bf16.gmra.mrb[0].mxu0 %v1276
      %v2094 = vpop.f32.mrb[0].mxu0
      %v2095 = vadd.f32 0.0, %v2094
      %v2096 = vpop.f32.mrb[0].mxu0
      %v2097 = vpop.f32.mrb[0].mxu0
      %v2098 = vadd.f32 0.0, %v2097
      %v2099 = vpop.f32.mrb[0].mxu0
      %2100 = vmatprep.mubr.bf16.mxu0 %v1285
      %2101 = vmatmul.mubr.bf16.gmra.mrb[0].mxu0 %v1284
      %v2102 = vpop.f32.mrb[0].mxu0
      %v2103 = vadd.f32 0.0, %v2102
      %v2104 = vpop.f32.mrb[0].mxu0
      %v2105 = vpop.f32.mrb[0].mxu0
      %v2106 = vadd.f32 0.0, %v2105
      %v2107 = vpop.f32.mrb[0].mxu0
      %2108 = vmatprep.mubr.bf16.mxu0 %v1293
      %2109 = vmatmul.mubr.bf16.gmra.mrb[0].mxu0 %v1292
      %v2110 = vpop.f32.mrb[0].mxu0
      %v2111 = vadd.f32 0.0, %v2110
      %v2112 = vpop.f32.mrb[0].mxu0
      %v2113 = vpop.f32.mrb[0].mxu0
      %v2114 = vpop.f32.mrb[0].mxu0
      %2115 = vdwg.mxu0
      %2116 = vmatprep.subr.bf16.mxu0 0
      %2117 = vmatpush1.bf16.msra.mxu0 %v1772
      %2118 = vmatprep.subr.bf16.mxu0 0
      %2119 = vmatpush1.bf16.msra.mxu0 %v1773
      %2120 = vmatprep.subr.bf16.mxu0 0
      %2121 = vmatpush1.bf16.msra.mxu0 %v1774
      %2122 = vmatprep.subr.bf16.mxu0 0
      %2123 = vmatpush1.bf16.msra.mxu0 %v1775
      %2124 = vmatprep.subr.bf16.mxu0 0
      %2125 = vmatpush1.bf16.msra.mxu0 %v1776
      %2126 = vmatprep.subr.bf16.mxu0 0
      %2127 = vmatpush1.bf16.msra.mxu0 %v1777
      %2128 = vmatprep.subr.bf16.mxu0 0
      %2129 = vmatpush1.bf16.msra.mxu0 %v1778
      %2130 = vmatprep.subr.bf16.mxu0 0
      %2131 = vmatpush1.bf16.msra.mxu0 %v1779
      %2132 = vmatprep.subr.bf16.mxu0 0
      %2133 = vmatpush1.bf16.msra.mxu0 %v1780
      %2134 = vmatprep.subr.bf16.mxu0 0
      %2135 = vmatpush1.bf16.msra.mxu0 %v1781
      %2136 = vmatprep.subr.bf16.mxu0 0
      %2137 = vmatpush1.bf16.msra.mxu0 %v1782
      %2138 = vmatprep.subr.bf16.mxu0 0
      %2139 = vmatpush1.bf16.msra.mxu0 %v1783
      %2140 = vmatprep.subr.bf16.mxu0 0
      %2141 = vmatpush1.bf16.msra.mxu0 %v1784
      %2142 = vmatprep.subr.bf16.mxu0 0
      %2143 = vmatpush1.bf16.msra.mxu0 %v1785
      %2144 = vmatprep.subr.bf16.mxu0 0
      %2145 = vmatpush1.bf16.msra.mxu0 %v1786
      %2146 = vmatprep.subr.bf16.mxu0 0
      %2147 = vmatpush1.bf16.msra.mxu0 %v1787
      %2148 = vmatprep.mubr.bf16.mxu0 %v1103
      %2149 = vmatmul.mubr.bf16.gmra.mrb[0].mxu0 %v1102
      %v2150 = vpop.f32.mrb[0].mxu0
      %v2151 = vadd.f32 %v1919, %v2150
      %v2152 = vpop.f32.mrb[0].mxu0
      %v2153 = vpop.f32.mrb[0].mxu0
      %v2154 = vadd.f32 %v1922, %v2153
      %v2155 = vpop.f32.mrb[0].mxu0
      %2156 = vmatprep.mubr.bf16.mxu0 %v1111
      %2157 = vmatmul.mubr.bf16.gmra.mrb[0].mxu0 %v1110
      %v2158 = vpop.f32.mrb[0].mxu0
      %v2159 = vadd.f32 %v1927, %v2158
      %v2160 = vpop.f32.mrb[0].mxu0
      %v2161 = vpop.f32.mrb[0].mxu0
      %v2162 = vadd.f32 %v1930, %v2161
      %v2163 = vpop.f32.mrb[0].mxu0
      %2164 = vmatprep.mubr.bf16.mxu0 %v1119
      %2165 = vmatmul.mubr.bf16.gmra.mrb[0].mxu0 %v1118
      %v2166 = vpop.f32.mrb[0].mxu0
      %v2167 = vadd.f32 %v1935, %v2166
      %v2168 = vpop.f32.mrb[0].mxu0
      %v2169 = vpop.f32.mrb[0].mxu0
      %v2170 = vadd.f32 %v1938, %v2169
      %v2171 = vpop.f32.mrb[0].mxu0
      %2172 = vmatprep.mubr.bf16.mxu0 %v1127
      %2173 = vmatmul.mubr.bf16.gmra.mrb[0].mxu0 %v1126
      %v2174 = vpop.f32.mrb[0].mxu0
      %v2175 = vadd.f32 %v1943, %v2174
      %v2176 = vpop.f32.mrb[0].mxu0
      %v2177 = vpop.f32.mrb[0].mxu0
      %v2178 = vadd.f32 %v1946, %v2177
      %v2179 = vpop.f32.mrb[0].mxu0
      %2180 = vmatprep.mubr.bf16.mxu0 %v1135
      %2181 = vmatmul.mubr.bf16.gmra.mrb[0].mxu0 %v1134
      %v2182 = vpop.f32.mrb[0].mxu0
      %v2183 = vadd.f32 %v1951, %v2182
      %v2184 = vpop.f32.mrb[0].mxu0
      %v2185 = vpop.f32.mrb[0].mxu0
      %v2186 = vadd.f32 %v1954, %v2185
      %v2187 = vpop.f32.mrb[0].mxu0
      %2188 = vmatprep.mubr.bf16.mxu0 %v1143
      %2189 = vmatmul.mubr.bf16.gmra.mrb[0].mxu0 %v1142
      %v2190 = vpop.f32.mrb[0].mxu0
      %v2191 = vadd.f32 %v1959, %v2190
      %v2192 = vpop.f32.mrb[0].mxu0
      %v2193 = vpop.f32.mrb[0].mxu0
      %v2194 = vadd.f32 %v1962, %v2193
      %v2195 = vpop.f32.mrb[0].mxu0
      %2196 = vmatprep.mubr.bf16.mxu0 %v1151
      %2197 = vmatmul.mubr.bf16.gmra.mrb[0].mxu0 %v1150
      %v2198 = vpop.f32.mrb[0].mxu0
      %v2199 = vadd.f32 %v1967, %v2198
      %v2200 = vpop.f32.mrb[0].mxu0
      %v2201 = vpop.f32.mrb[0].mxu0
      %v2202 = vadd.f32 %v1970, %v2201
      %v2203 = vpop.f32.mrb[0].mxu0
      %2204 = vmatprep.mubr.bf16.mxu0 %v1159
      %2205 = vmatmul.mubr.bf16.gmra.mrb[0].mxu0 %v1158
      %v2206 = vpop.f32.mrb[0].mxu0
      %v2207 = vadd.f32 %v1975, %v2206
      %v2208 = vpop.f32.mrb[0].mxu0
      %v2209 = vpop.f32.mrb[0].mxu0
      %v2210 = vadd.f32 %v1978, %v2209
      %v2211 = vpop.f32.mrb[0].mxu0
      %2212 = vmatprep.mubr.bf16.mxu0 %v1167
      %2213 = vmatmul.mubr.bf16.gmra.mrb[0].mxu0 %v1166
      %v2214 = vpop.f32.mrb[0].mxu0
      %v2215 = vadd.f32 %v1983, %v2214
      %v2216 = vpop.f32.mrb[0].mxu0
      %v2217 = vpop.f32.mrb[0].mxu0
      %v2218 = vadd.f32 %v1986, %v2217
      %v2219 = vpop.f32.mrb[0].mxu0
      %2220 = vmatprep.mubr.bf16.mxu0 %v1175
      %2221 = vmatmul.mubr.bf16.gmra.mrb[0].mxu0 %v1174
      %v2222 = vpop.f32.mrb[0].mxu0
      %v2223 = vadd.f32 %v1991, %v2222
      %v2224 = vpop.f32.mrb[0].mxu0
      %v2225 = vpop.f32.mrb[0].mxu0
      %v2226 = vadd.f32 %v1994, %v2225
      %v2227 = vpop.f32.mrb[0].mxu0
      %2228 = vmatprep.mubr.bf16.mxu0 %v1183
      %2229 = vmatmul.mubr.bf16.gmra.mrb[0].mxu0 %v1182
      %v2230 = vpop.f32.mrb[0].mxu0
      %v2231 = vadd.f32 %v1999, %v2230
      %v2232 = vpop.f32.mrb[0].mxu0
      %v2233 = vpop.f32.mrb[0].mxu0
      %v2234 = vadd.f32 %v2002, %v2233
      %v2235 = vpop.f32.mrb[0].mxu0
      %2236 = vmatprep.mubr.bf16.mxu0 %v1191
      %2237 = vmatmul.mubr.bf16.gmra.mrb[0].mxu0 %v1190
      %v2238 = vpop.f32.mrb[0].mxu0
      %v2239 = vadd.f32 %v2007, %v2238
      %v2240 = vpop.f32.mrb[0].mxu0
      %v2241 = vpop.f32.mrb[0].mxu0
      %v2242 = vadd.f32 %v2010, %v2241
      %v2243 = vpop.f32.mrb[0].mxu0
      %2244 = vmatprep.mubr.bf16.mxu0 %v1199
      %2245 = vmatmul.mubr.bf16.gmra.mrb[0].mxu0 %v1198
      %v2246 = vpop.f32.mrb[0].mxu0
      %v2247 = vadd.f32 %v2015, %v2246
      %v2248 = vpop.f32.mrb[0].mxu0
      %v2249 = vpop.f32.mrb[0].mxu0
      %v2250 = vadd.f32 %v2018, %v2249
      %v2251 = vpop.f32.mrb[0].mxu0
      %2252 = vmatprep.mubr.bf16.mxu0 %v1207
      %2253 = vmatmul.mubr.bf16.gmra.mrb[0].mxu0 %v1206
      %v2254 = vpop.f32.mrb[0].mxu0
      %v2255 = vadd.f32 %v2023, %v2254
      %v2256 = vpop.f32.mrb[0].mxu0
      %v2257 = vpop.f32.mrb[0].mxu0
      %v2258 = vadd.f32 %v2026, %v2257
      %v2259 = vpop.f32.mrb[0].mxu0
      %2260 = vmatprep.mubr.bf16.mxu0 %v1215
      %2261 = vmatmul.mubr.bf16.gmra.mrb[0].mxu0 %v1214
      %v2262 = vpop.f32.mrb[0].mxu0
      %v2263 = vadd.f32 %v2031, %v2262
      %v2264 = vpop.f32.mrb[0].mxu0
      %v2265 = vpop.f32.mrb[0].mxu0
      %v2266 = vadd.f32 %v2034, %v2265
      %v2267 = vpop.f32.mrb[0].mxu0
      %2268 = vmatprep.mubr.bf16.mxu0 %v1223
      %2269 = vmatmul.mubr.bf16.gmra.mrb[0].mxu0 %v1222
      %v2270 = vpop.f32.mrb[0].mxu0
      %v2271 = vadd.f32 %v2039, %v2270
      %v2272 = vpop.f32.mrb[0].mxu0
      %v2273 = vpop.f32.mrb[0].mxu0
      %v2274 = vadd.f32 %v2042, %v2273
      %v2275 = vpop.f32.mrb[0].mxu0
      %2276 = vmatprep.mubr.bf16.mxu0 %v1231
      %2277 = vmatmul.mubr.bf16.gmra.mrb[0].mxu0 %v1230
      %v2278 = vpop.f32.mrb[0].mxu0
      %v2279 = vadd.f32 %v2047, %v2278
      %v2280 = vpop.f32.mrb[0].mxu0
      %v2281 = vpop.f32.mrb[0].mxu0
      %v2282 = vadd.f32 %v2050, %v2281
      %v2283 = vpop.f32.mrb[0].mxu0
      %2284 = vmatprep.mubr.bf16.mxu0 %v1239
      %2285 = vmatmul.mubr.bf16.gmra.mrb[0].mxu0 %v1238
      %v2286 = vpop.f32.mrb[0].mxu0
      %v2287 = vadd.f32 %v2055, %v2286
      %v2288 = vpop.f32.mrb[0].mxu0
      %v2289 = vpop.f32.mrb[0].mxu0
      %v2290 = vadd.f32 %v2058, %v2289
      %v2291 = vpop.f32.mrb[0].mxu0
      %2292 = vmatprep.mubr.bf16.mxu0 %v1247
      %2293 = vmatmul.mubr.bf16.gmra.mrb[0].mxu0 %v1246
      %v2294 = vpop.f32.mrb[0].mxu0
      %v2295 = vadd.f32 %v2063, %v2294
      %v2296 = vpop.f32.mrb[0].mxu0
      %v2297 = vpop.f32.mrb[0].mxu0
      %v2298 = vadd.f32 %v2066, %v2297
      %v2299 = vpop.f32.mrb[0].mxu0
      %2300 = vmatprep.mubr.bf16.mxu0 %v1255
      %2301 = vmatmul.mubr.bf16.gmra.mrb[0].mxu0 %v1254
      %v2302 = vpop.f32.mrb[0].mxu0
      %v2303 = vadd.f32 %v2071, %v2302
      %v2304 = vpop.f32.mrb[0].mxu0
      %v2305 = vpop.f32.mrb[0].mxu0
      %v2306 = vadd.f32 %v2074, %v2305
      %v2307 = vpop.f32.mrb[0].mxu0
      %2308 = vmatprep.mubr.bf16.mxu0 %v1263
      %2309 = vmatmul.mubr.bf16.gmra.mrb[0].mxu0 %v1262
      %v2310 = vpop.f32.mrb[0].mxu0
      %v2311 = vadd.f32 %v2079, %v2310
      %v2312 = vpop.f32.mrb[0].mxu0
      %v2313 = vpop.f32.mrb[0].mxu0
      %v2314 = vadd.f32 %v2082, %v2313
      %v2315 = vpop.f32.mrb[0].mxu0
      %2316 = vmatprep.mubr.bf16.mxu0 %v1271
      %2317 = vmatmul.mubr.bf16.gmra.mrb[0].mxu0 %v1270
      %v2318 = vpop.f32.mrb[0].mxu0
      %v2319 = vadd.f32 %v2087, %v2318
      %v2320 = vpop.f32.mrb[0].mxu0
      %v2321 = vpop.f32.mrb[0].mxu0
      %v2322 = vadd.f32 %v2090, %v2321
      %v2323 = vpop.f32.mrb[0].mxu0
      %2324 = vmatprep.mubr.bf16.mxu0 %v1279
      %2325 = vmatmul.mubr.bf16.gmra.mrb[0].mxu0 %v1278
      %v2326 = vpop.f32.mrb[0].mxu0
      %v2327 = vadd.f32 %v2095, %v2326
      %v2328 = vpop.f32.mrb[0].mxu0
      %v2329 = vpop.f32.mrb[0].mxu0
      %v2330 = vadd.f32 %v2098, %v2329
      %v2331 = vpop.f32.mrb[0].mxu0
      %2332 = vmatprep.mubr.bf16.mxu0 %v1287
      %2333 = vmatmul.mubr.bf16.gmra.mrb[0].mxu0 %v1286
      %v2334 = vpop.f32.mrb[0].mxu0
      %v2335 = vadd.f32 %v2103, %v2334
      %v2336 = vpop.f32.mrb[0].mxu0
      %v2337 = vpop.f32.mrb[0].mxu0
      %v2338 = vadd.f32 %v2106, %v2337
      %v2339 = vpop.f32.mrb[0].mxu0
      %2340 = vmatprep.mubr.bf16.mxu0 %v1295
      %2341 = vmatmul.mubr.bf16.gmra.mrb[0].mxu0 %v1294
      %v2342 = vpop.f32.mrb[0].mxu0
      %v2343 = vadd.f32 %v2111, %v2342
      %v2344 = vpop.f32.mrb[0].mxu0
      %v2345 = vpop.f32.mrb[0].mxu0
      %v2346 = vpop.f32.mrb[0].mxu0
      %2347 = vdwg.mxu0
      %2348 = vmatprep.subr.bf16.mxu0 0
      %2349 = vmatpush1.bf16.msra.mxu0 %v1788
      %2350 = vmatprep.subr.bf16.mxu0 0
      %2351 = vmatpush1.bf16.msra.mxu0 %v1789
      %2352 = vmatprep.subr.bf16.mxu0 0
      %2353 = vmatpush1.bf16.msra.mxu0 %v1790
      %2354 = vmatprep.subr.bf16.mxu0 0
      %2355 = vmatpush1.bf16.msra.mxu0 %v1791
      %2356 = vmatprep.subr.bf16.mxu0 0
      %2357 = vmatpush1.bf16.msra.mxu0 %v1792
      %2358 = vmatprep.subr.bf16.mxu0 0
      %2359 = vmatpush1.bf16.msra.mxu0 %v1793
      %2360 = vmatprep.subr.bf16.mxu0 0
      %2361 = vmatpush1.bf16.msra.mxu0 %v1794
      %2362 = vmatprep.subr.bf16.mxu0 0
      %2363 = vmatpush1.bf16.msra.mxu0 %v1795
      %2364 = vmatprep.subr.bf16.mxu0 0
      %2365 = vmatpush1.bf16.msra.mxu0 %v1796
      %2366 = vmatprep.subr.bf16.mxu0 0
      %2367 = vmatpush1.bf16.msra.mxu0 %v1797
      %2368 = vmatprep.subr.bf16.mxu0 0
      %2369 = vmatpush1.bf16.msra.mxu0 %v1798
      %2370 = vmatprep.subr.bf16.mxu0 0
      %2371 = vmatpush1.bf16.msra.mxu0 %v1799
      %2372 = vmatprep.subr.bf16.mxu0 0
      %2373 = vmatpush1.bf16.msra.mxu0 %v1800
      %2374 = vmatprep.subr.bf16.mxu0 0
      %2375 = vmatpush1.bf16.msra.mxu0 %v1801
      %2376 = vmatprep.subr.bf16.mxu0 0
      %2377 = vmatpush1.bf16.msra.mxu0 %v1802
      %2378 = vmatprep.subr.bf16.mxu0 0
      %2379 = vmatpush1.bf16.msra.mxu0 %v1803
      %2380 = vmatprep.mubr.bf16.mxu0 %v1105
      %2381 = vmatmul.mubr.bf16.gmra.mrb[0].mxu0 %v1104
      %v2382 = vpop.f32.mrb[0].mxu0
      %v2383 = vadd.f32 %v2151, %v2382
      %v2384 = vpop.f32.mrb[0].mxu0
      %v2385 = vpop.f32.mrb[0].mxu0
      %v2386 = vadd.f32 %v2154, %v2385
      %v2387 = vpop.f32.mrb[0].mxu0
      %2388 = vmatprep.mubr.bf16.mxu0 %v1113
      %2389 = vmatmul.mubr.bf16.gmra.mrb[0].mxu0 %v1112
      %v2390 = vpop.f32.mrb[0].mxu0
      %v2391 = vadd.f32 %v2159, %v2390
      %v2392 = vpop.f32.mrb[0].mxu0
      %v2393 = vpop.f32.mrb[0].mxu0
      %v2394 = vadd.f32 %v2162, %v2393
      %v2395 = vpop.f32.mrb[0].mxu0
      %2396 = vmatprep.mubr.bf16.mxu0 %v1121
      %2397 = vmatmul.mubr.bf16.gmra.mrb[0].mxu0 %v1120
      %v2398 = vpop.f32.mrb[0].mxu0
      %v2399 = vadd.f32 %v2167, %v2398
      %v2400 = vpop.f32.mrb[0].mxu0
      %v2401 = vpop.f32.mrb[0].mxu0
      %v2402 = vadd.f32 %v2170, %v2401
      %v2403 = vpop.f32.mrb[0].mxu0
      %2404 = vmatprep.mubr.bf16.mxu0 %v1129
      %2405 = vmatmul.mubr.bf16.gmra.mrb[0].mxu0 %v1128
      %v2406 = vpop.f32.mrb[0].mxu0
      %v2407 = vadd.f32 %v2175, %v2406
      %v2408 = vpop.f32.mrb[0].mxu0
      %v2409 = vpop.f32.mrb[0].mxu0
      %v2410 = vadd.f32 %v2178, %v2409
      %v2411 = vpop.f32.mrb[0].mxu0
      %2412 = vmatprep.mubr.bf16.mxu0 %v1137
      %2413 = vmatmul.mubr.bf16.gmra.mrb[0].mxu0 %v1136
      %v2414 = vpop.f32.mrb[0].mxu0
      %v2415 = vadd.f32 %v2183, %v2414
      %v2416 = vpop.f32.mrb[0].mxu0
      %v2417 = vpop.f32.mrb[0].mxu0
      %v2418 = vadd.f32 %v2186, %v2417
      %v2419 = vpop.f32.mrb[0].mxu0
      %2420 = vmatprep.mubr.bf16.mxu0 %v1145
      %2421 = vmatmul.mubr.bf16.gmra.mrb[0].mxu0 %v1144
      %v2422 = vpop.f32.mrb[0].mxu0
      %v2423 = vadd.f32 %v2191, %v2422
      %v2424 = vpop.f32.mrb[0].mxu0
      %v2425 = vpop.f32.mrb[0].mxu0
      %v2426 = vadd.f32 %v2194, %v2425
      %v2427 = vpop.f32.mrb[0].mxu0
      %2428 = vmatprep.mubr.bf16.mxu0 %v1153
      %2429 = vmatmul.mubr.bf16.gmra.mrb[0].mxu0 %v1152
      %v2430 = vpop.f32.mrb[0].mxu0
      %v2431 = vadd.f32 %v2199, %v2430
      %v2432 = vpop.f32.mrb[0].mxu0
      %v2433 = vpop.f32.mrb[0].mxu0
      %v2434 = vadd.f32 %v2202, %v2433
      %v2435 = vpop.f32.mrb[0].mxu0
      %2436 = vmatprep.mubr.bf16.mxu0 %v1161
      %2437 = vmatmul.mubr.bf16.gmra.mrb[0].mxu0 %v1160
      %v2438 = vpop.f32.mrb[0].mxu0
      %v2439 = vadd.f32 %v2207, %v2438
      %v2440 = vpop.f32.mrb[0].mxu0
      %v2441 = vpop.f32.mrb[0].mxu0
      %v2442 = vadd.f32 %v2210, %v2441
      %v2443 = vpop.f32.mrb[0].mxu0
      %2444 = vmatprep.mubr.bf16.mxu0 %v1169
      %2445 = vmatmul.mubr.bf16.gmra.mrb[0].mxu0 %v1168
      %v2446 = vpop.f32.mrb[0].mxu0
      %v2447 = vadd.f32 %v2215, %v2446
      %v2448 = vpop.f32.mrb[0].mxu0
      %v2449 = vpop.f32.mrb[0].mxu0
      %v2450 = vadd.f32 %v2218, %v2449
      %v2451 = vpop.f32.mrb[0].mxu0
      %2452 = vmatprep.mubr.bf16.mxu0 %v1177
      %2453 = vmatmul.mubr.bf16.gmra.mrb[0].mxu0 %v1176
      %v2454 = vpop.f32.mrb[0].mxu0
      %v2455 = vadd.f32 %v2223, %v2454
      %v2456 = vpop.f32.mrb[0].mxu0
      %v2457 = vpop.f32.mrb[0].mxu0
      %v2458 = vadd.f32 %v2226, %v2457
      %v2459 = vpop.f32.mrb[0].mxu0
      %2460 = vmatprep.mubr.bf16.mxu0 %v1185
      %2461 = vmatmul.mubr.bf16.gmra.mrb[0].mxu0 %v1184
      %v2462 = vpop.f32.mrb[0].mxu0
      %v2463 = vadd.f32 %v2231, %v2462
      %v2464 = vpop.f32.mrb[0].mxu0
      %v2465 = vpop.f32.mrb[0].mxu0
      %v2466 = vadd.f32 %v2234, %v2465
      %v2467 = vpop.f32.mrb[0].mxu0
      %2468 = vmatprep.mubr.bf16.mxu0 %v1193
      %2469 = vmatmul.mubr.bf16.gmra.mrb[0].mxu0 %v1192
      %v2470 = vpop.f32.mrb[0].mxu0
      %v2471 = vadd.f32 %v2239, %v2470
      %v2472 = vpop.f32.mrb[0].mxu0
      %v2473 = vpop.f32.mrb[0].mxu0
      %v2474 = vadd.f32 %v2242, %v2473
      %v2475 = vpop.f32.mrb[0].mxu0
      %2476 = vmatprep.mubr.bf16.mxu0 %v1201
      %2477 = vmatmul.mubr.bf16.gmra.mrb[0].mxu0 %v1200
      %v2478 = vpop.f32.mrb[0].mxu0
      %v2479 = vadd.f32 %v2247, %v2478
      %v2480 = vpop.f32.mrb[0].mxu0
      %v2481 = vpop.f32.mrb[0].mxu0
      %v2482 = vadd.f32 %v2250, %v2481
      %v2483 = vpop.f32.mrb[0].mxu0
      %2484 = vmatprep.mubr.bf16.mxu0 %v1209
      %2485 = vmatmul.mubr.bf16.gmra.mrb[0].mxu0 %v1208
      %v2486 = vpop.f32.mrb[0].mxu0
      %v2487 = vadd.f32 %v2255, %v2486
      %v2488 = vpop.f32.mrb[0].mxu0
      %v2489 = vpop.f32.mrb[0].mxu0
      %v2490 = vadd.f32 %v2258, %v2489
      %v2491 = vpop.f32.mrb[0].mxu0
      %2492 = vmatprep.mubr.bf16.mxu0 %v1217
      %2493 = vmatmul.mubr.bf16.gmra.mrb[0].mxu0 %v1216
      %v2494 = vpop.f32.mrb[0].mxu0
      %v2495 = vadd.f32 %v2263, %v2494
      %v2496 = vpop.f32.mrb[0].mxu0
      %v2497 = vpop.f32.mrb[0].mxu0
      %v2498 = vadd.f32 %v2266, %v2497
      %v2499 = vpop.f32.mrb[0].mxu0
      %2500 = vmatprep.mubr.bf16.mxu0 %v1225
      %2501 = vmatmul.mubr.bf16.gmra.mrb[0].mxu0 %v1224
      %v2502 = vpop.f32.mrb[0].mxu0
      %v2503 = vadd.f32 %v2271, %v2502
      %v2504 = vpop.f32.mrb[0].mxu0
      %v2505 = vpop.f32.mrb[0].mxu0
      %v2506 = vadd.f32 %v2274, %v2505
      %v2507 = vpop.f32.mrb[0].mxu0
      %2508 = vmatprep.mubr.bf16.mxu0 %v1233
      %2509 = vmatmul.mubr.bf16.gmra.mrb[0].mxu0 %v1232
      %v2510 = vpop.f32.mrb[0].mxu0
      %v2511 = vadd.f32 %v2279, %v2510
      %v2512 = vpop.f32.mrb[0].mxu0
      %v2513 = vpop.f32.mrb[0].mxu0
      %v2514 = vadd.f32 %v2282, %v2513
      %v2515 = vpop.f32.mrb[0].mxu0
      %2516 = vmatprep.mubr.bf16.mxu0 %v1241
      %2517 = vmatmul.mubr.bf16.gmra.mrb[0].mxu0 %v1240
      %v2518 = vpop.f32.mrb[0].mxu0
      %v2519 = vadd.f32 %v2287, %v2518
      %v2520 = vpop.f32.mrb[0].mxu0
      %v2521 = vpop.f32.mrb[0].mxu0
      %v2522 = vadd.f32 %v2290, %v2521
      %v2523 = vpop.f32.mrb[0].mxu0
      %2524 = vmatprep.mubr.bf16.mxu0 %v1249
      %2525 = vmatmul.mubr.bf16.gmra.mrb[0].mxu0 %v1248
      %v2526 = vpop.f32.mrb[0].mxu0
      %v2527 = vadd.f32 %v2295, %v2526
      %v2528 = vpop.f32.mrb[0].mxu0
      %v2529 = vpop.f32.mrb[0].mxu0
      %v2530 = vadd.f32 %v2298, %v2529
      %v2531 = vpop.f32.mrb[0].mxu0
      %2532 = vmatprep.mubr.bf16.mxu0 %v1257
      %2533 = vmatmul.mubr.bf16.gmra.mrb[0].mxu0 %v1256
      %v2534 = vpop.f32.mrb[0].mxu0
      %v2535 = vadd.f32 %v2303, %v2534
      %v2536 = vpop.f32.mrb[0].mxu0
      %v2537 = vpop.f32.mrb[0].mxu0
      %v2538 = vadd.f32 %v2306, %v2537
      %v2539 = vpop.f32.mrb[0].mxu0
      %2540 = vmatprep.mubr.bf16.mxu0 %v1265
      %2541 = vmatmul.mubr.bf16.gmra.mrb[0].mxu0 %v1264
      %v2542 = vpop.f32.mrb[0].mxu0
      %v2543 = vadd.f32 %v2311, %v2542
      %v2544 = vpop.f32.mrb[0].mxu0
      %v2545 = vpop.f32.mrb[0].mxu0
      %v2546 = vadd.f32 %v2314, %v2545
      %v2547 = vpop.f32.mrb[0].mxu0
      %2548 = vmatprep.mubr.bf16.mxu0 %v1273
      %2549 = vmatmul.mubr.bf16.gmra.mrb[0].mxu0 %v1272
      %v2550 = vpop.f32.mrb[0].mxu0
      %v2551 = vadd.f32 %v2319, %v2550
      %v2552 = vpop.f32.mrb[0].mxu0
      %v2553 = vpop.f32.mrb[0].mxu0
      %v2554 = vadd.f32 %v2322, %v2553
      %v2555 = vpop.f32.mrb[0].mxu0
      %2556 = vmatprep.mubr.bf16.mxu0 %v1281
      %2557 = vmatmul.mubr.bf16.gmra.mrb[0].mxu0 %v1280
      %v2558 = vpop.f32.mrb[0].mxu0
      %v2559 = vadd.f32 %v2327, %v2558
      %v2560 = vpop.f32.mrb[0].mxu0
      %v2561 = vpop.f32.mrb[0].mxu0
      %v2562 = vadd.f32 %v2330, %v2561
      %v2563 = vpop.f32.mrb[0].mxu0
      %2564 = vmatprep.mubr.bf16.mxu0 %v1289
      %2565 = vmatmul.mubr.bf16.gmra.mrb[0].mxu0 %v1288
      %v2566 = vpop.f32.mrb[0].mxu0
      %v2567 = vadd.f32 %v2335, %v2566
      %v2568 = vpop.f32.mrb[0].mxu0
      %v2569 = vpop.f32.mrb[0].mxu0
      %v2570 = vadd.f32 %v2338, %v2569
      %v2571 = vpop.f32.mrb[0].mxu0
      %2572 = vmatprep.mubr.bf16.mxu0 %v1297
      %2573 = vmatmul.mubr.bf16.gmra.mrb[0].mxu0 %v1296
      %v2574 = vpop.f32.mrb[0].mxu0
      %v2575 = vadd.f32 %v2343, %v2574
      %v2576 = vpop.f32.mrb[0].mxu0
      %v2577 = vpop.f32.mrb[0].mxu0
      %v2578 = vpop.f32.mrb[0].mxu0
      %2579 = vdwg.mxu0
      %2580 = vmatprep.subr.bf16.mxu0 0
      %2581 = vmatpush1.bf16.msra.mxu0 %v1804
      %2582 = vmatprep.subr.bf16.mxu0 0
      %2583 = vmatpush1.bf16.msra.mxu0 %v1805
      %2584 = vmatprep.subr.bf16.mxu0 0
      %2585 = vmatpush1.bf16.msra.mxu0 %v1806
      %2586 = vmatprep.subr.bf16.mxu0 0
      %2587 = vmatpush1.bf16.msra.mxu0 %v1807
      %2588 = vmatprep.subr.bf16.mxu0 0
      %2589 = vmatpush1.bf16.msra.mxu0 %v1808
      %2590 = vmatprep.subr.bf16.mxu0 0
      %2591 = vmatpush1.bf16.msra.mxu0 %v1809
      %2592 = vmatprep.subr.bf16.mxu0 0
      %2593 = vmatpush1.bf16.msra.mxu0 %v1810
      %2594 = vmatprep.subr.bf16.mxu0 0
      %2595 = vmatpush1.bf16.msra.mxu0 %v1811
      %2596 = vmatprep.subr.bf16.mxu0 0
      %2597 = vmatpush1.bf16.msra.mxu0 %v1812
      %2598 = vmatprep.subr.bf16.mxu0 0
      %2599 = vmatpush1.bf16.msra.mxu0 %v1813
      %2600 = vmatprep.subr.bf16.mxu0 0
      %2601 = vmatpush1.bf16.msra.mxu0 %v1814
      %2602 = vmatprep.subr.bf16.mxu0 0
      %2603 = vmatpush1.bf16.msra.mxu0 %v1815
      %2604 = vmatprep.subr.bf16.mxu0 0
      %2605 = vmatpush1.bf16.msra.mxu0 %v1816
      %2606 = vmatprep.subr.bf16.mxu0 0
      %2607 = vmatpush1.bf16.msra.mxu0 %v1817
      %2608 = vmatprep.subr.bf16.mxu0 0
      %2609 = vmatpush1.bf16.msra.mxu0 %v1818
      %2610 = vmatprep.subr.bf16.mxu0 0
      %2611 = vmatpush1.bf16.msra.mxu0 %v1819
      %2612 = vmatprep.mubr.bf16.mxu0 %v1107
      %2613 = vmatmul.mubr.bf16.gmra.mrb[0].mxu0 %v1106
      %v2614 = vpop.f32.mrb[0].mxu0
      %v2615 = vadd.f32 %v2383, %v2614
      %v2616 = vpop.f32.mrb[0].mxu0
      %v2617 = vpop.f32.mrb[0].mxu0
      %v2618 = vadd.f32 %v2386, %v2617
      %v2619 = vpop.f32.mrb[0].mxu0
      %2620 = vmatprep.mubr.bf16.mxu0 %v1115
      %2621 = vmatmul.mubr.bf16.gmra.mrb[0].mxu0 %v1114
      %v2622 = vpop.f32.mrb[0].mxu0
      %v2623 = vadd.f32 %v2391, %v2622
      %v2624 = vpop.f32.mrb[0].mxu0
      %v2625 = vpop.f32.mrb[0].mxu0
      %v2626 = vadd.f32 %v2394, %v2625
      %v2627 = vpop.f32.mrb[0].mxu0
      %2628 = vmatprep.mubr.bf16.mxu0 %v1123
      %2629 = vmatmul.mubr.bf16.gmra.mrb[0].mxu0 %v1122
      %v2630 = vpop.f32.mrb[0].mxu0
      %v2631 = vadd.f32 %v2399, %v2630
      %v2632 = vpop.f32.mrb[0].mxu0
      %v2633 = vpop.f32.mrb[0].mxu0
      %v2634 = vadd.f32 %v2402, %v2633
      %v2635 = vpop.f32.mrb[0].mxu0
      %2636 = vmatprep.mubr.bf16.mxu0 %v1131
      %2637 = vmatmul.mubr.bf16.gmra.mrb[0].mxu0 %v1130
      %v2638 = vpop.f32.mrb[0].mxu0
      %v2639 = vadd.f32 %v2407, %v2638
      %v2640 = vpop.f32.mrb[0].mxu0
      %v2641 = vpop.f32.mrb[0].mxu0
      %v2642 = vadd.f32 %v2410, %v2641
      %v2643 = vpop.f32.mrb[0].mxu0
      %2644 = vmatprep.mubr.bf16.mxu0 %v1139
      %2645 = vmatmul.mubr.bf16.gmra.mrb[0].mxu0 %v1138
      %v2646 = vpop.f32.mrb[0].mxu0
      %v2647 = vadd.f32 %v2415, %v2646
      %v2648 = vpop.f32.mrb[0].mxu0
      %v2649 = vpop.f32.mrb[0].mxu0
      %v2650 = vadd.f32 %v2418, %v2649
      %v2651 = vpop.f32.mrb[0].mxu0
      %2652 = vmatprep.mubr.bf16.mxu0 %v1147
      %2653 = vmatmul.mubr.bf16.gmra.mrb[0].mxu0 %v1146
      %v2654 = vpop.f32.mrb[0].mxu0
      %v2655 = vadd.f32 %v2423, %v2654
      %v2656 = vpop.f32.mrb[0].mxu0
      %v2657 = vpop.f32.mrb[0].mxu0
      %v2658 = vadd.f32 %v2426, %v2657
      %v2659 = vpop.f32.mrb[0].mxu0
      %2660 = vmatprep.mubr.bf16.mxu0 %v1155
      %2661 = vmatmul.mubr.bf16.gmra.mrb[0].mxu0 %v1154
      %v2662 = vpop.f32.mrb[0].mxu0
      %v2663 = vadd.f32 %v2431, %v2662
      %v2664 = vpop.f32.mrb[0].mxu0
      %v2665 = vpop.f32.mrb[0].mxu0
      %v2666 = vadd.f32 %v2434, %v2665
      %v2667 = vpop.f32.mrb[0].mxu0
      %2668 = vmatprep.mubr.bf16.mxu0 %v1163
      %2669 = vmatmul.mubr.bf16.gmra.mrb[0].mxu0 %v1162
      %v2670 = vpop.f32.mrb[0].mxu0
      %v2671 = vadd.f32 %v2439, %v2670
      %v2672 = vpop.f32.mrb[0].mxu0
      %v2673 = vpop.f32.mrb[0].mxu0
      %v2674 = vadd.f32 %v2442, %v2673
      %v2675 = vpop.f32.mrb[0].mxu0
      %2676 = vmatprep.mubr.bf16.mxu0 %v1171
      %2677 = vmatmul.mubr.bf16.gmra.mrb[0].mxu0 %v1170
      %v2678 = vpop.f32.mrb[0].mxu0
      %v2679 = vadd.f32 %v2447, %v2678
      %v2680 = vpop.f32.mrb[0].mxu0
      %v2681 = vpop.f32.mrb[0].mxu0
      %v2682 = vadd.f32 %v2450, %v2681
      %v2683 = vpop.f32.mrb[0].mxu0
      %2684 = vmatprep.mubr.bf16.mxu0 %v1179
      %2685 = vmatmul.mubr.bf16.gmra.mrb[0].mxu0 %v1178
      %v2686 = vpop.f32.mrb[0].mxu0
      %v2687 = vadd.f32 %v2455, %v2686
      %v2688 = vpop.f32.mrb[0].mxu0
      %v2689 = vpop.f32.mrb[0].mxu0
      %v2690 = vadd.f32 %v2458, %v2689
      %v2691 = vpop.f32.mrb[0].mxu0
      %2692 = vmatprep.mubr.bf16.mxu0 %v1187
      %2693 = vmatmul.mubr.bf16.gmra.mrb[0].mxu0 %v1186
      %v2694 = vpop.f32.mrb[0].mxu0
      %v2695 = vadd.f32 %v2463, %v2694
      %v2696 = vpop.f32.mrb[0].mxu0
      %v2697 = vpop.f32.mrb[0].mxu0
      %v2698 = vadd.f32 %v2466, %v2697
      %v2699 = vpop.f32.mrb[0].mxu0
      %2700 = vmatprep.mubr.bf16.mxu0 %v1195
      %2701 = vmatmul.mubr.bf16.gmra.mrb[0].mxu0 %v1194
      %v2702 = vpop.f32.mrb[0].mxu0
      %v2703 = vadd.f32 %v2471, %v2702
      %v2704 = vpop.f32.mrb[0].mxu0
      %v2705 = vpop.f32.mrb[0].mxu0
      %v2706 = vadd.f32 %v2474, %v2705
      %v2707 = vpop.f32.mrb[0].mxu0
      %2708 = vmatprep.mubr.bf16.mxu0 %v1203
      %2709 = vmatmul.mubr.bf16.gmra.mrb[0].mxu0 %v1202
      %v2710 = vpop.f32.mrb[0].mxu0
      %v2711 = vadd.f32 %v2479, %v2710
      %v2712 = vpop.f32.mrb[0].mxu0
      %v2713 = vpop.f32.mrb[0].mxu0
      %v2714 = vadd.f32 %v2482, %v2713
      %v2715 = vpop.f32.mrb[0].mxu0
      %2716 = vmatprep.mubr.bf16.mxu0 %v1211
      %2717 = vmatmul.mubr.bf16.gmra.mrb[0].mxu0 %v1210
      %v2718 = vpop.f32.mrb[0].mxu0
      %v2719 = vadd.f32 %v2487, %v2718
      %v2720 = vpop.f32.mrb[0].mxu0
      %v2721 = vpop.f32.mrb[0].mxu0
      %v2722 = vadd.f32 %v2490, %v2721
      %v2723 = vpop.f32.mrb[0].mxu0
      %2724 = vmatprep.mubr.bf16.mxu0 %v1219
      %2725 = vmatmul.mubr.bf16.gmra.mrb[0].mxu0 %v1218
      %v2726 = vpop.f32.mrb[0].mxu0
      %v2727 = vadd.f32 %v2495, %v2726
      %v2728 = vpop.f32.mrb[0].mxu0
      %v2729 = vpop.f32.mrb[0].mxu0
      %v2730 = vadd.f32 %v2498, %v2729
      %v2731 = vpop.f32.mrb[0].mxu0
      %2732 = vmatprep.mubr.bf16.mxu0 %v1227
      %2733 = vmatmul.mubr.bf16.gmra.mrb[0].mxu0 %v1226
      %v2734 = vpop.f32.mrb[0].mxu0
      %v2735 = vadd.f32 %v2503, %v2734
      %v2736 = vpop.f32.mrb[0].mxu0
      %v2737 = vpop.f32.mrb[0].mxu0
      %v2738 = vadd.f32 %v2506, %v2737
      %v2739 = vpop.f32.mrb[0].mxu0
      %2740 = vmatprep.mubr.bf16.mxu0 %v1235
      %2741 = vmatmul.mubr.bf16.gmra.mrb[0].mxu0 %v1234
      %v2742 = vpop.f32.mrb[0].mxu0
      %v2743 = vadd.f32 %v2511, %v2742
      %v2744 = vpop.f32.mrb[0].mxu0
      %v2745 = vpop.f32.mrb[0].mxu0
      %v2746 = vadd.f32 %v2514, %v2745
      %v2747 = vpop.f32.mrb[0].mxu0
      %2748 = vmatprep.mubr.bf16.mxu0 %v1243
      %2749 = vmatmul.mubr.bf16.gmra.mrb[0].mxu0 %v1242
      %v2750 = vpop.f32.mrb[0].mxu0
      %v2751 = vadd.f32 %v2519, %v2750
      %v2752 = vpop.f32.mrb[0].mxu0
      %v2753 = vpop.f32.mrb[0].mxu0
      %v2754 = vadd.f32 %v2522, %v2753
      %v2755 = vpop.f32.mrb[0].mxu0
      %2756 = vmatprep.mubr.bf16.mxu0 %v1251
      %2757 = vmatmul.mubr.bf16.gmra.mrb[0].mxu0 %v1250
      %v2758 = vpop.f32.mrb[0].mxu0
      %v2759 = vadd.f32 %v2527, %v2758
      %v2760 = vpop.f32.mrb[0].mxu0
      %v2761 = vpop.f32.mrb[0].mxu0
      %v2762 = vadd.f32 %v2530, %v2761
      %v2763 = vpop.f32.mrb[0].mxu0
      %2764 = vmatprep.mubr.bf16.mxu0 %v1259
      %2765 = vmatmul.mubr.bf16.gmra.mrb[0].mxu0 %v1258
      %v2766 = vpop.f32.mrb[0].mxu0
      %v2767 = vadd.f32 %v2535, %v2766
      %v2768 = vpop.f32.mrb[0].mxu0
      %v2769 = vpop.f32.mrb[0].mxu0
      %v2770 = vadd.f32 %v2538, %v2769
      %v2771 = vpop.f32.mrb[0].mxu0
      %2772 = vmatprep.mubr.bf16.mxu0 %v1267
      %2773 = vmatmul.mubr.bf16.gmra.mrb[0].mxu0 %v1266
      %v2774 = vpop.f32.mrb[0].mxu0
      %v2775 = vadd.f32 %v2543, %v2774
      %v2776 = vpop.f32.mrb[0].mxu0
      %v2777 = vpop.f32.mrb[0].mxu0
      %v2778 = vadd.f32 %v2546, %v2777
      %v2779 = vpop.f32.mrb[0].mxu0
      %2780 = vmatprep.mubr.bf16.mxu0 %v1275
      %2781 = vmatmul.mubr.bf16.gmra.mrb[0].mxu0 %v1274
      %v2782 = vpop.f32.mrb[0].mxu0
      %v2783 = vadd.f32 %v2551, %v2782
      %v2784 = vpop.f32.mrb[0].mxu0
      %v2785 = vpop.f32.mrb[0].mxu0
      %v2786 = vadd.f32 %v2554, %v2785
      %v2787 = vpop.f32.mrb[0].mxu0
      %2788 = vmatprep.mubr.bf16.mxu0 %v1283
      %2789 = vmatmul.mubr.bf16.gmra.mrb[0].mxu0 %v1282
      %v2790 = vpop.f32.mrb[0].mxu0
      %v2791 = vadd.f32 %v2559, %v2790
      %v2792 = vpop.f32.mrb[0].mxu0
      %v2793 = vpop.f32.mrb[0].mxu0
      %v2794 = vadd.f32 %v2562, %v2793
      %v2795 = vpop.f32.mrb[0].mxu0
      %2796 = vmatprep.mubr.bf16.mxu0 %v1291
      %2797 = vmatmul.mubr.bf16.gmra.mrb[0].mxu0 %v1290
      %v2798 = vpop.f32.mrb[0].mxu0
      %v2799 = vadd.f32 %v2567, %v2798
      %v2800 = vpop.f32.mrb[0].mxu0
      %v2801 = vpop.f32.mrb[0].mxu0
      %v2802 = vadd.f32 %v2570, %v2801
      %v2803 = vpop.f32.mrb[0].mxu0
      %2804 = vmatprep.mubr.bf16.mxu0 %v1299
      %2805 = vmatmul.mubr.bf16.gmra.mrb[0].mxu0 %v1298
      %v2806 = vpop.f32.mrb[0].mxu0
      %v2807 = vadd.f32 %v2575, %v2806
      %v2808 = vpop.f32.mrb[0].mxu0
      %v2809 = vpop.f32.mrb[0].mxu0
      %v2810 = vpop.f32.mrb[0].mxu0
      %2811 = vdwg.mxu0
      %v2812 = vmax.f32 %v2615, 0.0
      %v2813 = vmax.f32 %v2618, 0.0
      %v2814 = vmax.f32 %v2623, 0.0
      %v2815 = vmax.f32 %v2626, 0.0
      %v2816 = vmax.f32 %v2631, 0.0
      %v2817 = vmax.f32 %v2634, 0.0
      %v2818 = vmax.f32 %v2639, 0.0
      %v2819 = vmax.f32 %v2642, 0.0
      %v2820 = vmax.f32 %v2647, 0.0
      %v2821 = vmax.f32 %v2650, 0.0
      %v2822 = vmax.f32 %v2655, 0.0
      %v2823 = vmax.f32 %v2658, 0.0
      %v2824 = vmax.f32 %v2663, 0.0
      %v2825 = vmax.f32 %v2666, 0.0
      %v2826 = vmax.f32 %v2671, 0.0
      %v2827 = vmax.f32 %v2674, 0.0
      %v2828 = vmax.f32 %v2679, 0.0
      %v2829 = vmax.f32 %v2682, 0.0
      %v2830 = vmax.f32 %v2687, 0.0
      %v2831 = vmax.f32 %v2690, 0.0
      %v2832 = vmax.f32 %v2695, 0.0
      %v2833 = vmax.f32 %v2698, 0.0
      %v2834 = vmax.f32 %v2703, 0.0
      %v2835 = vmax.f32 %v2706, 0.0
      %v2836 = vmax.f32 %v2711, 0.0
      %v2837 = vmax.f32 %v2714, 0.0
      %v2838 = vmax.f32 %v2719, 0.0
      %v2839 = vmax.f32 %v2722, 0.0
      %v2840 = vmax.f32 %v2727, 0.0
      %v2841 = vmax.f32 %v2730, 0.0
      %v2842 = vmax.f32 %v2735, 0.0
      %v2843 = vmax.f32 %v2738, 0.0
      %v2844 = vmax.f32 %v2743, 0.0
      %v2845 = vmax.f32 %v2746, 0.0
      %v2846 = vmax.f32 %v2751, 0.0
      %v2847 = vmax.f32 %v2754, 0.0
      %v2848 = vmax.f32 %v2759, 0.0
      %v2849 = vmax.f32 %v2762, 0.0
      %v2850 = vmax.f32 %v2767, 0.0
      %v2851 = vmax.f32 %v2770, 0.0
      %v2852 = vmax.f32 %v2775, 0.0
      %v2853 = vmax.f32 %v2778, 0.0
      %v2854 = vmax.f32 %v2783, 0.0
      %v2855 = vmax.f32 %v2786, 0.0
      %v2856 = vmax.f32 %v2791, 0.0
      %v2857 = vmax.f32 %v2794, 0.0
      %v2858 = vmax.f32 %v2799, 0.0
      %v2859 = vmax.f32 %v2802, 0.0
      %v2860 = vmax.f32 %v2807, 0.0
      %v2861 = vpack.c.bf16 %v2813, %v2812
      %v2862 = vpack.c.bf16 %v2815, %v2814
      %v2863 = vpack.c.bf16 %v2817, %v2816
      %v2864 = vpack.c.bf16 %v2819, %v2818
      %v2865 = vpack.c.bf16 %v2821, %v2820
      %v2866 = vpack.c.bf16 %v2823, %v2822
      %v2867 = vpack.c.bf16 %v2825, %v2824
      %v2868 = vpack.c.bf16 %v2827, %v2826
      %v2869 = vpack.c.bf16 %v2829, %v2828
      %v2870 = vpack.c.bf16 %v2831, %v2830
      %v2871 = vpack.c.bf16 %v2833, %v2832
      %v2872 = vpack.c.bf16 %v2835, %v2834
      %v2873 = vpack.c.bf16 %v2837, %v2836
      %v2874 = vpack.c.bf16 %v2839, %v2838
      %v2875 = vpack.c.bf16 %v2841, %v2840
      %v2876 = vpack.c.bf16 %v2843, %v2842
      %v2877 = vpack.c.bf16 %v2845, %v2844
      %v2878 = vpack.c.bf16 %v2847, %v2846
      %v2879 = vpack.c.bf16 %v2849, %v2848
      %v2880 = vpack.c.bf16 %v2851, %v2850
      %v2881 = vpack.c.bf16 %v2853, %v2852
      %v2882 = vpack.c.bf16 %v2855, %v2854
      %v2883 = vpack.c.bf16 %v2857, %v2856
      %v2884 = vpack.c.bf16 %v2859, %v2858
      %v2885 = vpack.c.bf16 %v2860, %v2860
      %v2911 = vunpack.c.l.b16 %v2861
      %v2912 = vunpack.c.h.b16 %v2861
      %v2913 = vunpack.c.l.b16 %v2862
      %v2914 = vunpack.c.h.b16 %v2862
      %v2915 = vunpack.c.l.b16 %v2863
      %v2916 = vunpack.c.h.b16 %v2863
      %v2917 = vunpack.c.l.b16 %v2864
      %v2918 = vunpack.c.h.b16 %v2864
      %v2919 = vunpack.c.l.b16 %v2865
      %v2920 = vunpack.c.h.b16 %v2865
      %v2921 = vunpack.c.l.b16 %v2866
      %v2922 = vunpack.c.h.b16 %v2866
      %v2923 = vunpack.c.l.b16 %v2867
      %v2924 = vunpack.c.h.b16 %v2867
      %v2925 = vunpack.c.l.b16 %v2868
      %v2926 = vunpack.c.h.b16 %v2868
      %v2927 = vunpack.c.l.b16 %v2869
      %v2928 = vunpack.c.h.b16 %v2869
      %v2929 = vunpack.c.l.b16 %v2870
      %v2930 = vunpack.c.h.b16 %v2870
      %v2931 = vunpack.c.l.b16 %v2871
      %v2932 = vunpack.c.h.b16 %v2871
      %v2933 = vunpack.c.l.b16 %v2872
      %v2934 = vunpack.c.h.b16 %v2872
      %v2935 = vunpack.c.l.b16 %v2873
      %v2936 = vunpack.c.h.b16 %v2873
      %v2937 = vunpack.c.l.b16 %v2874
      %v2938 = vunpack.c.h.b16 %v2874
      %v2939 = vunpack.c.l.b16 %v2875
      %v2940 = vunpack.c.h.b16 %v2875
      %v2941 = vunpack.c.l.b16 %v2876
      %v2942 = vunpack.c.h.b16 %v2876
      %v2943 = vunpack.c.l.b16 %v2877
      %v2944 = vunpack.c.h.b16 %v2877
      %v2945 = vunpack.c.l.b16 %v2878
      %v2946 = vunpack.c.h.b16 %v2878
      %v2947 = vunpack.c.l.b16 %v2879
      %v2948 = vunpack.c.h.b16 %v2879
      %v2949 = vunpack.c.l.b16 %v2880
      %v2950 = vunpack.c.h.b16 %v2880
      %v2951 = vunpack.c.l.b16 %v2881
      %v2952 = vunpack.c.h.b16 %v2881
      %v2953 = vunpack.c.l.b16 %v2882
      %v2954 = vunpack.c.h.b16 %v2882
      %v2955 = vunpack.c.l.b16 %v2883
      %v2956 = vunpack.c.h.b16 %v2883
      %v2957 = vunpack.c.l.b16 %v2884
      %v2958 = vunpack.c.h.b16 %v2884
      %v2959 = vunpack.c.l.b16 %v2885
      %v2960 = vpack.c.b16 %v2911, %v2911
      %v2961 = vpack.c.b16 %v2912, %v2912
      %v2962 = vpack.c.b16 %v2913, %v2913
      %v2963 = vpack.c.b16 %v2914, %v2914
      %v2964 = vpack.c.b16 %v2915, %v2915
      %v2965 = vpack.c.b16 %v2916, %v2916
      %v2966 = vpack.c.b16 %v2917, %v2917
      %v2967 = vpack.c.b16 %v2918, %v2918
      %v2968 = vpack.c.b16 %v2919, %v2919
      %v2969 = vpack.c.b16 %v2920, %v2920
      %v2970 = vpack.c.b16 %v2921, %v2921
      %v2971 = vpack.c.b16 %v2922, %v2922
      %v2972 = vpack.c.b16 %v2923, %v2923
      %v2973 = vpack.c.b16 %v2924, %v2924
      %v2974 = vpack.c.b16 %v2925, %v2925
      %v2975 = vpack.c.b16 %v2926, %v2926
      %v2976 = vpack.c.b16 %v2927, %v2927
      %v2977 = vpack.c.b16 %v2928, %v2928
      %v2978 = vpack.c.b16 %v2929, %v2929
      %v2979 = vpack.c.b16 %v2930, %v2930
      %v2980 = vpack.c.b16 %v2931, %v2931
      %v2981 = vpack.c.b16 %v2932, %v2932
      %v2982 = vpack.c.b16 %v2933, %v2933
      %v2983 = vpack.c.b16 %v2934, %v2934
      %v2984 = vpack.c.b16 %v2935, %v2935
      %v2985 = vpack.c.b16 %v2936, %v2936
      %v2986 = vpack.c.b16 %v2937, %v2937
      %v2987 = vpack.c.b16 %v2938, %v2938
      %v2988 = vpack.c.b16 %v2939, %v2939
      %v2989 = vpack.c.b16 %v2940, %v2940
      %v2990 = vpack.c.b16 %v2941, %v2941
      %v2991 = vpack.c.b16 %v2942, %v2942
      %v2992 = vpack.c.b16 %v2943, %v2943
      %v2993 = vpack.c.b16 %v2944, %v2944
      %v2994 = vpack.c.b16 %v2945, %v2945
      %v2995 = vpack.c.b16 %v2946, %v2946
      %v2996 = vpack.c.b16 %v2947, %v2947
      %v2997 = vpack.c.b16 %v2948, %v2948
      %v2998 = vpack.c.b16 %v2949, %v2949
      %v2999 = vpack.c.b16 %v2950, %v2950
      %v3000 = vpack.c.b16 %v2951, %v2951
      %v3001 = vpack.c.b16 %v2952, %v2952
      %v3002 = vpack.c.b16 %v2953, %v2953
      %v3003 = vpack.c.b16 %v2954, %v2954
      %v3004 = vpack.c.b16 %v2955, %v2955
      %v3005 = vpack.c.b16 %v2956, %v2956
      %v3006 = vpack.c.b16 %v2957, %v2957
      %v3007 = vpack.c.b16 %v2958, %v2958
      %v3008 = vpack.c.b16 %v2959, %v2959
      %3058 = vst [vmem:[%s185] sm:$0xf] %v2960
      %3059 = vst [vmem:[%s185 + $0x4] sm:$0xf] %v2961
      %3060 = vst [vmem:[%s185 + $0x8] sm:$0xf] %v2962
      %3061 = vst [vmem:[%s185 + $0xc] sm:$0xf] %v2963
      %3062 = vst [vmem:[%s185 + $0x10] sm:$0xf] %v2964
      %3063 = vst [vmem:[%s185 + $0x14] sm:$0xf] %v2965
      %3064 = vst [vmem:[%s185 + $0x18] sm:$0xf] %v2966
      %3065 = vst [vmem:[%s185 + $0x1c] sm:$0xf] %v2967
      %3066 = vst [vmem:[%s185 + $0x20] sm:$0xf] %v2968
      %3067 = vst [vmem:[%s185 + $0x24] sm:$0xf] %v2969
      %3068 = vst [vmem:[%s185 + $0x28] sm:$0xf] %v2970
      %3069 = vst [vmem:[%s185 + $0x2c] sm:$0xf] %v2971
      %3070 = vst [vmem:[%s185 + $0x30] sm:$0xf] %v2972
      %3071 = vst [vmem:[%s185 + $0x34] sm:$0xf] %v2973
      %3072 = vst [vmem:[%s185 + $0x38] sm:$0xf] %v2974
      %3073 = vst [vmem:[%s185 + $0x3c] sm:$0xf] %v2975
      %3074 = vst [vmem:[%s185 + $0x40] sm:$0xf] %v2976
      %3075 = vst [vmem:[%s185 + $0x44] sm:$0xf] %v2977
      %3076 = vst [vmem:[%s185 + $0x48] sm:$0xf] %v2978
      %3077 = vst [vmem:[%s185 + $0x4c] sm:$0xf] %v2979
      %3078 = vst [vmem:[%s185 + $0x50] sm:$0xf] %v2980
      %3079 = vst [vmem:[%s185 + $0x54] sm:$0xf] %v2981
      %3080 = vst [vmem:[%s185 + $0x58] sm:$0xf] %v2982
      %3081 = vst [vmem:[%s185 + $0x5c] sm:$0xf] %v2983
      %3082 = vst [vmem:[%s185 + $0x60] sm:$0xf] %v2984
      %3083 = vst [vmem:[%s185 + $0x64] sm:$0xf] %v2985
      %3084 = vst [vmem:[%s185 + $0x68] sm:$0xf] %v2986
      %3085 = vst [vmem:[%s185 + $0x6c] sm:$0xf] %v2987
      %3086 = vst [vmem:[%s185 + $0x70] sm:$0xf] %v2988
      %3087 = vst [vmem:[%s185 + $0x74] sm:$0xf] %v2989
      %3088 = vst [vmem:[%s185 + $0x78] sm:$0xf] %v2990
      %3089 = vst [vmem:[%s185 + $0x7c] sm:$0xf] %v2991
      %3090 = vst [vmem:[%s185 + $0x80] sm:$0xf] %v2992
      %3091 = vst [vmem:[%s185 + $0x84] sm:$0xf] %v2993
      %3092 = vst [vmem:[%s185 + $0x88] sm:$0xf] %v2994
      %3093 = vst [vmem:[%s185 + $0x8c] sm:$0xf] %v2995
      %3094 = vst [vmem:[%s185 + $0x90] sm:$0xf] %v2996
      %3095 = vst [vmem:[%s185 + $0x94] sm:$0xf] %v2997
      %3096 = vst [vmem:[%s185 + $0x98] sm:$0xf] %v2998
      %3097 = vst [vmem:[%s185 + $0x9c] sm:$0xf] %v2999
      %3098 = vst [vmem:[%s185 + $0xa0] sm:$0xf] %v3000
      %3099 = vst [vmem:[%s185 + $0xa4] sm:$0xf] %v3001
      %3100 = vst [vmem:[%s185 + $0xa8] sm:$0xf] %v3002
      %3101 = vst [vmem:[%s185 + $0xac] sm:$0xf] %v3003
      %3102 = vst [vmem:[%s185 + $0xb0] sm:$0xf] %v3004
      %3103 = vst [vmem:[%s185 + $0xb4] sm:$0xf] %v3005
      %3104 = vst [vmem:[%s185 + $0xb8] sm:$0xf] %v3006
      %3105 = vst [vmem:[%s185 + $0xbc] sm:$0xf] %v3007
      %3106 = vst [vmem:[%s185 + $0xc0] sm:$0xf] %v3008
      %s3107 = smul.u32 49, %s17
      %p3108 = scmp.lt.s32.totalorder %s3107, 195
      %s3109 = scalar_select %p3108, %s3107, 195
      %p3110 = scmp.lt.s32.totalorder %s18, 0
      %s3111 = scalar_select %p3110, %s18, 0
      %s3112 = sadd.s32 %s3111, %s3109
      %s3113 = smul.addr %s3112, 4
      %s3114 = scalar_lea.vmem %s2, %s3113
      // Predicated region
      $region29: #{gabor_cnn7_forward.9} parent=27 // pred_check
        %p3115 = pneg %p97
      $region30: #{gabor_cnn7_forward.9} parent=27 // pred_check_branch
        %3117 = sbr.rel (%p3115) target = $region32
      $region31: #{gabor_cnn7_forward.9} parent=27 // pred_region
        %s3118 = smul.u32 49, %s17
      $region32: #{gabor_cnn7_forward.9} parent=27 // pred_fallthru
        _
    $region28: #{gabor_cnn7_forward.9} parent=5 // pred_fallthru
      _
    %p3119 = scmp.le.s32.totalorder 2, %s8
    // Predicated region
    $region33: #{gabor_cnn7_forward.9} parent=5 // pred_check
      %p3120 = pneg %p3119
    $region34: #{gabor_cnn7_forward.9} parent=5 // pred_check_branch
      %3122 = sbr.rel (%p3120) target = $region36
    $region35: #{gabor_cnn7_forward.9} parent=5 // pred_region
      %s3123 = ssub.s32 %s8, 2
      // Predicated region
      $region37: #{gabor_cnn7_forward.9} parent=35 // pred_check
        %p3124 = pneg %p103
      $region38: #{gabor_cnn7_forward.9} parent=35 // pred_check_branch
        %3126 = sbr.rel (%p3124) target = $region40
      $region39: #{gabor_cnn7_forward.9} parent=35 // pred_region
        %s3127 = smul.u32 49, %s19
        %p3128 = scmp.lt.s32.totalorder %s3127, 195
        %s3129 = scalar_select %p3128, %s3127, 195
        %p3130 = scmp.lt.s32.totalorder %s20, 0
        %s3131 = scalar_select %p3130, %s20, 0
        %s3132 = sadd.s32 %s3131, %s3129
        %s3133 = smul.addr %s3132, 4
        %s3134 = scalar_lea.vmem %s2, %s3133
      $region40: #{gabor_cnn7_forward.9} parent=35 // pred_fallthru
        _
    $region36: #{gabor_cnn7_forward.9} parent=5 // pred_fallthru
      _
  $region6: #{gabor_cnn7_forward.9} parent=0 // loop_footer
    %s12 = sadd.s32 1, %s8
  $region7: #{gabor_cnn7_forward.9} parent=0 // loop_footer_branch
    %7 = sbr.rel target = $region3
  $region8: #{gabor_cnn7_forward.9} parent=0 // loop_exit
    _

// kernel: gabor_cnn7_forward.10
$region0: #{gabor_cnn7_forward.10}
  #allocation0 [shape = 'u32[]', space=smem, size = 0x4, offset = 0x4, fixed_abs, tag = 'smem constant byte address 0x4 - core index']
  #allocation1 [shape = 'u32[144,128]{1,0:T(1,128)}', space=vmem, size = 0x12000, scoped, tag = 'internal scratch']
  %s0 = inlined_call_operand.vmem [shape: bf16[28,2,14,256], index: 0, kind: input, shape index: {}]
  %s1 = inlined_call_operand.vmem [shape: bf16[28,14,128], index: 1, kind: output, shape index: {}]
  %s2 = sld [smem:[#allocation0]]
  $region14: #{gabor_cnn7_forward.10} parent=0
    _
  %s4 = ssub.s32 1, %s2
  %s5 = scalar_select 0, %s4, %s2
  // Predicated region
  $region2: #{gabor_cnn7_forward.10} parent=0 // pred_check
    _
  $region3: #{gabor_cnn7_forward.10} parent=0 // pred_check_branch
    %7 = sbr.rel (0) target = $region5
  $region4: #{gabor_cnn7_forward.10} parent=0 // pred_region
    _
  $region5: #{gabor_cnn7_forward.10} parent=0 // pred_fallthru
    _
  %v8 = vld [vmem:[%s0] sm:$0xff]
  %v9 = vld [vmem:[%s0 + $0x8] sm:$0x77]
  %v10 = vld [vmem:[%s0 + $0x20] sm:$0xff]
  %v11 = vld [vmem:[%s0 + $0x28] sm:$0x77]
  %v12 = vld [vmem:[%s0 + $0x40] sm:$0xff]
  %v13 = vld [vmem:[%s0 + $0x48] sm:$0x77]
  %v14 = vld [vmem:[%s0 + $0x60] sm:$0xff]
  %v15 = vld [vmem:[%s0 + $0x68] sm:$0x77]
  %v16 = vld [vmem:[%s0 + $0x80] sm:$0xff]
  %v17 = vld [vmem:[%s0 + $0x88] sm:$0x77]
  %v18 = vld [vmem:[%s0 + $0xa0] sm:$0xff]
  %v19 = vld [vmem:[%s0 + $0xa8] sm:$0x77]
  %v20 = vld [vmem:[%s0 + $0xc0] sm:$0xff]
  %v21 = vld [vmem:[%s0 + $0xc8] sm:$0x77]
  %v22 = vld [vmem:[%s0 + $0xe0] sm:$0xff]
  %v23 = vld [vmem:[%s0 + $0xe8] sm:$0x77]
  %v24 = vld [vmem:[%s0 + $0x100] sm:$0xff]
  %v25 = vld [vmem:[%s0 + $0x108] sm:$0x77]
  %v26 = vld [vmem:[%s0 + $0x120] sm:$0xff]
  %v27 = vld [vmem:[%s0 + $0x128] sm:$0x77]
  %v28 = vld [vmem:[%s0 + $0x140] sm:$0xff]
  %v29 = vld [vmem:[%s0 + $0x148] sm:$0x77]
  %v30 = vld [vmem:[%s0 + $0x160] sm:$0xff]
  %v31 = vld [vmem:[%s0 + $0x168] sm:$0x77]
  %v32 = vld [vmem:[%s0 + $0x180] sm:$0xff]
  %v33 = vld [vmem:[%s0 + $0x188] sm:$0x77]
  %v34 = vld [vmem:[%s0 + $0x1a0] sm:$0xff]
  %v35 = vld [vmem:[%s0 + $0x1a8] sm:$0x77]
  %v36 = vld [vmem:[%s0 + $0x1c0] sm:$0xff]
  %v37 = vld [vmem:[%s0 + $0x1c8] sm:$0x77]
  %v38 = vld [vmem:[%s0 + $0x1e0] sm:$0xff]
  %v39 = vld [vmem:[%s0 + $0x1e8] sm:$0x77]
  %v40 = vld [vmem:[%s0 + $0x200] sm:$0xff]
  %v41 = vld [vmem:[%s0 + $0x208] sm:$0x77]
  %v42 = vld [vmem:[%s0 + $0x220] sm:$0xff]
  %v43 = vld [vmem:[%s0 + $0x228] sm:$0x77]
  %v44 = vld [vmem:[%s0 + $0x240] sm:$0xff]
  %v45 = vld [vmem:[%s0 + $0x248] sm:$0x77]
  %v46 = vld [vmem:[%s0 + $0x260] sm:$0xff]
  %v47 = vld [vmem:[%s0 + $0x268] sm:$0x77]
  %v48 = vld [vmem:[%s0 + $0x280] sm:$0xff]
  %v49 = vld [vmem:[%s0 + $0x288] sm:$0x77]
  %v50 = vld [vmem:[%s0 + $0x2a0] sm:$0xff]
  %v51 = vld [vmem:[%s0 + $0x2a8] sm:$0x77]
  %v52 = vld [vmem:[%s0 + $0x2c0] sm:$0xff]
  %v53 = vld [vmem:[%s0 + $0x2c8] sm:$0x77]
  %v54 = vld [vmem:[%s0 + $0x2e0] sm:$0xff]
  %v55 = vld [vmem:[%s0 + $0x2e8] sm:$0x77]
  %v56 = vld [vmem:[%s0 + $0x300] sm:$0xff]
  %v57 = vld [vmem:[%s0 + $0x308] sm:$0x77]
  %v58 = vld [vmem:[%s0 + $0x320] sm:$0xff]
  %v59 = vld [vmem:[%s0 + $0x328] sm:$0x77]
  %v60 = vld [vmem:[%s0 + $0x340] sm:$0xff]
  %v61 = vld [vmem:[%s0 + $0x348] sm:$0x77]
  %v62 = vld [vmem:[%s0 + $0x360] sm:$0xff]
  %v63 = vld [vmem:[%s0 + $0x368] sm:$0x77]
  %s64 = scalar_lea.vmem %s0, 16
  %v65 = vld [vmem:[%s64] sm:$0xff]
  %v66 = vld [vmem:[%s64 + $0x8] sm:$0x77]
  %v67 = vld [vmem:[%s64 + $0x20] sm:$0xff]
  %v68 = vld [vmem:[%s64 + $0x28] sm:$0x77]
  %v69 = vld [vmem:[%s64 + $0x40] sm:$0xff]
  %v70 = vld [vmem:[%s64 + $0x48] sm:$0x77]
  %v71 = vld [vmem:[%s64 + $0x60] sm:$0xff]
  %v72 = vld [vmem:[%s64 + $0x68] sm:$0x77]
  %v73 = vld [vmem:[%s64 + $0x80] sm:$0xff]
  %v74 = vld [vmem:[%s64 + $0x88] sm:$0x77]
  %v75 = vld [vmem:[%s64 + $0xa0] sm:$0xff]
  %v76 = vld [vmem:[%s64 + $0xa8] sm:$0x77]
  %v77 = vld [vmem:[%s64 + $0xc0] sm:$0xff]
  %v78 = vld [vmem:[%s64 + $0xc8] sm:$0x77]
  %v79 = vld [vmem:[%s64 + $0xe0] sm:$0xff]
  %v80 = vld [vmem:[%s64 + $0xe8] sm:$0x77]
  %v81 = vld [vmem:[%s64 + $0x100] sm:$0xff]
  %v82 = vld [vmem:[%s64 + $0x108] sm:$0x77]
  %v83 = vld [vmem:[%s64 + $0x120] sm:$0xff]
  %v84 = vld [vmem:[%s64 + $0x128] sm:$0x77]
  %v85 = vld [vmem:[%s64 + $0x140] sm:$0xff]
  %v86 = vld [vmem:[%s64 + $0x148] sm:$0x77]
  %v87 = vld [vmem:[%s64 + $0x160] sm:$0xff]
  %v88 = vld [vmem:[%s64 + $0x168] sm:$0x77]
  %v89 = vld [vmem:[%s64 + $0x180] sm:$0xff]
  %v90 = vld [vmem:[%s64 + $0x188] sm:$0x77]
  %v91 = vld [vmem:[%s64 + $0x1a0] sm:$0xff]
  %v92 = vld [vmem:[%s64 + $0x1a8] sm:$0x77]
  %v93 = vld [vmem:[%s64 + $0x1c0] sm:$0xff]
  %v94 = vld [vmem:[%s64 + $0x1c8] sm:$0x77]
  %v95 = vld [vmem:[%s64 + $0x1e0] sm:$0xff]
  %v96 = vld [vmem:[%s64 + $0x1e8] sm:$0x77]
  %v97 = vld [vmem:[%s64 + $0x200] sm:$0xff]
  %v98 = vld [vmem:[%s64 + $0x208] sm:$0x77]
  %v99 = vld [vmem:[%s64 + $0x220] sm:$0xff]
  %v100 = vld [vmem:[%s64 + $0x228] sm:$0x77]
  %v101 = vld [vmem:[%s64 + $0x240] sm:$0xff]
  %v102 = vld [vmem:[%s64 + $0x248] sm:$0x77]
  %v103 = vld [vmem:[%s64 + $0x260] sm:$0xff]
  %v104 = vld [vmem:[%s64 + $0x268] sm:$0x77]
  %v105 = vld [vmem:[%s64 + $0x280] sm:$0xff]
  %v106 = vld [vmem:[%s64 + $0x288] sm:$0x77]
  %v107 = vld [vmem:[%s64 + $0x2a0] sm:$0xff]
  %v108 = vld [vmem:[%s64 + $0x2a8] sm:$0x77]
  %v109 = vld [vmem:[%s64 + $0x2c0] sm:$0xff]
  %v110 = vld [vmem:[%s64 + $0x2c8] sm:$0x77]
  %v111 = vld [vmem:[%s64 + $0x2e0] sm:$0xff]
  %v112 = vld [vmem:[%s64 + $0x2e8] sm:$0x77]
  %v113 = vld [vmem:[%s64 + $0x300] sm:$0xff]
  %v114 = vld [vmem:[%s64 + $0x308] sm:$0x77]
  %v115 = vld [vmem:[%s64 + $0x320] sm:$0xff]
  %v116 = vld [vmem:[%s64 + $0x328] sm:$0x77]
  %v117 = vld [vmem:[%s64 + $0x340] sm:$0xff]
  %v118 = vld [vmem:[%s64 + $0x348] sm:$0x77]
  %v119 = vld [vmem:[%s64 + $0x360] sm:$0xff]
  %v120 = vld [vmem:[%s64 + $0x368] sm:$0x77]
  %v121 = vmax.bf16 %v8, %v65
  %v122 = vmax.bf16 %v9, %v66
  %v123 = vmax.bf16 %v10, %v67
  %v124 = vmax.bf16 %v11, %v68
  %v125 = vmax.bf16 %v12, %v69
  %v126 = vmax.bf16 %v13, %v70
  %v127 = vmax.bf16 %v14, %v71
  %v128 = vmax.bf16 %v15, %v72
  %v129 = vmax.bf16 %v16, %v73
  %v130 = vmax.bf16 %v17, %v74
  %v131 = vmax.bf16 %v18, %v75
  %v132 = vmax.bf16 %v19, %v76
  %v133 = vmax.bf16 %v20, %v77
  %v134 = vmax.bf16 %v21, %v78
  %v135 = vmax.bf16 %v22, %v79
  %v136 = vmax.bf16 %v23, %v80
  %v137 = vmax.bf16 %v24, %v81
  %v138 = vmax.bf16 %v25, %v82
  %v139 = vmax.bf16 %v26, %v83
  %v140 = vmax.bf16 %v27, %v84
  %v141 = vmax.bf16 %v28, %v85
  %v142 = vmax.bf16 %v29, %v86
  %v143 = vmax.bf16 %v30, %v87
  %v144 = vmax.bf16 %v31, %v88
  %v145 = vmax.bf16 %v32, %v89
  %v146 = vmax.bf16 %v33, %v90
  %v147 = vmax.bf16 %v34, %v91
  %v148 = vmax.bf16 %v35, %v92
  %v149 = vmax.bf16 %v36, %v93
  %v150 = vmax.bf16 %v37, %v94
  %v151 = vmax.bf16 %v38, %v95
  %v152 = vmax.bf16 %v39, %v96
  %v153 = vmax.bf16 %v40, %v97
  %v154 = vmax.bf16 %v41, %v98
  %v155 = vmax.bf16 %v42, %v99
  %v156 = vmax.bf16 %v43, %v100
  %v157 = vmax.bf16 %v44, %v101
  %v158 = vmax.bf16 %v45, %v102
  %v159 = vmax.bf16 %v46, %v103
  %v160 = vmax.bf16 %v47, %v104
  %v161 = vmax.bf16 %v48, %v105
  %v162 = vmax.bf16 %v49, %v106
  %v163 = vmax.bf16 %v50, %v107
  %v164 = vmax.bf16 %v51, %v108
  %v165 = vmax.bf16 %v52, %v109
  %v166 = vmax.bf16 %v53, %v110
  %v167 = vmax.bf16 %v54, %v111
  %v168 = vmax.bf16 %v55, %v112
  %v169 = vmax.bf16 %v56, %v113
  %v170 = vmax.bf16 %v57, %v114
  %v171 = vmax.bf16 %v58, %v115
  %v172 = vmax.bf16 %v59, %v116
  %v173 = vmax.bf16 %v60, %v117
  %v174 = vmax.bf16 %v61, %v118
  %v175 = vmax.bf16 %v62, %v119
  %v176 = vmax.bf16 %v63, %v120
  %v233 = vrot.slane %v121, 4
  %v234 = vrot.slane %v122, 4
  %v235 = vrot.slane %v123, 4
  %v236 = vrot.slane %v124, 4
  %v237 = vrot.slane %v125, 4
  %v238 = vrot.slane %v126, 4
  %v239 = vrot.slane %v127, 4
  %v240 = vrot.slane %v128, 4
  %v241 = vrot.slane %v129, 4
  %v242 = vrot.slane %v130, 4
  %v243 = vrot.slane %v131, 4
  %v244 = vrot.slane %v132, 4
  %v245 = vrot.slane %v133, 4
  %v246 = vrot.slane %v134, 4
  %v247 = vrot.slane %v135, 4
  %v248 = vrot.slane %v136, 4
  %v249 = vrot.slane %v137, 4
  %v250 = vrot.slane %v138, 4
  %v251 = vrot.slane %v139, 4
  %v252 = vrot.slane %v140, 4
  %v253 = vrot.slane %v141, 4
  %v254 = vrot.slane %v142, 4
  %v255 = vrot.slane %v143, 4
  %v256 = vrot.slane %v144, 4
  %v257 = vrot.slane %v145, 4
  %v258 = vrot.slane %v146, 4
  %v259 = vrot.slane %v147, 4
  %v260 = vrot.slane %v148, 4
  %v261 = vrot.slane %v149, 4
  %v262 = vrot.slane %v150, 4
  %v263 = vrot.slane %v151, 4
  %v264 = vrot.slane %v152, 4
  %v265 = vrot.slane %v153, 4
  %v266 = vrot.slane %v154, 4
  %v267 = vrot.slane %v155, 4
  %v268 = vrot.slane %v156, 4
  %v269 = vrot.slane %v157, 4
  %v270 = vrot.slane %v158, 4
  %v271 = vrot.slane %v159, 4
  %v272 = vrot.slane %v160, 4
  %v273 = vrot.slane %v161, 4
  %v274 = vrot.slane %v162, 4
  %v275 = vrot.slane %v163, 4
  %v276 = vrot.slane %v164, 4
  %v277 = vrot.slane %v165, 4
  %v278 = vrot.slane %v166, 4
  %v279 = vrot.slane %v167, 4
  %v280 = vrot.slane %v168, 4
  %v281 = vrot.slane %v169, 4
  %v282 = vrot.slane %v170, 4
  %v283 = vrot.slane %v171, 4
  %v284 = vrot.slane %v172, 4
  %v285 = vrot.slane %v173, 4
  %v286 = vrot.slane %v174, 4
  %v287 = vrot.slane %v175, 4
  %v288 = vrot.slane %v176, 4
  %v345 = vmax.bf16 %v121, %v233
  %v346 = vmax.bf16 %v122, %v234
  %v347 = vmax.bf16 %v123, %v235
  %v348 = vmax.bf16 %v124, %v236
  %v349 = vmax.bf16 %v125, %v237
  %v350 = vmax.bf16 %v126, %v238
  %v351 = vmax.bf16 %v127, %v239
  %v352 = vmax.bf16 %v128, %v240
  %v353 = vmax.bf16 %v129, %v241
  %v354 = vmax.bf16 %v130, %v242
  %v355 = vmax.bf16 %v131, %v243
  %v356 = vmax.bf16 %v132, %v244
  %v357 = vmax.bf16 %v133, %v245
  %v358 = vmax.bf16 %v134, %v246
  %v359 = vmax.bf16 %v135, %v247
  %v360 = vmax.bf16 %v136, %v248
  %v361 = vmax.bf16 %v137, %v249
  %v362 = vmax.bf16 %v138, %v250
  %v363 = vmax.bf16 %v139, %v251
  %v364 = vmax.bf16 %v140, %v252
  %v365 = vmax.bf16 %v141, %v253
  %v366 = vmax.bf16 %v142, %v254
  %v367 = vmax.bf16 %v143, %v255
  %v368 = vmax.bf16 %v144, %v256
  %v369 = vmax.bf16 %v145, %v257
  %v370 = vmax.bf16 %v146, %v258
  %v371 = vmax.bf16 %v147, %v259
  %v372 = vmax.bf16 %v148, %v260
  %v373 = vmax.bf16 %v149, %v261
  %v374 = vmax.bf16 %v150, %v262
  %v375 = vmax.bf16 %v151, %v263
  %v376 = vmax.bf16 %v152, %v264
  %v377 = vmax.bf16 %v153, %v265
  %v378 = vmax.bf16 %v154, %v266
  %v379 = vmax.bf16 %v155, %v267
  %v380 = vmax.bf16 %v156, %v268
  %v381 = vmax.bf16 %v157, %v269
  %v382 = vmax.bf16 %v158, %v270
  %v383 = vmax.bf16 %v159, %v271
  %v384 = vmax.bf16 %v160, %v272
  %v385 = vmax.bf16 %v161, %v273
  %v386 = vmax.bf16 %v162, %v274
  %v387 = vmax.bf16 %v163, %v275
  %v388 = vmax.bf16 %v164, %v276
  %v389 = vmax.bf16 %v165, %v277
  %v390 = vmax.bf16 %v166, %v278
  %v391 = vmax.bf16 %v167, %v279
  %v392 = vmax.bf16 %v168, %v280
  %v393 = vmax.bf16 %v169, %v281
  %v394 = vmax.bf16 %v170, %v282
  %v395 = vmax.bf16 %v171, %v283
  %v396 = vmax.bf16 %v172, %v284
  %v397 = vmax.bf16 %v173, %v285
  %v398 = vmax.bf16 %v174, %v286
  %v399 = vmax.bf16 %v175, %v287
  %v400 = vmax.bf16 %v176, %v288
  %401 = vst [vmem:[%s1] sm:$0xf] %v345
  %402 = vst [vmem:[%s1 + $0x4] sm:$0x7] %v346
  %403 = vst [vmem:[%s1 + $0x8] sm:$0xf] %v347
  %404 = vst [vmem:[%s1 + $0xc] sm:$0x7] %v348
  %405 = vst [vmem:[%s1 + $0x10] sm:$0xf] %v349
  %406 = vst [vmem:[%s1 + $0x14] sm:$0x7] %v350
  %407 = vst [vmem:[%s1 + $0x18] sm:$0xf] %v351
  %408 = vst [vmem:[%s1 + $0x1c] sm:$0x7] %v352
  %409 = vst [vmem:[%s1 + $0x20] sm:$0xf] %v353
  %410 = vst [vmem:[%s1 + $0x24] sm:$0x7] %v354
  %411 = vst [vmem:[%s1 + $0x28] sm:$0xf] %v355
  %412 = vst [vmem:[%s1 + $0x2c] sm:$0x7] %v356
  %413 = vst [vmem:[%s1 + $0x30] sm:$0xf] %v357
  %414 = vst [vmem:[%s1 + $0x34] sm:$0x7] %v358
  %415 = vst [vmem:[%s1 + $0x38] sm:$0xf] %v359
  %416 = vst [vmem:[%s1 + $0x3c] sm:$0x7] %v360
  %417 = vst [vmem:[%s1 + $0x40] sm:$0xf] %v361
  %418 = vst [vmem:[%s1 + $0x44] sm:$0x7] %v362
  %419 = vst [vmem:[%s1 + $0x48] sm:$0xf] %v363
  %420 = vst [vmem:[%s1 + $0x4c] sm:$0x7] %v364
  %421 = vst [vmem:[%s1 + $0x50] sm:$0xf] %v365
  %422 = vst [vmem:[%s1 + $0x54] sm:$0x7] %v366
  %423 = vst [vmem:[%s1 + $0x58] sm:$0xf] %v367
  %424 = vst [vmem:[%s1 + $0x5c] sm:$0x7] %v368
  %425 = vst [vmem:[%s1 + $0x60] sm:$0xf] %v369
  %426 = vst [vmem:[%s1 + $0x64] sm:$0x7] %v370
  %427 = vst [vmem:[%s1 + $0x68] sm:$0xf] %v371
  %428 = vst [vmem:[%s1 + $0x6c] sm:$0x7] %v372
  %429 = vst [vmem:[%s1 + $0x70] sm:$0xf] %v373
  %430 = vst [vmem:[%s1 + $0x74] sm:$0x7] %v374
  %431 = vst [vmem:[%s1 + $0x78] sm:$0xf] %v375
  %432 = vst [vmem:[%s1 + $0x7c] sm:$0x7] %v376
  %433 = vst [vmem:[%s1 + $0x80] sm:$0xf] %v377
  %434 = vst [vmem:[%s1 + $0x84] sm:$0x7] %v378
  %435 = vst [vmem:[%s1 + $0x88] sm:$0xf] %v379
  %436 = vst [vmem:[%s1 + $0x8c] sm:$0x7] %v380
  %437 = vst [vmem:[%s1 + $0x90] sm:$0xf] %v381
  %438 = vst [vmem:[%s1 + $0x94] sm:$0x7] %v382
  %439 = vst [vmem:[%s1 + $0x98] sm:$0xf] %v383
  %440 = vst [vmem:[%s1 + $0x9c] sm:$0x7] %v384
  %441 = vst [vmem:[%s1 + $0xa0] sm:$0xf] %v385
  %442 = vst [vmem:[%s1 + $0xa4] sm:$0x7] %v386
  %443 = vst [vmem:[%s1 + $0xa8] sm:$0xf] %v387
  %444 = vst [vmem:[%s1 + $0xac] sm:$0x7] %v388
  %445 = vst [vmem:[%s1 + $0xb0] sm:$0xf] %v389
  %446 = vst [vmem:[%s1 + $0xb4] sm:$0x7] %v390
  %447 = vst [vmem:[%s1 + $0xb8] sm:$0xf] %v391
  %448 = vst [vmem:[%s1 + $0xbc] sm:$0x7] %v392
  %449 = vst [vmem:[%s1 + $0xc0] sm:$0xf] %v393
  %450 = vst [vmem:[%s1 + $0xc4] sm:$0x7] %v394
  %451 = vst [vmem:[%s1 + $0xc8] sm:$0xf] %v395
  %452 = vst [vmem:[%s1 + $0xcc] sm:$0x7] %v396
  %453 = vst [vmem:[%s1 + $0xd0] sm:$0xf] %v397
  %454 = vst [vmem:[%s1 + $0xd4] sm:$0x7] %v398
  %455 = vst [vmem:[%s1 + $0xd8] sm:$0xf] %v399
  %456 = vst [vmem:[%s1 + $0xdc] sm:$0x7] %v400
  // Predicated region
  $region6: #{gabor_cnn7_forward.10} parent=0 // pred_check
    _
  $region7: #{gabor_cnn7_forward.10} parent=0 // pred_check_branch
    %458 = sbr.rel (0) target = $region9
  $region8: #{gabor_cnn7_forward.10} parent=0 // pred_region
    _
  $region9: #{gabor_cnn7_forward.10} parent=0 // pred_fallthru
    _
  // Predicated region
  $region10: #{gabor_cnn7_forward.10} parent=0 // pred_check
    _
  $region11: #{gabor_cnn7_forward.10} parent=0 // pred_check_branch
    %460 = sbr.rel (0) target = $region13
  $region12: #{gabor_cnn7_forward.10} parent=0 // pred_region
    _
  $region13: #{gabor_cnn7_forward.10} parent=0 // pred_fallthru
    _

// kernel: gabor_cnn7_forward.12
$region0: #{gabor_cnn7_forward.12}
  #allocation0 [shape = 'u32[]', space=smem, size = 0x4, offset = 0x4, fixed_abs, tag = 'smem constant byte address 0x4 - core index']
  #allocation1 [shape = 'u32[144,128]{1,0:T(1,128)}', space=vmem, size = 0x12000, scoped, tag = 'internal scratch']
  %s0 = inlined_call_operand.vmem [shape: bf16[14,2,7,256], index: 0, kind: input, shape index: {}]
  %s1 = inlined_call_operand.vmem [shape: bf16[14,7,128], index: 1, kind: output, shape index: {}]
  %s2 = sld [smem:[#allocation0]]
  $region14: #{gabor_cnn7_forward.12} parent=0
    _
  %s4 = ssub.s32 1, %s2
  %s5 = scalar_select 0, %s4, %s2
  // Predicated region
  $region2: #{gabor_cnn7_forward.12} parent=0 // pred_check
    _
  $region3: #{gabor_cnn7_forward.12} parent=0 // pred_check_branch
    %7 = sbr.rel (0) target = $region5
  $region4: #{gabor_cnn7_forward.12} parent=0 // pred_region
    _
  $region5: #{gabor_cnn7_forward.12} parent=0 // pred_fallthru
    _
  %v8 = vld [vmem:[%s0] sm:$0xff]
  %v9 = vld [vmem:[%s0 + $0x10] sm:$0xff]
  %v10 = vld [vmem:[%s0 + $0x20] sm:$0xff]
  %v11 = vld [vmem:[%s0 + $0x30] sm:$0xff]
  %v12 = vld [vmem:[%s0 + $0x40] sm:$0xff]
  %v13 = vld [vmem:[%s0 + $0x50] sm:$0xff]
  %v14 = vld [vmem:[%s0 + $0x60] sm:$0xff]
  %v15 = vld [vmem:[%s0 + $0x70] sm:$0xff]
  %v16 = vld [vmem:[%s0 + $0x80] sm:$0xff]
  %v17 = vld [vmem:[%s0 + $0x90] sm:$0xff]
  %v18 = vld [vmem:[%s0 + $0xa0] sm:$0xff]
  %v19 = vld [vmem:[%s0 + $0xb0] sm:$0xff]
  %v20 = vld [vmem:[%s0 + $0xc0] sm:$0xff]
  %v21 = vld [vmem:[%s0 + $0xd0] sm:$0xff]
  %s22 = scalar_lea.vmem %s0, 8
  %v23 = vld [vmem:[%s22] sm:$0xff]
  %v24 = vld [vmem:[%s22 + $0x10] sm:$0xff]
  %v25 = vld [vmem:[%s22 + $0x20] sm:$0xff]
  %v26 = vld [vmem:[%s22 + $0x30] sm:$0xff]
  %v27 = vld [vmem:[%s22 + $0x40] sm:$0xff]
  %v28 = vld [vmem:[%s22 + $0x50] sm:$0xff]
  %v29 = vld [vmem:[%s22 + $0x60] sm:$0xff]
  %v30 = vld [vmem:[%s22 + $0x70] sm:$0xff]
  %v31 = vld [vmem:[%s22 + $0x80] sm:$0xff]
  %v32 = vld [vmem:[%s22 + $0x90] sm:$0xff]
  %v33 = vld [vmem:[%s22 + $0xa0] sm:$0xff]
  %v34 = vld [vmem:[%s22 + $0xb0] sm:$0xff]
  %v35 = vld [vmem:[%s22 + $0xc0] sm:$0xff]
  %v36 = vld [vmem:[%s22 + $0xd0] sm:$0xff]
  %v37 = vmax.bf16 %v8, %v23
  %v38 = vmax.bf16 %v9, %v24
  %v39 = vmax.bf16 %v10, %v25
  %v40 = vmax.bf16 %v11, %v26
  %v41 = vmax.bf16 %v12, %v27
  %v42 = vmax.bf16 %v13, %v28
  %v43 = vmax.bf16 %v14, %v29
  %v44 = vmax.bf16 %v15, %v30
  %v45 = vmax.bf16 %v16, %v31
  %v46 = vmax.bf16 %v17, %v32
  %v47 = vmax.bf16 %v18, %v33
  %v48 = vmax.bf16 %v19, %v34
  %v49 = vmax.bf16 %v20, %v35
  %v50 = vmax.bf16 %v21, %v36
  %v65 = vrot.slane %v37, 4
  %v66 = vrot.slane %v38, 4
  %v67 = vrot.slane %v39, 4
  %v68 = vrot.slane %v40, 4
  %v69 = vrot.slane %v41, 4
  %v70 = vrot.slane %v42, 4
  %v71 = vrot.slane %v43, 4
  %v72 = vrot.slane %v44, 4
  %v73 = vrot.slane %v45, 4
  %v74 = vrot.slane %v46, 4
  %v75 = vrot.slane %v47, 4
  %v76 = vrot.slane %v48, 4
  %v77 = vrot.slane %v49, 4
  %v78 = vrot.slane %v50, 4
  %v93 = vmax.bf16 %v37, %v65
  %v94 = vmax.bf16 %v38, %v66
  %v95 = vmax.bf16 %v39, %v67
  %v96 = vmax.bf16 %v40, %v68
  %v97 = vmax.bf16 %v41, %v69
  %v98 = vmax.bf16 %v42, %v70
  %v99 = vmax.bf16 %v43, %v71
  %v100 = vmax.bf16 %v44, %v72
  %v101 = vmax.bf16 %v45, %v73
  %v102 = vmax.bf16 %v46, %v74
  %v103 = vmax.bf16 %v47, %v75
  %v104 = vmax.bf16 %v48, %v76
  %v105 = vmax.bf16 %v49, %v77
  %v106 = vmax.bf16 %v50, %v78
  %vm107 = vcmask 1043456
  %vm108 = vsmask.f32 3328
  %vm109 = vmand %vm107, %vm108
  %v110 = vld [vmem:[%s1] sm:$0xf]
  %v111 = vsel %vm109, %v93, %v110
  %112 = vst [vmem:[%s1] sm:$0xf] %v111
  %v113 = vld [vmem:[%s1 + $0x4] sm:$0xf]
  %v114 = vsel %vm109, %v94, %v113
  %115 = vst [vmem:[%s1 + $0x4] sm:$0xf] %v114
  %v116 = vld [vmem:[%s1 + $0x8] sm:$0xf]
  %v117 = vsel %vm109, %v95, %v116
  %118 = vst [vmem:[%s1 + $0x8] sm:$0xf] %v117
  %v119 = vld [vmem:[%s1 + $0xc] sm:$0xf]
  %v120 = vsel %vm109, %v96, %v119
  %121 = vst [vmem:[%s1 + $0xc] sm:$0xf] %v120
  %v122 = vld [vmem:[%s1 + $0x10] sm:$0xf]
  %v123 = vsel %vm109, %v97, %v122
  %124 = vst [vmem:[%s1 + $0x10] sm:$0xf] %v123
  %v125 = vld [vmem:[%s1 + $0x14] sm:$0xf]
  %v126 = vsel %vm109, %v98, %v125
  %127 = vst [vmem:[%s1 + $0x14] sm:$0xf] %v126
  %v128 = vld [vmem:[%s1 + $0x18] sm:$0xf]
  %v129 = vsel %vm109, %v99, %v128
  %130 = vst [vmem:[%s1 + $0x18] sm:$0xf] %v129
  %v131 = vld [vmem:[%s1 + $0x1c] sm:$0xf]
  %v132 = vsel %vm109, %v100, %v131
  %133 = vst [vmem:[%s1 + $0x1c] sm:$0xf] %v132
  %v134 = vld [vmem:[%s1 + $0x20] sm:$0xf]
  %v135 = vsel %vm109, %v101, %v134
  %136 = vst [vmem:[%s1 + $0x20] sm:$0xf] %v135
  %v137 = vld [vmem:[%s1 + $0x24] sm:$0xf]
  %v138 = vsel %vm109, %v102, %v137
  %139 = vst [vmem:[%s1 + $0x24] sm:$0xf] %v138
  %v140 = vld [vmem:[%s1 + $0x28] sm:$0xf]
  %v141 = vsel %vm109, %v103, %v140
  %142 = vst [vmem:[%s1 + $0x28] sm:$0xf] %v141
  %v143 = vld [vmem:[%s1 + $0x2c] sm:$0xf]
  %v144 = vsel %vm109, %v104, %v143
  %145 = vst [vmem:[%s1 + $0x2c] sm:$0xf] %v144
  %v146 = vld [vmem:[%s1 + $0x30] sm:$0xf]
  %v147 = vsel %vm109, %v105, %v146
  %148 = vst [vmem:[%s1 + $0x30] sm:$0xf] %v147
  %v149 = vld [vmem:[%s1 + $0x34] sm:$0xf]
  %v150 = vsel %vm109, %v106, %v149
  %151 = vst [vmem:[%s1 + $0x34] sm:$0xf] %v150
  // Predicated region
  $region6: #{gabor_cnn7_forward.12} parent=0 // pred_check
    _
  $region7: #{gabor_cnn7_forward.12} parent=0 // pred_check_branch
    %153 = sbr.rel (0) target = $region9
  $region8: #{gabor_cnn7_forward.12} parent=0 // pred_region
    _
  $region9: #{gabor_cnn7_forward.12} parent=0 // pred_fallthru
    _
  // Predicated region
  $region10: #{gabor_cnn7_forward.12} parent=0 // pred_check
    _
  $region11: #{gabor_cnn7_forward.12} parent=0 // pred_check_branch
    %155 = sbr.rel (0) target = $region13
  $region12: #{gabor_cnn7_forward.12} parent=0 // pred_region
    _
  $region13: #{gabor_cnn7_forward.12} parent=0 // pred_fallthru
    _

// kernel: gabor_cnn7_forward.11
$region0: #{gabor_cnn7_forward.11}
  #allocation0 [shape = 'u32[]', space=smem, size = 0x4, offset = 0x4, fixed_abs, tag = 'smem constant byte address 0x4 - core index']
  #allocation1 [shape = 'u32[144,128]{1,0:T(1,128)}', space=vmem, size = 0x12000, scoped, tag = 'internal scratch']
  #allocation2 [shape = 'f32[392,128]{1,0:T(8,128)}', space=vmem, size = 0x31000, scoped, tag = 'scratch operand']
  %s0 = inlined_call_operand.vmem [shape: bf16[392,2048], index: 0, kind: input, shape index: {}]
  %s1 = inlined_call_operand.vmem [shape: bf16[2048,128], index: 1, kind: input, shape index: {}]
  %s2 = inlined_call_operand.vmem [shape: bf16[392,128], index: 2, kind: output, shape index: {}]
  %s3 = sld [smem:[#allocation0]]
  $region72: #{gabor_cnn7_forward.11} parent=0
    _
  %s5 = ssub.s32 1, %s3
  %s6 = scalar_select 0, %s5, %s3
  $region1: #{gabor_cnn7_forward.11} parent=0
    #allocation3 [shape = 'u8[1605632]{0}', space=vmem, size = 0x188000, scoped, tag = 'input window, operand 0']
    loop: start=0, step=1, limit=4
    $region2: #{gabor_cnn7_forward.11} parent=1 // loop_pre_header
      _
    $region3: #{gabor_cnn7_forward.11} parent=1 // loop_header
      %s8 = sphi 0, %s12
      %p9 = scmp.ge.s32.totalorder %s8, 4
      %s15 = sphi 0, %s34
      %s16 = sphi 0, %s30
      %s17 = sphi 0, %s26
      %s18 = sphi 0, %s15
      %s19 = sphi 0, %s16
      %s20 = sphi 0, %s17
      %s21 = sphi 0, %s18
      %s22 = sphi 0, %s19
      %s23 = sphi 0, %s20
      %s39 = sphi 0, %s41
      %s42 = sphi 0, %s39
      %s43 = sphi 0, %s42
      %s59 = sphi 0, %s43
      %s67 = sphi 0, %s69
      %s70 = sphi 0, %s67
      %s71 = sphi 0, %s70
      %s87 = sphi 0, %s71
      %s95 = sphi 0, %s97
      %s98 = sphi 0, %s95
      %s99 = sphi 0, %s98
      %s115 = sphi 0, %s99
    $region4: #{gabor_cnn7_forward.11} parent=1 // loop_header_branch
      %11 = sbr.rel (%p9) target = $region8
    $region5: #{gabor_cnn7_forward.11} parent=1 // loop_body
      %s13 = ssub.s32 %s8, 1
      %s14 = ssub.s32 %s8, 2
      %s24 = sadd.s32 1, %s17
      %p25 = scmp.ge.s32.totalorder %s24, 2
      %s26 = scalar_select %p25, 0, %s24
      %s27 = sadd.s32 1, %s16
      %s28 = scalar_select %p25, %s27, %s16
      %p29 = scmp.ge.s32.totalorder %s28, 1
      %s30 = scalar_select %p29, 0, %s28
      %s31 = sadd.s32 1, %s15
      %s32 = scalar_select %p29, %s31, %s15
      %p33 = scmp.ge.s32.totalorder %s32, 1
      %s34 = scalar_select %p33, 0, %s32
      %s35 = ssub.s32 %s15, %s34
      %s36 = ssub.s32 %s17, %s26
      %s37 = sor.u32 %s35, %s36
      %p38 = scmp.eq.s32.totalorder %s37, 0
      %s40 = sadd.s32 %s39, 1
      %s41 = scalar_select %p38, %s39, %s40
      %p44 = pneg %p38
      %p45 = scmp.eq.s32.totalorder %s8, 1
      %p46 = por %p44, %p45
      %p47 = scmp.ne.s32.totalorder %s39, %s42
      %p48 = scmp.eq.s32.totalorder %s8, 0
      %p49 = por %p47, %p48
      %p50 = scmp.ne.s32.totalorder %s39, %s42
      %p51 = scmp.eq.s32.totalorder %s13, 1
      %p52 = por %p50, %p51
      %p53 = scmp.ne.s32.totalorder %s42, %s43
      %p54 = scmp.eq.s32.totalorder %s13, 0
      %p55 = por %p53, %p54
      %p56 = scmp.ne.s32.totalorder %s42, %s43
      %p57 = scmp.eq.s32.totalorder %s14, 1
      %p58 = por %p56, %p57
      %p60 = scmp.ne.s32.totalorder %s43, %s59
      %p61 = scmp.eq.s32.totalorder %s14, 0
      %p62 = por %p60, %p61
      %s63 = ssub.s32 %s17, %s26
      %s64 = ssub.s32 %s16, %s30
      %s65 = sor.u32 %s63, %s64
      %p66 = scmp.eq.s32.totalorder %s65, 0
      %s68 = sadd.s32 %s67, 1
      %s69 = scalar_select %p66, %s67, %s68
      %p72 = pneg %p66
      %p73 = scmp.eq.s32.totalorder %s8, 1
      %p74 = por %p72, %p73
      %p75 = scmp.ne.s32.totalorder %s67, %s70
      %p76 = scmp.eq.s32.totalorder %s8, 0
      %p77 = por %p75, %p76
      %p78 = scmp.ne.s32.totalorder %s67, %s70
      %p79 = scmp.eq.s32.totalorder %s13, 1
      %p80 = por %p78, %p79
      %p81 = scmp.ne.s32.totalorder %s70, %s71
      %p82 = scmp.eq.s32.totalorder %s13, 0
      %p83 = por %p81, %p82
      %p84 = scmp.ne.s32.totalorder %s70, %s71
      %p85 = scmp.eq.s32.totalorder %s14, 1
      %p86 = por %p84, %p85
      %p88 = scmp.ne.s32.totalorder %s71, %s87
      %p89 = scmp.eq.s32.totalorder %s14, 0
      %p90 = por %p88, %p89
      %s91 = ssub.s32 %s15, %s34
      %s92 = ssub.s32 %s16, %s30
      %s93 = sor.u32 %s91, %s92
      %p94 = scmp.eq.s32.totalorder %s93, 0
      %s96 = sadd.s32 %s95, 1
      %s97 = scalar_select %p94, %s95, %s96
      %p100 = pneg %p94
      %p101 = scmp.eq.s32.totalorder %s8, 1
      %p102 = por %p100, %p101
      %p103 = scmp.ne.s32.totalorder %s95, %s98
      %p104 = scmp.eq.s32.totalorder %s8, 0
      %p105 = por %p103, %p104
      %p106 = scmp.ne.s32.totalorder %s95, %s98
      %p107 = scmp.eq.s32.totalorder %s13, 1
      %p108 = por %p106, %p107
      %p109 = scmp.ne.s32.totalorder %s98, %s99
      %p110 = scmp.eq.s32.totalorder %s13, 0
      %p111 = por %p109, %p110
      %p112 = scmp.ne.s32.totalorder %s98, %s99
      %p113 = scmp.eq.s32.totalorder %s14, 1
      %p114 = por %p112, %p113
      %p116 = scmp.ne.s32.totalorder %s99, %s115
      %p117 = scmp.eq.s32.totalorder %s14, 0
      %p118 = por %p116, %p117
      %p119 = scmp.le.s32.totalorder 1, %s8
      %p120 = scmp.lt.s32.totalorder %s8, 3
      %p121 = pnand %p119, %p120
      %p122 = pneg %p121
      // Predicated region
      $region9: #{gabor_cnn7_forward.11} parent=5 // pred_check
        _
      $region10: #{gabor_cnn7_forward.11} parent=5 // pred_check_branch
        %124 = sbr.rel (%p121) target = $region12
      $region11: #{gabor_cnn7_forward.11} parent=5 // pred_region
        %s125 = ssub.s32 %s8, 1
      $region12: #{gabor_cnn7_forward.11} parent=5 // pred_fallthru
        _
      %p126 = scmp.lt.s32.totalorder %s8, 2
      // Predicated region
      $region13: #{gabor_cnn7_forward.11} parent=5 // pred_check
        %p127 = pneg %p126
      $region14: #{gabor_cnn7_forward.11} parent=5 // pred_check_branch
        %129 = sbr.rel (%p127) target = $region16
      $region15: #{gabor_cnn7_forward.11} parent=5 // pred_region
        // Predicated region
        $region17: #{gabor_cnn7_forward.11} parent=15 // pred_check
          %p130 = pneg %p49
        $region18: #{gabor_cnn7_forward.11} parent=15 // pred_check_branch
          %132 = sbr.rel (%p130) target = $region20
        $region19: #{gabor_cnn7_forward.11} parent=15 // pred_region
          %s133 = sand.u32 %s39, 1
          %s134 = sand.u32 %s39, 1
          %s135 = smul.addr %s134, 1568
          %s136 = scalar_lea.vmem [#allocation3], %s135
          %s137 = smul.u32 49, %s15
          %s138 = smul.u32 8, %s17
          %s139 = smul.addr %s137, 16
          %s140 = sadd.s32 %s138, %s139
          %s141 = smul.addr %s140, 4
          %s142 = scalar_lea.vmem %s0, %s141
          // Predicated region
          $region21: #{gabor_cnn7_forward.11} parent=19 // pred_check
            _
          $region22: #{gabor_cnn7_forward.11} parent=19 // pred_check_branch
            %144 = sbr.rel (0) target = $region24
          $region23: #{gabor_cnn7_forward.11} parent=19 // pred_region
            // Predicated region
            $region25: #{gabor_cnn7_forward.11} parent=23 // pred_check
              _
            $region26: #{gabor_cnn7_forward.11} parent=23 // pred_check_branch
              %146 = sbr.rel (0) target = $region28
            $region27: #{gabor_cnn7_forward.11} parent=23 // pred_region
              loop: start=0, step=1, limit=1
              $region29: #{gabor_cnn7_forward.11} parent=27 // loop_pre_header
                _
              $region30: #{gabor_cnn7_forward.11} parent=27 // loop_header
                %s148 = sphi 0, %s152
                %p149 = scmp.ge.s32.totalorder %s148, 1
                %s153 = sphi %s142, %s142
                %s154 = sphi %s136, %s136
              $region31: #{gabor_cnn7_forward.11} parent=27 // loop_header_branch
                %151 = sbr.rel (%p149) target = $region35
              $region32: #{gabor_cnn7_forward.11} parent=27 // loop_body
                %v155 = vld [vmem:[%s153] sm:$0xff]
                %156 = vst [vmem:[%s154] sm:$0xff] %v155
                %v157 = vld [vmem:[%s153 + $0x8] sm:$0xff]
                %158 = vst [vmem:[%s154 + $0x8] sm:$0xff] %v157
                %v159 = vld [vmem:[%s153 + $0x10] sm:$0xff]
                %160 = vst [vmem:[%s154 + $0x10] sm:$0xff] %v159
                %v161 = vld [vmem:[%s153 + $0x18] sm:$0xff]
                %162 = vst [vmem:[%s154 + $0x18] sm:$0xff] %v161
                %v163 = vld [vmem:[%s153 + $0x40] sm:$0xff]
                %164 = vst [vmem:[%s154 + $0x20] sm:$0xff] %v163
                %v165 = vld [vmem:[%s153 + $0x48] sm:$0xff]
                %166 = vst [vmem:[%s154 + $0x28] sm:$0xff] %v165
                %v167 = vld [vmem:[%s153 + $0x50] sm:$0xff]
                %168 = vst [vmem:[%s154 + $0x30] sm:$0xff] %v167
                %v169 = vld [vmem:[%s153 + $0x58] sm:$0xff]
                %170 = vst [vmem:[%s154 + $0x38] sm:$0xff] %v169
                %v171 = vld [vmem:[%s153 + $0x80] sm:$0xff]
                %172 = vst [vmem:[%s154 + $0x40] sm:$0xff] %v171
                %v173 = vld [vmem:[%s153 + $0x88] sm:$0xff]
                %174 = vst [vmem:[%s154 + $0x48] sm:$0xff] %v173
                %v175 = vld [vmem:[%s153 + $0x90] sm:$0xff]
                %176 = vst [vmem:[%s154 + $0x50] sm:$0xff] %v175
                %v177 = vld [vmem:[%s153 + $0x98] sm:$0xff]
                %178 = vst [vmem:[%s154 + $0x58] sm:$0xff] %v177
                %v179 = vld [vmem:[%s153 + $0xc0] sm:$0xff]
                %180 = vst [vmem:[%s154 + $0x60] sm:$0xff] %v179
                %v181 = vld [vmem:[%s153 + $0xc8] sm:$0xff]
                %182 = vst [vmem:[%s154 + $0x68] sm:$0xff] %v181
                %v183 = vld [vmem:[%s153 + $0xd0] sm:$0xff]
                %184 = vst [vmem:[%s154 + $0x70] sm:$0xff] %v183
                %v185 = vld [vmem:[%s153 + $0xd8] sm:$0xff]
                %186 = vst [vmem:[%s154 + $0x78] sm:$0xff] %v185
                %v187 = vld [vmem:[%s153 + $0x100] sm:$0xff]
                %188 = vst [vmem:[%s154 + $0x80] sm:$0xff] %v187
                %v189 = vld [vmem:[%s153 + $0x108] sm:$0xff]
                %190 = vst [vmem:[%s154 + $0x88] sm:$0xff] %v189
                %v191 = vld [vmem:[%s153 + $0x110] sm:$0xff]
                %192 = vst [vmem:[%s154 + $0x90] sm:$0xff] %v191
                %v193 = vld [vmem:[%s153 + $0x118] sm:$0xff]
                %194 = vst [vmem:[%s154 + $0x98] sm:$0xff] %v193
                %v195 = vld [vmem:[%s153 + $0x140] sm:$0xff]
                %196 = vst [vmem:[%s154 + $0xa0] sm:$0xff] %v195
                %v197 = vld [vmem:[%s153 + $0x148] sm:$0xff]
                %198 = vst [vmem:[%s154 + $0xa8] sm:$0xff] %v197
                %v199 = vld [vmem:[%s153 + $0x150] sm:$0xff]
                %200 = vst [vmem:[%s154 + $0xb0] sm:$0xff] %v199
                %v201 = vld [vmem:[%s153 + $0x158] sm:$0xff]
                %202 = vst [vmem:[%s154 + $0xb8] sm:$0xff] %v201
                %v203 = vld [vmem:[%s153 + $0x180] sm:$0xff]
                %204 = vst [vmem:[%s154 + $0xc0] sm:$0xff] %v203
                %v205 = vld [vmem:[%s153 + $0x188] sm:$0xff]
                %206 = vst [vmem:[%s154 + $0xc8] sm:$0xff] %v205
                %v207 = vld [vmem:[%s153 + $0x190] sm:$0xff]
                %208 = vst [vmem:[%s154 + $0xd0] sm:$0xff] %v207
                %v209 = vld [vmem:[%s153 + $0x198] sm:$0xff]
                %210 = vst [vmem:[%s154 + $0xd8] sm:$0xff] %v209
                %v211 = vld [vmem:[%s153 + $0x1c0] sm:$0xff]
                %212 = vst [vmem:[%s154 + $0xe0] sm:$0xff] %v211
                %v213 = vld [vmem:[%s153 + $0x1c8] sm:$0xff]
                %214 = vst [vmem:[%s154 + $0xe8] sm:$0xff] %v213
                %v215 = vld [vmem:[%s153 + $0x1d0] sm:$0xff]
                %216 = vst [vmem:[%s154 + $0xf0] sm:$0xff] %v215
                %v217 = vld [vmem:[%s153 + $0x1d8] sm:$0xff]
                %218 = vst [vmem:[%s154 + $0xf8] sm:$0xff] %v217
                %v219 = vld [vmem:[%s153 + $0x200] sm:$0xff]
                %220 = vst [vmem:[%s154 + $0x100] sm:$0xff] %v219
                %v221 = vld [vmem:[%s153 + $0x208] sm:$0xff]
                %222 = vst [vmem:[%s154 + $0x108] sm:$0xff] %v221
                %v223 = vld [vmem:[%s153 + $0x210] sm:$0xff]
                %224 = vst [vmem:[%s154 + $0x110] sm:$0xff] %v223
                %v225 = vld [vmem:[%s153 + $0x218] sm:$0xff]
                %226 = vst [vmem:[%s154 + $0x118] sm:$0xff] %v225
                %v227 = vld [vmem:[%s153 + $0x240] sm:$0xff]
                %228 = vst [vmem:[%s154 + $0x120] sm:$0xff] %v227
                %v229 = vld [vmem:[%s153 + $0x248] sm:$0xff]
                %230 = vst [vmem:[%s154 + $0x128] sm:$0xff] %v229
                %v231 = vld [vmem:[%s153 + $0x250] sm:$0xff]
                %232 = vst [vmem:[%s154 + $0x130] sm:$0xff] %v231
                %v233 = vld [vmem:[%s153 + $0x258] sm:$0xff]
                %234 = vst [vmem:[%s154 + $0x138] sm:$0xff] %v233
                %v235 = vld [vmem:[%s153 + $0x280] sm:$0xff]
                %236 = vst [vmem:[%s154 + $0x140] sm:$0xff] %v235
                %v237 = vld [vmem:[%s153 + $0x288] sm:$0xff]
                %238 = vst [vmem:[%s154 + $0x148] sm:$0xff] %v237
                %v239 = vld [vmem:[%s153 + $0x290] sm:$0xff]
                %240 = vst [vmem:[%s154 + $0x150] sm:$0xff] %v239
                %v241 = vld [vmem:[%s153 + $0x298] sm:$0xff]
                %242 = vst [vmem:[%s154 + $0x158] sm:$0xff] %v241
                %v243 = vld [vmem:[%s153 + $0x2c0] sm:$0xff]
                %244 = vst [vmem:[%s154 + $0x160] sm:$0xff] %v243
                %v245 = vld [vmem:[%s153 + $0x2c8] sm:$0xff]
                %246 = vst [vmem:[%s154 + $0x168] sm:$0xff] %v245
                %v247 = vld [vmem:[%s153 + $0x2d0] sm:$0xff]
                %248 = vst [vmem:[%s154 + $0x170] sm:$0xff] %v247
                %v249 = vld [vmem:[%s153 + $0x2d8] sm:$0xff]
                %250 = vst [vmem:[%s154 + $0x178] sm:$0xff] %v249
                %v251 = vld [vmem:[%s153 + $0x300] sm:$0xff]
                %252 = vst [vmem:[%s154 + $0x180] sm:$0xff] %v251
                %v253 = vld [vmem:[%s153 + $0x308] sm:$0xff]
                %254 = vst [vmem:[%s154 + $0x188] sm:$0xff] %v253
                %v255 = vld [vmem:[%s153 + $0x310] sm:$0xff]
                %256 = vst [vmem:[%s154 + $0x190] sm:$0xff] %v255
                %v257 = vld [vmem:[%s153 + $0x318] sm:$0xff]
                %258 = vst [vmem:[%s154 + $0x198] sm:$0xff] %v257
                %v259 = vld [vmem:[%s153 + $0x340] sm:$0xff]
                %260 = vst [vmem:[%s154 + $0x1a0] sm:$0xff] %v259
                %v261 = vld [vmem:[%s153 + $0x348] sm:$0xff]
                %262 = vst [vmem:[%s154 + $0x1a8] sm:$0xff] %v261
                %v263 = vld [vmem:[%s153 + $0x350] sm:$0xff]
                %264 = vst [vmem:[%s154 + $0x1b0] sm:$0xff] %v263
                %v265 = vld [vmem:[%s153 + $0x358] sm:$0xff]
                %266 = vst [vmem:[%s154 + $0x1b8] sm:$0xff] %v265
                %v267 = vld [vmem:[%s153 + $0x380] sm:$0xff]
                %268 = vst [vmem:[%s154 + $0x1c0] sm:$0xff] %v267
                %v269 = vld [vmem:[%s153 + $0x388] sm:$0xff]
                %270 = vst [vmem:[%s154 + $0x1c8] sm:$0xff] %v269
                %v271 = vld [vmem:[%s153 + $0x390] sm:$0xff]
                %272 = vst [vmem:[%s154 + $0x1d0] sm:$0xff] %v271
                %v273 = vld [vmem:[%s153 + $0x398] sm:$0xff]
                %274 = vst [vmem:[%s154 + $0x1d8] sm:$0xff] %v273
                %v275 = vld [vmem:[%s153 + $0x3c0] sm:$0xff]
                %276 = vst [vmem:[%s154 + $0x1e0] sm:$0xff] %v275
                %v277 = vld [vmem:[%s153 + $0x3c8] sm:$0xff]
                %278 = vst [vmem:[%s154 + $0x1e8] sm:$0xff] %v277
                %v279 = vld [vmem:[%s153 + $0x3d0] sm:$0xff]
                %280 = vst [vmem:[%s154 + $0x1f0] sm:$0xff] %v279
                %v281 = vld [vmem:[%s153 + $0x3d8] sm:$0xff]
                %282 = vst [vmem:[%s154 + $0x1f8] sm:$0xff] %v281
                %v283 = vld [vmem:[%s153 + $0x400] sm:$0xff]
                %284 = vst [vmem:[%s154 + $0x200] sm:$0xff] %v283
                %v285 = vld [vmem:[%s153 + $0x408] sm:$0xff]
                %286 = vst [vmem:[%s154 + $0x208] sm:$0xff] %v285
                %v287 = vld [vmem:[%s153 + $0x410] sm:$0xff]
                %288 = vst [vmem:[%s154 + $0x210] sm:$0xff] %v287
                %v289 = vld [vmem:[%s153 + $0x418] sm:$0xff]
                %290 = vst [vmem:[%s154 + $0x218] sm:$0xff] %v289
                %v291 = vld [vmem:[%s153 + $0x440] sm:$0xff]
                %292 = vst [vmem:[%s154 + $0x220] sm:$0xff] %v291
                %v293 = vld [vmem:[%s153 + $0x448] sm:$0xff]
                %294 = vst [vmem:[%s154 + $0x228] sm:$0xff] %v293
                %v295 = vld [vmem:[%s153 + $0x450] sm:$0xff]
                %296 = vst [vmem:[%s154 + $0x230] sm:$0xff] %v295
                %v297 = vld [vmem:[%s153 + $0x458] sm:$0xff]
                %298 = vst [vmem:[%s154 + $0x238] sm:$0xff] %v297
                %v299 = vld [vmem:[%s153 + $0x480] sm:$0xff]
                %300 = vst [vmem:[%s154 + $0x240] sm:$0xff] %v299
                %v301 = vld [vmem:[%s153 + $0x488] sm:$0xff]
                %302 = vst [vmem:[%s154 + $0x248] sm:$0xff] %v301
                %v303 = vld [vmem:[%s153 + $0x490] sm:$0xff]
                %304 = vst [vmem:[%s154 + $0x250] sm:$0xff] %v303
                %v305 = vld [vmem:[%s153 + $0x498] sm:$0xff]
                %306 = vst [vmem:[%s154 + $0x258] sm:$0xff] %v305
                %v307 = vld [vmem:[%s153 + $0x4c0] sm:$0xff]
                %308 = vst [vmem:[%s154 + $0x260] sm:$0xff] %v307
                %v309 = vld [vmem:[%s153 + $0x4c8] sm:$0xff]
                %310 = vst [vmem:[%s154 + $0x268] sm:$0xff] %v309
                %v311 = vld [vmem:[%s153 + $0x4d0] sm:$0xff]
                %312 = vst [vmem:[%s154 + $0x270] sm:$0xff] %v311
                %v313 = vld [vmem:[%s153 + $0x4d8] sm:$0xff]
                %314 = vst [vmem:[%s154 + $0x278] sm:$0xff] %v313
                %v315 = vld [vmem:[%s153 + $0x500] sm:$0xff]
                %316 = vst [vmem:[%s154 + $0x280] sm:$0xff] %v315
                %v317 = vld [vmem:[%s153 + $0x508] sm:$0xff]
                %318 = vst [vmem:[%s154 + $0x288] sm:$0xff] %v317
                %v319 = vld [vmem:[%s153 + $0x510] sm:$0xff]
                %320 = vst [vmem:[%s154 + $0x290] sm:$0xff] %v319
                %v321 = vld [vmem:[%s153 + $0x518] sm:$0xff]
                %322 = vst [vmem:[%s154 + $0x298] sm:$0xff] %v321
                %v323 = vld [vmem:[%s153 + $0x540] sm:$0xff]
                %324 = vst [vmem:[%s154 + $0x2a0] sm:$0xff] %v323
                %v325 = vld [vmem:[%s153 + $0x548] sm:$0xff]
                %326 = vst [vmem:[%s154 + $0x2a8] sm:$0xff] %v325
                %v327 = vld [vmem:[%s153 + $0x550] sm:$0xff]
                %328 = vst [vmem:[%s154 + $0x2b0] sm:$0xff] %v327
                %v329 = vld [vmem:[%s153 + $0x558] sm:$0xff]
                %330 = vst [vmem:[%s154 + $0x2b8] sm:$0xff] %v329
                %v331 = vld [vmem:[%s153 + $0x580] sm:$0xff]
                %332 = vst [vmem:[%s154 + $0x2c0] sm:$0xff] %v331
                %v333 = vld [vmem:[%s153 + $0x588] sm:$0xff]
                %334 = vst [vmem:[%s154 + $0x2c8] sm:$0xff] %v333
                %v335 = vld [vmem:[%s153 + $0x590] sm:$0xff]
                %336 = vst [vmem:[%s154 + $0x2d0] sm:$0xff] %v335
                %v337 = vld [vmem:[%s153 + $0x598] sm:$0xff]
                %338 = vst [vmem:[%s154 + $0x2d8] sm:$0xff] %v337
                %v339 = vld [vmem:[%s153 + $0x5c0] sm:$0xff]
                %340 = vst [vmem:[%s154 + $0x2e0] sm:$0xff] %v339
                %v341 = vld [vmem:[%s153 + $0x5c8] sm:$0xff]
                %342 = vst [vmem:[%s154 + $0x2e8] sm:$0xff] %v341
                %v343 = vld [vmem:[%s153 + $0x5d0] sm:$0xff]
                %344 = vst [vmem:[%s154 + $0x2f0] sm:$0xff] %v343
                %v345 = vld [vmem:[%s153 + $0x5d8] sm:$0xff]
                %346 = vst [vmem:[%s154 + $0x2f8] sm:$0xff] %v345
                %v347 = vld [vmem:[%s153 + $0x600] sm:$0xff]
                %348 = vst [vmem:[%s154 + $0x300] sm:$0xff] %v347
                %v349 = vld [vmem:[%s153 + $0x608] sm:$0xff]
                %350 = vst [vmem:[%s154 + $0x308] sm:$0xff] %v349
                %v351 = vld [vmem:[%s153 + $0x610] sm:$0xff]
                %352 = vst [vmem:[%s154 + $0x310] sm:$0xff] %v351
                %v353 = vld [vmem:[%s153 + $0x618] sm:$0xff]
                %354 = vst [vmem:[%s154 + $0x318] sm:$0xff] %v353
                %v355 = vld [vmem:[%s153 + $0x640] sm:$0xff]
                %356 = vst [vmem:[%s154 + $0x320] sm:$0xff] %v355
                %v357 = vld [vmem:[%s153 + $0x648] sm:$0xff]
                %358 = vst [vmem:[%s154 + $0x328] sm:$0xff] %v357
                %v359 = vld [vmem:[%s153 + $0x650] sm:$0xff]
                %360 = vst [vmem:[%s154 + $0x330] sm:$0xff] %v359
                %v361 = vld [vmem:[%s153 + $0x658] sm:$0xff]
                %362 = vst [vmem:[%s154 + $0x338] sm:$0xff] %v361
                %v363 = vld [vmem:[%s153 + $0x680] sm:$0xff]
                %364 = vst [vmem:[%s154 + $0x340] sm:$0xff] %v363
                %v365 = vld [vmem:[%s153 + $0x688] sm:$0xff]
                %366 = vst [vmem:[%s154 + $0x348] sm:$0xff] %v365
                %v367 = vld [vmem:[%s153 + $0x690] sm:$0xff]
                %368 = vst [vmem:[%s154 + $0x350] sm:$0xff] %v367
                %v369 = vld [vmem:[%s153 + $0x698] sm:$0xff]
                %370 = vst [vmem:[%s154 + $0x358] sm:$0xff] %v369
                %v371 = vld [vmem:[%s153 + $0x6c0] sm:$0xff]
                %372 = vst [vmem:[%s154 + $0x360] sm:$0xff] %v371
                %v373 = vld [vmem:[%s153 + $0x6c8] sm:$0xff]
                %374 = vst [vmem:[%s154 + $0x368] sm:$0xff] %v373
                %v375 = vld [vmem:[%s153 + $0x6d0] sm:$0xff]
                %376 = vst [vmem:[%s154 + $0x370] sm:$0xff] %v375
                %v377 = vld [vmem:[%s153 + $0x6d8] sm:$0xff]
                %378 = vst [vmem:[%s154 + $0x378] sm:$0xff] %v377
                %v379 = vld [vmem:[%s153 + $0x700] sm:$0xff]
                %380 = vst [vmem:[%s154 + $0x380] sm:$0xff] %v379
                %v381 = vld [vmem:[%s153 + $0x708] sm:$0xff]
                %382 = vst [vmem:[%s154 + $0x388] sm:$0xff] %v381
                %v383 = vld [vmem:[%s153 + $0x710] sm:$0xff]
                %384 = vst [vmem:[%s154 + $0x390] sm:$0xff] %v383
                %v385 = vld [vmem:[%s153 + $0x718] sm:$0xff]
                %386 = vst [vmem:[%s154 + $0x398] sm:$0xff] %v385
                %v387 = vld [vmem:[%s153 + $0x740] sm:$0xff]
                %388 = vst [vmem:[%s154 + $0x3a0] sm:$0xff] %v387
                %v389 = vld [vmem:[%s153 + $0x748] sm:$0xff]
                %390 = vst [vmem:[%s154 + $0x3a8] sm:$0xff] %v389
                %v391 = vld [vmem:[%s153 + $0x750] sm:$0xff]
                %392 = vst [vmem:[%s154 + $0x3b0] sm:$0xff] %v391
                %v393 = vld [vmem:[%s153 + $0x758] sm:$0xff]
                %394 = vst [vmem:[%s154 + $0x3b8] sm:$0xff] %v393
                %v395 = vld [vmem:[%s153 + $0x780] sm:$0xff]
                %396 = vst [vmem:[%s154 + $0x3c0] sm:$0xff] %v395
                %v397 = vld [vmem:[%s153 + $0x788] sm:$0xff]
                %398 = vst [vmem:[%s154 + $0x3c8] sm:$0xff] %v397
                %v399 = vld [vmem:[%s153 + $0x790] sm:$0xff]
                %400 = vst [vmem:[%s154 + $0x3d0] sm:$0xff] %v399
                %v401 = vld [vmem:[%s153 + $0x798] sm:$0xff]
                %402 = vst [vmem:[%s154 + $0x3d8] sm:$0xff] %v401
                %v403 = vld [vmem:[%s153 + $0x7c0] sm:$0xff]
                %404 = vst [vmem:[%s154 + $0x3e0] sm:$0xff] %v403
                %v405 = vld [vmem:[%s153 + $0x7c8] sm:$0xff]
                %406 = vst [vmem:[%s154 + $0x3e8] sm:$0xff] %v405
                %v407 = vld [vmem:[%s153 + $0x7d0] sm:$0xff]
                %408 = vst [vmem:[%s154 + $0x3f0] sm:$0xff] %v407
                %v409 = vld [vmem:[%s153 + $0x7d8] sm:$0xff]
                %410 = vst [vmem:[%s154 + $0x3f8] sm:$0xff] %v409
                %v411 = vld [vmem:[%s153 + $0x800] sm:$0xff]
                %412 = vst [vmem:[%s154 + $0x400] sm:$0xff] %v411
                %v413 = vld [vmem:[%s153 + $0x808] sm:$0xff]
                %414 = vst [vmem:[%s154 + $0x408] sm:$0xff] %v413
                %v415 = vld [vmem:[%s153 + $0x810] sm:$0xff]
                %416 = vst [vmem:[%s154 + $0x410] sm:$0xff] %v415
                %v417 = vld [vmem:[%s153 + $0x818] sm:$0xff]
                %418 = vst [vmem:[%s154 + $0x418] sm:$0xff] %v417
                %v419 = vld [vmem:[%s153 + $0x840] sm:$0xff]
                %420 = vst [vmem:[%s154 + $0x420] sm:$0xff] %v419
                %v421 = vld [vmem:[%s153 + $0x848] sm:$0xff]
                %422 = vst [vmem:[%s154 + $0x428] sm:$0xff] %v421
                %v423 = vld [vmem:[%s153 + $0x850] sm:$0xff]
                %424 = vst [vmem:[%s154 + $0x430] sm:$0xff] %v423
                %v425 = vld [vmem:[%s153 + $0x858] sm:$0xff]
                %426 = vst [vmem:[%s154 + $0x438] sm:$0xff] %v425
                %v427 = vld [vmem:[%s153 + $0x880] sm:$0xff]
                %428 = vst [vmem:[%s154 + $0x440] sm:$0xff] %v427
                %v429 = vld [vmem:[%s153 + $0x888] sm:$0xff]
                %430 = vst [vmem:[%s154 + $0x448] sm:$0xff] %v429
                %v431 = vld [vmem:[%s153 + $0x890] sm:$0xff]
                %432 = vst [vmem:[%s154 + $0x450] sm:$0xff] %v431
                %v433 = vld [vmem:[%s153 + $0x898] sm:$0xff]
                %434 = vst [vmem:[%s154 + $0x458] sm:$0xff] %v433
                %v435 = vld [vmem:[%s153 + $0x8c0] sm:$0xff]
                %436 = vst [vmem:[%s154 + $0x460] sm:$0xff] %v435
                %v437 = vld [vmem:[%s153 + $0x8c8] sm:$0xff]
                %438 = vst [vmem:[%s154 + $0x468] sm:$0xff] %v437
                %v439 = vld [vmem:[%s153 + $0x8d0] sm:$0xff]
                %440 = vst [vmem:[%s154 + $0x470] sm:$0xff] %v439
                %v441 = vld [vmem:[%s153 + $0x8d8] sm:$0xff]
                %442 = vst [vmem:[%s154 + $0x478] sm:$0xff] %v441
                %v443 = vld [vmem:[%s153 + $0x900] sm:$0xff]
                %444 = vst [vmem:[%s154 + $0x480] sm:$0xff] %v443
                %v445 = vld [vmem:[%s153 + $0x908] sm:$0xff]
                %446 = vst [vmem:[%s154 + $0x488] sm:$0xff] %v445
                %v447 = vld [vmem:[%s153 + $0x910] sm:$0xff]
                %448 = vst [vmem:[%s154 + $0x490] sm:$0xff] %v447
                %v449 = vld [vmem:[%s153 + $0x918] sm:$0xff]
                %450 = vst [vmem:[%s154 + $0x498] sm:$0xff] %v449
                %v451 = vld [vmem:[%s153 + $0x940] sm:$0xff]
                %452 = vst [vmem:[%s154 + $0x4a0] sm:$0xff] %v451
                %v453 = vld [vmem:[%s153 + $0x948] sm:$0xff]
                %454 = vst [vmem:[%s154 + $0x4a8] sm:$0xff] %v453
                %v455 = vld [vmem:[%s153 + $0x950] sm:$0xff]
                %456 = vst [vmem:[%s154 + $0x4b0] sm:$0xff] %v455
                %v457 = vld [vmem:[%s153 + $0x958] sm:$0xff]
                %458 = vst [vmem:[%s154 + $0x4b8] sm:$0xff] %v457
                %v459 = vld [vmem:[%s153 + $0x980] sm:$0xff]
                %460 = vst [vmem:[%s154 + $0x4c0] sm:$0xff] %v459
                %v461 = vld [vmem:[%s153 + $0x988] sm:$0xff]
                %462 = vst [vmem:[%s154 + $0x4c8] sm:$0xff] %v461
                %v463 = vld [vmem:[%s153 + $0x990] sm:$0xff]
                %464 = vst [vmem:[%s154 + $0x4d0] sm:$0xff] %v463
                %v465 = vld [vmem:[%s153 + $0x998] sm:$0xff]
                %466 = vst [vmem:[%s154 + $0x4d8] sm:$0xff] %v465
                %v467 = vld [vmem:[%s153 + $0x9c0] sm:$0xff]
                %468 = vst [vmem:[%s154 + $0x4e0] sm:$0xff] %v467
                %v469 = vld [vmem:[%s153 + $0x9c8] sm:$0xff]
                %470 = vst [vmem:[%s154 + $0x4e8] sm:$0xff] %v469
                %v471 = vld [vmem:[%s153 + $0x9d0] sm:$0xff]
                %472 = vst [vmem:[%s154 + $0x4f0] sm:$0xff] %v471
                %v473 = vld [vmem:[%s153 + $0x9d8] sm:$0xff]
                %474 = vst [vmem:[%s154 + $0x4f8] sm:$0xff] %v473
                %v475 = vld [vmem:[%s153 + $0xa00] sm:$0xff]
                %476 = vst [vmem:[%s154 + $0x500] sm:$0xff] %v475
                %v477 = vld [vmem:[%s153 + $0xa08] sm:$0xff]
                %478 = vst [vmem:[%s154 + $0x508] sm:$0xff] %v477
                %v479 = vld [vmem:[%s153 + $0xa10] sm:$0xff]
                %480 = vst [vmem:[%s154 + $0x510] sm:$0xff] %v479
                %v481 = vld [vmem:[%s153 + $0xa18] sm:$0xff]
                %482 = vst [vmem:[%s154 + $0x518] sm:$0xff] %v481
                %v483 = vld [vmem:[%s153 + $0xa40] sm:$0xff]
                %484 = vst [vmem:[%s154 + $0x520] sm:$0xff] %v483
                %v485 = vld [vmem:[%s153 + $0xa48] sm:$0xff]
                %486 = vst [vmem:[%s154 + $0x528] sm:$0xff] %v485
                %v487 = vld [vmem:[%s153 + $0xa50] sm:$0xff]
                %488 = vst [vmem:[%s154 + $0x530] sm:$0xff] %v487
                %v489 = vld [vmem:[%s153 + $0xa58] sm:$0xff]
                %490 = vst [vmem:[%s154 + $0x538] sm:$0xff] %v489
                %v491 = vld [vmem:[%s153 + $0xa80] sm:$0xff]
                %492 = vst [vmem:[%s154 + $0x540] sm:$0xff] %v491
                %v493 = vld [vmem:[%s153 + $0xa88] sm:$0xff]
                %494 = vst [vmem:[%s154 + $0x548] sm:$0xff] %v493
                %v495 = vld [vmem:[%s153 + $0xa90] sm:$0xff]
                %496 = vst [vmem:[%s154 + $0x550] sm:$0xff] %v495
                %v497 = vld [vmem:[%s153 + $0xa98] sm:$0xff]
                %498 = vst [vmem:[%s154 + $0x558] sm:$0xff] %v497
                %v499 = vld [vmem:[%s153 + $0xac0] sm:$0xff]
                %500 = vst [vmem:[%s154 + $0x560] sm:$0xff] %v499
                %v501 = vld [vmem:[%s153 + $0xac8] sm:$0xff]
                %502 = vst [vmem:[%s154 + $0x568] sm:$0xff] %v501
                %v503 = vld [vmem:[%s153 + $0xad0] sm:$0xff]
                %504 = vst [vmem:[%s154 + $0x570] sm:$0xff] %v503
                %v505 = vld [vmem:[%s153 + $0xad8] sm:$0xff]
                %506 = vst [vmem:[%s154 + $0x578] sm:$0xff] %v505
                %v507 = vld [vmem:[%s153 + $0xb00] sm:$0xff]
                %508 = vst [vmem:[%s154 + $0x580] sm:$0xff] %v507
                %v509 = vld [vmem:[%s153 + $0xb08] sm:$0xff]
                %510 = vst [vmem:[%s154 + $0x588] sm:$0xff] %v509
                %v511 = vld [vmem:[%s153 + $0xb10] sm:$0xff]
                %512 = vst [vmem:[%s154 + $0x590] sm:$0xff] %v511
                %v513 = vld [vmem:[%s153 + $0xb18] sm:$0xff]
                %514 = vst [vmem:[%s154 + $0x598] sm:$0xff] %v513
                %v515 = vld [vmem:[%s153 + $0xb40] sm:$0xff]
                %516 = vst [vmem:[%s154 + $0x5a0] sm:$0xff] %v515
                %v517 = vld [vmem:[%s153 + $0xb48] sm:$0xff]
                %518 = vst [vmem:[%s154 + $0x5a8] sm:$0xff] %v517
                %v519 = vld [vmem:[%s153 + $0xb50] sm:$0xff]
                %520 = vst [vmem:[%s154 + $0x5b0] sm:$0xff] %v519
                %v521 = vld [vmem:[%s153 + $0xb58] sm:$0xff]
                %522 = vst [vmem:[%s154 + $0x5b8] sm:$0xff] %v521
                %v523 = vld [vmem:[%s153 + $0xb80] sm:$0xff]
                %524 = vst [vmem:[%s154 + $0x5c0] sm:$0xff] %v523
                %v525 = vld [vmem:[%s153 + $0xb88] sm:$0xff]
                %526 = vst [vmem:[%s154 + $0x5c8] sm:$0xff] %v525
                %v527 = vld [vmem:[%s153 + $0xb90] sm:$0xff]
                %528 = vst [vmem:[%s154 + $0x5d0] sm:$0xff] %v527
                %v529 = vld [vmem:[%s153 + $0xb98] sm:$0xff]
                %530 = vst [vmem:[%s154 + $0x5d8] sm:$0xff] %v529
                %v531 = vld [vmem:[%s153 + $0xbc0] sm:$0xff]
                %532 = vst [vmem:[%s154 + $0x5e0] sm:$0xff] %v531
                %v533 = vld [vmem:[%s153 + $0xbc8] sm:$0xff]
                %534 = vst [vmem:[%s154 + $0x5e8] sm:$0xff] %v533
                %v535 = vld [vmem:[%s153 + $0xbd0] sm:$0xff]
                %536 = vst [vmem:[%s154 + $0x5f0] sm:$0xff] %v535
                %v537 = vld [vmem:[%s153 + $0xbd8] sm:$0xff]
                %538 = vst [vmem:[%s154 + $0x5f8] sm:$0xff] %v537
                %v539 = vld [vmem:[%s153 + $0xc00] sm:$0xff]
                %540 = vst [vmem:[%s154 + $0x600] sm:$0xff] %v539
                %v541 = vld [vmem:[%s153 + $0xc08] sm:$0xff]
                %542 = vst [vmem:[%s154 + $0x608] sm:$0xff] %v541
                %v543 = vld [vmem:[%s153 + $0xc10] sm:$0xff]
                %544 = vst [vmem:[%s154 + $0x610] sm:$0xff] %v543
                %v545 = vld [vmem:[%s153 + $0xc18] sm:$0xff]
                %546 = vst [vmem:[%s154 + $0x618] sm:$0xff] %v545
              $region33: #{gabor_cnn7_forward.11} parent=27 // loop_footer
                %s152 = sadd.s32 1, %s148
              $region34: #{gabor_cnn7_forward.11} parent=27 // loop_footer_branch
                %147 = sbr.rel target = $region30
              $region35: #{gabor_cnn7_forward.11} parent=27 // loop_exit
                _
            $region28: #{gabor_cnn7_forward.11} parent=23 // pred_fallthru
              _
            // Predicated region
            $region36: #{gabor_cnn7_forward.11} parent=23 // pred_check
              _
            $region37: #{gabor_cnn7_forward.11} parent=23 // pred_check_branch
              %548 = sbr.rel target = $region39
            $region38: #{gabor_cnn7_forward.11} parent=23 // pred_region
              _
            $region39: #{gabor_cnn7_forward.11} parent=23 // pred_fallthru
              _
          $region24: #{gabor_cnn7_forward.11} parent=19 // pred_fallthru
            _
          %549 = vnop
        $region20: #{gabor_cnn7_forward.11} parent=15 // pred_fallthru
          _
        // Predicated region
        $region40: #{gabor_cnn7_forward.11} parent=15 // pred_check
          %p550 = pneg %p77
        $region41: #{gabor_cnn7_forward.11} parent=15 // pred_check_branch
          %552 = sbr.rel (%p550) target = $region43
        $region42: #{gabor_cnn7_forward.11} parent=15 // pred_region
          %s553 = smul.u32 128, %s17
          %p554 = scmp.lt.s32.totalorder %s553, 255
          %s555 = scalar_select %p554, %s553, 255
          %p556 = scmp.lt.s32.totalorder %s16, 0
          %s557 = scalar_select %p556, %s16, 0
          %s558 = sadd.s32 %s557, %s555
          %s559 = smul.addr %s558, 4
          %s560 = scalar_lea.vmem %s1, %s559
          %s561 = smul.u32 128, %s17
        $region43: #{gabor_cnn7_forward.11} parent=15 // pred_fallthru
          _
      $region16: #{gabor_cnn7_forward.11} parent=5 // pred_fallthru
        _
      %p562 = scmp.le.s32.totalorder 1, %s8
      %p563 = scmp.lt.s32.totalorder %s8, 3
      %p564 = pnand %p562, %p563
      %p565 = pneg %p564
      // Predicated region
      $region44: #{gabor_cnn7_forward.11} parent=5 // pred_check
        _
      $region45: #{gabor_cnn7_forward.11} parent=5 // pred_check_branch
        %567 = sbr.rel (%p564) target = $region47
      $region46: #{gabor_cnn7_forward.11} parent=5 // pred_region
        %s568 = ssub.s32 %s8, 1
        %s569 = sand.u32 %s42, 1
        %s570 = sand.u32 %s42, 1
        %s571 = smul.addr %s570, 1568
        %s572 = scalar_lea.vmem [#allocation3], %s571
        // Predicated region
        $region48: #{gabor_cnn7_forward.11} parent=46 // pred_check
          %p573 = pneg %p55
        $region49: #{gabor_cnn7_forward.11} parent=46 // pred_check_branch
          %575 = sbr.rel (%p573) target = $region51
        $region50: #{gabor_cnn7_forward.11} parent=46 // pred_region
          _
        $region51: #{gabor_cnn7_forward.11} parent=46 // pred_fallthru
          _
        %s576 = sand.u32 %s42, 1
        %s577 = sand.u32 %s42, 1
        %s578 = smul.addr %s577, 1568
        %s579 = scalar_lea.vmem [#allocation3], %s578
        %p580 = pneg %p55
        %p581 = pneg %p52
        %s582 = smul.u32 128, %s20
        %p583 = scmp.lt.s32.totalorder %s582, 255
        %s584 = scalar_select %p583, %s582, 255
        %p585 = scmp.lt.s32.totalorder %s19, 0
        %s586 = scalar_select %p585, %s19, 0
        %s587 = sadd.s32 %s586, %s584
        %s588 = smul.addr %s587, 4
        %s589 = scalar_lea.vmem %s1, %s588
        %p590 = pneg %p83
        %p591 = pneg %p80
        %p592 = pneg %p111
        %p593 = pneg %p108
        %s594 = smul.u32 49, %s18
        %p595 = scmp.lt.s32.totalorder %s594, 48
        %s596 = scalar_select %p595, %s594, 48
        %p597 = scmp.lt.s32.totalorder %s19, 0
        %s598 = scalar_select %p597, %s19, 0
        %s599 = sadd.s32 %s598, %s596
        %s600 = smul.addr %s599, 4
        %s601 = scalar_lea.vmem %s2, %s600
        %s602 = smul.u32 49, %s18
        %s603 = smul.u32 8, %s20
        %s604 = smul.u32 128, %s20
        %p605 = scmp.lt.s32.totalorder %s604, 255
        %s606 = scalar_select %p605, %s604, 255
        %p607 = scmp.lt.s32.totalorder %s19, 0
        %s608 = scalar_select %p607, %s19, 0
        %s609 = sadd.s32 %s608, %s606
        %s610 = smul.addr %s609, 4
        %s611 = scalar_lea.vmem %s1, %s610
        %s612 = smul.u32 128, %s20
        %s613 = smul.u32 49, %s18
        %p614 = scmp.lt.s32.totalorder %s613, 48
        %s615 = scalar_select %p614, %s613, 48
        %p616 = scmp.lt.s32.totalorder %s19, 0
        %s617 = scalar_select %p616, %s19, 0
        %s618 = sadd.s32 %s617, %s615
        %s619 = smul.addr %s618, 4
        %s620 = scalar_lea.vmem %s2, %s619
        %s621 = smul.u32 49, %s18
        %p623 = scmp.eq.s32.totalorder %s20, 0
        // Predicated region
        $region52: #{gabor_cnn7_forward.11} parent=46 // pred_check
          %p624 = pneg %p623
        $region53: #{gabor_cnn7_forward.11} parent=46 // pred_check_branch
          %626 = sbr.rel (%p624) target = $region55
        $region54: #{gabor_cnn7_forward.11} parent=46 // pred_region
          %627 = vst [vmem:[#allocation2] sm:$0xff] 0.0
          %628 = vst [vmem:[#allocation2 + $0x8] sm:$0xff] 0.0
          %629 = vst [vmem:[#allocation2 + $0x10] sm:$0xff] 0.0
          %630 = vst [vmem:[#allocation2 + $0x18] sm:$0xff] 0.0
          %631 = vst [vmem:[#allocation2 + $0x20] sm:$0xff] 0.0
          %632 = vst [vmem:[#allocation2 + $0x28] sm:$0xff] 0.0
          %633 = vst [vmem:[#allocation2 + $0x30] sm:$0xff] 0.0
          %634 = vst [vmem:[#allocation2 + $0x38] sm:$0xff] 0.0
          %635 = vst [vmem:[#allocation2 + $0x40] sm:$0xff] 0.0
          %636 = vst [vmem:[#allocation2 + $0x48] sm:$0xff] 0.0
          %637 = vst [vmem:[#allocation2 + $0x50] sm:$0xff] 0.0
          %638 = vst [vmem:[#allocation2 + $0x58] sm:$0xff] 0.0
          %639 = vst [vmem:[#allocation2 + $0x60] sm:$0xff] 0.0
          %640 = vst [vmem:[#allocation2 + $0x68] sm:$0xff] 0.0
          %641 = vst [vmem:[#allocation2 + $0x70] sm:$0xff] 0.0
          %642 = vst [vmem:[#allocation2 + $0x78] sm:$0xff] 0.0
          %643 = vst [vmem:[#allocation2 + $0x80] sm:$0xff] 0.0
          %644 = vst [vmem:[#allocation2 + $0x88] sm:$0xff] 0.0
          %645 = vst [vmem:[#allocation2 + $0x90] sm:$0xff] 0.0
          %646 = vst [vmem:[#allocation2 + $0x98] sm:$0xff] 0.0
          %647 = vst [vmem:[#allocation2 + $0xa0] sm:$0xff] 0.0
          %648 = vst [vmem:[#allocation2 + $0xa8] sm:$0xff] 0.0
          %649 = vst [vmem:[#allocation2 + $0xb0] sm:$0xff] 0.0
          %650 = vst [vmem:[#allocation2 + $0xb8] sm:$0xff] 0.0
          %651 = vst [vmem:[#allocation2 + $0xc0] sm:$0xff] 0.0
          %652 = vst [vmem:[#allocation2 + $0xc8] sm:$0xff] 0.0
          %653 = vst [vmem:[#allocation2 + $0xd0] sm:$0xff] 0.0
          %654 = vst [vmem:[#allocation2 + $0xd8] sm:$0xff] 0.0
          %655 = vst [vmem:[#allocation2 + $0xe0] sm:$0xff] 0.0
          %656 = vst [vmem:[#allocation2 + $0xe8] sm:$0xff] 0.0
          %657 = vst [vmem:[#allocation2 + $0xf0] sm:$0xff] 0.0
          %658 = vst [vmem:[#allocation2 + $0xf8] sm:$0xff] 0.0
          %659 = vst [vmem:[#allocation2 + $0x100] sm:$0xff] 0.0
          %660 = vst [vmem:[#allocation2 + $0x108] sm:$0xff] 0.0
          %661 = vst [vmem:[#allocation2 + $0x110] sm:$0xff] 0.0
          %662 = vst [vmem:[#allocation2 + $0x118] sm:$0xff] 0.0
          %663 = vst [vmem:[#allocation2 + $0x120] sm:$0xff] 0.0
          %664 = vst [vmem:[#allocation2 + $0x128] sm:$0xff] 0.0
          %665 = vst [vmem:[#allocation2 + $0x130] sm:$0xff] 0.0
          %666 = vst [vmem:[#allocation2 + $0x138] sm:$0xff] 0.0
          %667 = vst [vmem:[#allocation2 + $0x140] sm:$0xff] 0.0
          %668 = vst [vmem:[#allocation2 + $0x148] sm:$0xff] 0.0
          %669 = vst [vmem:[#allocation2 + $0x150] sm:$0xff] 0.0
          %670 = vst [vmem:[#allocation2 + $0x158] sm:$0xff] 0.0
          %671 = vst [vmem:[#allocation2 + $0x160] sm:$0xff] 0.0
          %672 = vst [vmem:[#allocation2 + $0x168] sm:$0xff] 0.0
          %673 = vst [vmem:[#allocation2 + $0x170] sm:$0xff] 0.0
          %674 = vst [vmem:[#allocation2 + $0x178] sm:$0xff] 0.0
          %675 = vst [vmem:[#allocation2 + $0x180] sm:$0xff] 0.0
        $region55: #{gabor_cnn7_forward.11} parent=46 // pred_fallthru
          _
        %v676 = vld [vmem:[#allocation2] sm:$0xff]
        %v677 = vld [vmem:[#allocation2 + $0x8] sm:$0xff]
        %v678 = vld [vmem:[#allocation2 + $0x10] sm:$0xff]
        %v679 = vld [vmem:[#allocation2 + $0x18] sm:$0xff]
        %v680 = vld [vmem:[#allocation2 + $0x20] sm:$0xff]
        %v681 = vld [vmem:[#allocation2 + $0x28] sm:$0xff]
        %v682 = vld [vmem:[#allocation2 + $0x30] sm:$0xff]
        %v683 = vld [vmem:[#allocation2 + $0x38] sm:$0xff]
        %v684 = vld [vmem:[#allocation2 + $0x40] sm:$0xff]
        %v685 = vld [vmem:[#allocation2 + $0x48] sm:$0xff]
        %v686 = vld [vmem:[#allocation2 + $0x50] sm:$0xff]
        %v687 = vld [vmem:[#allocation2 + $0x58] sm:$0xff]
        %v688 = vld [vmem:[#allocation2 + $0x60] sm:$0xff]
        %v689 = vld [vmem:[#allocation2 + $0x68] sm:$0xff]
        %v690 = vld [vmem:[#allocation2 + $0x70] sm:$0xff]
        %v691 = vld [vmem:[#allocation2 + $0x78] sm:$0xff]
        %v692 = vld [vmem:[#allocation2 + $0x80] sm:$0xff]
        %v693 = vld [vmem:[#allocation2 + $0x88] sm:$0xff]
        %v694 = vld [vmem:[#allocation2 + $0x90] sm:$0xff]
        %v695 = vld [vmem:[#allocation2 + $0x98] sm:$0xff]
        %v696 = vld [vmem:[#allocation2 + $0xa0] sm:$0xff]
        %v697 = vld [vmem:[#allocation2 + $0xa8] sm:$0xff]
        %v698 = vld [vmem:[#allocation2 + $0xb0] sm:$0xff]
        %v699 = vld [vmem:[#allocation2 + $0xb8] sm:$0xff]
        %v700 = vld [vmem:[#allocation2 + $0xc0] sm:$0xff]
        %v701 = vld [vmem:[#allocation2 + $0xc8] sm:$0xff]
        %v702 = vld [vmem:[#allocation2 + $0xd0] sm:$0xff]
        %v703 = vld [vmem:[#allocation2 + $0xd8] sm:$0xff]
        %v704 = vld [vmem:[#allocation2 + $0xe0] sm:$0xff]
        %v705 = vld [vmem:[#allocation2 + $0xe8] sm:$0xff]
        %v706 = vld [vmem:[#allocation2 + $0xf0] sm:$0xff]
        %v707 = vld [vmem:[#allocation2 + $0xf8] sm:$0xff]
        %v708 = vld [vmem:[#allocation2 + $0x100] sm:$0xff]
        %v709 = vld [vmem:[#allocation2 + $0x108] sm:$0xff]
        %v710 = vld [vmem:[#allocation2 + $0x110] sm:$0xff]
        %v711 = vld [vmem:[#allocation2 + $0x118] sm:$0xff]
        %v712 = vld [vmem:[#allocation2 + $0x120] sm:$0xff]
        %v713 = vld [vmem:[#allocation2 + $0x128] sm:$0xff]
        %v714 = vld [vmem:[#allocation2 + $0x130] sm:$0xff]
        %v715 = vld [vmem:[#allocation2 + $0x138] sm:$0xff]
        %v716 = vld [vmem:[#allocation2 + $0x140] sm:$0xff]
        %v717 = vld [vmem:[#allocation2 + $0x148] sm:$0xff]
        %v718 = vld [vmem:[#allocation2 + $0x150] sm:$0xff]
        %v719 = vld [vmem:[#allocation2 + $0x158] sm:$0xff]
        %v720 = vld [vmem:[#allocation2 + $0x160] sm:$0xff]
        %v721 = vld [vmem:[#allocation2 + $0x168] sm:$0xff]
        %v722 = vld [vmem:[#allocation2 + $0x170] sm:$0xff]
        %v723 = vld [vmem:[#allocation2 + $0x178] sm:$0xff]
        %v724 = vld [vmem:[#allocation2 + $0x180] sm:$0xff]
        %v725 = vld [vmem:[%s572] sm:$0xff]
        %v726 = vld [vmem:[%s572 + $0x8] sm:$0xff]
        %v727 = vld [vmem:[%s572 + $0x10] sm:$0xff]
        %v728 = vld [vmem:[%s572 + $0x18] sm:$0xff]
        %v729 = vld [vmem:[%s572 + $0x20] sm:$0xff]
        %v730 = vld [vmem:[%s572 + $0x28] sm:$0xff]
        %v731 = vld [vmem:[%s572 + $0x30] sm:$0xff]
        %v732 = vld [vmem:[%s572 + $0x38] sm:$0xff]
        %v733 = vld [vmem:[%s572 + $0x40] sm:$0xff]
        %v734 = vld [vmem:[%s572 + $0x48] sm:$0xff]
        %v735 = vld [vmem:[%s572 + $0x50] sm:$0xff]
        %v736 = vld [vmem:[%s572 + $0x58] sm:$0xff]
        %v737 = vld [vmem:[%s572 + $0x60] sm:$0xff]
        %v738 = vld [vmem:[%s572 + $0x68] sm:$0xff]
        %v739 = vld [vmem:[%s572 + $0x70] sm:$0xff]
        %v740 = vld [vmem:[%s572 + $0x78] sm:$0xff]
        %v741 = vld [vmem:[%s572 + $0x80] sm:$0xff]
        %v742 = vld [vmem:[%s572 + $0x88] sm:$0xff]
        %v743 = vld [vmem:[%s572 + $0x90] sm:$0xff]
        %v744 = vld [vmem:[%s572 + $0x98] sm:$0xff]
        %v745 = vld [vmem:[%s572 + $0xa0] sm:$0xff]
        %v746 = vld [vmem:[%s572 + $0xa8] sm:$0xff]
        %v747 = vld [vmem:[%s572 + $0xb0] sm:$0xff]
        %v748 = vld [vmem:[%s572 + $0xb8] sm:$0xff]
        %v749 = vld [vmem:[%s572 + $0xc0] sm:$0xff]
        %v750 = vld [vmem:[%s572 + $0xc8] sm:$0xff]
        %v751 = vld [vmem:[%s572 + $0xd0] sm:$0xff]
        %v752 = vld [vmem:[%s572 + $0xd8] sm:$0xff]
        %v753 = vld [vmem:[%s572 + $0xe0] sm:$0xff]
        %v754 = vld [vmem:[%s572 + $0xe8] sm:$0xff]
        %v755 = vld [vmem:[%s572 + $0xf0] sm:$0xff]
        %v756 = vld [vmem:[%s572 + $0xf8] sm:$0xff]
        %v757 = vld [vmem:[%s572 + $0x100] sm:$0xff]
        %v758 = vld [vmem:[%s572 + $0x108] sm:$0xff]
        %v759 = vld [vmem:[%s572 + $0x110] sm:$0xff]
        %v760 = vld [vmem:[%s572 + $0x118] sm:$0xff]
        %v761 = vld [vmem:[%s572 + $0x120] sm:$0xff]
        %v762 = vld [vmem:[%s572 + $0x128] sm:$0xff]
        %v763 = vld [vmem:[%s572 + $0x130] sm:$0xff]
        %v764 = vld [vmem:[%s572 + $0x138] sm:$0xff]
        %v765 = vld [vmem:[%s572 + $0x140] sm:$0xff]
        %v766 = vld [vmem:[%s572 + $0x148] sm:$0xff]
        %v767 = vld [vmem:[%s572 + $0x150] sm:$0xff]
        %v768 = vld [vmem:[%s572 + $0x158] sm:$0xff]
        %v769 = vld [vmem:[%s572 + $0x160] sm:$0xff]
        %v770 = vld [vmem:[%s572 + $0x168] sm:$0xff]
        %v771 = vld [vmem:[%s572 + $0x170] sm:$0xff]
        %v772 = vld [vmem:[%s572 + $0x178] sm:$0xff]
        %v773 = vld [vmem:[%s572 + $0x180] sm:$0xff]
        %v774 = vld [vmem:[%s572 + $0x188] sm:$0xff]
        %v775 = vld [vmem:[%s572 + $0x190] sm:$0xff]
        %v776 = vld [vmem:[%s572 + $0x198] sm:$0xff]
        %v777 = vld [vmem:[%s572 + $0x1a0] sm:$0xff]
        %v778 = vld [vmem:[%s572 + $0x1a8] sm:$0xff]
        %v779 = vld [vmem:[%s572 + $0x1b0] sm:$0xff]
        %v780 = vld [vmem:[%s572 + $0x1b8] sm:$0xff]
        %v781 = vld [vmem:[%s572 + $0x1c0] sm:$0xff]
        %v782 = vld [vmem:[%s572 + $0x1c8] sm:$0xff]
        %v783 = vld [vmem:[%s572 + $0x1d0] sm:$0xff]
        %v784 = vld [vmem:[%s572 + $0x1d8] sm:$0xff]
        %v785 = vld [vmem:[%s572 + $0x1e0] sm:$0xff]
        %v786 = vld [vmem:[%s572 + $0x1e8] sm:$0xff]
        %v787 = vld [vmem:[%s572 + $0x1f0] sm:$0xff]
        %v788 = vld [vmem:[%s572 + $0x1f8] sm:$0xff]
        %v789 = vld [vmem:[%s572 + $0x200] sm:$0xff]
        %v790 = vld [vmem:[%s572 + $0x208] sm:$0xff]
        %v791 = vld [vmem:[%s572 + $0x210] sm:$0xff]
        %v792 = vld [vmem:[%s572 + $0x218] sm:$0xff]
        %v793 = vld [vmem:[%s572 + $0x220] sm:$0xff]
        %v794 = vld [vmem:[%s572 + $0x228] sm:$0xff]
        %v795 = vld [vmem:[%s572 + $0x230] sm:$0xff]
        %v796 = vld [vmem:[%s572 + $0x238] sm:$0xff]
        %v797 = vld [vmem:[%s572 + $0x240] sm:$0xff]
        %v798 = vld [vmem:[%s572 + $0x248] sm:$0xff]
        %v799 = vld [vmem:[%s572 + $0x250] sm:$0xff]
        %v800 = vld [vmem:[%s572 + $0x258] sm:$0xff]
        %v801 = vld [vmem:[%s572 + $0x260] sm:$0xff]
        %v802 = vld [vmem:[%s572 + $0x268] sm:$0xff]
        %v803 = vld [vmem:[%s572 + $0x270] sm:$0xff]
        %v804 = vld [vmem:[%s572 + $0x278] sm:$0xff]
        %v805 = vld [vmem:[%s572 + $0x280] sm:$0xff]
        %v806 = vld [vmem:[%s572 + $0x288] sm:$0xff]
        %v807 = vld [vmem:[%s572 + $0x290] sm:$0xff]
        %v808 = vld [vmem:[%s572 + $0x298] sm:$0xff]
        %v809 = vld [vmem:[%s572 + $0x2a0] sm:$0xff]
        %v810 = vld [vmem:[%s572 + $0x2a8] sm:$0xff]
        %v811 = vld [vmem:[%s572 + $0x2b0] sm:$0xff]
        %v812 = vld [vmem:[%s572 + $0x2b8] sm:$0xff]
        %v813 = vld [vmem:[%s572 + $0x2c0] sm:$0xff]
        %v814 = vld [vmem:[%s572 + $0x2c8] sm:$0xff]
        %v815 = vld [vmem:[%s572 + $0x2d0] sm:$0xff]
        %v816 = vld [vmem:[%s572 + $0x2d8] sm:$0xff]
        %v817 = vld [vmem:[%s572 + $0x2e0] sm:$0xff]
        %v818 = vld [vmem:[%s572 + $0x2e8] sm:$0xff]
        %v819 = vld [vmem:[%s572 + $0x2f0] sm:$0xff]
        %v820 = vld [vmem:[%s572 + $0x2f8] sm:$0xff]
        %v821 = vld [vmem:[%s572 + $0x300] sm:$0xff]
        %v822 = vld [vmem:[%s572 + $0x308] sm:$0xff]
        %v823 = vld [vmem:[%s572 + $0x310] sm:$0xff]
        %v824 = vld [vmem:[%s572 + $0x318] sm:$0xff]
        %v825 = vld [vmem:[%s572 + $0x320] sm:$0xff]
        %v826 = vld [vmem:[%s572 + $0x328] sm:$0xff]
        %v827 = vld [vmem:[%s572 + $0x330] sm:$0xff]
        %v828 = vld [vmem:[%s572 + $0x338] sm:$0xff]
        %v829 = vld [vmem:[%s572 + $0x340] sm:$0xff]
        %v830 = vld [vmem:[%s572 + $0x348] sm:$0xff]
        %v831 = vld [vmem:[%s572 + $0x350] sm:$0xff]
        %v832 = vld [vmem:[%s572 + $0x358] sm:$0xff]
        %v833 = vld [vmem:[%s572 + $0x360] sm:$0xff]
        %v834 = vld [vmem:[%s572 + $0x368] sm:$0xff]
        %v835 = vld [vmem:[%s572 + $0x370] sm:$0xff]
        %v836 = vld [vmem:[%s572 + $0x378] sm:$0xff]
        %v837 = vld [vmem:[%s572 + $0x380] sm:$0xff]
        %v838 = vld [vmem:[%s572 + $0x388] sm:$0xff]
        %v839 = vld [vmem:[%s572 + $0x390] sm:$0xff]
        %v840 = vld [vmem:[%s572 + $0x398] sm:$0xff]
        %v841 = vld [vmem:[%s572 + $0x3a0] sm:$0xff]
        %v842 = vld [vmem:[%s572 + $0x3a8] sm:$0xff]
        %v843 = vld [vmem:[%s572 + $0x3b0] sm:$0xff]
        %v844 = vld [vmem:[%s572 + $0x3b8] sm:$0xff]
        %v845 = vld [vmem:[%s572 + $0x3c0] sm:$0xff]
        %v846 = vld [vmem:[%s572 + $0x3c8] sm:$0xff]
        %v847 = vld [vmem:[%s572 + $0x3d0] sm:$0xff]
        %v848 = vld [vmem:[%s572 + $0x3d8] sm:$0xff]
        %v849 = vld [vmem:[%s572 + $0x3e0] sm:$0xff]
        %v850 = vld [vmem:[%s572 + $0x3e8] sm:$0xff]
        %v851 = vld [vmem:[%s572 + $0x3f0] sm:$0xff]
        %v852 = vld [vmem:[%s572 + $0x3f8] sm:$0xff]
        %v853 = vld [vmem:[%s572 + $0x400] sm:$0xff]
        %v854 = vld [vmem:[%s572 + $0x408] sm:$0xff]
        %v855 = vld [vmem:[%s572 + $0x410] sm:$0xff]
        %v856 = vld [vmem:[%s572 + $0x418] sm:$0xff]
        %v857 = vld [vmem:[%s572 + $0x420] sm:$0xff]
        %v858 = vld [vmem:[%s572 + $0x428] sm:$0xff]
        %v859 = vld [vmem:[%s572 + $0x430] sm:$0xff]
        %v860 = vld [vmem:[%s572 + $0x438] sm:$0xff]
        %v861 = vld [vmem:[%s572 + $0x440] sm:$0xff]
        %v862 = vld [vmem:[%s572 + $0x448] sm:$0xff]
        %v863 = vld [vmem:[%s572 + $0x450] sm:$0xff]
        %v864 = vld [vmem:[%s572 + $0x458] sm:$0xff]
        %v865 = vld [vmem:[%s572 + $0x460] sm:$0xff]
        %v866 = vld [vmem:[%s572 + $0x468] sm:$0xff]
        %v867 = vld [vmem:[%s572 + $0x470] sm:$0xff]
        %v868 = vld [vmem:[%s572 + $0x478] sm:$0xff]
        %v869 = vld [vmem:[%s572 + $0x480] sm:$0xff]
        %v870 = vld [vmem:[%s572 + $0x488] sm:$0xff]
        %v871 = vld [vmem:[%s572 + $0x490] sm:$0xff]
        %v872 = vld [vmem:[%s572 + $0x498] sm:$0xff]
        %v873 = vld [vmem:[%s572 + $0x4a0] sm:$0xff]
        %v874 = vld [vmem:[%s572 + $0x4a8] sm:$0xff]
        %v875 = vld [vmem:[%s572 + $0x4b0] sm:$0xff]
        %v876 = vld [vmem:[%s572 + $0x4b8] sm:$0xff]
        %v877 = vld [vmem:[%s572 + $0x4c0] sm:$0xff]
        %v878 = vld [vmem:[%s572 + $0x4c8] sm:$0xff]
        %v879 = vld [vmem:[%s572 + $0x4d0] sm:$0xff]
        %v880 = vld [vmem:[%s572 + $0x4d8] sm:$0xff]
        %v881 = vld [vmem:[%s572 + $0x4e0] sm:$0xff]
        %v882 = vld [vmem:[%s572 + $0x4e8] sm:$0xff]
        %v883 = vld [vmem:[%s572 + $0x4f0] sm:$0xff]
        %v884 = vld [vmem:[%s572 + $0x4f8] sm:$0xff]
        %v885 = vld [vmem:[%s572 + $0x500] sm:$0xff]
        %v886 = vld [vmem:[%s572 + $0x508] sm:$0xff]
        %v887 = vld [vmem:[%s572 + $0x510] sm:$0xff]
        %v888 = vld [vmem:[%s572 + $0x518] sm:$0xff]
        %v889 = vld [vmem:[%s572 + $0x520] sm:$0xff]
        %v890 = vld [vmem:[%s572 + $0x528] sm:$0xff]
        %v891 = vld [vmem:[%s572 + $0x530] sm:$0xff]
        %v892 = vld [vmem:[%s572 + $0x538] sm:$0xff]
        %v893 = vld [vmem:[%s572 + $0x540] sm:$0xff]
        %v894 = vld [vmem:[%s572 + $0x548] sm:$0xff]
        %v895 = vld [vmem:[%s572 + $0x550] sm:$0xff]
        %v896 = vld [vmem:[%s572 + $0x558] sm:$0xff]
        %v897 = vld [vmem:[%s572 + $0x560] sm:$0xff]
        %v898 = vld [vmem:[%s572 + $0x568] sm:$0xff]
        %v899 = vld [vmem:[%s572 + $0x570] sm:$0xff]
        %v900 = vld [vmem:[%s572 + $0x578] sm:$0xff]
        %v901 = vld [vmem:[%s572 + $0x580] sm:$0xff]
        %v902 = vld [vmem:[%s572 + $0x588] sm:$0xff]
        %v903 = vld [vmem:[%s572 + $0x590] sm:$0xff]
        %v904 = vld [vmem:[%s572 + $0x598] sm:$0xff]
        %v905 = vld [vmem:[%s572 + $0x5a0] sm:$0xff]
        %v906 = vld [vmem:[%s572 + $0x5a8] sm:$0xff]
        %v907 = vld [vmem:[%s572 + $0x5b0] sm:$0xff]
        %v908 = vld [vmem:[%s572 + $0x5b8] sm:$0xff]
        %v909 = vld [vmem:[%s572 + $0x5c0] sm:$0xff]
        %v910 = vld [vmem:[%s572 + $0x5c8] sm:$0xff]
        %v911 = vld [vmem:[%s572 + $0x5d0] sm:$0xff]
        %v912 = vld [vmem:[%s572 + $0x5d8] sm:$0xff]
        %v913 = vld [vmem:[%s572 + $0x5e0] sm:$0xff]
        %v914 = vld [vmem:[%s572 + $0x5e8] sm:$0xff]
        %v915 = vld [vmem:[%s572 + $0x5f0] sm:$0xff]
        %v916 = vld [vmem:[%s572 + $0x5f8] sm:$0xff]
        %v917 = vld [vmem:[%s572 + $0x600] sm:$0xff]
        %v918 = vld [vmem:[%s572 + $0x608] sm:$0xff]
        %v919 = vld [vmem:[%s572 + $0x610] sm:$0xff]
        %v920 = vld [vmem:[%s572 + $0x618] sm:$0xff]
        %v921 = vld [vmem:[%s611] sm:$0xf]
        %v922 = vld [vmem:[%s611 + $0x4] sm:$0xf]
        %v923 = vld [vmem:[%s611 + $0x8] sm:$0xf]
        %v924 = vld [vmem:[%s611 + $0xc] sm:$0xf]
        %v925 = vld [vmem:[%s611 + $0x10] sm:$0xf]
        %v926 = vld [vmem:[%s611 + $0x14] sm:$0xf]
        %v927 = vld [vmem:[%s611 + $0x18] sm:$0xf]
        %v928 = vld [vmem:[%s611 + $0x1c] sm:$0xf]
        %v929 = vld [vmem:[%s611 + $0x20] sm:$0xf]
        %v930 = vld [vmem:[%s611 + $0x24] sm:$0xf]
        %v931 = vld [vmem:[%s611 + $0x28] sm:$0xf]
        %v932 = vld [vmem:[%s611 + $0x2c] sm:$0xf]
        %v933 = vld [vmem:[%s611 + $0x30] sm:$0xf]
        %v934 = vld [vmem:[%s611 + $0x34] sm:$0xf]
        %v935 = vld [vmem:[%s611 + $0x38] sm:$0xf]
        %v936 = vld [vmem:[%s611 + $0x3c] sm:$0xf]
        %v937 = vld [vmem:[%s611 + $0x40] sm:$0xf]
        %v938 = vld [vmem:[%s611 + $0x44] sm:$0xf]
        %v939 = vld [vmem:[%s611 + $0x48] sm:$0xf]
        %v940 = vld [vmem:[%s611 + $0x4c] sm:$0xf]
        %v941 = vld [vmem:[%s611 + $0x50] sm:$0xf]
        %v942 = vld [vmem:[%s611 + $0x54] sm:$0xf]
        %v943 = vld [vmem:[%s611 + $0x58] sm:$0xf]
        %v944 = vld [vmem:[%s611 + $0x5c] sm:$0xf]
        %v945 = vld [vmem:[%s611 + $0x60] sm:$0xf]
        %v946 = vld [vmem:[%s611 + $0x64] sm:$0xf]
        %v947 = vld [vmem:[%s611 + $0x68] sm:$0xf]
        %v948 = vld [vmem:[%s611 + $0x6c] sm:$0xf]
        %v949 = vld [vmem:[%s611 + $0x70] sm:$0xf]
        %v950 = vld [vmem:[%s611 + $0x74] sm:$0xf]
        %v951 = vld [vmem:[%s611 + $0x78] sm:$0xf]
        %v952 = vld [vmem:[%s611 + $0x7c] sm:$0xf]
        %v953 = vld [vmem:[%s611 + $0x80] sm:$0xf]
        %v954 = vld [vmem:[%s611 + $0x84] sm:$0xf]
        %v955 = vld [vmem:[%s611 + $0x88] sm:$0xf]
        %v956 = vld [vmem:[%s611 + $0x8c] sm:$0xf]
        %v957 = vld [vmem:[%s611 + $0x90] sm:$0xf]
        %v958 = vld [vmem:[%s611 + $0x94] sm:$0xf]
        %v959 = vld [vmem:[%s611 + $0x98] sm:$0xf]
        %v960 = vld [vmem:[%s611 + $0x9c] sm:$0xf]
        %v961 = vld [vmem:[%s611 + $0xa0] sm:$0xf]
        %v962 = vld [vmem:[%s611 + $0xa4] sm:$0xf]
        %v963 = vld [vmem:[%s611 + $0xa8] sm:$0xf]
        %v964 = vld [vmem:[%s611 + $0xac] sm:$0xf]
        %v965 = vld [vmem:[%s611 + $0xb0] sm:$0xf]
        %v966 = vld [vmem:[%s611 + $0xb4] sm:$0xf]
        %v967 = vld [vmem:[%s611 + $0xb8] sm:$0xf]
        %v968 = vld [vmem:[%s611 + $0xbc] sm:$0xf]
        %v969 = vld [vmem:[%s611 + $0xc0] sm:$0xf]
        %v970 = vld [vmem:[%s611 + $0xc4] sm:$0xf]
        %v971 = vld [vmem:[%s611 + $0xc8] sm:$0xf]
        %v972 = vld [vmem:[%s611 + $0xcc] sm:$0xf]
        %v973 = vld [vmem:[%s611 + $0xd0] sm:$0xf]
        %v974 = vld [vmem:[%s611 + $0xd4] sm:$0xf]
        %v975 = vld [vmem:[%s611 + $0xd8] sm:$0xf]
        %v976 = vld [vmem:[%s611 + $0xdc] sm:$0xf]
        %v977 = vld [vmem:[%s611 + $0xe0] sm:$0xf]
        %v978 = vld [vmem:[%s611 + $0xe4] sm:$0xf]
        %v979 = vld [vmem:[%s611 + $0xe8] sm:$0xf]
        %v980 = vld [vmem:[%s611 + $0xec] sm:$0xf]
        %v981 = vld [vmem:[%s611 + $0xf0] sm:$0xf]
        %v982 = vld [vmem:[%s611 + $0xf4] sm:$0xf]
        %v983 = vld [vmem:[%s611 + $0xf8] sm:$0xf]
        %v984 = vld [vmem:[%s611 + $0xfc] sm:$0xf]
        %v985 = vld [vmem:[%s611 + $0x100] sm:$0xf]
        %v986 = vld [vmem:[%s611 + $0x104] sm:$0xf]
        %v987 = vld [vmem:[%s611 + $0x108] sm:$0xf]
        %v988 = vld [vmem:[%s611 + $0x10c] sm:$0xf]
        %v989 = vld [vmem:[%s611 + $0x110] sm:$0xf]
        %v990 = vld [vmem:[%s611 + $0x114] sm:$0xf]
        %v991 = vld [vmem:[%s611 + $0x118] sm:$0xf]
        %v992 = vld [vmem:[%s611 + $0x11c] sm:$0xf]
        %v993 = vld [vmem:[%s611 + $0x120] sm:$0xf]
        %v994 = vld [vmem:[%s611 + $0x124] sm:$0xf]
        %v995 = vld [vmem:[%s611 + $0x128] sm:$0xf]
        %v996 = vld [vmem:[%s611 + $0x12c] sm:$0xf]
        %v997 = vld [vmem:[%s611 + $0x130] sm:$0xf]
        %v998 = vld [vmem:[%s611 + $0x134] sm:$0xf]
        %v999 = vld [vmem:[%s611 + $0x138] sm:$0xf]
        %v1000 = vld [vmem:[%s611 + $0x13c] sm:$0xf]
        %v1001 = vld [vmem:[%s611 + $0x140] sm:$0xf]
        %v1002 = vld [vmem:[%s611 + $0x144] sm:$0xf]
        %v1003 = vld [vmem:[%s611 + $0x148] sm:$0xf]
        %v1004 = vld [vmem:[%s611 + $0x14c] sm:$0xf]
        %v1005 = vld [vmem:[%s611 + $0x150] sm:$0xf]
        %v1006 = vld [vmem:[%s611 + $0x154] sm:$0xf]
        %v1007 = vld [vmem:[%s611 + $0x158] sm:$0xf]
        %v1008 = vld [vmem:[%s611 + $0x15c] sm:$0xf]
        %v1009 = vld [vmem:[%s611 + $0x160] sm:$0xf]
        %v1010 = vld [vmem:[%s611 + $0x164] sm:$0xf]
        %v1011 = vld [vmem:[%s611 + $0x168] sm:$0xf]
        %v1012 = vld [vmem:[%s611 + $0x16c] sm:$0xf]
        %v1013 = vld [vmem:[%s611 + $0x170] sm:$0xf]
        %v1014 = vld [vmem:[%s611 + $0x174] sm:$0xf]
        %v1015 = vld [vmem:[%s611 + $0x178] sm:$0xf]
        %v1016 = vld [vmem:[%s611 + $0x17c] sm:$0xf]
        %v1017 = vld [vmem:[%s611 + $0x180] sm:$0xf]
        %v1018 = vld [vmem:[%s611 + $0x184] sm:$0xf]
        %v1019 = vld [vmem:[%s611 + $0x188] sm:$0xf]
        %v1020 = vld [vmem:[%s611 + $0x18c] sm:$0xf]
        %v1021 = vld [vmem:[%s611 + $0x190] sm:$0xf]
        %v1022 = vld [vmem:[%s611 + $0x194] sm:$0xf]
        %v1023 = vld [vmem:[%s611 + $0x198] sm:$0xf]
        %v1024 = vld [vmem:[%s611 + $0x19c] sm:$0xf]
        %v1025 = vld [vmem:[%s611 + $0x1a0] sm:$0xf]
        %v1026 = vld [vmem:[%s611 + $0x1a4] sm:$0xf]
        %v1027 = vld [vmem:[%s611 + $0x1a8] sm:$0xf]
        %v1028 = vld [vmem:[%s611 + $0x1ac] sm:$0xf]
        %v1029 = vld [vmem:[%s611 + $0x1b0] sm:$0xf]
        %v1030 = vld [vmem:[%s611 + $0x1b4] sm:$0xf]
        %v1031 = vld [vmem:[%s611 + $0x1b8] sm:$0xf]
        %v1032 = vld [vmem:[%s611 + $0x1bc] sm:$0xf]
        %v1033 = vld [vmem:[%s611 + $0x1c0] sm:$0xf]
        %v1034 = vld [vmem:[%s611 + $0x1c4] sm:$0xf]
        %v1035 = vld [vmem:[%s611 + $0x1c8] sm:$0xf]
        %v1036 = vld [vmem:[%s611 + $0x1cc] sm:$0xf]
        %v1037 = vld [vmem:[%s611 + $0x1d0] sm:$0xf]
        %v1038 = vld [vmem:[%s611 + $0x1d4] sm:$0xf]
        %v1039 = vld [vmem:[%s611 + $0x1d8] sm:$0xf]
        %v1040 = vld [vmem:[%s611 + $0x1dc] sm:$0xf]
        %v1041 = vld [vmem:[%s611 + $0x1e0] sm:$0xf]
        %v1042 = vld [vmem:[%s611 + $0x1e4] sm:$0xf]
        %v1043 = vld [vmem:[%s611 + $0x1e8] sm:$0xf]
        %v1044 = vld [vmem:[%s611 + $0x1ec] sm:$0xf]
        %v1045 = vld [vmem:[%s611 + $0x1f0] sm:$0xf]
        %v1046 = vld [vmem:[%s611 + $0x1f4] sm:$0xf]
        %v1047 = vld [vmem:[%s611 + $0x1f8] sm:$0xf]
        %v1048 = vld [vmem:[%s611 + $0x1fc] sm:$0xf]
        %v1245 = vunpack.c.l.b16 %v725
        %v1246 = vunpack.c.h.b16 %v725
        %v1247 = vunpack.c.l.b16 %v726
        %v1248 = vunpack.c.h.b16 %v726
        %v1249 = vunpack.c.l.b16 %v727
        %v1250 = vunpack.c.h.b16 %v727
        %v1251 = vunpack.c.l.b16 %v728
        %v1252 = vunpack.c.h.b16 %v728
        %v1253 = vunpack.c.l.b16 %v729
        %v1254 = vunpack.c.h.b16 %v729
        %v1255 = vunpack.c.l.b16 %v730
        %v1256 = vunpack.c.h.b16 %v730
        %v1257 = vunpack.c.l.b16 %v731
        %v1258 = vunpack.c.h.b16 %v731
        %v1259 = vunpack.c.l.b16 %v732
        %v1260 = vunpack.c.h.b16 %v732
        %v1261 = vunpack.c.l.b16 %v733
        %v1262 = vunpack.c.h.b16 %v733
        %v1263 = vunpack.c.l.b16 %v734
        %v1264 = vunpack.c.h.b16 %v734
        %v1265 = vunpack.c.l.b16 %v735
        %v1266 = vunpack.c.h.b16 %v735
        %v1267 = vunpack.c.l.b16 %v736
        %v1268 = vunpack.c.h.b16 %v736
        %v1269 = vunpack.c.l.b16 %v737
        %v1270 = vunpack.c.h.b16 %v737
        %v1271 = vunpack.c.l.b16 %v738
        %v1272 = vunpack.c.h.b16 %v738
        %v1273 = vunpack.c.l.b16 %v739
        %v1274 = vunpack.c.h.b16 %v739
        %v1275 = vunpack.c.l.b16 %v740
        %v1276 = vunpack.c.h.b16 %v740
        %v1277 = vunpack.c.l.b16 %v741
        %v1278 = vunpack.c.h.b16 %v741
        %v1279 = vunpack.c.l.b16 %v742
        %v1280 = vunpack.c.h.b16 %v742
        %v1281 = vunpack.c.l.b16 %v743
        %v1282 = vunpack.c.h.b16 %v743
        %v1283 = vunpack.c.l.b16 %v744
        %v1284 = vunpack.c.h.b16 %v744
        %v1285 = vunpack.c.l.b16 %v745
        %v1286 = vunpack.c.h.b16 %v745
        %v1287 = vunpack.c.l.b16 %v746
        %v1288 = vunpack.c.h.b16 %v746
        %v1289 = vunpack.c.l.b16 %v747
        %v1290 = vunpack.c.h.b16 %v747
        %v1291 = vunpack.c.l.b16 %v748
        %v1292 = vunpack.c.h.b16 %v748
        %v1293 = vunpack.c.l.b16 %v749
        %v1294 = vunpack.c.h.b16 %v749
        %v1295 = vunpack.c.l.b16 %v750
        %v1296 = vunpack.c.h.b16 %v750
        %v1297 = vunpack.c.l.b16 %v751
        %v1298 = vunpack.c.h.b16 %v751
        %v1299 = vunpack.c.l.b16 %v752
        %v1300 = vunpack.c.h.b16 %v752
        %v1301 = vunpack.c.l.b16 %v753
        %v1302 = vunpack.c.h.b16 %v753
        %v1303 = vunpack.c.l.b16 %v754
        %v1304 = vunpack.c.h.b16 %v754
        %v1305 = vunpack.c.l.b16 %v755
        %v1306 = vunpack.c.h.b16 %v755
        %v1307 = vunpack.c.l.b16 %v756
        %v1308 = vunpack.c.h.b16 %v756
        %v1309 = vunpack.c.l.b16 %v757
        %v1310 = vunpack.c.h.b16 %v757
        %v1311 = vunpack.c.l.b16 %v758
        %v1312 = vunpack.c.h.b16 %v758
        %v1313 = vunpack.c.l.b16 %v759
        %v1314 = vunpack.c.h.b16 %v759
        %v1315 = vunpack.c.l.b16 %v760
        %v1316 = vunpack.c.h.b16 %v760
        %v1317 = vunpack.c.l.b16 %v761
        %v1318 = vunpack.c.h.b16 %v761
        %v1319 = vunpack.c.l.b16 %v762
        %v1320 = vunpack.c.h.b16 %v762
        %v1321 = vunpack.c.l.b16 %v763
        %v1322 = vunpack.c.h.b16 %v763
        %v1323 = vunpack.c.l.b16 %v764
        %v1324 = vunpack.c.h.b16 %v764
        %v1325 = vunpack.c.l.b16 %v765
        %v1326 = vunpack.c.h.b16 %v765
        %v1327 = vunpack.c.l.b16 %v766
        %v1328 = vunpack.c.h.b16 %v766
        %v1329 = vunpack.c.l.b16 %v767
        %v1330 = vunpack.c.h.b16 %v767
        %v1331 = vunpack.c.l.b16 %v768
        %v1332 = vunpack.c.h.b16 %v768
        %v1333 = vunpack.c.l.b16 %v769
        %v1334 = vunpack.c.h.b16 %v769
        %v1335 = vunpack.c.l.b16 %v770
        %v1336 = vunpack.c.h.b16 %v770
        %v1337 = vunpack.c.l.b16 %v771
        %v1338 = vunpack.c.h.b16 %v771
        %v1339 = vunpack.c.l.b16 %v772
        %v1340 = vunpack.c.h.b16 %v772
        %v1341 = vunpack.c.l.b16 %v773
        %v1342 = vunpack.c.h.b16 %v773
        %v1343 = vunpack.c.l.b16 %v774
        %v1344 = vunpack.c.h.b16 %v774
        %v1345 = vunpack.c.l.b16 %v775
        %v1346 = vunpack.c.h.b16 %v775
        %v1347 = vunpack.c.l.b16 %v776
        %v1348 = vunpack.c.h.b16 %v776
        %v1349 = vunpack.c.l.b16 %v777
        %v1350 = vunpack.c.h.b16 %v777
        %v1351 = vunpack.c.l.b16 %v778
        %v1352 = vunpack.c.h.b16 %v778
        %v1353 = vunpack.c.l.b16 %v779
        %v1354 = vunpack.c.h.b16 %v779
        %v1355 = vunpack.c.l.b16 %v780
        %v1356 = vunpack.c.h.b16 %v780
        %v1357 = vunpack.c.l.b16 %v781
        %v1358 = vunpack.c.h.b16 %v781
        %v1359 = vunpack.c.l.b16 %v782
        %v1360 = vunpack.c.h.b16 %v782
        %v1361 = vunpack.c.l.b16 %v783
        %v1362 = vunpack.c.h.b16 %v783
        %v1363 = vunpack.c.l.b16 %v784
        %v1364 = vunpack.c.h.b16 %v784
        %v1365 = vunpack.c.l.b16 %v785
        %v1366 = vunpack.c.h.b16 %v785
        %v1367 = vunpack.c.l.b16 %v786
        %v1368 = vunpack.c.h.b16 %v786
        %v1369 = vunpack.c.l.b16 %v787
        %v1370 = vunpack.c.h.b16 %v787
        %v1371 = vunpack.c.l.b16 %v788
        %v1372 = vunpack.c.h.b16 %v788
        %v1373 = vunpack.c.l.b16 %v789
        %v1374 = vunpack.c.h.b16 %v789
        %v1375 = vunpack.c.l.b16 %v790
        %v1376 = vunpack.c.h.b16 %v790
        %v1377 = vunpack.c.l.b16 %v791
        %v1378 = vunpack.c.h.b16 %v791
        %v1379 = vunpack.c.l.b16 %v792
        %v1380 = vunpack.c.h.b16 %v792
        %v1381 = vunpack.c.l.b16 %v793
        %v1382 = vunpack.c.h.b16 %v793
        %v1383 = vunpack.c.l.b16 %v794
        %v1384 = vunpack.c.h.b16 %v794
        %v1385 = vunpack.c.l.b16 %v795
        %v1386 = vunpack.c.h.b16 %v795
        %v1387 = vunpack.c.l.b16 %v796
        %v1388 = vunpack.c.h.b16 %v796
        %v1389 = vunpack.c.l.b16 %v797
        %v1390 = vunpack.c.h.b16 %v797
        %v1391 = vunpack.c.l.b16 %v798
        %v1392 = vunpack.c.h.b16 %v798
        %v1393 = vunpack.c.l.b16 %v799
        %v1394 = vunpack.c.h.b16 %v799
        %v1395 = vunpack.c.l.b16 %v800
        %v1396 = vunpack.c.h.b16 %v800
        %v1397 = vunpack.c.l.b16 %v801
        %v1398 = vunpack.c.h.b16 %v801
        %v1399 = vunpack.c.l.b16 %v802
        %v1400 = vunpack.c.h.b16 %v802
        %v1401 = vunpack.c.l.b16 %v803
        %v1402 = vunpack.c.h.b16 %v803
        %v1403 = vunpack.c.l.b16 %v804
        %v1404 = vunpack.c.h.b16 %v804
        %v1405 = vunpack.c.l.b16 %v805
        %v1406 = vunpack.c.h.b16 %v805
        %v1407 = vunpack.c.l.b16 %v806
        %v1408 = vunpack.c.h.b16 %v806
        %v1409 = vunpack.c.l.b16 %v807
        %v1410 = vunpack.c.h.b16 %v807
        %v1411 = vunpack.c.l.b16 %v808
        %v1412 = vunpack.c.h.b16 %v808
        %v1413 = vunpack.c.l.b16 %v809
        %v1414 = vunpack.c.h.b16 %v809
        %v1415 = vunpack.c.l.b16 %v810
        %v1416 = vunpack.c.h.b16 %v810
        %v1417 = vunpack.c.l.b16 %v811
        %v1418 = vunpack.c.h.b16 %v811
        %v1419 = vunpack.c.l.b16 %v812
        %v1420 = vunpack.c.h.b16 %v812
        %v1421 = vunpack.c.l.b16 %v813
        %v1422 = vunpack.c.h.b16 %v813
        %v1423 = vunpack.c.l.b16 %v814
        %v1424 = vunpack.c.h.b16 %v814
        %v1425 = vunpack.c.l.b16 %v815
        %v1426 = vunpack.c.h.b16 %v815
        %v1427 = vunpack.c.l.b16 %v816
        %v1428 = vunpack.c.h.b16 %v816
        %v1429 = vunpack.c.l.b16 %v817
        %v1430 = vunpack.c.h.b16 %v817
        %v1431 = vunpack.c.l.b16 %v818
        %v1432 = vunpack.c.h.b16 %v818
        %v1433 = vunpack.c.l.b16 %v819
        %v1434 = vunpack.c.h.b16 %v819
        %v1435 = vunpack.c.l.b16 %v820
        %v1436 = vunpack.c.h.b16 %v820
        %v1437 = vunpack.c.l.b16 %v821
        %v1438 = vunpack.c.h.b16 %v821
        %v1439 = vunpack.c.l.b16 %v822
        %v1440 = vunpack.c.h.b16 %v822
        %v1441 = vunpack.c.l.b16 %v823
        %v1442 = vunpack.c.h.b16 %v823
        %v1443 = vunpack.c.l.b16 %v824
        %v1444 = vunpack.c.h.b16 %v824
        %v1445 = vunpack.c.l.b16 %v825
        %v1446 = vunpack.c.h.b16 %v825
        %v1447 = vunpack.c.l.b16 %v826
        %v1448 = vunpack.c.h.b16 %v826
        %v1449 = vunpack.c.l.b16 %v827
        %v1450 = vunpack.c.h.b16 %v827
        %v1451 = vunpack.c.l.b16 %v828
        %v1452 = vunpack.c.h.b16 %v828
        %v1453 = vunpack.c.l.b16 %v829
        %v1454 = vunpack.c.h.b16 %v829
        %v1455 = vunpack.c.l.b16 %v830
        %v1456 = vunpack.c.h.b16 %v830
        %v1457 = vunpack.c.l.b16 %v831
        %v1458 = vunpack.c.h.b16 %v831
        %v1459 = vunpack.c.l.b16 %v832
        %v1460 = vunpack.c.h.b16 %v832
        %v1461 = vunpack.c.l.b16 %v833
        %v1462 = vunpack.c.h.b16 %v833
        %v1463 = vunpack.c.l.b16 %v834
        %v1464 = vunpack.c.h.b16 %v834
        %v1465 = vunpack.c.l.b16 %v835
        %v1466 = vunpack.c.h.b16 %v835
        %v1467 = vunpack.c.l.b16 %v836
        %v1468 = vunpack.c.h.b16 %v836
        %v1469 = vunpack.c.l.b16 %v837
        %v1470 = vunpack.c.h.b16 %v837
        %v1471 = vunpack.c.l.b16 %v838
        %v1472 = vunpack.c.h.b16 %v838
        %v1473 = vunpack.c.l.b16 %v839
        %v1474 = vunpack.c.h.b16 %v839
        %v1475 = vunpack.c.l.b16 %v840
        %v1476 = vunpack.c.h.b16 %v840
        %v1477 = vunpack.c.l.b16 %v841
        %v1478 = vunpack.c.h.b16 %v841
        %v1479 = vunpack.c.l.b16 %v842
        %v1480 = vunpack.c.h.b16 %v842
        %v1481 = vunpack.c.l.b16 %v843
        %v1482 = vunpack.c.h.b16 %v843
        %v1483 = vunpack.c.l.b16 %v844
        %v1484 = vunpack.c.h.b16 %v844
        %v1485 = vunpack.c.l.b16 %v845
        %v1486 = vunpack.c.h.b16 %v845
        %v1487 = vunpack.c.l.b16 %v846
        %v1488 = vunpack.c.h.b16 %v846
        %v1489 = vunpack.c.l.b16 %v847
        %v1490 = vunpack.c.h.b16 %v847
        %v1491 = vunpack.c.l.b16 %v848
        %v1492 = vunpack.c.h.b16 %v848
        %v1493 = vunpack.c.l.b16 %v849
        %v1494 = vunpack.c.h.b16 %v849
        %v1495 = vunpack.c.l.b16 %v850
        %v1496 = vunpack.c.h.b16 %v850
        %v1497 = vunpack.c.l.b16 %v851
        %v1498 = vunpack.c.h.b16 %v851
        %v1499 = vunpack.c.l.b16 %v852
        %v1500 = vunpack.c.h.b16 %v852
        %v1501 = vunpack.c.l.b16 %v853
        %v1502 = vunpack.c.h.b16 %v853
        %v1503 = vunpack.c.l.b16 %v854
        %v1504 = vunpack.c.h.b16 %v854
        %v1505 = vunpack.c.l.b16 %v855
        %v1506 = vunpack.c.h.b16 %v855
        %v1507 = vunpack.c.l.b16 %v856
        %v1508 = vunpack.c.h.b16 %v856
        %v1509 = vunpack.c.l.b16 %v857
        %v1510 = vunpack.c.h.b16 %v857
        %v1511 = vunpack.c.l.b16 %v858
        %v1512 = vunpack.c.h.b16 %v858
        %v1513 = vunpack.c.l.b16 %v859
        %v1514 = vunpack.c.h.b16 %v859
        %v1515 = vunpack.c.l.b16 %v860
        %v1516 = vunpack.c.h.b16 %v860
        %v1517 = vunpack.c.l.b16 %v861
        %v1518 = vunpack.c.h.b16 %v861
        %v1519 = vunpack.c.l.b16 %v862
        %v1520 = vunpack.c.h.b16 %v862
        %v1521 = vunpack.c.l.b16 %v863
        %v1522 = vunpack.c.h.b16 %v863
        %v1523 = vunpack.c.l.b16 %v864
        %v1524 = vunpack.c.h.b16 %v864
        %v1525 = vunpack.c.l.b16 %v865
        %v1526 = vunpack.c.h.b16 %v865
        %v1527 = vunpack.c.l.b16 %v866
        %v1528 = vunpack.c.h.b16 %v866
        %v1529 = vunpack.c.l.b16 %v867
        %v1530 = vunpack.c.h.b16 %v867
        %v1531 = vunpack.c.l.b16 %v868
        %v1532 = vunpack.c.h.b16 %v868
        %v1533 = vunpack.c.l.b16 %v869
        %v1534 = vunpack.c.h.b16 %v869
        %v1535 = vunpack.c.l.b16 %v870
        %v1536 = vunpack.c.h.b16 %v870
        %v1537 = vunpack.c.l.b16 %v871
        %v1538 = vunpack.c.h.b16 %v871
        %v1539 = vunpack.c.l.b16 %v872
        %v1540 = vunpack.c.h.b16 %v872
        %v1541 = vunpack.c.l.b16 %v873
        %v1542 = vunpack.c.h.b16 %v873
        %v1543 = vunpack.c.l.b16 %v874
        %v1544 = vunpack.c.h.b16 %v874
        %v1545 = vunpack.c.l.b16 %v875
        %v1546 = vunpack.c.h.b16 %v875
        %v1547 = vunpack.c.l.b16 %v876
        %v1548 = vunpack.c.h.b16 %v876
        %v1549 = vunpack.c.l.b16 %v877
        %v1550 = vunpack.c.h.b16 %v877
        %v1551 = vunpack.c.l.b16 %v878
        %v1552 = vunpack.c.h.b16 %v878
        %v1553 = vunpack.c.l.b16 %v879
        %v1554 = vunpack.c.h.b16 %v879
        %v1555 = vunpack.c.l.b16 %v880
        %v1556 = vunpack.c.h.b16 %v880
        %v1557 = vunpack.c.l.b16 %v881
        %v1558 = vunpack.c.h.b16 %v881
        %v1559 = vunpack.c.l.b16 %v882
        %v1560 = vunpack.c.h.b16 %v882
        %v1561 = vunpack.c.l.b16 %v883
        %v1562 = vunpack.c.h.b16 %v883
        %v1563 = vunpack.c.l.b16 %v884
        %v1564 = vunpack.c.h.b16 %v884
        %v1565 = vunpack.c.l.b16 %v885
        %v1566 = vunpack.c.h.b16 %v885
        %v1567 = vunpack.c.l.b16 %v886
        %v1568 = vunpack.c.h.b16 %v886
        %v1569 = vunpack.c.l.b16 %v887
        %v1570 = vunpack.c.h.b16 %v887
        %v1571 = vunpack.c.l.b16 %v888
        %v1572 = vunpack.c.h.b16 %v888
        %v1573 = vunpack.c.l.b16 %v889
        %v1574 = vunpack.c.h.b16 %v889
        %v1575 = vunpack.c.l.b16 %v890
        %v1576 = vunpack.c.h.b16 %v890
        %v1577 = vunpack.c.l.b16 %v891
        %v1578 = vunpack.c.h.b16 %v891
        %v1579 = vunpack.c.l.b16 %v892
        %v1580 = vunpack.c.h.b16 %v892
        %v1581 = vunpack.c.l.b16 %v893
        %v1582 = vunpack.c.h.b16 %v893
        %v1583 = vunpack.c.l.b16 %v894
        %v1584 = vunpack.c.h.b16 %v894
        %v1585 = vunpack.c.l.b16 %v895
        %v1586 = vunpack.c.h.b16 %v895
        %v1587 = vunpack.c.l.b16 %v896
        %v1588 = vunpack.c.h.b16 %v896
        %v1589 = vunpack.c.l.b16 %v897
        %v1590 = vunpack.c.h.b16 %v897
        %v1591 = vunpack.c.l.b16 %v898
        %v1592 = vunpack.c.h.b16 %v898
        %v1593 = vunpack.c.l.b16 %v899
        %v1594 = vunpack.c.h.b16 %v899
        %v1595 = vunpack.c.l.b16 %v900
        %v1596 = vunpack.c.h.b16 %v900
        %v1597 = vunpack.c.l.b16 %v901
        %v1598 = vunpack.c.h.b16 %v901
        %v1599 = vunpack.c.l.b16 %v902
        %v1600 = vunpack.c.h.b16 %v902
        %v1601 = vunpack.c.l.b16 %v903
        %v1602 = vunpack.c.h.b16 %v903
        %v1603 = vunpack.c.l.b16 %v904
        %v1604 = vunpack.c.h.b16 %v904
        %v1605 = vunpack.c.l.b16 %v905
        %v1606 = vunpack.c.h.b16 %v905
        %v1607 = vunpack.c.l.b16 %v906
        %v1608 = vunpack.c.h.b16 %v906
        %v1609 = vunpack.c.l.b16 %v907
        %v1610 = vunpack.c.h.b16 %v907
        %v1611 = vunpack.c.l.b16 %v908
        %v1612 = vunpack.c.h.b16 %v908
        %v1613 = vunpack.c.l.b16 %v909
        %v1614 = vunpack.c.h.b16 %v909
        %v1615 = vunpack.c.l.b16 %v910
        %v1616 = vunpack.c.h.b16 %v910
        %v1617 = vunpack.c.l.b16 %v911
        %v1618 = vunpack.c.h.b16 %v911
        %v1619 = vunpack.c.l.b16 %v912
        %v1620 = vunpack.c.h.b16 %v912
        %v1621 = vunpack.c.l.b16 %v913
        %v1622 = vunpack.c.h.b16 %v913
        %v1623 = vunpack.c.l.b16 %v914
        %v1624 = vunpack.c.h.b16 %v914
        %v1625 = vunpack.c.l.b16 %v915
        %v1626 = vunpack.c.h.b16 %v915
        %v1627 = vunpack.c.l.b16 %v916
        %v1628 = vunpack.c.h.b16 %v916
        %v1629 = vunpack.c.l.b16 %v917
        %v1630 = vunpack.c.h.b16 %v917
        %v1631 = vunpack.c.l.b16 %v918
        %v1632 = vunpack.c.h.b16 %v918
        %v1633 = vunpack.c.l.b16 %v919
        %v1634 = vunpack.c.h.b16 %v919
        %v1635 = vunpack.c.l.b16 %v920
        %v1636 = vunpack.c.h.b16 %v920
        %v1637 = vpack.c.b16 %v1253, %v1245
        %v1638 = vpack.c.b16 %v1254, %v1246
        %v1639 = vpack.c.b16 %v1255, %v1247
        %v1640 = vpack.c.b16 %v1256, %v1248
        %v1641 = vpack.c.b16 %v1257, %v1249
        %v1642 = vpack.c.b16 %v1258, %v1250
        %v1643 = vpack.c.b16 %v1259, %v1251
        %v1644 = vpack.c.b16 %v1260, %v1252
        %v1645 = vpack.c.b16 %v1269, %v1261
        %v1646 = vpack.c.b16 %v1270, %v1262
        %v1647 = vpack.c.b16 %v1271, %v1263
        %v1648 = vpack.c.b16 %v1272, %v1264
        %v1649 = vpack.c.b16 %v1273, %v1265
        %v1650 = vpack.c.b16 %v1274, %v1266
        %v1651 = vpack.c.b16 %v1275, %v1267
        %v1652 = vpack.c.b16 %v1276, %v1268
        %v1653 = vpack.c.b16 %v1285, %v1277
        %v1654 = vpack.c.b16 %v1286, %v1278
        %v1655 = vpack.c.b16 %v1287, %v1279
        %v1656 = vpack.c.b16 %v1288, %v1280
        %v1657 = vpack.c.b16 %v1289, %v1281
        %v1658 = vpack.c.b16 %v1290, %v1282
        %v1659 = vpack.c.b16 %v1291, %v1283
        %v1660 = vpack.c.b16 %v1292, %v1284
        %v1661 = vpack.c.b16 %v1301, %v1293
        %v1662 = vpack.c.b16 %v1302, %v1294
        %v1663 = vpack.c.b16 %v1303, %v1295
        %v1664 = vpack.c.b16 %v1304, %v1296
        %v1665 = vpack.c.b16 %v1305, %v1297
        %v1666 = vpack.c.b16 %v1306, %v1298
        %v1667 = vpack.c.b16 %v1307, %v1299
        %v1668 = vpack.c.b16 %v1308, %v1300
        %v1669 = vpack.c.b16 %v1317, %v1309
        %v1670 = vpack.c.b16 %v1318, %v1310
        %v1671 = vpack.c.b16 %v1319, %v1311
        %v1672 = vpack.c.b16 %v1320, %v1312
        %v1673 = vpack.c.b16 %v1321, %v1313
        %v1674 = vpack.c.b16 %v1322, %v1314
        %v1675 = vpack.c.b16 %v1323, %v1315
        %v1676 = vpack.c.b16 %v1324, %v1316
        %v1677 = vpack.c.b16 %v1333, %v1325
        %v1678 = vpack.c.b16 %v1334, %v1326
        %v1679 = vpack.c.b16 %v1335, %v1327
        %v1680 = vpack.c.b16 %v1336, %v1328
        %v1681 = vpack.c.b16 %v1337, %v1329
        %v1682 = vpack.c.b16 %v1338, %v1330
        %v1683 = vpack.c.b16 %v1339, %v1331
        %v1684 = vpack.c.b16 %v1340, %v1332
        %v1685 = vpack.c.b16 %v1349, %v1341
        %v1686 = vpack.c.b16 %v1350, %v1342
        %v1687 = vpack.c.b16 %v1351, %v1343
        %v1688 = vpack.c.b16 %v1352, %v1344
        %v1689 = vpack.c.b16 %v1353, %v1345
        %v1690 = vpack.c.b16 %v1354, %v1346
        %v1691 = vpack.c.b16 %v1355, %v1347
        %v1692 = vpack.c.b16 %v1356, %v1348
        %v1693 = vpack.c.b16 %v1365, %v1357
        %v1694 = vpack.c.b16 %v1366, %v1358
        %v1695 = vpack.c.b16 %v1367, %v1359
        %v1696 = vpack.c.b16 %v1368, %v1360
        %v1697 = vpack.c.b16 %v1369, %v1361
        %v1698 = vpack.c.b16 %v1370, %v1362
        %v1699 = vpack.c.b16 %v1371, %v1363
        %v1700 = vpack.c.b16 %v1372, %v1364
        %v1701 = vpack.c.b16 %v1381, %v1373
        %v1702 = vpack.c.b16 %v1382, %v1374
        %v1703 = vpack.c.b16 %v1383, %v1375
        %v1704 = vpack.c.b16 %v1384, %v1376
        %v1705 = vpack.c.b16 %v1385, %v1377
        %v1706 = vpack.c.b16 %v1386, %v1378
        %v1707 = vpack.c.b16 %v1387, %v1379
        %v1708 = vpack.c.b16 %v1388, %v1380
        %v1709 = vpack.c.b16 %v1397, %v1389
        %v1710 = vpack.c.b16 %v1398, %v1390
        %v1711 = vpack.c.b16 %v1399, %v1391
        %v1712 = vpack.c.b16 %v1400, %v1392
        %v1713 = vpack.c.b16 %v1401, %v1393
        %v1714 = vpack.c.b16 %v1402, %v1394
        %v1715 = vpack.c.b16 %v1403, %v1395
        %v1716 = vpack.c.b16 %v1404, %v1396
        %v1717 = vpack.c.b16 %v1413, %v1405
        %v1718 = vpack.c.b16 %v1414, %v1406
        %v1719 = vpack.c.b16 %v1415, %v1407
        %v1720 = vpack.c.b16 %v1416, %v1408
        %v1721 = vpack.c.b16 %v1417, %v1409
        %v1722 = vpack.c.b16 %v1418, %v1410
        %v1723 = vpack.c.b16 %v1419, %v1411
        %v1724 = vpack.c.b16 %v1420, %v1412
        %v1725 = vpack.c.b16 %v1429, %v1421
        %v1726 = vpack.c.b16 %v1430, %v1422
        %v1727 = vpack.c.b16 %v1431, %v1423
        %v1728 = vpack.c.b16 %v1432, %v1424
        %v1729 = vpack.c.b16 %v1433, %v1425
        %v1730 = vpack.c.b16 %v1434, %v1426
        %v1731 = vpack.c.b16 %v1435, %v1427
        %v1732 = vpack.c.b16 %v1436, %v1428
        %v1733 = vpack.c.b16 %v1445, %v1437
        %v1734 = vpack.c.b16 %v1446, %v1438
        %v1735 = vpack.c.b16 %v1447, %v1439
        %v1736 = vpack.c.b16 %v1448, %v1440
        %v1737 = vpack.c.b16 %v1449, %v1441
        %v1738 = vpack.c.b16 %v1450, %v1442
        %v1739 = vpack.c.b16 %v1451, %v1443
        %v1740 = vpack.c.b16 %v1452, %v1444
        %v1741 = vpack.c.b16 %v1461, %v1453
        %v1742 = vpack.c.b16 %v1462, %v1454
        %v1743 = vpack.c.b16 %v1463, %v1455
        %v1744 = vpack.c.b16 %v1464, %v1456
        %v1745 = vpack.c.b16 %v1465, %v1457
        %v1746 = vpack.c.b16 %v1466, %v1458
        %v1747 = vpack.c.b16 %v1467, %v1459
        %v1748 = vpack.c.b16 %v1468, %v1460
        %v1749 = vpack.c.b16 %v1477, %v1469
        %v1750 = vpack.c.b16 %v1478, %v1470
        %v1751 = vpack.c.b16 %v1479, %v1471
        %v1752 = vpack.c.b16 %v1480, %v1472
        %v1753 = vpack.c.b16 %v1481, %v1473
        %v1754 = vpack.c.b16 %v1482, %v1474
        %v1755 = vpack.c.b16 %v1483, %v1475
        %v1756 = vpack.c.b16 %v1484, %v1476
        %v1757 = vpack.c.b16 %v1493, %v1485
        %v1758 = vpack.c.b16 %v1494, %v1486
        %v1759 = vpack.c.b16 %v1495, %v1487
        %v1760 = vpack.c.b16 %v1496, %v1488
        %v1761 = vpack.c.b16 %v1497, %v1489
        %v1762 = vpack.c.b16 %v1498, %v1490
        %v1763 = vpack.c.b16 %v1499, %v1491
        %v1764 = vpack.c.b16 %v1500, %v1492
        %v1765 = vpack.c.b16 %v1509, %v1501
        %v1766 = vpack.c.b16 %v1510, %v1502
        %v1767 = vpack.c.b16 %v1511, %v1503
        %v1768 = vpack.c.b16 %v1512, %v1504
        %v1769 = vpack.c.b16 %v1513, %v1505
        %v1770 = vpack.c.b16 %v1514, %v1506
        %v1771 = vpack.c.b16 %v1515, %v1507
        %v1772 = vpack.c.b16 %v1516, %v1508
        %v1773 = vpack.c.b16 %v1525, %v1517
        %v1774 = vpack.c.b16 %v1526, %v1518
        %v1775 = vpack.c.b16 %v1527, %v1519
        %v1776 = vpack.c.b16 %v1528, %v1520
        %v1777 = vpack.c.b16 %v1529, %v1521
        %v1778 = vpack.c.b16 %v1530, %v1522
        %v1779 = vpack.c.b16 %v1531, %v1523
        %v1780 = vpack.c.b16 %v1532, %v1524
        %v1781 = vpack.c.b16 %v1541, %v1533
        %v1782 = vpack.c.b16 %v1542, %v1534
        %v1783 = vpack.c.b16 %v1543, %v1535
        %v1784 = vpack.c.b16 %v1544, %v1536
        %v1785 = vpack.c.b16 %v1545, %v1537
        %v1786 = vpack.c.b16 %v1546, %v1538
        %v1787 = vpack.c.b16 %v1547, %v1539
        %v1788 = vpack.c.b16 %v1548, %v1540
        %v1789 = vpack.c.b16 %v1557, %v1549
        %v1790 = vpack.c.b16 %v1558, %v1550
        %v1791 = vpack.c.b16 %v1559, %v1551
        %v1792 = vpack.c.b16 %v1560, %v1552
        %v1793 = vpack.c.b16 %v1561, %v1553
        %v1794 = vpack.c.b16 %v1562, %v1554
        %v1795 = vpack.c.b16 %v1563, %v1555
        %v1796 = vpack.c.b16 %v1564, %v1556
        %v1797 = vpack.c.b16 %v1573, %v1565
        %v1798 = vpack.c.b16 %v1574, %v1566
        %v1799 = vpack.c.b16 %v1575, %v1567
        %v1800 = vpack.c.b16 %v1576, %v1568
        %v1801 = vpack.c.b16 %v1577, %v1569
        %v1802 = vpack.c.b16 %v1578, %v1570
        %v1803 = vpack.c.b16 %v1579, %v1571
        %v1804 = vpack.c.b16 %v1580, %v1572
        %v1805 = vpack.c.b16 %v1589, %v1581
        %v1806 = vpack.c.b16 %v1590, %v1582
        %v1807 = vpack.c.b16 %v1591, %v1583
        %v1808 = vpack.c.b16 %v1592, %v1584
        %v1809 = vpack.c.b16 %v1593, %v1585
        %v1810 = vpack.c.b16 %v1594, %v1586
        %v1811 = vpack.c.b16 %v1595, %v1587
        %v1812 = vpack.c.b16 %v1596, %v1588
        %v1813 = vpack.c.b16 %v1605, %v1597
        %v1814 = vpack.c.b16 %v1606, %v1598
        %v1815 = vpack.c.b16 %v1607, %v1599
        %v1816 = vpack.c.b16 %v1608, %v1600
        %v1817 = vpack.c.b16 %v1609, %v1601
        %v1818 = vpack.c.b16 %v1610, %v1602
        %v1819 = vpack.c.b16 %v1611, %v1603
        %v1820 = vpack.c.b16 %v1612, %v1604
        %v1821 = vpack.c.b16 %v1621, %v1613
        %v1822 = vpack.c.b16 %v1622, %v1614
        %v1823 = vpack.c.b16 %v1623, %v1615
        %v1824 = vpack.c.b16 %v1624, %v1616
        %v1825 = vpack.c.b16 %v1625, %v1617
        %v1826 = vpack.c.b16 %v1626, %v1618
        %v1827 = vpack.c.b16 %v1627, %v1619
        %v1828 = vpack.c.b16 %v1628, %v1620
        %v1829 = vpack.c.b16 %v1629, %v1629
        %v1830 = vpack.c.b16 %v1630, %v1630
        %v1831 = vpack.c.b16 %v1631, %v1631
        %v1832 = vpack.c.b16 %v1632, %v1632
        %v1833 = vpack.c.b16 %v1633, %v1633
        %v1834 = vpack.c.b16 %v1634, %v1634
        %v1835 = vpack.c.b16 %v1635, %v1635
        %v1836 = vpack.c.b16 %v1636, %v1636
        %v2165 = vunpack.c.l.b16 %v921
        %v2166 = vunpack.c.l.b16 %v922
        %v2167 = vunpack.c.l.b16 %v923
        %v2168 = vunpack.c.l.b16 %v924
        %v2169 = vunpack.c.l.b16 %v925
        %v2170 = vunpack.c.l.b16 %v926
        %v2171 = vunpack.c.l.b16 %v927
        %v2172 = vunpack.c.l.b16 %v928
        %v2173 = vunpack.c.l.b16 %v929
        %v2174 = vunpack.c.l.b16 %v930
        %v2175 = vunpack.c.l.b16 %v931
        %v2176 = vunpack.c.l.b16 %v932
        %v2177 = vunpack.c.l.b16 %v933
        %v2178 = vunpack.c.l.b16 %v934
        %v2179 = vunpack.c.l.b16 %v935
        %v2180 = vunpack.c.l.b16 %v936
        %v2181 = vunpack.c.l.b16 %v937
        %v2182 = vunpack.c.l.b16 %v938
        %v2183 = vunpack.c.l.b16 %v939
        %v2184 = vunpack.c.l.b16 %v940
        %v2185 = vunpack.c.l.b16 %v941
        %v2186 = vunpack.c.l.b16 %v942
        %v2187 = vunpack.c.l.b16 %v943
        %v2188 = vunpack.c.l.b16 %v944
        %v2189 = vunpack.c.l.b16 %v945
        %v2190 = vunpack.c.l.b16 %v946
        %v2191 = vunpack.c.l.b16 %v947
        %v2192 = vunpack.c.l.b16 %v948
        %v2193 = vunpack.c.l.b16 %v949
        %v2194 = vunpack.c.l.b16 %v950
        %v2195 = vunpack.c.l.b16 %v951
        %v2196 = vunpack.c.l.b16 %v952
        %v2197 = vunpack.c.l.b16 %v953
        %v2198 = vunpack.c.l.b16 %v954
        %v2199 = vunpack.c.l.b16 %v955
        %v2200 = vunpack.c.l.b16 %v956
        %v2201 = vunpack.c.l.b16 %v957
        %v2202 = vunpack.c.l.b16 %v958
        %v2203 = vunpack.c.l.b16 %v959
        %v2204 = vunpack.c.l.b16 %v960
        %v2205 = vunpack.c.l.b16 %v961
        %v2206 = vunpack.c.l.b16 %v962
        %v2207 = vunpack.c.l.b16 %v963
        %v2208 = vunpack.c.l.b16 %v964
        %v2209 = vunpack.c.l.b16 %v965
        %v2210 = vunpack.c.l.b16 %v966
        %v2211 = vunpack.c.l.b16 %v967
        %v2212 = vunpack.c.l.b16 %v968
        %v2213 = vunpack.c.l.b16 %v969
        %v2214 = vunpack.c.l.b16 %v970
        %v2215 = vunpack.c.l.b16 %v971
        %v2216 = vunpack.c.l.b16 %v972
        %v2217 = vunpack.c.l.b16 %v973
        %v2218 = vunpack.c.l.b16 %v974
        %v2219 = vunpack.c.l.b16 %v975
        %v2220 = vunpack.c.l.b16 %v976
        %v2221 = vunpack.c.l.b16 %v977
        %v2222 = vunpack.c.l.b16 %v978
        %v2223 = vunpack.c.l.b16 %v979
        %v2224 = vunpack.c.l.b16 %v980
        %v2225 = vunpack.c.l.b16 %v981
        %v2226 = vunpack.c.l.b16 %v982
        %v2227 = vunpack.c.l.b16 %v983
        %v2228 = vunpack.c.l.b16 %v984
        %v2229 = vunpack.c.l.b16 %v985
        %v2230 = vunpack.c.l.b16 %v986
        %v2231 = vunpack.c.l.b16 %v987
        %v2232 = vunpack.c.l.b16 %v988
        %v2233 = vunpack.c.l.b16 %v989
        %v2234 = vunpack.c.l.b16 %v990
        %v2235 = vunpack.c.l.b16 %v991
        %v2236 = vunpack.c.l.b16 %v992
        %v2237 = vunpack.c.l.b16 %v993
        %v2238 = vunpack.c.l.b16 %v994
        %v2239 = vunpack.c.l.b16 %v995
        %v2240 = vunpack.c.l.b16 %v996
        %v2241 = vunpack.c.l.b16 %v997
        %v2242 = vunpack.c.l.b16 %v998
        %v2243 = vunpack.c.l.b16 %v999
        %v2244 = vunpack.c.l.b16 %v1000
        %v2245 = vunpack.c.l.b16 %v1001
        %v2246 = vunpack.c.l.b16 %v1002
        %v2247 = vunpack.c.l.b16 %v1003
        %v2248 = vunpack.c.l.b16 %v1004
        %v2249 = vunpack.c.l.b16 %v1005
        %v2250 = vunpack.c.l.b16 %v1006
        %v2251 = vunpack.c.l.b16 %v1007
        %v2252 = vunpack.c.l.b16 %v1008
        %v2253 = vunpack.c.l.b16 %v1009
        %v2254 = vunpack.c.l.b16 %v1010
        %v2255 = vunpack.c.l.b16 %v1011
        %v2256 = vunpack.c.l.b16 %v1012
        %v2257 = vunpack.c.l.b16 %v1013
        %v2258 = vunpack.c.l.b16 %v1014
        %v2259 = vunpack.c.l.b16 %v1015
        %v2260 = vunpack.c.l.b16 %v1016
        %v2261 = vunpack.c.l.b16 %v1017
        %v2262 = vunpack.c.l.b16 %v1018
        %v2263 = vunpack.c.l.b16 %v1019
        %v2264 = vunpack.c.l.b16 %v1020
        %v2265 = vunpack.c.l.b16 %v1021
        %v2266 = vunpack.c.l.b16 %v1022
        %v2267 = vunpack.c.l.b16 %v1023
        %v2268 = vunpack.c.l.b16 %v1024
        %v2269 = vunpack.c.l.b16 %v1025
        %v2270 = vunpack.c.l.b16 %v1026
        %v2271 = vunpack.c.l.b16 %v1027
        %v2272 = vunpack.c.l.b16 %v1028
        %v2273 = vunpack.c.l.b16 %v1029
        %v2274 = vunpack.c.l.b16 %v1030
        %v2275 = vunpack.c.l.b16 %v1031
        %v2276 = vunpack.c.l.b16 %v1032
        %v2277 = vunpack.c.l.b16 %v1033
        %v2278 = vunpack.c.l.b16 %v1034
        %v2279 = vunpack.c.l.b16 %v1035
        %v2280 = vunpack.c.l.b16 %v1036
        %v2281 = vunpack.c.l.b16 %v1037
        %v2282 = vunpack.c.l.b16 %v1038
        %v2283 = vunpack.c.l.b16 %v1039
        %v2284 = vunpack.c.l.b16 %v1040
        %v2285 = vunpack.c.l.b16 %v1041
        %v2286 = vunpack.c.l.b16 %v1042
        %v2287 = vunpack.c.l.b16 %v1043
        %v2288 = vunpack.c.l.b16 %v1044
        %v2289 = vunpack.c.l.b16 %v1045
        %v2290 = vunpack.c.l.b16 %v1046
        %v2291 = vunpack.c.l.b16 %v1047
        %v2292 = vunpack.c.l.b16 %v1048
        %v2293 = vpack.c.b16 %v2166, %v2165
        %v2294 = vpack.c.b16 %v2168, %v2167
        %v2295 = vpack.c.b16 %v2170, %v2169
        %v2296 = vpack.c.b16 %v2172, %v2171
        %v2297 = vpack.c.b16 %v2174, %v2173
        %v2298 = vpack.c.b16 %v2176, %v2175
        %v2299 = vpack.c.b16 %v2178, %v2177
        %v2300 = vpack.c.b16 %v2180, %v2179
        %v2301 = vpack.c.b16 %v2182, %v2181
        %v2302 = vpack.c.b16 %v2184, %v2183
        %v2303 = vpack.c.b16 %v2186, %v2185
        %v2304 = vpack.c.b16 %v2188, %v2187
        %v2305 = vpack.c.b16 %v2190, %v2189
        %v2306 = vpack.c.b16 %v2192, %v2191
        %v2307 = vpack.c.b16 %v2194, %v2193
        %v2308 = vpack.c.b16 %v2196, %v2195
        %v2309 = vpack.c.b16 %v2198, %v2197
        %v2310 = vpack.c.b16 %v2200, %v2199
        %v2311 = vpack.c.b16 %v2202, %v2201
        %v2312 = vpack.c.b16 %v2204, %v2203
        %v2313 = vpack.c.b16 %v2206, %v2205
        %v2314 = vpack.c.b16 %v2208, %v2207
        %v2315 = vpack.c.b16 %v2210, %v2209
        %v2316 = vpack.c.b16 %v2212, %v2211
        %v2317 = vpack.c.b16 %v2214, %v2213
        %v2318 = vpack.c.b16 %v2216, %v2215
        %v2319 = vpack.c.b16 %v2218, %v2217
        %v2320 = vpack.c.b16 %v2220, %v2219
        %v2321 = vpack.c.b16 %v2222, %v2221
        %v2322 = vpack.c.b16 %v2224, %v2223
        %v2323 = vpack.c.b16 %v2226, %v2225
        %v2324 = vpack.c.b16 %v2228, %v2227
        %v2325 = vpack.c.b16 %v2230, %v2229
        %v2326 = vpack.c.b16 %v2232, %v2231
        %v2327 = vpack.c.b16 %v2234, %v2233
        %v2328 = vpack.c.b16 %v2236, %v2235
        %v2329 = vpack.c.b16 %v2238, %v2237
        %v2330 = vpack.c.b16 %v2240, %v2239
        %v2331 = vpack.c.b16 %v2242, %v2241
        %v2332 = vpack.c.b16 %v2244, %v2243
        %v2333 = vpack.c.b16 %v2246, %v2245
        %v2334 = vpack.c.b16 %v2248, %v2247
        %v2335 = vpack.c.b16 %v2250, %v2249
        %v2336 = vpack.c.b16 %v2252, %v2251
        %v2337 = vpack.c.b16 %v2254, %v2253
        %v2338 = vpack.c.b16 %v2256, %v2255
        %v2339 = vpack.c.b16 %v2258, %v2257
        %v2340 = vpack.c.b16 %v2260, %v2259
        %v2341 = vpack.c.b16 %v2262, %v2261
        %v2342 = vpack.c.b16 %v2264, %v2263
        %v2343 = vpack.c.b16 %v2266, %v2265
        %v2344 = vpack.c.b16 %v2268, %v2267
        %v2345 = vpack.c.b16 %v2270, %v2269
        %v2346 = vpack.c.b16 %v2272, %v2271
        %v2347 = vpack.c.b16 %v2274, %v2273
        %v2348 = vpack.c.b16 %v2276, %v2275
        %v2349 = vpack.c.b16 %v2278, %v2277
        %v2350 = vpack.c.b16 %v2280, %v2279
        %v2351 = vpack.c.b16 %v2282, %v2281
        %v2352 = vpack.c.b16 %v2284, %v2283
        %v2353 = vpack.c.b16 %v2286, %v2285
        %v2354 = vpack.c.b16 %v2288, %v2287
        %v2355 = vpack.c.b16 %v2290, %v2289
        %v2356 = vpack.c.b16 %v2292, %v2291
        %2421 = vmatprep.subr.bf16.mxu0 0
        %2422 = vmatpush1.bf16.msra.mxu0 %v2293
        %2423 = vmatprep.subr.bf16.mxu0 0
        %2424 = vmatpush1.bf16.msra.mxu0 %v2294
        %2425 = vmatprep.subr.bf16.mxu0 0
        %2426 = vmatpush1.bf16.msra.mxu0 %v2295
        %2427 = vmatprep.subr.bf16.mxu0 0
        %2428 = vmatpush1.bf16.msra.mxu0 %v2296
        %2429 = vmatprep.subr.bf16.mxu0 0
        %2430 = vmatpush1.bf16.msra.mxu0 %v2297
        %2431 = vmatprep.subr.bf16.mxu0 0
        %2432 = vmatpush1.bf16.msra.mxu0 %v2298
        %2433 = vmatprep.subr.bf16.mxu0 0
        %2434 = vmatpush1.bf16.msra.mxu0 %v2299
        %2435 = vmatprep.subr.bf16.mxu0 0
        %2436 = vmatpush1.bf16.msra.mxu0 %v2300
        %2437 = vmatprep.subr.bf16.mxu0 0
        %2438 = vmatpush1.bf16.msra.mxu0 %v2301
        %2439 = vmatprep.subr.bf16.mxu0 0
        %2440 = vmatpush1.bf16.msra.mxu0 %v2302
        %2441 = vmatprep.subr.bf16.mxu0 0
        %2442 = vmatpush1.bf16.msra.mxu0 %v2303
        %2443 = vmatprep.subr.bf16.mxu0 0
        %2444 = vmatpush1.bf16.msra.mxu0 %v2304
        %2445 = vmatprep.subr.bf16.mxu0 0
        %2446 = vmatpush1.bf16.msra.mxu0 %v2305
        %2447 = vmatprep.subr.bf16.mxu0 0
        %2448 = vmatpush1.bf16.msra.mxu0 %v2306
        %2449 = vmatprep.subr.bf16.mxu0 0
        %2450 = vmatpush1.bf16.msra.mxu0 %v2307
        %2451 = vmatprep.subr.bf16.mxu0 0
        %2452 = vmatpush1.bf16.msra.mxu0 %v2308
        %2453 = vmatprep.mubr.bf16.mxu0 %v1638
        %2454 = vmatmul.mubr.bf16.gmra.mrb[0].mxu0 %v1637
        %v2455 = vpop.f32.mrb[0].mxu0
        %v2456 = vadd.f32 0.0, %v2455
        %v2457 = vpop.f32.mrb[0].mxu0
        %v2458 = vpop.f32.mrb[0].mxu0
        %v2459 = vadd.f32 0.0, %v2458
        %v2460 = vpop.f32.mrb[0].mxu0
        %2461 = vmatprep.mubr.bf16.mxu0 %v1646
        %2462 = vmatmul.mubr.bf16.gmra.mrb[0].mxu0 %v1645
        %v2463 = vpop.f32.mrb[0].mxu0
        %v2464 = vadd.f32 0.0, %v2463
        %v2465 = vpop.f32.mrb[0].mxu0
        %v2466 = vpop.f32.mrb[0].mxu0
        %v2467 = vadd.f32 0.0, %v2466
        %v2468 = vpop.f32.mrb[0].mxu0
        %2469 = vmatprep.mubr.bf16.mxu0 %v1654
        %2470 = vmatmul.mubr.bf16.gmra.mrb[0].mxu0 %v1653
        %v2471 = vpop.f32.mrb[0].mxu0
        %v2472 = vadd.f32 0.0, %v2471
        %v2473 = vpop.f32.mrb[0].mxu0
        %v2474 = vpop.f32.mrb[0].mxu0
        %v2475 = vadd.f32 0.0, %v2474
        %v2476 = vpop.f32.mrb[0].mxu0
        %2477 = vmatprep.mubr.bf16.mxu0 %v1662
        %2478 = vmatmul.mubr.bf16.gmra.mrb[0].mxu0 %v1661
        %v2479 = vpop.f32.mrb[0].mxu0
        %v2480 = vadd.f32 0.0, %v2479
        %v2481 = vpop.f32.mrb[0].mxu0
        %v2482 = vpop.f32.mrb[0].mxu0
        %v2483 = vadd.f32 0.0, %v2482
        %v2484 = vpop.f32.mrb[0].mxu0
        %2485 = vmatprep.mubr.bf16.mxu0 %v1670
        %2486 = vmatmul.mubr.bf16.gmra.mrb[0].mxu0 %v1669
        %v2487 = vpop.f32.mrb[0].mxu0
        %v2488 = vadd.f32 0.0, %v2487
        %v2489 = vpop.f32.mrb[0].mxu0
        %v2490 = vpop.f32.mrb[0].mxu0
        %v2491 = vadd.f32 0.0, %v2490
        %v2492 = vpop.f32.mrb[0].mxu0
        %2493 = vmatprep.mubr.bf16.mxu0 %v1678
        %2494 = vmatmul.mubr.bf16.gmra.mrb[0].mxu0 %v1677
        %v2495 = vpop.f32.mrb[0].mxu0
        %v2496 = vadd.f32 0.0, %v2495
        %v2497 = vpop.f32.mrb[0].mxu0
        %v2498 = vpop.f32.mrb[0].mxu0
        %v2499 = vadd.f32 0.0, %v2498
        %v2500 = vpop.f32.mrb[0].mxu0
        %2501 = vmatprep.mubr.bf16.mxu0 %v1686
        %2502 = vmatmul.mubr.bf16.gmra.mrb[0].mxu0 %v1685
        %v2503 = vpop.f32.mrb[0].mxu0
        %v2504 = vadd.f32 0.0, %v2503
        %v2505 = vpop.f32.mrb[0].mxu0
        %v2506 = vpop.f32.mrb[0].mxu0
        %v2507 = vadd.f32 0.0, %v2506
        %v2508 = vpop.f32.mrb[0].mxu0
        %2509 = vmatprep.mubr.bf16.mxu0 %v1694
        %2510 = vmatmul.mubr.bf16.gmra.mrb[0].mxu0 %v1693
        %v2511 = vpop.f32.mrb[0].mxu0
        %v2512 = vadd.f32 0.0, %v2511
        %v2513 = vpop.f32.mrb[0].mxu0
        %v2514 = vpop.f32.mrb[0].mxu0
        %v2515 = vadd.f32 0.0, %v2514
        %v2516 = vpop.f32.mrb[0].mxu0
        %2517 = vmatprep.mubr.bf16.mxu0 %v1702
        %2518 = vmatmul.mubr.bf16.gmra.mrb[0].mxu0 %v1701
        %v2519 = vpop.f32.mrb[0].mxu0
        %v2520 = vadd.f32 0.0, %v2519
        %v2521 = vpop.f32.mrb[0].mxu0
        %v2522 = vpop.f32.mrb[0].mxu0
        %v2523 = vadd.f32 0.0, %v2522
        %v2524 = vpop.f32.mrb[0].mxu0
        %2525 = vmatprep.mubr.bf16.mxu0 %v1710
        %2526 = vmatmul.mubr.bf16.gmra.mrb[0].mxu0 %v1709
        %v2527 = vpop.f32.mrb[0].mxu0
        %v2528 = vadd.f32 0.0, %v2527
        %v2529 = vpop.f32.mrb[0].mxu0
        %v2530 = vpop.f32.mrb[0].mxu0
        %v2531 = vadd.f32 0.0, %v2530
        %v2532 = vpop.f32.mrb[0].mxu0
        %2533 = vmatprep.mubr.bf16.mxu0 %v1718
        %2534 = vmatmul.mubr.bf16.gmra.mrb[0].mxu0 %v1717
        %v2535 = vpop.f32.mrb[0].mxu0
        %v2536 = vadd.f32 0.0, %v2535
        %v2537 = vpop.f32.mrb[0].mxu0
        %v2538 = vpop.f32.mrb[0].mxu0
        %v2539 = vadd.f32 0.0, %v2538
        %v2540 = vpop.f32.mrb[0].mxu0
        %2541 = vmatprep.mubr.bf16.mxu0 %v1726
        %2542 = vmatmul.mubr.bf16.gmra.mrb[0].mxu0 %v1725
        %v2543 = vpop.f32.mrb[0].mxu0
        %v2544 = vadd.f32 0.0, %v2543
        %v2545 = vpop.f32.mrb[0].mxu0
        %v2546 = vpop.f32.mrb[0].mxu0
        %v2547 = vadd.f32 0.0, %v2546
        %v2548 = vpop.f32.mrb[0].mxu0
        %2549 = vmatprep.mubr.bf16.mxu0 %v1734
        %2550 = vmatmul.mubr.bf16.gmra.mrb[0].mxu0 %v1733
        %v2551 = vpop.f32.mrb[0].mxu0
        %v2552 = vadd.f32 0.0, %v2551
        %v2553 = vpop.f32.mrb[0].mxu0
        %v2554 = vpop.f32.mrb[0].mxu0
        %v2555 = vadd.f32 0.0, %v2554
        %v2556 = vpop.f32.mrb[0].mxu0
        %2557 = vmatprep.mubr.bf16.mxu0 %v1742
        %2558 = vmatmul.mubr.bf16.gmra.mrb[0].mxu0 %v1741
        %v2559 = vpop.f32.mrb[0].mxu0
        %v2560 = vadd.f32 0.0, %v2559
        %v2561 = vpop.f32.mrb[0].mxu0
        %v2562 = vpop.f32.mrb[0].mxu0
        %v2563 = vadd.f32 0.0, %v2562
        %v2564 = vpop.f32.mrb[0].mxu0
        %2565 = vmatprep.mubr.bf16.mxu0 %v1750
        %2566 = vmatmul.mubr.bf16.gmra.mrb[0].mxu0 %v1749
        %v2567 = vpop.f32.mrb[0].mxu0
        %v2568 = vadd.f32 0.0, %v2567
        %v2569 = vpop.f32.mrb[0].mxu0
        %v2570 = vpop.f32.mrb[0].mxu0
        %v2571 = vadd.f32 0.0, %v2570
        %v2572 = vpop.f32.mrb[0].mxu0
        %2573 = vmatprep.mubr.bf16.mxu0 %v1758
        %2574 = vmatmul.mubr.bf16.gmra.mrb[0].mxu0 %v1757
        %v2575 = vpop.f32.mrb[0].mxu0
        %v2576 = vadd.f32 0.0, %v2575
        %v2577 = vpop.f32.mrb[0].mxu0
        %v2578 = vpop.f32.mrb[0].mxu0
        %v2579 = vadd.f32 0.0, %v2578
        %v2580 = vpop.f32.mrb[0].mxu0
        %2581 = vmatprep.mubr.bf16.mxu0 %v1766
        %2582 = vmatmul.mubr.bf16.gmra.mrb[0].mxu0 %v1765
        %v2583 = vpop.f32.mrb[0].mxu0
        %v2584 = vadd.f32 0.0, %v2583
        %v2585 = vpop.f32.mrb[0].mxu0
        %v2586 = vpop.f32.mrb[0].mxu0
        %v2587 = vadd.f32 0.0, %v2586
        %v2588 = vpop.f32.mrb[0].mxu0
        %2589 = vmatprep.mubr.bf16.mxu0 %v1774
        %2590 = vmatmul.mubr.bf16.gmra.mrb[0].mxu0 %v1773
        %v2591 = vpop.f32.mrb[0].mxu0
        %v2592 = vadd.f32 0.0, %v2591
        %v2593 = vpop.f32.mrb[0].mxu0
        %v2594 = vpop.f32.mrb[0].mxu0
        %v2595 = vadd.f32 0.0, %v2594
        %v2596 = vpop.f32.mrb[0].mxu0
        %2597 = vmatprep.mubr.bf16.mxu0 %v1782
        %2598 = vmatmul.mubr.bf16.gmra.mrb[0].mxu0 %v1781
        %v2599 = vpop.f32.mrb[0].mxu0
        %v2600 = vadd.f32 0.0, %v2599
        %v2601 = vpop.f32.mrb[0].mxu0
        %v2602 = vpop.f32.mrb[0].mxu0
        %v2603 = vadd.f32 0.0, %v2602
        %v2604 = vpop.f32.mrb[0].mxu0
        %2605 = vmatprep.mubr.bf16.mxu0 %v1790
        %2606 = vmatmul.mubr.bf16.gmra.mrb[0].mxu0 %v1789
        %v2607 = vpop.f32.mrb[0].mxu0
        %v2608 = vadd.f32 0.0, %v2607
        %v2609 = vpop.f32.mrb[0].mxu0
        %v2610 = vpop.f32.mrb[0].mxu0
        %v2611 = vadd.f32 0.0, %v2610
        %v2612 = vpop.f32.mrb[0].mxu0
        %2613 = vmatprep.mubr.bf16.mxu0 %v1798
        %2614 = vmatmul.mubr.bf16.gmra.mrb[0].mxu0 %v1797
        %v2615 = vpop.f32.mrb[0].mxu0
        %v2616 = vadd.f32 0.0, %v2615
        %v2617 = vpop.f32.mrb[0].mxu0
        %v2618 = vpop.f32.mrb[0].mxu0
        %v2619 = vadd.f32 0.0, %v2618
        %v2620 = vpop.f32.mrb[0].mxu0
        %2621 = vmatprep.mubr.bf16.mxu0 %v1806
        %2622 = vmatmul.mubr.bf16.gmra.mrb[0].mxu0 %v1805
        %v2623 = vpop.f32.mrb[0].mxu0
        %v2624 = vadd.f32 0.0, %v2623
        %v2625 = vpop.f32.mrb[0].mxu0
        %v2626 = vpop.f32.mrb[0].mxu0
        %v2627 = vadd.f32 0.0, %v2626
        %v2628 = vpop.f32.mrb[0].mxu0
        %2629 = vmatprep.mubr.bf16.mxu0 %v1814
        %2630 = vmatmul.mubr.bf16.gmra.mrb[0].mxu0 %v1813
        %v2631 = vpop.f32.mrb[0].mxu0
        %v2632 = vadd.f32 0.0, %v2631
        %v2633 = vpop.f32.mrb[0].mxu0
        %v2634 = vpop.f32.mrb[0].mxu0
        %v2635 = vadd.f32 0.0, %v2634
        %v2636 = vpop.f32.mrb[0].mxu0
        %2637 = vmatprep.mubr.bf16.mxu0 %v1822
        %2638 = vmatmul.mubr.bf16.gmra.mrb[0].mxu0 %v1821
        %v2639 = vpop.f32.mrb[0].mxu0
        %v2640 = vadd.f32 0.0, %v2639
        %v2641 = vpop.f32.mrb[0].mxu0
        %v2642 = vpop.f32.mrb[0].mxu0
        %v2643 = vadd.f32 0.0, %v2642
        %v2644 = vpop.f32.mrb[0].mxu0
        %2645 = vmatprep.mubr.bf16.mxu0 %v1830
        %2646 = vmatmul.mubr.bf16.gmra.mrb[0].mxu0 %v1829
        %v2647 = vpop.f32.mrb[0].mxu0
        %v2648 = vadd.f32 0.0, %v2647
        %v2649 = vpop.f32.mrb[0].mxu0
        %v2650 = vpop.f32.mrb[0].mxu0
        %v2651 = vpop.f32.mrb[0].mxu0
        %2652 = vdwg.mxu0
        %2653 = vmatprep.subr.bf16.mxu0 0
        %2654 = vmatpush1.bf16.msra.mxu0 %v2309
        %2655 = vmatprep.subr.bf16.mxu0 0
        %2656 = vmatpush1.bf16.msra.mxu0 %v2310
        %2657 = vmatprep.subr.bf16.mxu0 0
        %2658 = vmatpush1.bf16.msra.mxu0 %v2311
        %2659 = vmatprep.subr.bf16.mxu0 0
        %2660 = vmatpush1.bf16.msra.mxu0 %v2312
        %2661 = vmatprep.subr.bf16.mxu0 0
        %2662 = vmatpush1.bf16.msra.mxu0 %v2313
        %2663 = vmatprep.subr.bf16.mxu0 0
        %2664 = vmatpush1.bf16.msra.mxu0 %v2314
        %2665 = vmatprep.subr.bf16.mxu0 0
        %2666 = vmatpush1.bf16.msra.mxu0 %v2315
        %2667 = vmatprep.subr.bf16.mxu0 0
        %2668 = vmatpush1.bf16.msra.mxu0 %v2316
        %2669 = vmatprep.subr.bf16.mxu0 0
        %2670 = vmatpush1.bf16.msra.mxu0 %v2317
        %2671 = vmatprep.subr.bf16.mxu0 0
        %2672 = vmatpush1.bf16.msra.mxu0 %v2318
        %2673 = vmatprep.subr.bf16.mxu0 0
        %2674 = vmatpush1.bf16.msra.mxu0 %v2319
        %2675 = vmatprep.subr.bf16.mxu0 0
        %2676 = vmatpush1.bf16.msra.mxu0 %v2320
        %2677 = vmatprep.subr.bf16.mxu0 0
        %2678 = vmatpush1.bf16.msra.mxu0 %v2321
        %2679 = vmatprep.subr.bf16.mxu0 0
        %2680 = vmatpush1.bf16.msra.mxu0 %v2322
        %2681 = vmatprep.subr.bf16.mxu0 0
        %2682 = vmatpush1.bf16.msra.mxu0 %v2323
        %2683 = vmatprep.subr.bf16.mxu0 0
        %2684 = vmatpush1.bf16.msra.mxu0 %v2324
        %2685 = vmatprep.mubr.bf16.mxu0 %v1640
        %2686 = vmatmul.mubr.bf16.gmra.mrb[0].mxu0 %v1639
        %v2687 = vpop.f32.mrb[0].mxu0
        %v2688 = vadd.f32 %v2456, %v2687
        %v2689 = vpop.f32.mrb[0].mxu0
        %v2690 = vpop.f32.mrb[0].mxu0
        %v2691 = vadd.f32 %v2459, %v2690
        %v2692 = vpop.f32.mrb[0].mxu0
        %2693 = vmatprep.mubr.bf16.mxu0 %v1648
        %2694 = vmatmul.mubr.bf16.gmra.mrb[0].mxu0 %v1647
        %v2695 = vpop.f32.mrb[0].mxu0
        %v2696 = vadd.f32 %v2464, %v2695
        %v2697 = vpop.f32.mrb[0].mxu0
        %v2698 = vpop.f32.mrb[0].mxu0
        %v2699 = vadd.f32 %v2467, %v2698
        %v2700 = vpop.f32.mrb[0].mxu0
        %2701 = vmatprep.mubr.bf16.mxu0 %v1656
        %2702 = vmatmul.mubr.bf16.gmra.mrb[0].mxu0 %v1655
        %v2703 = vpop.f32.mrb[0].mxu0
        %v2704 = vadd.f32 %v2472, %v2703
        %v2705 = vpop.f32.mrb[0].mxu0
        %v2706 = vpop.f32.mrb[0].mxu0
        %v2707 = vadd.f32 %v2475, %v2706
        %v2708 = vpop.f32.mrb[0].mxu0
        %2709 = vmatprep.mubr.bf16.mxu0 %v1664
        %2710 = vmatmul.mubr.bf16.gmra.mrb[0].mxu0 %v1663
        %v2711 = vpop.f32.mrb[0].mxu0
        %v2712 = vadd.f32 %v2480, %v2711
        %v2713 = vpop.f32.mrb[0].mxu0
        %v2714 = vpop.f32.mrb[0].mxu0
        %v2715 = vadd.f32 %v2483, %v2714
        %v2716 = vpop.f32.mrb[0].mxu0
        %2717 = vmatprep.mubr.bf16.mxu0 %v1672
        %2718 = vmatmul.mubr.bf16.gmra.mrb[0].mxu0 %v1671
        %v2719 = vpop.f32.mrb[0].mxu0
        %v2720 = vadd.f32 %v2488, %v2719
        %v2721 = vpop.f32.mrb[0].mxu0
        %v2722 = vpop.f32.mrb[0].mxu0
        %v2723 = vadd.f32 %v2491, %v2722
        %v2724 = vpop.f32.mrb[0].mxu0
        %2725 = vmatprep.mubr.bf16.mxu0 %v1680
        %2726 = vmatmul.mubr.bf16.gmra.mrb[0].mxu0 %v1679
        %v2727 = vpop.f32.mrb[0].mxu0
        %v2728 = vadd.f32 %v2496, %v2727
        %v2729 = vpop.f32.mrb[0].mxu0
        %v2730 = vpop.f32.mrb[0].mxu0
        %v2731 = vadd.f32 %v2499, %v2730
        %v2732 = vpop.f32.mrb[0].mxu0
        %2733 = vmatprep.mubr.bf16.mxu0 %v1688
        %2734 = vmatmul.mubr.bf16.gmra.mrb[0].mxu0 %v1687
        %v2735 = vpop.f32.mrb[0].mxu0
        %v2736 = vadd.f32 %v2504, %v2735
        %v2737 = vpop.f32.mrb[0].mxu0
        %v2738 = vpop.f32.mrb[0].mxu0
        %v2739 = vadd.f32 %v2507, %v2738
        %v2740 = vpop.f32.mrb[0].mxu0
        %2741 = vmatprep.mubr.bf16.mxu0 %v1696
        %2742 = vmatmul.mubr.bf16.gmra.mrb[0].mxu0 %v1695
        %v2743 = vpop.f32.mrb[0].mxu0
        %v2744 = vadd.f32 %v2512, %v2743
        %v2745 = vpop.f32.mrb[0].mxu0
        %v2746 = vpop.f32.mrb[0].mxu0
        %v2747 = vadd.f32 %v2515, %v2746
        %v2748 = vpop.f32.mrb[0].mxu0
        %2749 = vmatprep.mubr.bf16.mxu0 %v1704
        %2750 = vmatmul.mubr.bf16.gmra.mrb[0].mxu0 %v1703
        %v2751 = vpop.f32.mrb[0].mxu0
        %v2752 = vadd.f32 %v2520, %v2751
        %v2753 = vpop.f32.mrb[0].mxu0
        %v2754 = vpop.f32.mrb[0].mxu0
        %v2755 = vadd.f32 %v2523, %v2754
        %v2756 = vpop.f32.mrb[0].mxu0
        %2757 = vmatprep.mubr.bf16.mxu0 %v1712
        %2758 = vmatmul.mubr.bf16.gmra.mrb[0].mxu0 %v1711
        %v2759 = vpop.f32.mrb[0].mxu0
        %v2760 = vadd.f32 %v2528, %v2759
        %v2761 = vpop.f32.mrb[0].mxu0
        %v2762 = vpop.f32.mrb[0].mxu0
        %v2763 = vadd.f32 %v2531, %v2762
        %v2764 = vpop.f32.mrb[0].mxu0
        %2765 = vmatprep.mubr.bf16.mxu0 %v1720
        %2766 = vmatmul.mubr.bf16.gmra.mrb[0].mxu0 %v1719
        %v2767 = vpop.f32.mrb[0].mxu0
        %v2768 = vadd.f32 %v2536, %v2767
        %v2769 = vpop.f32.mrb[0].mxu0
        %v2770 = vpop.f32.mrb[0].mxu0
        %v2771 = vadd.f32 %v2539, %v2770
        %v2772 = vpop.f32.mrb[0].mxu0
        %2773 = vmatprep.mubr.bf16.mxu0 %v1728
        %2774 = vmatmul.mubr.bf16.gmra.mrb[0].mxu0 %v1727
        %v2775 = vpop.f32.mrb[0].mxu0
        %v2776 = vadd.f32 %v2544, %v2775
        %v2777 = vpop.f32.mrb[0].mxu0
        %v2778 = vpop.f32.mrb[0].mxu0
        %v2779 = vadd.f32 %v2547, %v2778
        %v2780 = vpop.f32.mrb[0].mxu0
        %2781 = vmatprep.mubr.bf16.mxu0 %v1736
        %2782 = vmatmul.mubr.bf16.gmra.mrb[0].mxu0 %v1735
        %v2783 = vpop.f32.mrb[0].mxu0
        %v2784 = vadd.f32 %v2552, %v2783
        %v2785 = vpop.f32.mrb[0].mxu0
        %v2786 = vpop.f32.mrb[0].mxu0
        %v2787 = vadd.f32 %v2555, %v2786
        %v2788 = vpop.f32.mrb[0].mxu0
        %2789 = vmatprep.mubr.bf16.mxu0 %v1744
        %2790 = vmatmul.mubr.bf16.gmra.mrb[0].mxu0 %v1743
        %v2791 = vpop.f32.mrb[0].mxu0
        %v2792 = vadd.f32 %v2560, %v2791
        %v2793 = vpop.f32.mrb[0].mxu0
        %v2794 = vpop.f32.mrb[0].mxu0
        %v2795 = vadd.f32 %v2563, %v2794
        %v2796 = vpop.f32.mrb[0].mxu0
        %2797 = vmatprep.mubr.bf16.mxu0 %v1752
        %2798 = vmatmul.mubr.bf16.gmra.mrb[0].mxu0 %v1751
        %v2799 = vpop.f32.mrb[0].mxu0
        %v2800 = vadd.f32 %v2568, %v2799
        %v2801 = vpop.f32.mrb[0].mxu0
        %v2802 = vpop.f32.mrb[0].mxu0
        %v2803 = vadd.f32 %v2571, %v2802
        %v2804 = vpop.f32.mrb[0].mxu0
        %2805 = vmatprep.mubr.bf16.mxu0 %v1760
        %2806 = vmatmul.mubr.bf16.gmra.mrb[0].mxu0 %v1759
        %v2807 = vpop.f32.mrb[0].mxu0
        %v2808 = vadd.f32 %v2576, %v2807
        %v2809 = vpop.f32.mrb[0].mxu0
        %v2810 = vpop.f32.mrb[0].mxu0
        %v2811 = vadd.f32 %v2579, %v2810
        %v2812 = vpop.f32.mrb[0].mxu0
        %2813 = vmatprep.mubr.bf16.mxu0 %v1768
        %2814 = vmatmul.mubr.bf16.gmra.mrb[0].mxu0 %v1767
        %v2815 = vpop.f32.mrb[0].mxu0
        %v2816 = vadd.f32 %v2584, %v2815
        %v2817 = vpop.f32.mrb[0].mxu0
        %v2818 = vpop.f32.mrb[0].mxu0
        %v2819 = vadd.f32 %v2587, %v2818
        %v2820 = vpop.f32.mrb[0].mxu0
        %2821 = vmatprep.mubr.bf16.mxu0 %v1776
        %2822 = vmatmul.mubr.bf16.gmra.mrb[0].mxu0 %v1775
        %v2823 = vpop.f32.mrb[0].mxu0
        %v2824 = vadd.f32 %v2592, %v2823
        %v2825 = vpop.f32.mrb[0].mxu0
        %v2826 = vpop.f32.mrb[0].mxu0
        %v2827 = vadd.f32 %v2595, %v2826
        %v2828 = vpop.f32.mrb[0].mxu0
        %2829 = vmatprep.mubr.bf16.mxu0 %v1784
        %2830 = vmatmul.mubr.bf16.gmra.mrb[0].mxu0 %v1783
        %v2831 = vpop.f32.mrb[0].mxu0
        %v2832 = vadd.f32 %v2600, %v2831
        %v2833 = vpop.f32.mrb[0].mxu0
        %v2834 = vpop.f32.mrb[0].mxu0
        %v2835 = vadd.f32 %v2603, %v2834
        %v2836 = vpop.f32.mrb[0].mxu0
        %2837 = vmatprep.mubr.bf16.mxu0 %v1792
        %2838 = vmatmul.mubr.bf16.gmra.mrb[0].mxu0 %v1791
        %v2839 = vpop.f32.mrb[0].mxu0
        %v2840 = vadd.f32 %v2608, %v2839
        %v2841 = vpop.f32.mrb[0].mxu0
        %v2842 = vpop.f32.mrb[0].mxu0
        %v2843 = vadd.f32 %v2611, %v2842
        %v2844 = vpop.f32.mrb[0].mxu0
        %2845 = vmatprep.mubr.bf16.mxu0 %v1800
        %2846 = vmatmul.mubr.bf16.gmra.mrb[0].mxu0 %v1799
        %v2847 = vpop.f32.mrb[0].mxu0
        %v2848 = vadd.f32 %v2616, %v2847
        %v2849 = vpop.f32.mrb[0].mxu0
        %v2850 = vpop.f32.mrb[0].mxu0
        %v2851 = vadd.f32 %v2619, %v2850
        %v2852 = vpop.f32.mrb[0].mxu0
        %2853 = vmatprep.mubr.bf16.mxu0 %v1808
        %2854 = vmatmul.mubr.bf16.gmra.mrb[0].mxu0 %v1807
        %v2855 = vpop.f32.mrb[0].mxu0
        %v2856 = vadd.f32 %v2624, %v2855
        %v2857 = vpop.f32.mrb[0].mxu0
        %v2858 = vpop.f32.mrb[0].mxu0
        %v2859 = vadd.f32 %v2627, %v2858
        %v2860 = vpop.f32.mrb[0].mxu0
        %2861 = vmatprep.mubr.bf16.mxu0 %v1816
        %2862 = vmatmul.mubr.bf16.gmra.mrb[0].mxu0 %v1815
        %v2863 = vpop.f32.mrb[0].mxu0
        %v2864 = vadd.f32 %v2632, %v2863
        %v2865 = vpop.f32.mrb[0].mxu0
        %v2866 = vpop.f32.mrb[0].mxu0
        %v2867 = vadd.f32 %v2635, %v2866
        %v2868 = vpop.f32.mrb[0].mxu0
        %2869 = vmatprep.mubr.bf16.mxu0 %v1824
        %2870 = vmatmul.mubr.bf16.gmra.mrb[0].mxu0 %v1823
        %v2871 = vpop.f32.mrb[0].mxu0
        %v2872 = vadd.f32 %v2640, %v2871
        %v2873 = vpop.f32.mrb[0].mxu0
        %v2874 = vpop.f32.mrb[0].mxu0
        %v2875 = vadd.f32 %v2643, %v2874
        %v2876 = vpop.f32.mrb[0].mxu0
        %2877 = vmatprep.mubr.bf16.mxu0 %v1832
        %2878 = vmatmul.mubr.bf16.gmra.mrb[0].mxu0 %v1831
        %v2879 = vpop.f32.mrb[0].mxu0
        %v2880 = vadd.f32 %v2648, %v2879
        %v2881 = vpop.f32.mrb[0].mxu0
        %v2882 = vpop.f32.mrb[0].mxu0
        %v2883 = vpop.f32.mrb[0].mxu0
        %2884 = vdwg.mxu0
        %2885 = vmatprep.subr.bf16.mxu0 0
        %2886 = vmatpush1.bf16.msra.mxu0 %v2325
        %2887 = vmatprep.subr.bf16.mxu0 0
        %2888 = vmatpush1.bf16.msra.mxu0 %v2326
        %2889 = vmatprep.subr.bf16.mxu0 0
        %2890 = vmatpush1.bf16.msra.mxu0 %v2327
        %2891 = vmatprep.subr.bf16.mxu0 0
        %2892 = vmatpush1.bf16.msra.mxu0 %v2328
        %2893 = vmatprep.subr.bf16.mxu0 0
        %2894 = vmatpush1.bf16.msra.mxu0 %v2329
        %2895 = vmatprep.subr.bf16.mxu0 0
        %2896 = vmatpush1.bf16.msra.mxu0 %v2330
        %2897 = vmatprep.subr.bf16.mxu0 0
        %2898 = vmatpush1.bf16.msra.mxu0 %v2331
        %2899 = vmatprep.subr.bf16.mxu0 0
        %2900 = vmatpush1.bf16.msra.mxu0 %v2332
        %2901 = vmatprep.subr.bf16.mxu0 0
        %2902 = vmatpush1.bf16.msra.mxu0 %v2333
        %2903 = vmatprep.subr.bf16.mxu0 0
        %2904 = vmatpush1.bf16.msra.mxu0 %v2334
        %2905 = vmatprep.subr.bf16.mxu0 0
        %2906 = vmatpush1.bf16.msra.mxu0 %v2335
        %2907 = vmatprep.subr.bf16.mxu0 0
        %2908 = vmatpush1.bf16.msra.mxu0 %v2336
        %2909 = vmatprep.subr.bf16.mxu0 0
        %2910 = vmatpush1.bf16.msra.mxu0 %v2337
        %2911 = vmatprep.subr.bf16.mxu0 0
        %2912 = vmatpush1.bf16.msra.mxu0 %v2338
        %2913 = vmatprep.subr.bf16.mxu0 0
        %2914 = vmatpush1.bf16.msra.mxu0 %v2339
        %2915 = vmatprep.subr.bf16.mxu0 0
        %2916 = vmatpush1.bf16.msra.mxu0 %v2340
        %2917 = vmatprep.mubr.bf16.mxu0 %v1642
        %2918 = vmatmul.mubr.bf16.gmra.mrb[0].mxu0 %v1641
        %v2919 = vpop.f32.mrb[0].mxu0
        %v2920 = vadd.f32 %v2688, %v2919
        %v2921 = vpop.f32.mrb[0].mxu0
        %v2922 = vpop.f32.mrb[0].mxu0
        %v2923 = vadd.f32 %v2691, %v2922
        %v2924 = vpop.f32.mrb[0].mxu0
        %2925 = vmatprep.mubr.bf16.mxu0 %v1650
        %2926 = vmatmul.mubr.bf16.gmra.mrb[0].mxu0 %v1649
        %v2927 = vpop.f32.mrb[0].mxu0
        %v2928 = vadd.f32 %v2696, %v2927
        %v2929 = vpop.f32.mrb[0].mxu0
        %v2930 = vpop.f32.mrb[0].mxu0
        %v2931 = vadd.f32 %v2699, %v2930
        %v2932 = vpop.f32.mrb[0].mxu0
        %2933 = vmatprep.mubr.bf16.mxu0 %v1658
        %2934 = vmatmul.mubr.bf16.gmra.mrb[0].mxu0 %v1657
        %v2935 = vpop.f32.mrb[0].mxu0
        %v2936 = vadd.f32 %v2704, %v2935
        %v2937 = vpop.f32.mrb[0].mxu0
        %v2938 = vpop.f32.mrb[0].mxu0
        %v2939 = vadd.f32 %v2707, %v2938
        %v2940 = vpop.f32.mrb[0].mxu0
        %2941 = vmatprep.mubr.bf16.mxu0 %v1666
        %2942 = vmatmul.mubr.bf16.gmra.mrb[0].mxu0 %v1665
        %v2943 = vpop.f32.mrb[0].mxu0
        %v2944 = vadd.f32 %v2712, %v2943
        %v2945 = vpop.f32.mrb[0].mxu0
        %v2946 = vpop.f32.mrb[0].mxu0
        %v2947 = vadd.f32 %v2715, %v2946
        %v2948 = vpop.f32.mrb[0].mxu0
        %2949 = vmatprep.mubr.bf16.mxu0 %v1674
        %2950 = vmatmul.mubr.bf16.gmra.mrb[0].mxu0 %v1673
        %v2951 = vpop.f32.mrb[0].mxu0
        %v2952 = vadd.f32 %v2720, %v2951
        %v2953 = vpop.f32.mrb[0].mxu0
        %v2954 = vpop.f32.mrb[0].mxu0
        %v2955 = vadd.f32 %v2723, %v2954
        %v2956 = vpop.f32.mrb[0].mxu0
        %2957 = vmatprep.mubr.bf16.mxu0 %v1682
        %2958 = vmatmul.mubr.bf16.gmra.mrb[0].mxu0 %v1681
        %v2959 = vpop.f32.mrb[0].mxu0
        %v2960 = vadd.f32 %v2728, %v2959
        %v2961 = vpop.f32.mrb[0].mxu0
        %v2962 = vpop.f32.mrb[0].mxu0
        %v2963 = vadd.f32 %v2731, %v2962
        %v2964 = vpop.f32.mrb[0].mxu0
        %2965 = vmatprep.mubr.bf16.mxu0 %v1690
        %2966 = vmatmul.mubr.bf16.gmra.mrb[0].mxu0 %v1689
        %v2967 = vpop.f32.mrb[0].mxu0
        %v2968 = vadd.f32 %v2736, %v2967
        %v2969 = vpop.f32.mrb[0].mxu0
        %v2970 = vpop.f32.mrb[0].mxu0
        %v2971 = vadd.f32 %v2739, %v2970
        %v2972 = vpop.f32.mrb[0].mxu0
        %2973 = vmatprep.mubr.bf16.mxu0 %v1698
        %2974 = vmatmul.mubr.bf16.gmra.mrb[0].mxu0 %v1697
        %v2975 = vpop.f32.mrb[0].mxu0
        %v2976 = vadd.f32 %v2744, %v2975
        %v2977 = vpop.f32.mrb[0].mxu0
        %v2978 = vpop.f32.mrb[0].mxu0
        %v2979 = vadd.f32 %v2747, %v2978
        %v2980 = vpop.f32.mrb[0].mxu0
        %2981 = vmatprep.mubr.bf16.mxu0 %v1706
        %2982 = vmatmul.mubr.bf16.gmra.mrb[0].mxu0 %v1705
        %v2983 = vpop.f32.mrb[0].mxu0
        %v2984 = vadd.f32 %v2752, %v2983
        %v2985 = vpop.f32.mrb[0].mxu0
        %v2986 = vpop.f32.mrb[0].mxu0
        %v2987 = vadd.f32 %v2755, %v2986
        %v2988 = vpop.f32.mrb[0].mxu0
        %2989 = vmatprep.mubr.bf16.mxu0 %v1714
        %2990 = vmatmul.mubr.bf16.gmra.mrb[0].mxu0 %v1713
        %v2991 = vpop.f32.mrb[0].mxu0
        %v2992 = vadd.f32 %v2760, %v2991
        %v2993 = vpop.f32.mrb[0].mxu0
        %v2994 = vpop.f32.mrb[0].mxu0
        %v2995 = vadd.f32 %v2763, %v2994
        %v2996 = vpop.f32.mrb[0].mxu0
        %2997 = vmatprep.mubr.bf16.mxu0 %v1722
        %2998 = vmatmul.mubr.bf16.gmra.mrb[0].mxu0 %v1721
        %v2999 = vpop.f32.mrb[0].mxu0
        %v3000 = vadd.f32 %v2768, %v2999
        %v3001 = vpop.f32.mrb[0].mxu0
        %v3002 = vpop.f32.mrb[0].mxu0
        %v3003 = vadd.f32 %v2771, %v3002
        %v3004 = vpop.f32.mrb[0].mxu0
        %3005 = vmatprep.mubr.bf16.mxu0 %v1730
        %3006 = vmatmul.mubr.bf16.gmra.mrb[0].mxu0 %v1729
        %v3007 = vpop.f32.mrb[0].mxu0
        %v3008 = vadd.f32 %v2776, %v3007
        %v3009 = vpop.f32.mrb[0].mxu0
        %v3010 = vpop.f32.mrb[0].mxu0
        %v3011 = vadd.f32 %v2779, %v3010
        %v3012 = vpop.f32.mrb[0].mxu0
        %3013 = vmatprep.mubr.bf16.mxu0 %v1738
        %3014 = vmatmul.mubr.bf16.gmra.mrb[0].mxu0 %v1737
        %v3015 = vpop.f32.mrb[0].mxu0
        %v3016 = vadd.f32 %v2784, %v3015
        %v3017 = vpop.f32.mrb[0].mxu0
        %v3018 = vpop.f32.mrb[0].mxu0
        %v3019 = vadd.f32 %v2787, %v3018
        %v3020 = vpop.f32.mrb[0].mxu0
        %3021 = vmatprep.mubr.bf16.mxu0 %v1746
        %3022 = vmatmul.mubr.bf16.gmra.mrb[0].mxu0 %v1745
        %v3023 = vpop.f32.mrb[0].mxu0
        %v3024 = vadd.f32 %v2792, %v3023
        %v3025 = vpop.f32.mrb[0].mxu0
        %v3026 = vpop.f32.mrb[0].mxu0
        %v3027 = vadd.f32 %v2795, %v3026
        %v3028 = vpop.f32.mrb[0].mxu0
        %3029 = vmatprep.mubr.bf16.mxu0 %v1754
        %3030 = vmatmul.mubr.bf16.gmra.mrb[0].mxu0 %v1753
        %v3031 = vpop.f32.mrb[0].mxu0
        %v3032 = vadd.f32 %v2800, %v3031
        %v3033 = vpop.f32.mrb[0].mxu0
        %v3034 = vpop.f32.mrb[0].mxu0
        %v3035 = vadd.f32 %v2803, %v3034
        %v3036 = vpop.f32.mrb[0].mxu0
        %3037 = vmatprep.mubr.bf16.mxu0 %v1762
        %3038 = vmatmul.mubr.bf16.gmra.mrb[0].mxu0 %v1761
        %v3039 = vpop.f32.mrb[0].mxu0
        %v3040 = vadd.f32 %v2808, %v3039
        %v3041 = vpop.f32.mrb[0].mxu0
        %v3042 = vpop.f32.mrb[0].mxu0
        %v3043 = vadd.f32 %v2811, %v3042
        %v3044 = vpop.f32.mrb[0].mxu0
        %3045 = vmatprep.mubr.bf16.mxu0 %v1770
        %3046 = vmatmul.mubr.bf16.gmra.mrb[0].mxu0 %v1769
        %v3047 = vpop.f32.mrb[0].mxu0
        %v3048 = vadd.f32 %v2816, %v3047
        %v3049 = vpop.f32.mrb[0].mxu0
        %v3050 = vpop.f32.mrb[0].mxu0
        %v3051 = vadd.f32 %v2819, %v3050
        %v3052 = vpop.f32.mrb[0].mxu0
        %3053 = vmatprep.mubr.bf16.mxu0 %v1778
        %3054 = vmatmul.mubr.bf16.gmra.mrb[0].mxu0 %v1777
        %v3055 = vpop.f32.mrb[0].mxu0
        %v3056 = vadd.f32 %v2824, %v3055
        %v3057 = vpop.f32.mrb[0].mxu0
        %v3058 = vpop.f32.mrb[0].mxu0
        %v3059 = vadd.f32 %v2827, %v3058
        %v3060 = vpop.f32.mrb[0].mxu0
        %3061 = vmatprep.mubr.bf16.mxu0 %v1786
        %3062 = vmatmul.mubr.bf16.gmra.mrb[0].mxu0 %v1785
        %v3063 = vpop.f32.mrb[0].mxu0
        %v3064 = vadd.f32 %v2832, %v3063
        %v3065 = vpop.f32.mrb[0].mxu0
        %v3066 = vpop.f32.mrb[0].mxu0
        %v3067 = vadd.f32 %v2835, %v3066
        %v3068 = vpop.f32.mrb[0].mxu0
        %3069 = vmatprep.mubr.bf16.mxu0 %v1794
        %3070 = vmatmul.mubr.bf16.gmra.mrb[0].mxu0 %v1793
        %v3071 = vpop.f32.mrb[0].mxu0
        %v3072 = vadd.f32 %v2840, %v3071
        %v3073 = vpop.f32.mrb[0].mxu0
        %v3074 = vpop.f32.mrb[0].mxu0
        %v3075 = vadd.f32 %v2843, %v3074
        %v3076 = vpop.f32.mrb[0].mxu0
        %3077 = vmatprep.mubr.bf16.mxu0 %v1802
        %3078 = vmatmul.mubr.bf16.gmra.mrb[0].mxu0 %v1801
        %v3079 = vpop.f32.mrb[0].mxu0
        %v3080 = vadd.f32 %v2848, %v3079
        %v3081 = vpop.f32.mrb[0].mxu0
        %v3082 = vpop.f32.mrb[0].mxu0
        %v3083 = vadd.f32 %v2851, %v3082
        %v3084 = vpop.f32.mrb[0].mxu0
        %3085 = vmatprep.mubr.bf16.mxu0 %v1810
        %3086 = vmatmul.mubr.bf16.gmra.mrb[0].mxu0 %v1809
        %v3087 = vpop.f32.mrb[0].mxu0
        %v3088 = vadd.f32 %v2856, %v3087
        %v3089 = vpop.f32.mrb[0].mxu0
        %v3090 = vpop.f32.mrb[0].mxu0
        %v3091 = vadd.f32 %v2859, %v3090
        %v3092 = vpop.f32.mrb[0].mxu0
        %3093 = vmatprep.mubr.bf16.mxu0 %v1818
        %3094 = vmatmul.mubr.bf16.gmra.mrb[0].mxu0 %v1817
        %v3095 = vpop.f32.mrb[0].mxu0
        %v3096 = vadd.f32 %v2864, %v3095
        %v3097 = vpop.f32.mrb[0].mxu0
        %v3098 = vpop.f32.mrb[0].mxu0
        %v3099 = vadd.f32 %v2867, %v3098
        %v3100 = vpop.f32.mrb[0].mxu0
        %3101 = vmatprep.mubr.bf16.mxu0 %v1826
        %3102 = vmatmul.mubr.bf16.gmra.mrb[0].mxu0 %v1825
        %v3103 = vpop.f32.mrb[0].mxu0
        %v3104 = vadd.f32 %v2872, %v3103
        %v3105 = vpop.f32.mrb[0].mxu0
        %v3106 = vpop.f32.mrb[0].mxu0
        %v3107 = vadd.f32 %v2875, %v3106
        %v3108 = vpop.f32.mrb[0].mxu0
        %3109 = vmatprep.mubr.bf16.mxu0 %v1834
        %3110 = vmatmul.mubr.bf16.gmra.mrb[0].mxu0 %v1833
        %v3111 = vpop.f32.mrb[0].mxu0
        %v3112 = vadd.f32 %v2880, %v3111
        %v3113 = vpop.f32.mrb[0].mxu0
        %v3114 = vpop.f32.mrb[0].mxu0
        %v3115 = vpop.f32.mrb[0].mxu0
        %3116 = vdwg.mxu0
        %3117 = vmatprep.subr.bf16.mxu0 0
        %3118 = vmatpush1.bf16.msra.mxu0 %v2341
        %3119 = vmatprep.subr.bf16.mxu0 0
        %3120 = vmatpush1.bf16.msra.mxu0 %v2342
        %3121 = vmatprep.subr.bf16.mxu0 0
        %3122 = vmatpush1.bf16.msra.mxu0 %v2343
        %3123 = vmatprep.subr.bf16.mxu0 0
        %3124 = vmatpush1.bf16.msra.mxu0 %v2344
        %3125 = vmatprep.subr.bf16.mxu0 0
        %3126 = vmatpush1.bf16.msra.mxu0 %v2345
        %3127 = vmatprep.subr.bf16.mxu0 0
        %3128 = vmatpush1.bf16.msra.mxu0 %v2346
        %3129 = vmatprep.subr.bf16.mxu0 0
        %3130 = vmatpush1.bf16.msra.mxu0 %v2347
        %3131 = vmatprep.subr.bf16.mxu0 0
        %3132 = vmatpush1.bf16.msra.mxu0 %v2348
        %3133 = vmatprep.subr.bf16.mxu0 0
        %3134 = vmatpush1.bf16.msra.mxu0 %v2349
        %3135 = vmatprep.subr.bf16.mxu0 0
        %3136 = vmatpush1.bf16.msra.mxu0 %v2350
        %3137 = vmatprep.subr.bf16.mxu0 0
        %3138 = vmatpush1.bf16.msra.mxu0 %v2351
        %3139 = vmatprep.subr.bf16.mxu0 0
        %3140 = vmatpush1.bf16.msra.mxu0 %v2352
        %3141 = vmatprep.subr.bf16.mxu0 0
        %3142 = vmatpush1.bf16.msra.mxu0 %v2353
        %3143 = vmatprep.subr.bf16.mxu0 0
        %3144 = vmatpush1.bf16.msra.mxu0 %v2354
        %3145 = vmatprep.subr.bf16.mxu0 0
        %3146 = vmatpush1.bf16.msra.mxu0 %v2355
        %3147 = vmatprep.subr.bf16.mxu0 0
        %3148 = vmatpush1.bf16.msra.mxu0 %v2356
        %3149 = vmatprep.mubr.bf16.mxu0 %v1644
        %3150 = vmatmul.mubr.bf16.gmra.mrb[0].mxu0 %v1643
        %v3151 = vpop.f32.mrb[0].mxu0
        %v3152 = vadd.f32 %v2920, %v3151
        %v3153 = vpop.f32.mrb[0].mxu0
        %v3154 = vpop.f32.mrb[0].mxu0
        %v3155 = vadd.f32 %v2923, %v3154
        %v3156 = vpop.f32.mrb[0].mxu0
        %3157 = vmatprep.mubr.bf16.mxu0 %v1652
        %3158 = vmatmul.mubr.bf16.gmra.mrb[0].mxu0 %v1651
        %v3159 = vpop.f32.mrb[0].mxu0
        %v3160 = vadd.f32 %v2928, %v3159
        %v3161 = vpop.f32.mrb[0].mxu0
        %v3162 = vpop.f32.mrb[0].mxu0
        %v3163 = vadd.f32 %v2931, %v3162
        %v3164 = vpop.f32.mrb[0].mxu0
        %3165 = vmatprep.mubr.bf16.mxu0 %v1660
        %3166 = vmatmul.mubr.bf16.gmra.mrb[0].mxu0 %v1659
        %v3167 = vpop.f32.mrb[0].mxu0
        %v3168 = vadd.f32 %v2936, %v3167
        %v3169 = vpop.f32.mrb[0].mxu0
        %v3170 = vpop.f32.mrb[0].mxu0
        %v3171 = vadd.f32 %v2939, %v3170
        %v3172 = vpop.f32.mrb[0].mxu0
        %3173 = vmatprep.mubr.bf16.mxu0 %v1668
        %3174 = vmatmul.mubr.bf16.gmra.mrb[0].mxu0 %v1667
        %v3175 = vpop.f32.mrb[0].mxu0
        %v3176 = vadd.f32 %v2944, %v3175
        %v3177 = vpop.f32.mrb[0].mxu0
        %v3178 = vpop.f32.mrb[0].mxu0
        %v3179 = vadd.f32 %v2947, %v3178
        %v3180 = vpop.f32.mrb[0].mxu0
        %3181 = vmatprep.mubr.bf16.mxu0 %v1676
        %3182 = vmatmul.mubr.bf16.gmra.mrb[0].mxu0 %v1675
        %v3183 = vpop.f32.mrb[0].mxu0
        %v3184 = vadd.f32 %v2952, %v3183
        %v3185 = vpop.f32.mrb[0].mxu0
        %v3186 = vpop.f32.mrb[0].mxu0
        %v3187 = vadd.f32 %v2955, %v3186
        %v3188 = vpop.f32.mrb[0].mxu0
        %3189 = vmatprep.mubr.bf16.mxu0 %v1684
        %3190 = vmatmul.mubr.bf16.gmra.mrb[0].mxu0 %v1683
        %v3191 = vpop.f32.mrb[0].mxu0
        %v3192 = vadd.f32 %v2960, %v3191
        %v3193 = vpop.f32.mrb[0].mxu0
        %v3194 = vpop.f32.mrb[0].mxu0
        %v3195 = vadd.f32 %v2963, %v3194
        %v3196 = vpop.f32.mrb[0].mxu0
        %3197 = vmatprep.mubr.bf16.mxu0 %v1692
        %3198 = vmatmul.mubr.bf16.gmra.mrb[0].mxu0 %v1691
        %v3199 = vpop.f32.mrb[0].mxu0
        %v3200 = vadd.f32 %v2968, %v3199
        %v3201 = vpop.f32.mrb[0].mxu0
        %v3202 = vpop.f32.mrb[0].mxu0
        %v3203 = vadd.f32 %v2971, %v3202
        %v3204 = vpop.f32.mrb[0].mxu0
        %3205 = vmatprep.mubr.bf16.mxu0 %v1700
        %3206 = vmatmul.mubr.bf16.gmra.mrb[0].mxu0 %v1699
        %v3207 = vpop.f32.mrb[0].mxu0
        %v3208 = vadd.f32 %v2976, %v3207
        %v3209 = vpop.f32.mrb[0].mxu0
        %v3210 = vpop.f32.mrb[0].mxu0
        %v3211 = vadd.f32 %v2979, %v3210
        %v3212 = vpop.f32.mrb[0].mxu0
        %3213 = vmatprep.mubr.bf16.mxu0 %v1708
        %3214 = vmatmul.mubr.bf16.gmra.mrb[0].mxu0 %v1707
        %v3215 = vpop.f32.mrb[0].mxu0
        %v3216 = vadd.f32 %v2984, %v3215
        %v3217 = vpop.f32.mrb[0].mxu0
        %v3218 = vpop.f32.mrb[0].mxu0
        %v3219 = vadd.f32 %v2987, %v3218
        %v3220 = vpop.f32.mrb[0].mxu0
        %3221 = vmatprep.mubr.bf16.mxu0 %v1716
        %3222 = vmatmul.mubr.bf16.gmra.mrb[0].mxu0 %v1715
        %v3223 = vpop.f32.mrb[0].mxu0
        %v3224 = vadd.f32 %v2992, %v3223
        %v3225 = vpop.f32.mrb[0].mxu0
        %v3226 = vpop.f32.mrb[0].mxu0
        %v3227 = vadd.f32 %v2995, %v3226
        %v3228 = vpop.f32.mrb[0].mxu0
        %3229 = vmatprep.mubr.bf16.mxu0 %v1724
        %3230 = vmatmul.mubr.bf16.gmra.mrb[0].mxu0 %v1723
        %v3231 = vpop.f32.mrb[0].mxu0
        %v3232 = vadd.f32 %v3000, %v3231
        %v3233 = vpop.f32.mrb[0].mxu0
        %v3234 = vpop.f32.mrb[0].mxu0
        %v3235 = vadd.f32 %v3003, %v3234
        %v3236 = vpop.f32.mrb[0].mxu0
        %3237 = vmatprep.mubr.bf16.mxu0 %v1732
        %3238 = vmatmul.mubr.bf16.gmra.mrb[0].mxu0 %v1731
        %v3239 = vpop.f32.mrb[0].mxu0
        %v3240 = vadd.f32 %v3008, %v3239
        %v3241 = vpop.f32.mrb[0].mxu0
        %v3242 = vpop.f32.mrb[0].mxu0
        %v3243 = vadd.f32 %v3011, %v3242
        %v3244 = vpop.f32.mrb[0].mxu0
        %3245 = vmatprep.mubr.bf16.mxu0 %v1740
        %3246 = vmatmul.mubr.bf16.gmra.mrb[0].mxu0 %v1739
        %v3247 = vpop.f32.mrb[0].mxu0
        %v3248 = vadd.f32 %v3016, %v3247
        %v3249 = vpop.f32.mrb[0].mxu0
        %v3250 = vpop.f32.mrb[0].mxu0
        %v3251 = vadd.f32 %v3019, %v3250
        %v3252 = vpop.f32.mrb[0].mxu0
        %3253 = vmatprep.mubr.bf16.mxu0 %v1748
        %3254 = vmatmul.mubr.bf16.gmra.mrb[0].mxu0 %v1747
        %v3255 = vpop.f32.mrb[0].mxu0
        %v3256 = vadd.f32 %v3024, %v3255
        %v3257 = vpop.f32.mrb[0].mxu0
        %v3258 = vpop.f32.mrb[0].mxu0
        %v3259 = vadd.f32 %v3027, %v3258
        %v3260 = vpop.f32.mrb[0].mxu0
        %3261 = vmatprep.mubr.bf16.mxu0 %v1756
        %3262 = vmatmul.mubr.bf16.gmra.mrb[0].mxu0 %v1755
        %v3263 = vpop.f32.mrb[0].mxu0
        %v3264 = vadd.f32 %v3032, %v3263
        %v3265 = vpop.f32.mrb[0].mxu0
        %v3266 = vpop.f32.mrb[0].mxu0
        %v3267 = vadd.f32 %v3035, %v3266
        %v3268 = vpop.f32.mrb[0].mxu0
        %3269 = vmatprep.mubr.bf16.mxu0 %v1764
        %3270 = vmatmul.mubr.bf16.gmra.mrb[0].mxu0 %v1763
        %v3271 = vpop.f32.mrb[0].mxu0
        %v3272 = vadd.f32 %v3040, %v3271
        %v3273 = vpop.f32.mrb[0].mxu0
        %v3274 = vpop.f32.mrb[0].mxu0
        %v3275 = vadd.f32 %v3043, %v3274
        %v3276 = vpop.f32.mrb[0].mxu0
        %3277 = vmatprep.mubr.bf16.mxu0 %v1772
        %3278 = vmatmul.mubr.bf16.gmra.mrb[0].mxu0 %v1771
        %v3279 = vpop.f32.mrb[0].mxu0
        %v3280 = vadd.f32 %v3048, %v3279
        %v3281 = vpop.f32.mrb[0].mxu0
        %v3282 = vpop.f32.mrb[0].mxu0
        %v3283 = vadd.f32 %v3051, %v3282
        %v3284 = vpop.f32.mrb[0].mxu0
        %3285 = vmatprep.mubr.bf16.mxu0 %v1780
        %3286 = vmatmul.mubr.bf16.gmra.mrb[0].mxu0 %v1779
        %v3287 = vpop.f32.mrb[0].mxu0
        %v3288 = vadd.f32 %v3056, %v3287
        %v3289 = vpop.f32.mrb[0].mxu0
        %v3290 = vpop.f32.mrb[0].mxu0
        %v3291 = vadd.f32 %v3059, %v3290
        %v3292 = vpop.f32.mrb[0].mxu0
        %3293 = vmatprep.mubr.bf16.mxu0 %v1788
        %3294 = vmatmul.mubr.bf16.gmra.mrb[0].mxu0 %v1787
        %v3295 = vpop.f32.mrb[0].mxu0
        %v3296 = vadd.f32 %v3064, %v3295
        %v3297 = vpop.f32.mrb[0].mxu0
        %v3298 = vpop.f32.mrb[0].mxu0
        %v3299 = vadd.f32 %v3067, %v3298
        %v3300 = vpop.f32.mrb[0].mxu0
        %3301 = vmatprep.mubr.bf16.mxu0 %v1796
        %3302 = vmatmul.mubr.bf16.gmra.mrb[0].mxu0 %v1795
        %v3303 = vpop.f32.mrb[0].mxu0
        %v3304 = vadd.f32 %v3072, %v3303
        %v3305 = vpop.f32.mrb[0].mxu0
        %v3306 = vpop.f32.mrb[0].mxu0
        %v3307 = vadd.f32 %v3075, %v3306
        %v3308 = vpop.f32.mrb[0].mxu0
        %3309 = vmatprep.mubr.bf16.mxu0 %v1804
        %3310 = vmatmul.mubr.bf16.gmra.mrb[0].mxu0 %v1803
        %v3311 = vpop.f32.mrb[0].mxu0
        %v3312 = vadd.f32 %v3080, %v3311
        %v3313 = vpop.f32.mrb[0].mxu0
        %v3314 = vpop.f32.mrb[0].mxu0
        %v3315 = vadd.f32 %v3083, %v3314
        %v3316 = vpop.f32.mrb[0].mxu0
        %3317 = vmatprep.mubr.bf16.mxu0 %v1812
        %3318 = vmatmul.mubr.bf16.gmra.mrb[0].mxu0 %v1811
        %v3319 = vpop.f32.mrb[0].mxu0
        %v3320 = vadd.f32 %v3088, %v3319
        %v3321 = vpop.f32.mrb[0].mxu0
        %v3322 = vpop.f32.mrb[0].mxu0
        %v3323 = vadd.f32 %v3091, %v3322
        %v3324 = vpop.f32.mrb[0].mxu0
        %3325 = vmatprep.mubr.bf16.mxu0 %v1820
        %3326 = vmatmul.mubr.bf16.gmra.mrb[0].mxu0 %v1819
        %v3327 = vpop.f32.mrb[0].mxu0
        %v3328 = vadd.f32 %v3096, %v3327
        %v3329 = vpop.f32.mrb[0].mxu0
        %v3330 = vpop.f32.mrb[0].mxu0
        %v3331 = vadd.f32 %v3099, %v3330
        %v3332 = vpop.f32.mrb[0].mxu0
        %3333 = vmatprep.mubr.bf16.mxu0 %v1828
        %3334 = vmatmul.mubr.bf16.gmra.mrb[0].mxu0 %v1827
        %v3335 = vpop.f32.mrb[0].mxu0
        %v3336 = vadd.f32 %v3104, %v3335
        %v3337 = vpop.f32.mrb[0].mxu0
        %v3338 = vpop.f32.mrb[0].mxu0
        %v3339 = vadd.f32 %v3107, %v3338
        %v3340 = vpop.f32.mrb[0].mxu0
        %3341 = vmatprep.mubr.bf16.mxu0 %v1836
        %3342 = vmatmul.mubr.bf16.gmra.mrb[0].mxu0 %v1835
        %v3343 = vpop.f32.mrb[0].mxu0
        %v3344 = vadd.f32 %v3112, %v3343
        %v3345 = vpop.f32.mrb[0].mxu0
        %v3346 = vpop.f32.mrb[0].mxu0
        %v3347 = vpop.f32.mrb[0].mxu0
        %3348 = vdwg.mxu0
        %v3349 = vadd.f32 %v676, %v3152
        %v3350 = vadd.f32 %v677, %v3155
        %v3351 = vadd.f32 %v678, %v3160
        %v3352 = vadd.f32 %v679, %v3163
        %v3353 = vadd.f32 %v680, %v3168
        %v3354 = vadd.f32 %v681, %v3171
        %v3355 = vadd.f32 %v682, %v3176
        %v3356 = vadd.f32 %v683, %v3179
        %v3357 = vadd.f32 %v684, %v3184
        %v3358 = vadd.f32 %v685, %v3187
        %v3359 = vadd.f32 %v686, %v3192
        %v3360 = vadd.f32 %v687, %v3195
        %v3361 = vadd.f32 %v688, %v3200
        %v3362 = vadd.f32 %v689, %v3203
        %v3363 = vadd.f32 %v690, %v3208
        %v3364 = vadd.f32 %v691, %v3211
        %v3365 = vadd.f32 %v692, %v3216
        %v3366 = vadd.f32 %v693, %v3219
        %v3367 = vadd.f32 %v694, %v3224
        %v3368 = vadd.f32 %v695, %v3227
        %v3369 = vadd.f32 %v696, %v3232
        %v3370 = vadd.f32 %v697, %v3235
        %v3371 = vadd.f32 %v698, %v3240
        %v3372 = vadd.f32 %v699, %v3243
        %v3373 = vadd.f32 %v700, %v3248
        %v3374 = vadd.f32 %v701, %v3251
        %v3375 = vadd.f32 %v702, %v3256
        %v3376 = vadd.f32 %v703, %v3259
        %v3377 = vadd.f32 %v704, %v3264
        %v3378 = vadd.f32 %v705, %v3267
        %v3379 = vadd.f32 %v706, %v3272
        %v3380 = vadd.f32 %v707, %v3275
        %v3381 = vadd.f32 %v708, %v3280
        %v3382 = vadd.f32 %v709, %v3283
        %v3383 = vadd.f32 %v710, %v3288
        %v3384 = vadd.f32 %v711, %v3291
        %v3385 = vadd.f32 %v712, %v3296
        %v3386 = vadd.f32 %v713, %v3299
        %v3387 = vadd.f32 %v714, %v3304
        %v3388 = vadd.f32 %v715, %v3307
        %v3389 = vadd.f32 %v716, %v3312
        %v3390 = vadd.f32 %v717, %v3315
        %v3391 = vadd.f32 %v718, %v3320
        %v3392 = vadd.f32 %v719, %v3323
        %v3393 = vadd.f32 %v720, %v3328
        %v3394 = vadd.f32 %v721, %v3331
        %v3395 = vadd.f32 %v722, %v3336
        %v3396 = vadd.f32 %v723, %v3339
        %v3397 = vadd.f32 %v724, %v3344
        %3398 = vst [vmem:[#allocation2] sm:$0xff] %v3349
        %3399 = vst [vmem:[#allocation2 + $0x8] sm:$0xff] %v3350
        %3400 = vst [vmem:[#allocation2 + $0x10] sm:$0xff] %v3351
        %3401 = vst [vmem:[#allocation2 + $0x18] sm:$0xff] %v3352
        %3402 = vst [vmem:[#allocation2 + $0x20] sm:$0xff] %v3353
        %3403 = vst [vmem:[#allocation2 + $0x28] sm:$0xff] %v3354
        %3404 = vst [vmem:[#allocation2 + $0x30] sm:$0xff] %v3355
        %3405 = vst [vmem:[#allocation2 + $0x38] sm:$0xff] %v3356
        %3406 = vst [vmem:[#allocation2 + $0x40] sm:$0xff] %v3357
        %3407 = vst [vmem:[#allocation2 + $0x48] sm:$0xff] %v3358
        %3408 = vst [vmem:[#allocation2 + $0x50] sm:$0xff] %v3359
        %3409 = vst [vmem:[#allocation2 + $0x58] sm:$0xff] %v3360
        %3410 = vst [vmem:[#allocation2 + $0x60] sm:$0xff] %v3361
        %3411 = vst [vmem:[#allocation2 + $0x68] sm:$0xff] %v3362
        %3412 = vst [vmem:[#allocation2 + $0x70] sm:$0xff] %v3363
        %3413 = vst [vmem:[#allocation2 + $0x78] sm:$0xff] %v3364
        %3414 = vst [vmem:[#allocation2 + $0x80] sm:$0xff] %v3365
        %3415 = vst [vmem:[#allocation2 + $0x88] sm:$0xff] %v3366
        %3416 = vst [vmem:[#allocation2 + $0x90] sm:$0xff] %v3367
        %3417 = vst [vmem:[#allocation2 + $0x98] sm:$0xff] %v3368
        %3418 = vst [vmem:[#allocation2 + $0xa0] sm:$0xff] %v3369
        %3419 = vst [vmem:[#allocation2 + $0xa8] sm:$0xff] %v3370
        %3420 = vst [vmem:[#allocation2 + $0xb0] sm:$0xff] %v3371
        %3421 = vst [vmem:[#allocation2 + $0xb8] sm:$0xff] %v3372
        %3422 = vst [vmem:[#allocation2 + $0xc0] sm:$0xff] %v3373
        %3423 = vst [vmem:[#allocation2 + $0xc8] sm:$0xff] %v3374
        %3424 = vst [vmem:[#allocation2 + $0xd0] sm:$0xff] %v3375
        %3425 = vst [vmem:[#allocation2 + $0xd8] sm:$0xff] %v3376
        %3426 = vst [vmem:[#allocation2 + $0xe0] sm:$0xff] %v3377
        %3427 = vst [vmem:[#allocation2 + $0xe8] sm:$0xff] %v3378
        %3428 = vst [vmem:[#allocation2 + $0xf0] sm:$0xff] %v3379
        %3429 = vst [vmem:[#allocation2 + $0xf8] sm:$0xff] %v3380
        %3430 = vst [vmem:[#allocation2 + $0x100] sm:$0xff] %v3381
        %3431 = vst [vmem:[#allocation2 + $0x108] sm:$0xff] %v3382
        %3432 = vst [vmem:[#allocation2 + $0x110] sm:$0xff] %v3383
        %3433 = vst [vmem:[#allocation2 + $0x118] sm:$0xff] %v3384
        %3434 = vst [vmem:[#allocation2 + $0x120] sm:$0xff] %v3385
        %3435 = vst [vmem:[#allocation2 + $0x128] sm:$0xff] %v3386
        %3436 = vst [vmem:[#allocation2 + $0x130] sm:$0xff] %v3387
        %3437 = vst [vmem:[#allocation2 + $0x138] sm:$0xff] %v3388
        %3438 = vst [vmem:[#allocation2 + $0x140] sm:$0xff] %v3389
        %3439 = vst [vmem:[#allocation2 + $0x148] sm:$0xff] %v3390
        %3440 = vst [vmem:[#allocation2 + $0x150] sm:$0xff] %v3391
        %3441 = vst [vmem:[#allocation2 + $0x158] sm:$0xff] %v3392
        %3442 = vst [vmem:[#allocation2 + $0x160] sm:$0xff] %v3393
        %3443 = vst [vmem:[#allocation2 + $0x168] sm:$0xff] %v3394
        %3444 = vst [vmem:[#allocation2 + $0x170] sm:$0xff] %v3395
        %3445 = vst [vmem:[#allocation2 + $0x178] sm:$0xff] %v3396
        %3446 = vst [vmem:[#allocation2 + $0x180] sm:$0xff] %v3397
        %p3447 = scmp.eq.s32.totalorder %s20, 1
        // Predicated region
        $region56: #{gabor_cnn7_forward.11} parent=46 // pred_check
          %p3448 = pneg %p3447
        $region57: #{gabor_cnn7_forward.11} parent=46 // pred_check_branch
          %3450 = sbr.rel (%p3448) target = $region59
        $region58: #{gabor_cnn7_forward.11} parent=46 // pred_region
          %v3451 = vld [vmem:[#allocation2] sm:$0xff]
          %v3452 = vld [vmem:[#allocation2 + $0x8] sm:$0xff]
          %v3453 = vld [vmem:[#allocation2 + $0x10] sm:$0xff]
          %v3454 = vld [vmem:[#allocation2 + $0x18] sm:$0xff]
          %v3455 = vld [vmem:[#allocation2 + $0x20] sm:$0xff]
          %v3456 = vld [vmem:[#allocation2 + $0x28] sm:$0xff]
          %v3457 = vld [vmem:[#allocation2 + $0x30] sm:$0xff]
          %v3458 = vld [vmem:[#allocation2 + $0x38] sm:$0xff]
          %v3459 = vld [vmem:[#allocation2 + $0x40] sm:$0xff]
          %v3460 = vld [vmem:[#allocation2 + $0x48] sm:$0xff]
          %v3461 = vld [vmem:[#allocation2 + $0x50] sm:$0xff]
          %v3462 = vld [vmem:[#allocation2 + $0x58] sm:$0xff]
          %v3463 = vld [vmem:[#allocation2 + $0x60] sm:$0xff]
          %v3464 = vld [vmem:[#allocation2 + $0x68] sm:$0xff]
          %v3465 = vld [vmem:[#allocation2 + $0x70] sm:$0xff]
          %v3466 = vld [vmem:[#allocation2 + $0x78] sm:$0xff]
          %v3467 = vld [vmem:[#allocation2 + $0x80] sm:$0xff]
          %v3468 = vld [vmem:[#allocation2 + $0x88] sm:$0xff]
          %v3469 = vld [vmem:[#allocation2 + $0x90] sm:$0xff]
          %v3470 = vld [vmem:[#allocation2 + $0x98] sm:$0xff]
          %v3471 = vld [vmem:[#allocation2 + $0xa0] sm:$0xff]
          %v3472 = vld [vmem:[#allocation2 + $0xa8] sm:$0xff]
          %v3473 = vld [vmem:[#allocation2 + $0xb0] sm:$0xff]
          %v3474 = vld [vmem:[#allocation2 + $0xb8] sm:$0xff]
          %v3475 = vld [vmem:[#allocation2 + $0xc0] sm:$0xff]
          %v3476 = vld [vmem:[#allocation2 + $0xc8] sm:$0xff]
          %v3477 = vld [vmem:[#allocation2 + $0xd0] sm:$0xff]
          %v3478 = vld [vmem:[#allocation2 + $0xd8] sm:$0xff]
          %v3479 = vld [vmem:[#allocation2 + $0xe0] sm:$0xff]
          %v3480 = vld [vmem:[#allocation2 + $0xe8] sm:$0xff]
          %v3481 = vld [vmem:[#allocation2 + $0xf0] sm:$0xff]
          %v3482 = vld [vmem:[#allocation2 + $0xf8] sm:$0xff]
          %v3483 = vld [vmem:[#allocation2 + $0x100] sm:$0xff]
          %v3484 = vld [vmem:[#allocation2 + $0x108] sm:$0xff]
          %v3485 = vld [vmem:[#allocation2 + $0x110] sm:$0xff]
          %v3486 = vld [vmem:[#allocation2 + $0x118] sm:$0xff]
          %v3487 = vld [vmem:[#allocation2 + $0x120] sm:$0xff]
          %v3488 = vld [vmem:[#allocation2 + $0x128] sm:$0xff]
          %v3489 = vld [vmem:[#allocation2 + $0x130] sm:$0xff]
          %v3490 = vld [vmem:[#allocation2 + $0x138] sm:$0xff]
          %v3491 = vld [vmem:[#allocation2 + $0x140] sm:$0xff]
          %v3492 = vld [vmem:[#allocation2 + $0x148] sm:$0xff]
          %v3493 = vld [vmem:[#allocation2 + $0x150] sm:$0xff]
          %v3494 = vld [vmem:[#allocation2 + $0x158] sm:$0xff]
          %v3495 = vld [vmem:[#allocation2 + $0x160] sm:$0xff]
          %v3496 = vld [vmem:[#allocation2 + $0x168] sm:$0xff]
          %v3497 = vld [vmem:[#allocation2 + $0x170] sm:$0xff]
          %v3498 = vld [vmem:[#allocation2 + $0x178] sm:$0xff]
          %v3499 = vld [vmem:[#allocation2 + $0x180] sm:$0xff]
          %v3500 = vmax.f32 %v3451, 0.0
          %v3501 = vmax.f32 %v3452, 0.0
          %v3502 = vmax.f32 %v3453, 0.0
          %v3503 = vmax.f32 %v3454, 0.0
          %v3504 = vmax.f32 %v3455, 0.0
          %v3505 = vmax.f32 %v3456, 0.0
          %v3506 = vmax.f32 %v3457, 0.0
          %v3507 = vmax.f32 %v3458, 0.0
          %v3508 = vmax.f32 %v3459, 0.0
          %v3509 = vmax.f32 %v3460, 0.0
          %v3510 = vmax.f32 %v3461, 0.0
          %v3511 = vmax.f32 %v3462, 0.0
          %v3512 = vmax.f32 %v3463, 0.0
          %v3513 = vmax.f32 %v3464, 0.0
          %v3514 = vmax.f32 %v3465, 0.0
          %v3515 = vmax.f32 %v3466, 0.0
          %v3516 = vmax.f32 %v3467, 0.0
          %v3517 = vmax.f32 %v3468, 0.0
          %v3518 = vmax.f32 %v3469, 0.0
          %v3519 = vmax.f32 %v3470, 0.0
          %v3520 = vmax.f32 %v3471, 0.0
          %v3521 = vmax.f32 %v3472, 0.0
          %v3522 = vmax.f32 %v3473, 0.0
          %v3523 = vmax.f32 %v3474, 0.0
          %v3524 = vmax.f32 %v3475, 0.0
          %v3525 = vmax.f32 %v3476, 0.0
          %v3526 = vmax.f32 %v3477, 0.0
          %v3527 = vmax.f32 %v3478, 0.0
          %v3528 = vmax.f32 %v3479, 0.0
          %v3529 = vmax.f32 %v3480, 0.0
          %v3530 = vmax.f32 %v3481, 0.0
          %v3531 = vmax.f32 %v3482, 0.0
          %v3532 = vmax.f32 %v3483, 0.0
          %v3533 = vmax.f32 %v3484, 0.0
          %v3534 = vmax.f32 %v3485, 0.0
          %v3535 = vmax.f32 %v3486, 0.0
          %v3536 = vmax.f32 %v3487, 0.0
          %v3537 = vmax.f32 %v3488, 0.0
          %v3538 = vmax.f32 %v3489, 0.0
          %v3539 = vmax.f32 %v3490, 0.0
          %v3540 = vmax.f32 %v3491, 0.0
          %v3541 = vmax.f32 %v3492, 0.0
          %v3542 = vmax.f32 %v3493, 0.0
          %v3543 = vmax.f32 %v3494, 0.0
          %v3544 = vmax.f32 %v3495, 0.0
          %v3545 = vmax.f32 %v3496, 0.0
          %v3546 = vmax.f32 %v3497, 0.0
          %v3547 = vmax.f32 %v3498, 0.0
          %v3548 = vmax.f32 %v3499, 0.0
          %v3549 = vpack.c.bf16 %v3501, %v3500
          %v3550 = vpack.c.bf16 %v3503, %v3502
          %v3551 = vpack.c.bf16 %v3505, %v3504
          %v3552 = vpack.c.bf16 %v3507, %v3506
          %v3553 = vpack.c.bf16 %v3509, %v3508
          %v3554 = vpack.c.bf16 %v3511, %v3510
          %v3555 = vpack.c.bf16 %v3513, %v3512
          %v3556 = vpack.c.bf16 %v3515, %v3514
          %v3557 = vpack.c.bf16 %v3517, %v3516
          %v3558 = vpack.c.bf16 %v3519, %v3518
          %v3559 = vpack.c.bf16 %v3521, %v3520
          %v3560 = vpack.c.bf16 %v3523, %v3522
          %v3561 = vpack.c.bf16 %v3525, %v3524
          %v3562 = vpack.c.bf16 %v3527, %v3526
          %v3563 = vpack.c.bf16 %v3529, %v3528
          %v3564 = vpack.c.bf16 %v3531, %v3530
          %v3565 = vpack.c.bf16 %v3533, %v3532
          %v3566 = vpack.c.bf16 %v3535, %v3534
          %v3567 = vpack.c.bf16 %v3537, %v3536
          %v3568 = vpack.c.bf16 %v3539, %v3538
          %v3569 = vpack.c.bf16 %v3541, %v3540
          %v3570 = vpack.c.bf16 %v3543, %v3542
          %v3571 = vpack.c.bf16 %v3545, %v3544
          %v3572 = vpack.c.bf16 %v3547, %v3546
          %v3573 = vpack.c.bf16 %v3548, %v3548
          %v3599 = vunpack.c.l.b16 %v3549
          %v3600 = vunpack.c.h.b16 %v3549
          %v3601 = vunpack.c.l.b16 %v3550
          %v3602 = vunpack.c.h.b16 %v3550
          %v3603 = vunpack.c.l.b16 %v3551
          %v3604 = vunpack.c.h.b16 %v3551
          %v3605 = vunpack.c.l.b16 %v3552
          %v3606 = vunpack.c.h.b16 %v3552
          %v3607 = vunpack.c.l.b16 %v3553
          %v3608 = vunpack.c.h.b16 %v3553
          %v3609 = vunpack.c.l.b16 %v3554
          %v3610 = vunpack.c.h.b16 %v3554
          %v3611 = vunpack.c.l.b16 %v3555
          %v3612 = vunpack.c.h.b16 %v3555
          %v3613 = vunpack.c.l.b16 %v3556
          %v3614 = vunpack.c.h.b16 %v3556
          %v3615 = vunpack.c.l.b16 %v3557
          %v3616 = vunpack.c.h.b16 %v3557
          %v3617 = vunpack.c.l.b16 %v3558
          %v3618 = vunpack.c.h.b16 %v3558
          %v3619 = vunpack.c.l.b16 %v3559
          %v3620 = vunpack.c.h.b16 %v3559
          %v3621 = vunpack.c.l.b16 %v3560
          %v3622 = vunpack.c.h.b16 %v3560
          %v3623 = vunpack.c.l.b16 %v3561
          %v3624 = vunpack.c.h.b16 %v3561
          %v3625 = vunpack.c.l.b16 %v3562
          %v3626 = vunpack.c.h.b16 %v3562
          %v3627 = vunpack.c.l.b16 %v3563
          %v3628 = vunpack.c.h.b16 %v3563
          %v3629 = vunpack.c.l.b16 %v3564
          %v3630 = vunpack.c.h.b16 %v3564
          %v3631 = vunpack.c.l.b16 %v3565
          %v3632 = vunpack.c.h.b16 %v3565
          %v3633 = vunpack.c.l.b16 %v3566
          %v3634 = vunpack.c.h.b16 %v3566
          %v3635 = vunpack.c.l.b16 %v3567
          %v3636 = vunpack.c.h.b16 %v3567
          %v3637 = vunpack.c.l.b16 %v3568
          %v3638 = vunpack.c.h.b16 %v3568
          %v3639 = vunpack.c.l.b16 %v3569
          %v3640 = vunpack.c.h.b16 %v3569
          %v3641 = vunpack.c.l.b16 %v3570
          %v3642 = vunpack.c.h.b16 %v3570
          %v3643 = vunpack.c.l.b16 %v3571
          %v3644 = vunpack.c.h.b16 %v3571
          %v3645 = vunpack.c.l.b16 %v3572
          %v3646 = vunpack.c.h.b16 %v3572
          %v3647 = vunpack.c.l.b16 %v3573
          %v3648 = vpack.c.b16 %v3599, %v3599
          %v3649 = vpack.c.b16 %v3600, %v3600
          %v3650 = vpack.c.b16 %v3601, %v3601
          %v3651 = vpack.c.b16 %v3602, %v3602
          %v3652 = vpack.c.b16 %v3603, %v3603
          %v3653 = vpack.c.b16 %v3604, %v3604
          %v3654 = vpack.c.b16 %v3605, %v3605
          %v3655 = vpack.c.b16 %v3606, %v3606
          %v3656 = vpack.c.b16 %v3607, %v3607
          %v3657 = vpack.c.b16 %v3608, %v3608
          %v3658 = vpack.c.b16 %v3609, %v3609
          %v3659 = vpack.c.b16 %v3610, %v3610
          %v3660 = vpack.c.b16 %v3611, %v3611
          %v3661 = vpack.c.b16 %v3612, %v3612
          %v3662 = vpack.c.b16 %v3613, %v3613
          %v3663 = vpack.c.b16 %v3614, %v3614
          %v3664 = vpack.c.b16 %v3615, %v3615
          %v3665 = vpack.c.b16 %v3616, %v3616
          %v3666 = vpack.c.b16 %v3617, %v3617
          %v3667 = vpack.c.b16 %v3618, %v3618
          %v3668 = vpack.c.b16 %v3619, %v3619
          %v3669 = vpack.c.b16 %v3620, %v3620
          %v3670 = vpack.c.b16 %v3621, %v3621
          %v3671 = vpack.c.b16 %v3622, %v3622
          %v3672 = vpack.c.b16 %v3623, %v3623
          %v3673 = vpack.c.b16 %v3624, %v3624
          %v3674 = vpack.c.b16 %v3625, %v3625
          %v3675 = vpack.c.b16 %v3626, %v3626
          %v3676 = vpack.c.b16 %v3627, %v3627
          %v3677 = vpack.c.b16 %v3628, %v3628
          %v3678 = vpack.c.b16 %v3629, %v3629
          %v3679 = vpack.c.b16 %v3630, %v3630
          %v3680 = vpack.c.b16 %v3631, %v3631
          %v3681 = vpack.c.b16 %v3632, %v3632
          %v3682 = vpack.c.b16 %v3633, %v3633
          %v3683 = vpack.c.b16 %v3634, %v3634
          %v3684 = vpack.c.b16 %v3635, %v3635
          %v3685 = vpack.c.b16 %v3636, %v3636
          %v3686 = vpack.c.b16 %v3637, %v3637
          %v3687 = vpack.c.b16 %v3638, %v3638
          %v3688 = vpack.c.b16 %v3639, %v3639
          %v3689 = vpack.c.b16 %v3640, %v3640
          %v3690 = vpack.c.b16 %v3641, %v3641
          %v3691 = vpack.c.b16 %v3642, %v3642
          %v3692 = vpack.c.b16 %v3643, %v3643
          %v3693 = vpack.c.b16 %v3644, %v3644
          %v3694 = vpack.c.b16 %v3645, %v3645
          %v3695 = vpack.c.b16 %v3646, %v3646
          %v3696 = vpack.c.b16 %v3647, %v3647
          %3746 = vst [vmem:[%s620] sm:$0xf] %v3648
          %3747 = vst [vmem:[%s620 + $0x4] sm:$0xf] %v3649
          %3748 = vst [vmem:[%s620 + $0x8] sm:$0xf] %v3650
          %3749 = vst [vmem:[%s620 + $0xc] sm:$0xf] %v3651
          %3750 = vst [vmem:[%s620 + $0x10] sm:$0xf] %v3652
          %3751 = vst [vmem:[%s620 + $0x14] sm:$0xf] %v3653
          %3752 = vst [vmem:[%s620 + $0x18] sm:$0xf] %v3654
          %3753 = vst [vmem:[%s620 + $0x1c] sm:$0xf] %v3655
          %3754 = vst [vmem:[%s620 + $0x20] sm:$0xf] %v3656
          %3755 = vst [vmem:[%s620 + $0x24] sm:$0xf] %v3657
          %3756 = vst [vmem:[%s620 + $0x28] sm:$0xf] %v3658
          %3757 = vst [vmem:[%s620 + $0x2c] sm:$0xf] %v3659
          %3758 = vst [vmem:[%s620 + $0x30] sm:$0xf] %v3660
          %3759 = vst [vmem:[%s620 + $0x34] sm:$0xf] %v3661
          %3760 = vst [vmem:[%s620 + $0x38] sm:$0xf] %v3662
          %3761 = vst [vmem:[%s620 + $0x3c] sm:$0xf] %v3663
          %3762 = vst [vmem:[%s620 + $0x40] sm:$0xf] %v3664
          %3763 = vst [vmem:[%s620 + $0x44] sm:$0xf] %v3665
          %3764 = vst [vmem:[%s620 + $0x48] sm:$0xf] %v3666
          %3765 = vst [vmem:[%s620 + $0x4c] sm:$0xf] %v3667
          %3766 = vst [vmem:[%s620 + $0x50] sm:$0xf] %v3668
          %3767 = vst [vmem:[%s620 + $0x54] sm:$0xf] %v3669
          %3768 = vst [vmem:[%s620 + $0x58] sm:$0xf] %v3670
          %3769 = vst [vmem:[%s620 + $0x5c] sm:$0xf] %v3671
          %3770 = vst [vmem:[%s620 + $0x60] sm:$0xf] %v3672
          %3771 = vst [vmem:[%s620 + $0x64] sm:$0xf] %v3673
          %3772 = vst [vmem:[%s620 + $0x68] sm:$0xf] %v3674
          %3773 = vst [vmem:[%s620 + $0x6c] sm:$0xf] %v3675
          %3774 = vst [vmem:[%s620 + $0x70] sm:$0xf] %v3676
          %3775 = vst [vmem:[%s620 + $0x74] sm:$0xf] %v3677
          %3776 = vst [vmem:[%s620 + $0x78] sm:$0xf] %v3678
          %3777 = vst [vmem:[%s620 + $0x7c] sm:$0xf] %v3679
          %3778 = vst [vmem:[%s620 + $0x80] sm:$0xf] %v3680
          %3779 = vst [vmem:[%s620 + $0x84] sm:$0xf] %v3681
          %3780 = vst [vmem:[%s620 + $0x88] sm:$0xf] %v3682
          %3781 = vst [vmem:[%s620 + $0x8c] sm:$0xf] %v3683
          %3782 = vst [vmem:[%s620 + $0x90] sm:$0xf] %v3684
          %3783 = vst [vmem:[%s620 + $0x94] sm:$0xf] %v3685
          %3784 = vst [vmem:[%s620 + $0x98] sm:$0xf] %v3686
          %3785 = vst [vmem:[%s620 + $0x9c] sm:$0xf] %v3687
          %3786 = vst [vmem:[%s620 + $0xa0] sm:$0xf] %v3688
          %3787 = vst [vmem:[%s620 + $0xa4] sm:$0xf] %v3689
          %3788 = vst [vmem:[%s620 + $0xa8] sm:$0xf] %v3690
          %3789 = vst [vmem:[%s620 + $0xac] sm:$0xf] %v3691
          %3790 = vst [vmem:[%s620 + $0xb0] sm:$0xf] %v3692
          %3791 = vst [vmem:[%s620 + $0xb4] sm:$0xf] %v3693
          %3792 = vst [vmem:[%s620 + $0xb8] sm:$0xf] %v3694
          %3793 = vst [vmem:[%s620 + $0xbc] sm:$0xf] %v3695
          %3794 = vst [vmem:[%s620 + $0xc0] sm:$0xf] %v3696
        $region59: #{gabor_cnn7_forward.11} parent=46 // pred_fallthru
          _
        %s3795 = smul.u32 49, %s18
        %p3796 = scmp.lt.s32.totalorder %s3795, 48
        %s3797 = scalar_select %p3796, %s3795, 48
        %p3798 = scmp.lt.s32.totalorder %s19, 0
        %s3799 = scalar_select %p3798, %s19, 0
        %s3800 = sadd.s32 %s3799, %s3797
        %s3801 = smul.addr %s3800, 4
        %s3802 = scalar_lea.vmem %s2, %s3801
        // Predicated region
        $region60: #{gabor_cnn7_forward.11} parent=46 // pred_check
          %p3803 = pneg %p108
        $region61: #{gabor_cnn7_forward.11} parent=46 // pred_check_branch
          %3805 = sbr.rel (%p3803) target = $region63
        $region62: #{gabor_cnn7_forward.11} parent=46 // pred_region
          %s3806 = smul.u32 49, %s18
        $region63: #{gabor_cnn7_forward.11} parent=46 // pred_fallthru
          _
        // Predicated region
        $region64: #{gabor_cnn7_forward.11} parent=46 // pred_check
          %p3807 = pneg %p108
        $region65: #{gabor_cnn7_forward.11} parent=46 // pred_check_branch
          %3809 = sbr.rel (%p3807) target = $region67
        $region66: #{gabor_cnn7_forward.11} parent=46 // pred_region
          %s3810 = smul.u32 49, %s18
          %p3811 = scmp.lt.s32.totalorder %s3810, 48
          %s3812 = scalar_select %p3811, %s3810, 48
          %p3813 = scmp.lt.s32.totalorder %s19, 0
          %s3814 = scalar_select %p3813, %s19, 0
          %s3815 = sadd.s32 %s3814, %s3812
          %s3816 = smul.addr %s3815, 4
          %s3817 = scalar_lea.vmem %s2, %s3816
        $region67: #{gabor_cnn7_forward.11} parent=46 // pred_fallthru
          _
      $region47: #{gabor_cnn7_forward.11} parent=5 // pred_fallthru
        _
      %p3818 = scmp.le.s32.totalorder 2, %s8
      // Predicated region
      $region68: #{gabor_cnn7_forward.11} parent=5 // pred_check
        %p3819 = pneg %p3818
      $region69: #{gabor_cnn7_forward.11} parent=5 // pred_check_branch
        %3821 = sbr.rel (%p3819) target = $region71
      $region70: #{gabor_cnn7_forward.11} parent=5 // pred_region
        %s3822 = ssub.s32 %s8, 2
      $region71: #{gabor_cnn7_forward.11} parent=5 // pred_fallthru
        _
    $region6: #{gabor_cnn7_forward.11} parent=1 // loop_footer
      %s12 = sadd.s32 1, %s8
    $region7: #{gabor_cnn7_forward.11} parent=1 // loop_footer_branch
      %7 = sbr.rel target = $region3
    $region8: #{gabor_cnn7_forward.11} parent=1 // loop_exit
      _

// kernel: gabor_cnn7_forward.14
$region0: #{gabor_cnn7_forward.14}
  #allocation0 [shape = 'u32[]', space=smem, size = 0x4, offset = 0x4, fixed_abs, tag = 'smem constant byte address 0x4 - core index']
  #allocation1 [shape = 'u32[144,128]{1,0:T(1,128)}', space=vmem, size = 0x12000, scoped, tag = 'internal scratch']
  %s0 = inlined_call_operand.vmem [shape: bf16[2,256], index: 0, kind: input, shape index: {}]
  %s1 = inlined_call_operand.vmem [shape: bf16[256,1024], index: 1, kind: input, shape index: {}]
  %s2 = inlined_call_operand.vmem [shape: f32[1,1024], index: 2, kind: input, shape index: {}]
  %s3 = inlined_call_operand.hbm [shape: f32[2,1024], index: 3, kind: output, shape index: {0}]
  %s4 = inlined_call_operand.vmem [shape: bf16[2,1024], index: 4, kind: output, shape index: {1}]
  %5 = xla_tuple %s3, %s4
  %s6 = sld [smem:[#allocation0]]
  $region91: #{gabor_cnn7_forward.14} parent=0
    _
  %s8 = ssub.s32 1, %s6
  %s9 = scalar_select 0, %s8, %s6
  $region1: #{gabor_cnn7_forward.14} parent=0
    #allocation2 [shape = 'u8[262144]{0}', space=vmem, size = 0x40000, scoped, tag = 'input window, operand 1']
    #allocation3 [shape = 'u8[4096]{0}', space=vmem, size = 0x1000, scoped, tag = 'output window, operand 0']
    #allocation4 [shape = 's32[2]{0}', space=sflag, size = 0x8, scoped, tag = 'scoped memory for gabor_cnn7_forward.14']
    %10 = vsyncpa [#allocation4], 0
    %s11 = scalar_lea.sflag [#allocation4], 1
    %12 = vsyncpa %s11, 0
    loop: start=0, step=1, limit=6
    $region2: #{gabor_cnn7_forward.14} parent=1 // loop_pre_header
      _
    $region3: #{gabor_cnn7_forward.14} parent=1 // loop_header
      %s14 = sphi 0, %s18
      %p15 = scmp.ge.s32.totalorder %s14, 6
      %s21 = sphi 0, %s33
      %s22 = sphi 0, %s29
      %s23 = sphi 0, %s21
      %s24 = sphi 0, %s22
      %s25 = sphi 0, %s23
      %s26 = sphi 0, %s24
      %s36 = sphi 0, %s38
      %s39 = sphi 0, %s36
      %s40 = sphi 0, %s39
      %s56 = sphi 0, %s40
      %s62 = sphi 0, %s64
      %s65 = sphi 0, %s62
      %s66 = sphi 0, %s65
      %s82 = sphi 0, %s66
      %s88 = sphi 0, %s90
      %s91 = sphi 0, %s88
      %s92 = sphi 0, %s91
      %s108 = sphi 0, %s92
      %s116 = sphi 0, %s118
      %s119 = sphi 0, %s116
      %s120 = sphi 0, %s119
      %s136 = sphi 0, %s120
      %s144 = sphi 0, %s146
      %s147 = sphi 0, %s144
      %s148 = sphi 0, %s147
      %s164 = sphi 0, %s148
    $region4: #{gabor_cnn7_forward.14} parent=1 // loop_header_branch
      %17 = sbr.rel (%p15) target = $region8
    $region5: #{gabor_cnn7_forward.14} parent=1 // loop_body
      %s19 = ssub.s32 %s14, 1
      %s20 = ssub.s32 %s14, 2
      %s27 = sadd.s32 1, %s22
      %p28 = scmp.ge.s32.totalorder %s27, 4
      %s29 = scalar_select %p28, 0, %s27
      %s30 = sadd.s32 1, %s21
      %s31 = scalar_select %p28, %s30, %s21
      %p32 = scmp.ge.s32.totalorder %s31, 1
      %s33 = scalar_select %p32, 0, %s31
      %s34 = ssub.s32 %s21, %s33
      %p35 = scmp.eq.s32.totalorder %s34, 0
      %s37 = sadd.s32 %s36, 1
      %s38 = scalar_select %p35, %s36, %s37
      %p41 = pneg %p35
      %p42 = scmp.eq.s32.totalorder %s14, 3
      %p43 = por %p41, %p42
      %p44 = scmp.ne.s32.totalorder %s36, %s39
      %p45 = scmp.eq.s32.totalorder %s14, 0
      %p46 = por %p44, %p45
      %p47 = scmp.ne.s32.totalorder %s36, %s39
      %p48 = scmp.eq.s32.totalorder %s19, 3
      %p49 = por %p47, %p48
      %p50 = scmp.ne.s32.totalorder %s39, %s40
      %p51 = scmp.eq.s32.totalorder %s19, 0
      %p52 = por %p50, %p51
      %p53 = scmp.ne.s32.totalorder %s39, %s40
      %p54 = scmp.eq.s32.totalorder %s20, 3
      %p55 = por %p53, %p54
      %p57 = scmp.ne.s32.totalorder %s40, %s56
      %p58 = scmp.eq.s32.totalorder %s20, 0
      %p59 = por %p57, %p58
      %s60 = ssub.s32 %s22, %s29
      %p61 = scmp.eq.s32.totalorder %s60, 0
      %s63 = sadd.s32 %s62, 1
      %s64 = scalar_select %p61, %s62, %s63
      %p67 = pneg %p61
      %p68 = scmp.eq.s32.totalorder %s14, 3
      %p69 = por %p67, %p68
      %p70 = scmp.ne.s32.totalorder %s62, %s65
      %p71 = scmp.eq.s32.totalorder %s14, 0
      %p72 = por %p70, %p71
      %p73 = scmp.ne.s32.totalorder %s62, %s65
      %p74 = scmp.eq.s32.totalorder %s19, 3
      %p75 = por %p73, %p74
      %p76 = scmp.ne.s32.totalorder %s65, %s66
      %p77 = scmp.eq.s32.totalorder %s19, 0
      %p78 = por %p76, %p77
      %p79 = scmp.ne.s32.totalorder %s65, %s66
      %p80 = scmp.eq.s32.totalorder %s20, 3
      %p81 = por %p79, %p80
      %p83 = scmp.ne.s32.totalorder %s66, %s82
      %p84 = scmp.eq.s32.totalorder %s20, 0
      %p85 = por %p83, %p84
      %s86 = ssub.s32 %s22, %s29
      %p87 = scmp.eq.s32.totalorder %s86, 0
      %s89 = sadd.s32 %s88, 1
      %s90 = scalar_select %p87, %s88, %s89
      %p93 = pneg %p87
      %p94 = scmp.eq.s32.totalorder %s14, 3
      %p95 = por %p93, %p94
      %p96 = scmp.ne.s32.totalorder %s88, %s91
      %p97 = scmp.eq.s32.totalorder %s14, 0
      %p98 = por %p96, %p97
      %p99 = scmp.ne.s32.totalorder %s88, %s91
      %p100 = scmp.eq.s32.totalorder %s19, 3
      %p101 = por %p99, %p100
      %p102 = scmp.ne.s32.totalorder %s91, %s92
      %p103 = scmp.eq.s32.totalorder %s19, 0
      %p104 = por %p102, %p103
      %p105 = scmp.ne.s32.totalorder %s91, %s92
      %p106 = scmp.eq.s32.totalorder %s20, 3
      %p107 = por %p105, %p106
      %p109 = scmp.ne.s32.totalorder %s92, %s108
      %p110 = scmp.eq.s32.totalorder %s20, 0
      %p111 = por %p109, %p110
      %s112 = ssub.s32 %s21, %s33
      %s113 = ssub.s32 %s22, %s29
      %s114 = sor.u32 %s112, %s113
      %p115 = scmp.eq.s32.totalorder %s114, 0
      %s117 = sadd.s32 %s116, 1
      %s118 = scalar_select %p115, %s116, %s117
      %p121 = pneg %p115
      %p122 = scmp.eq.s32.totalorder %s14, 3
      %p123 = por %p121, %p122
      %p124 = scmp.ne.s32.totalorder %s116, %s119
      %p125 = scmp.eq.s32.totalorder %s14, 0
      %p126 = por %p124, %p125
      %p127 = scmp.ne.s32.totalorder %s116, %s119
      %p128 = scmp.eq.s32.totalorder %s19, 3
      %p129 = por %p127, %p128
      %p130 = scmp.ne.s32.totalorder %s119, %s120
      %p131 = scmp.eq.s32.totalorder %s19, 0
      %p132 = por %p130, %p131
      %p133 = scmp.ne.s32.totalorder %s119, %s120
      %p134 = scmp.eq.s32.totalorder %s20, 3
      %p135 = por %p133, %p134
      %p137 = scmp.ne.s32.totalorder %s120, %s136
      %p138 = scmp.eq.s32.totalorder %s20, 0
      %p139 = por %p137, %p138
      %s140 = ssub.s32 %s21, %s33
      %s141 = ssub.s32 %s22, %s29
      %s142 = sor.u32 %s140, %s141
      %p143 = scmp.eq.s32.totalorder %s142, 0
      %s145 = sadd.s32 %s144, 1
      %s146 = scalar_select %p143, %s144, %s145
      %p149 = pneg %p143
      %p150 = scmp.eq.s32.totalorder %s14, 3
      %p151 = por %p149, %p150
      %p152 = scmp.ne.s32.totalorder %s144, %s147
      %p153 = scmp.eq.s32.totalorder %s14, 0
      %p154 = por %p152, %p153
      %p155 = scmp.ne.s32.totalorder %s144, %s147
      %p156 = scmp.eq.s32.totalorder %s19, 3
      %p157 = por %p155, %p156
      %p158 = scmp.ne.s32.totalorder %s147, %s148
      %p159 = scmp.eq.s32.totalorder %s19, 0
      %p160 = por %p158, %p159
      %p161 = scmp.ne.s32.totalorder %s147, %s148
      %p162 = scmp.eq.s32.totalorder %s20, 3
      %p163 = por %p161, %p162
      %p165 = scmp.ne.s32.totalorder %s148, %s164
      %p166 = scmp.eq.s32.totalorder %s20, 0
      %p167 = por %p165, %p166
      %p168 = scmp.le.s32.totalorder 1, %s14
      %p169 = scmp.lt.s32.totalorder %s14, 5
      %p170 = pnand %p168, %p169
      %p171 = pneg %p170
      // Predicated region
      $region9: #{gabor_cnn7_forward.14} parent=5 // pred_check
        _
      $region10: #{gabor_cnn7_forward.14} parent=5 // pred_check_branch
        %173 = sbr.rel (%p170) target = $region12
      $region11: #{gabor_cnn7_forward.14} parent=5 // pred_region
        %s174 = ssub.s32 %s14, 1
        // Predicated region
        $region13: #{gabor_cnn7_forward.14} parent=11 // pred_check
          %p175 = pneg %p52
        $region14: #{gabor_cnn7_forward.14} parent=11 // pred_check_branch
          %177 = sbr.rel (%p175) target = $region16
        $region15: #{gabor_cnn7_forward.14} parent=11 // pred_region
          %p178 = scmp.lt.s32.totalorder %s23, 0
          %s179 = scalar_select %p178, %s23, 0
          %s180 = smul.addr %s179, 2
          %s181 = scalar_lea.vmem %s0, %s180
        $region16: #{gabor_cnn7_forward.14} parent=11 // pred_fallthru
          _
      $region12: #{gabor_cnn7_forward.14} parent=5 // pred_fallthru
        _
      %p182 = scmp.lt.s32.totalorder %s14, 4
      // Predicated region
      $region17: #{gabor_cnn7_forward.14} parent=5 // pred_check
        %p183 = pneg %p182
      $region18: #{gabor_cnn7_forward.14} parent=5 // pred_check_branch
        %185 = sbr.rel (%p183) target = $region20
      $region19: #{gabor_cnn7_forward.14} parent=5 // pred_region
        // Predicated region
        $region21: #{gabor_cnn7_forward.14} parent=19 // pred_check
          %p186 = pneg %p72
        $region22: #{gabor_cnn7_forward.14} parent=19 // pred_check_branch
          %188 = sbr.rel (%p186) target = $region24
        $region23: #{gabor_cnn7_forward.14} parent=19 // pred_region
          %s189 = sand.u32 %s62, 1
          %s190 = sand.u32 %s62, 1
          %s191 = smul.addr %s190, 256
          %s192 = scalar_lea.vmem [#allocation2], %s191
          %s193 = smul.u32 2, %s22
          %s194 = smul.addr %s193, 4
          %s195 = scalar_lea.vmem %s1, %s194
          // Predicated region
          $region25: #{gabor_cnn7_forward.14} parent=23 // pred_check
            _
          $region26: #{gabor_cnn7_forward.14} parent=23 // pred_check_branch
            %197 = sbr.rel (0) target = $region28
          $region27: #{gabor_cnn7_forward.14} parent=23 // pred_region
            // Predicated region
            $region29: #{gabor_cnn7_forward.14} parent=27 // pred_check
              _
            $region30: #{gabor_cnn7_forward.14} parent=27 // pred_check_branch
              %199 = sbr.rel (0) target = $region32
            $region31: #{gabor_cnn7_forward.14} parent=27 // pred_region
              // Predicated region
              $region44: #{gabor_cnn7_forward.14} parent=31 // pred_check
                _
              $region45: #{gabor_cnn7_forward.14} parent=31 // pred_check_branch
                %276 = sbr.rel (0) target = $region47
              $region46: #{gabor_cnn7_forward.14} parent=31 // pred_region
                loop: start=0, step=1, limit=1
                $region48: #{gabor_cnn7_forward.14} parent=46 // loop_pre_header
                  _
                $region49: #{gabor_cnn7_forward.14} parent=46 // loop_header
                  %s278 = sphi 0, %s282
                  %p279 = scmp.ge.s32.totalorder %s278, 1
                  %s283 = sphi %s195, %s195
                  %s284 = sphi %s192, %s192
                $region50: #{gabor_cnn7_forward.14} parent=46 // loop_header_branch
                  %281 = sbr.rel (%p279) target = $region54
                $region51: #{gabor_cnn7_forward.14} parent=46 // loop_body
                  %v285 = vld [vmem:[%s283] sm:$0xff]
                  %286 = vst [vmem:[%s284] sm:$0xff] %v285
                  %v287 = vld [vmem:[%s283 + $0x20] sm:$0xff]
                  %288 = vst [vmem:[%s284 + $0x8] sm:$0xff] %v287
                  %v289 = vld [vmem:[%s283 + $0x40] sm:$0xff]
                  %290 = vst [vmem:[%s284 + $0x10] sm:$0xff] %v289
                  %v291 = vld [vmem:[%s283 + $0x60] sm:$0xff]
                  %292 = vst [vmem:[%s284 + $0x18] sm:$0xff] %v291
                  %v293 = vld [vmem:[%s283 + $0x80] sm:$0xff]
                  %294 = vst [vmem:[%s284 + $0x20] sm:$0xff] %v293
                  %v295 = vld [vmem:[%s283 + $0xa0] sm:$0xff]
                  %296 = vst [vmem:[%s284 + $0x28] sm:$0xff] %v295
                  %v297 = vld [vmem:[%s283 + $0xc0] sm:$0xff]
                  %298 = vst [vmem:[%s284 + $0x30] sm:$0xff] %v297
                  %v299 = vld [vmem:[%s283 + $0xe0] sm:$0xff]
                  %300 = vst [vmem:[%s284 + $0x38] sm:$0xff] %v299
                  %v301 = vld [vmem:[%s283 + $0x100] sm:$0xff]
                  %302 = vst [vmem:[%s284 + $0x40] sm:$0xff] %v301
                  %v303 = vld [vmem:[%s283 + $0x120] sm:$0xff]
                  %304 = vst [vmem:[%s284 + $0x48] sm:$0xff] %v303
                  %v305 = vld [vmem:[%s283 + $0x140] sm:$0xff]
                  %306 = vst [vmem:[%s284 + $0x50] sm:$0xff] %v305
                  %v307 = vld [vmem:[%s283 + $0x160] sm:$0xff]
                  %308 = vst [vmem:[%s284 + $0x58] sm:$0xff] %v307
                  %v309 = vld [vmem:[%s283 + $0x180] sm:$0xff]
                  %310 = vst [vmem:[%s284 + $0x60] sm:$0xff] %v309
                  %v311 = vld [vmem:[%s283 + $0x1a0] sm:$0xff]
                  %312 = vst [vmem:[%s284 + $0x68] sm:$0xff] %v311
                  %v313 = vld [vmem:[%s283 + $0x1c0] sm:$0xff]
                  %314 = vst [vmem:[%s284 + $0x70] sm:$0xff] %v313
                  %v315 = vld [vmem:[%s283 + $0x1e0] sm:$0xff]
                  %316 = vst [vmem:[%s284 + $0x78] sm:$0xff] %v315
                  %v317 = vld [vmem:[%s283 + $0x200] sm:$0xff]
                  %318 = vst [vmem:[%s284 + $0x80] sm:$0xff] %v317
                  %v319 = vld [vmem:[%s283 + $0x220] sm:$0xff]
                  %320 = vst [vmem:[%s284 + $0x88] sm:$0xff] %v319
                  %v321 = vld [vmem:[%s283 + $0x240] sm:$0xff]
                  %322 = vst [vmem:[%s284 + $0x90] sm:$0xff] %v321
                  %v323 = vld [vmem:[%s283 + $0x260] sm:$0xff]
                  %324 = vst [vmem:[%s284 + $0x98] sm:$0xff] %v323
                  %v325 = vld [vmem:[%s283 + $0x280] sm:$0xff]
                  %326 = vst [vmem:[%s284 + $0xa0] sm:$0xff] %v325
                  %v327 = vld [vmem:[%s283 + $0x2a0] sm:$0xff]
                  %328 = vst [vmem:[%s284 + $0xa8] sm:$0xff] %v327
                  %v329 = vld [vmem:[%s283 + $0x2c0] sm:$0xff]
                  %330 = vst [vmem:[%s284 + $0xb0] sm:$0xff] %v329
                  %v331 = vld [vmem:[%s283 + $0x2e0] sm:$0xff]
                  %332 = vst [vmem:[%s284 + $0xb8] sm:$0xff] %v331
                  %v333 = vld [vmem:[%s283 + $0x300] sm:$0xff]
                  %334 = vst [vmem:[%s284 + $0xc0] sm:$0xff] %v333
                  %v335 = vld [vmem:[%s283 + $0x320] sm:$0xff]
                  %336 = vst [vmem:[%s284 + $0xc8] sm:$0xff] %v335
                  %v337 = vld [vmem:[%s283 + $0x340] sm:$0xff]
                  %338 = vst [vmem:[%s284 + $0xd0] sm:$0xff] %v337
                  %v339 = vld [vmem:[%s283 + $0x360] sm:$0xff]
                  %340 = vst [vmem:[%s284 + $0xd8] sm:$0xff] %v339
                  %v341 = vld [vmem:[%s283 + $0x380] sm:$0xff]
                  %342 = vst [vmem:[%s284 + $0xe0] sm:$0xff] %v341
                  %v343 = vld [vmem:[%s283 + $0x3a0] sm:$0xff]
                  %344 = vst [vmem:[%s284 + $0xe8] sm:$0xff] %v343
                  %v345 = vld [vmem:[%s283 + $0x3c0] sm:$0xff]
                  %346 = vst [vmem:[%s284 + $0xf0] sm:$0xff] %v345
                  %v347 = vld [vmem:[%s283 + $0x3e0] sm:$0xff]
                  %348 = vst [vmem:[%s284 + $0xf8] sm:$0xff] %v347
                $region52: #{gabor_cnn7_forward.14} parent=46 // loop_footer
                  %s282 = sadd.s32 1, %s278
                $region53: #{gabor_cnn7_forward.14} parent=46 // loop_footer_branch
                  %277 = sbr.rel target = $region49
                $region54: #{gabor_cnn7_forward.14} parent=46 // loop_exit
                  _
              $region47: #{gabor_cnn7_forward.14} parent=31 // pred_fallthru
                _
              // Predicated region
              $region55: #{gabor_cnn7_forward.14} parent=31 // pred_check
                _
              $region56: #{gabor_cnn7_forward.14} parent=31 // pred_check_branch
                %350 = sbr.rel target = $region58
              $region57: #{gabor_cnn7_forward.14} parent=31 // pred_region
                _
              $region58: #{gabor_cnn7_forward.14} parent=31 // pred_fallthru
                _
            $region32: #{gabor_cnn7_forward.14} parent=27 // pred_fallthru
              _
            // Predicated region
            $region33: #{gabor_cnn7_forward.14} parent=27 // pred_check
              _
            $region34: #{gabor_cnn7_forward.14} parent=27 // pred_check_branch
              %201 = sbr.rel target = $region36
            $region35: #{gabor_cnn7_forward.14} parent=27 // pred_region
              loop: start=0, step=1, limit=1
              $region37: #{gabor_cnn7_forward.14} parent=35 // loop_pre_header
                _
              $region38: #{gabor_cnn7_forward.14} parent=35 // loop_header
                %s204 = sphi 0, %s208
                %p205 = scmp.ge.s32.totalorder %s204, 1
                %s209 = sphi %s195, %s195
                %s210 = sphi %s192, %s192
              $region39: #{gabor_cnn7_forward.14} parent=35 // loop_header_branch
                %207 = sbr.rel (%p205) target = $region43
              $region40: #{gabor_cnn7_forward.14} parent=35 // loop_body
                %v211 = vld [vmem:[%s209] sm:$0xff]
                %212 = vst [vmem:[%s210] sm:$0xff] %v211
                %v213 = vld [vmem:[%s209 + $0x20] sm:$0xff]
                %214 = vst [vmem:[%s210 + $0x8] sm:$0xff] %v213
                %v215 = vld [vmem:[%s209 + $0x40] sm:$0xff]
                %216 = vst [vmem:[%s210 + $0x10] sm:$0xff] %v215
                %v217 = vld [vmem:[%s209 + $0x60] sm:$0xff]
                %218 = vst [vmem:[%s210 + $0x18] sm:$0xff] %v217
                %v219 = vld [vmem:[%s209 + $0x80] sm:$0xff]
                %220 = vst [vmem:[%s210 + $0x20] sm:$0xff] %v219
                %v221 = vld [vmem:[%s209 + $0xa0] sm:$0xff]
                %222 = vst [vmem:[%s210 + $0x28] sm:$0xff] %v221
                %v223 = vld [vmem:[%s209 + $0xc0] sm:$0xff]
                %224 = vst [vmem:[%s210 + $0x30] sm:$0xff] %v223
                %v225 = vld [vmem:[%s209 + $0xe0] sm:$0xff]
                %226 = vst [vmem:[%s210 + $0x38] sm:$0xff] %v225
                %v227 = vld [vmem:[%s209 + $0x100] sm:$0xff]
                %228 = vst [vmem:[%s210 + $0x40] sm:$0xff] %v227
                %v229 = vld [vmem:[%s209 + $0x120] sm:$0xff]
                %230 = vst [vmem:[%s210 + $0x48] sm:$0xff] %v229
                %v231 = vld [vmem:[%s209 + $0x140] sm:$0xff]
                %232 = vst [vmem:[%s210 + $0x50] sm:$0xff] %v231
                %v233 = vld [vmem:[%s209 + $0x160] sm:$0xff]
                %234 = vst [vmem:[%s210 + $0x58] sm:$0xff] %v233
                %v235 = vld [vmem:[%s209 + $0x180] sm:$0xff]
                %236 = vst [vmem:[%s210 + $0x60] sm:$0xff] %v235
                %v237 = vld [vmem:[%s209 + $0x1a0] sm:$0xff]
                %238 = vst [vmem:[%s210 + $0x68] sm:$0xff] %v237
                %v239 = vld [vmem:[%s209 + $0x1c0] sm:$0xff]
                %240 = vst [vmem:[%s210 + $0x70] sm:$0xff] %v239
                %v241 = vld [vmem:[%s209 + $0x1e0] sm:$0xff]
                %242 = vst [vmem:[%s210 + $0x78] sm:$0xff] %v241
                %v243 = vld [vmem:[%s209 + $0x200] sm:$0xff]
                %244 = vst [vmem:[%s210 + $0x80] sm:$0xff] %v243
                %v245 = vld [vmem:[%s209 + $0x220] sm:$0xff]
                %246 = vst [vmem:[%s210 + $0x88] sm:$0xff] %v245
                %v247 = vld [vmem:[%s209 + $0x240] sm:$0xff]
                %248 = vst [vmem:[%s210 + $0x90] sm:$0xff] %v247
                %v249 = vld [vmem:[%s209 + $0x260] sm:$0xff]
                %250 = vst [vmem:[%s210 + $0x98] sm:$0xff] %v249
                %v251 = vld [vmem:[%s209 + $0x280] sm:$0xff]
                %252 = vst [vmem:[%s210 + $0xa0] sm:$0xff] %v251
                %v253 = vld [vmem:[%s209 + $0x2a0] sm:$0xff]
                %254 = vst [vmem:[%s210 + $0xa8] sm:$0xff] %v253
                %v255 = vld [vmem:[%s209 + $0x2c0] sm:$0xff]
                %256 = vst [vmem:[%s210 + $0xb0] sm:$0xff] %v255
                %v257 = vld [vmem:[%s209 + $0x2e0] sm:$0xff]
                %258 = vst [vmem:[%s210 + $0xb8] sm:$0xff] %v257
                %v259 = vld [vmem:[%s209 + $0x300] sm:$0xff]
                %260 = vst [vmem:[%s210 + $0xc0] sm:$0xff] %v259
                %v261 = vld [vmem:[%s209 + $0x320] sm:$0xff]
                %262 = vst [vmem:[%s210 + $0xc8] sm:$0xff] %v261
                %v263 = vld [vmem:[%s209 + $0x340] sm:$0xff]
                %264 = vst [vmem:[%s210 + $0xd0] sm:$0xff] %v263
                %v265 = vld [vmem:[%s209 + $0x360] sm:$0xff]
                %266 = vst [vmem:[%s210 + $0xd8] sm:$0xff] %v265
                %v267 = vld [vmem:[%s209 + $0x380] sm:$0xff]
                %268 = vst [vmem:[%s210 + $0xe0] sm:$0xff] %v267
                %v269 = vld [vmem:[%s209 + $0x3a0] sm:$0xff]
                %270 = vst [vmem:[%s210 + $0xe8] sm:$0xff] %v269
                %v271 = vld [vmem:[%s209 + $0x3c0] sm:$0xff]
                %272 = vst [vmem:[%s210 + $0xf0] sm:$0xff] %v271
                %v273 = vld [vmem:[%s209 + $0x3e0] sm:$0xff]
                %274 = vst [vmem:[%s210 + $0xf8] sm:$0xff] %v273
              $region41: #{gabor_cnn7_forward.14} parent=35 // loop_footer
                %s208 = sadd.s32 1, %s204
              $region42: #{gabor_cnn7_forward.14} parent=35 // loop_footer_branch
                %203 = sbr.rel target = $region38
              $region43: #{gabor_cnn7_forward.14} parent=35 // loop_exit
                _
            $region36: #{gabor_cnn7_forward.14} parent=27 // pred_fallthru
              _
          $region28: #{gabor_cnn7_forward.14} parent=23 // pred_fallthru
            _
          %351 = vnop
        $region24: #{gabor_cnn7_forward.14} parent=19 // pred_fallthru
          _
        // Predicated region
        $region59: #{gabor_cnn7_forward.14} parent=19 // pred_check
          %p352 = pneg %p98
        $region60: #{gabor_cnn7_forward.14} parent=19 // pred_check_branch
          %354 = sbr.rel (%p352) target = $region62
        $region61: #{gabor_cnn7_forward.14} parent=19 // pred_region
          %s355 = smul.u32 2, %s22
          %p356 = scmp.lt.s32.totalorder %s355, 7
          %s357 = scalar_select %p356, %s355, 7
          %s358 = scalar_lea.vmem %s2, %s357
          %s359 = smul.u32 2, %s22
        $region62: #{gabor_cnn7_forward.14} parent=19 // pred_fallthru
          _
      $region20: #{gabor_cnn7_forward.14} parent=5 // pred_fallthru
        _
      %p360 = scmp.le.s32.totalorder 1, %s14
      %p361 = scmp.lt.s32.totalorder %s14, 5
      %p362 = pnand %p360, %p361
      %p363 = pneg %p362
      // Predicated region
      $region63: #{gabor_cnn7_forward.14} parent=5 // pred_check
        _
      $region64: #{gabor_cnn7_forward.14} parent=5 // pred_check_branch
        %365 = sbr.rel (%p362) target = $region66
      $region65: #{gabor_cnn7_forward.14} parent=5 // pred_region
        %s366 = ssub.s32 %s14, 1
        %s367 = sand.u32 %s65, 1
        %s368 = sand.u32 %s65, 1
        %s369 = smul.addr %s368, 256
        %s370 = scalar_lea.vmem [#allocation2], %s369
        // Predicated region
        $region67: #{gabor_cnn7_forward.14} parent=65 // pred_check
          %p371 = pneg %p78
        $region68: #{gabor_cnn7_forward.14} parent=65 // pred_check_branch
          %373 = sbr.rel (%p371) target = $region70
        $region69: #{gabor_cnn7_forward.14} parent=65 // pred_region
          _
        $region70: #{gabor_cnn7_forward.14} parent=65 // pred_fallthru
          _
        %p374 = scmp.lt.s32.totalorder %s23, 0
        %s375 = scalar_select %p374, %s23, 0
        %s376 = smul.addr %s375, 2
        %s377 = scalar_lea.vmem %s0, %s376
        %p378 = pneg %p52
        %p379 = pneg %p49
        %s380 = sand.u32 %s65, 1
        %s381 = sand.u32 %s65, 1
        %s382 = smul.addr %s381, 256
        %s383 = scalar_lea.vmem [#allocation2], %s382
        %p384 = pneg %p78
        %p385 = pneg %p75
        %s386 = smul.u32 2, %s24
        %p387 = scmp.lt.s32.totalorder %s386, 7
        %s388 = scalar_select %p387, %s386, 7
        %s389 = scalar_lea.vmem %s2, %s388
        %p390 = pneg %p104
        %p391 = pneg %p101
        %p392 = pneg %p132
        %p393 = pneg %p129
        %s394 = sand.u32 %s119, 1
        %s395 = scalar_lea.sflag [#allocation4], %s394
        %s396 = sand.u32 %s119, 1
        %s397 = smul.addr %s396, 4
        %s398 = scalar_lea.vmem [#allocation3], %s397
        %p399 = pneg %p160
        %p400 = pneg %p157
        %s401 = smul.u32 2, %s24
        %p402 = scmp.lt.s32.totalorder %s23, 0
        %s403 = scalar_select %p402, %s23, 0
        %p404 = scmp.lt.s32.totalorder %s401, 7
        %s405 = scalar_select %p404, %s401, 7
        %s406 = smul.addr %s403, 8
        %s407 = sadd.s32 %s405, %s406
        %s408 = scalar_lea.vmem %s4, %s407
        %p409 = scmp.lt.s32.totalorder %s23, 0
        %s410 = scalar_select %p409, %s23, 0
        %s411 = smul.addr %s410, 2
        %s412 = scalar_lea.vmem %s0, %s411
        %s413 = smul.u32 2, %s24
        %s414 = smul.u32 2, %s24
        %p415 = scmp.lt.s32.totalorder %s414, 7
        %s416 = scalar_select %p415, %s414, 7
        %s417 = scalar_lea.vmem %s2, %s416
        %s418 = smul.u32 2, %s24
        %s419 = smul.u32 2, %s24
        %s420 = smul.u32 2, %s24
        %p421 = scmp.lt.s32.totalorder %s23, 0
        %s422 = scalar_select %p421, %s23, 0
        %p423 = scmp.lt.s32.totalorder %s420, 7
        %s424 = scalar_select %p423, %s420, 7
        %s425 = smul.addr %s422, 8
        %s426 = sadd.s32 %s424, %s425
        %s427 = scalar_lea.vmem %s4, %s426
        %s428 = smul.u32 2, %s24
        %v429 = vld [vmem:[%s412] sm:$0x3]
        %v430 = vld [vmem:[%s370] sm:$0xff]
        %v431 = vld [vmem:[%s370 + $0x8] sm:$0xff]
        %v432 = vld [vmem:[%s370 + $0x10] sm:$0xff]
        %v433 = vld [vmem:[%s370 + $0x18] sm:$0xff]
        %v434 = vld [vmem:[%s370 + $0x20] sm:$0xff]
        %v435 = vld [vmem:[%s370 + $0x28] sm:$0xff]
        %v436 = vld [vmem:[%s370 + $0x30] sm:$0xff]
        %v437 = vld [vmem:[%s370 + $0x38] sm:$0xff]
        %v438 = vld [vmem:[%s370 + $0x40] sm:$0xff]
        %v439 = vld [vmem:[%s370 + $0x48] sm:$0xff]
        %v440 = vld [vmem:[%s370 + $0x50] sm:$0xff]
        %v441 = vld [vmem:[%s370 + $0x58] sm:$0xff]
        %v442 = vld [vmem:[%s370 + $0x60] sm:$0xff]
        %v443 = vld [vmem:[%s370 + $0x68] sm:$0xff]
        %v444 = vld [vmem:[%s370 + $0x70] sm:$0xff]
        %v445 = vld [vmem:[%s370 + $0x78] sm:$0xff]
        %v446 = vld [vmem:[%s370 + $0x80] sm:$0xff]
        %v447 = vld [vmem:[%s370 + $0x88] sm:$0xff]
        %v448 = vld [vmem:[%s370 + $0x90] sm:$0xff]
        %v449 = vld [vmem:[%s370 + $0x98] sm:$0xff]
        %v450 = vld [vmem:[%s370 + $0xa0] sm:$0xff]
        %v451 = vld [vmem:[%s370 + $0xa8] sm:$0xff]
        %v452 = vld [vmem:[%s370 + $0xb0] sm:$0xff]
        %v453 = vld [vmem:[%s370 + $0xb8] sm:$0xff]
        %v454 = vld [vmem:[%s370 + $0xc0] sm:$0xff]
        %v455 = vld [vmem:[%s370 + $0xc8] sm:$0xff]
        %v456 = vld [vmem:[%s370 + $0xd0] sm:$0xff]
        %v457 = vld [vmem:[%s370 + $0xd8] sm:$0xff]
        %v458 = vld [vmem:[%s370 + $0xe0] sm:$0xff]
        %v459 = vld [vmem:[%s370 + $0xe8] sm:$0xff]
        %v460 = vld [vmem:[%s370 + $0xf0] sm:$0xff]
        %v461 = vld [vmem:[%s370 + $0xf8] sm:$0xff]
        %v462 = vld [vmem:[%s417] sm:$0x3]
        %v464 = vlaneseq
        %v465 = vshrl.u32 %v464, 7
        %v466 = vsub.s32 0, %v465
        %v467 = vrot.slane %v462, %v466
        %v468 = vlaneseq
        %v469 = vshrl.u32 %v468, 7
        %v470 = vsub.s32 1, %v469
        %v471 = vrot.slane %v462, %v470
        %v476 = vunpack.c.l.s4 1966171168
        %v477 = vunpack.c.0.s8 %v476
        %v478 = vlaneseq
        %v479 = vshrl.u32 %v478, 7
        %v480 = vsub.s32 %v477, %v479
        %v481 = vrot.slane %v429, %v480
        %v482 = vcombine.high %v481, %v481
        %v484 = vunpack.c.l.s4 1966171168
        %v485 = vunpack.c.0.s8 %v484
        %v486 = vlaneseq
        %v487 = vshrl.u32 %v486, 7
        %v488 = vsub.s32 %v485, %v487
        %v489 = vrot.slane %v481, %v488
        %v491 = vunpack.c.l.s4 1966171168
        %v492 = vunpack.c.0.s8 %v491
        %v493 = vlaneseq
        %v494 = vshrl.u32 %v493, 7
        %v495 = vsub.s32 %v492, %v494
        %v496 = vrot.slane %v482, %v495
        %v531 = vunpack.c.l.b16 %v430
        %v532 = vunpack.c.h.b16 %v430
        %v533 = vunpack.c.l.b16 %v431
        %v534 = vunpack.c.h.b16 %v431
        %v535 = vunpack.c.l.b16 %v432
        %v536 = vunpack.c.h.b16 %v432
        %v537 = vunpack.c.l.b16 %v433
        %v538 = vunpack.c.h.b16 %v433
        %v539 = vunpack.c.l.b16 %v434
        %v540 = vunpack.c.h.b16 %v434
        %v541 = vunpack.c.l.b16 %v435
        %v542 = vunpack.c.h.b16 %v435
        %v543 = vunpack.c.l.b16 %v436
        %v544 = vunpack.c.h.b16 %v436
        %v545 = vunpack.c.l.b16 %v437
        %v546 = vunpack.c.h.b16 %v437
        %v547 = vunpack.c.l.b16 %v438
        %v548 = vunpack.c.h.b16 %v438
        %v549 = vunpack.c.l.b16 %v439
        %v550 = vunpack.c.h.b16 %v439
        %v551 = vunpack.c.l.b16 %v440
        %v552 = vunpack.c.h.b16 %v440
        %v553 = vunpack.c.l.b16 %v441
        %v554 = vunpack.c.h.b16 %v441
        %v555 = vunpack.c.l.b16 %v442
        %v556 = vunpack.c.h.b16 %v442
        %v557 = vunpack.c.l.b16 %v443
        %v558 = vunpack.c.h.b16 %v443
        %v559 = vunpack.c.l.b16 %v444
        %v560 = vunpack.c.h.b16 %v444
        %v561 = vunpack.c.l.b16 %v445
        %v562 = vunpack.c.h.b16 %v445
        %v563 = vunpack.c.l.b16 %v446
        %v564 = vunpack.c.h.b16 %v446
        %v565 = vunpack.c.l.b16 %v447
        %v566 = vunpack.c.h.b16 %v447
        %v567 = vunpack.c.l.b16 %v448
        %v568 = vunpack.c.h.b16 %v448
        %v569 = vunpack.c.l.b16 %v449
        %v570 = vunpack.c.h.b16 %v449
        %v571 = vunpack.c.l.b16 %v450
        %v572 = vunpack.c.h.b16 %v450
        %v573 = vunpack.c.l.b16 %v451
        %v574 = vunpack.c.h.b16 %v451
        %v575 = vunpack.c.l.b16 %v452
        %v576 = vunpack.c.h.b16 %v452
        %v577 = vunpack.c.l.b16 %v453
        %v578 = vunpack.c.h.b16 %v453
        %v579 = vunpack.c.l.b16 %v454
        %v580 = vunpack.c.h.b16 %v454
        %v581 = vunpack.c.l.b16 %v455
        %v582 = vunpack.c.h.b16 %v455
        %v583 = vunpack.c.l.b16 %v456
        %v584 = vunpack.c.h.b16 %v456
        %v585 = vunpack.c.l.b16 %v457
        %v586 = vunpack.c.h.b16 %v457
        %v587 = vunpack.c.l.b16 %v458
        %v588 = vunpack.c.h.b16 %v458
        %v589 = vunpack.c.l.b16 %v459
        %v590 = vunpack.c.h.b16 %v459
        %v591 = vunpack.c.l.b16 %v460
        %v592 = vunpack.c.h.b16 %v460
        %v593 = vunpack.c.l.b16 %v461
        %v594 = vunpack.c.h.b16 %v461
        %v595 = vpack.c.b16 %v533, %v531
        %v596 = vpack.c.b16 %v534, %v532
        %v597 = vpack.c.b16 %v537, %v535
        %v598 = vpack.c.b16 %v538, %v536
        %v599 = vpack.c.b16 %v541, %v539
        %v600 = vpack.c.b16 %v542, %v540
        %v601 = vpack.c.b16 %v545, %v543
        %v602 = vpack.c.b16 %v546, %v544
        %v603 = vpack.c.b16 %v549, %v547
        %v604 = vpack.c.b16 %v550, %v548
        %v605 = vpack.c.b16 %v553, %v551
        %v606 = vpack.c.b16 %v554, %v552
        %v607 = vpack.c.b16 %v557, %v555
        %v608 = vpack.c.b16 %v558, %v556
        %v609 = vpack.c.b16 %v561, %v559
        %v610 = vpack.c.b16 %v562, %v560
        %v611 = vpack.c.b16 %v565, %v563
        %v612 = vpack.c.b16 %v566, %v564
        %v613 = vpack.c.b16 %v569, %v567
        %v614 = vpack.c.b16 %v570, %v568
        %v615 = vpack.c.b16 %v573, %v571
        %v616 = vpack.c.b16 %v574, %v572
        %v617 = vpack.c.b16 %v577, %v575
        %v618 = vpack.c.b16 %v578, %v576
        %v619 = vpack.c.b16 %v581, %v579
        %v620 = vpack.c.b16 %v582, %v580
        %v621 = vpack.c.b16 %v585, %v583
        %v622 = vpack.c.b16 %v586, %v584
        %v623 = vpack.c.b16 %v589, %v587
        %v624 = vpack.c.b16 %v590, %v588
        %v625 = vpack.c.b16 %v593, %v591
        %v626 = vpack.c.b16 %v594, %v592
        %659 = vmatprep.subr.bf16.mxu0 %v596
        %660 = vmatpush1.bf16.msra.mxu0 %v595
        %661 = vmatprep.subr.bf16.mxu0 %v598
        %662 = vmatpush1.bf16.msra.mxu0 %v597
        %663 = vmatprep.subr.bf16.mxu0 %v600
        %664 = vmatpush1.bf16.msra.mxu0 %v599
        %665 = vmatprep.subr.bf16.mxu0 %v602
        %666 = vmatpush1.bf16.msra.mxu0 %v601
        %667 = vmatprep.subr.bf16.mxu0 %v604
        %668 = vmatpush1.bf16.msra.mxu0 %v603
        %669 = vmatprep.subr.bf16.mxu0 %v606
        %670 = vmatpush1.bf16.msra.mxu0 %v605
        %671 = vmatprep.subr.bf16.mxu0 %v608
        %672 = vmatpush1.bf16.msra.mxu0 %v607
        %673 = vmatprep.subr.bf16.mxu0 %v610
        %674 = vmatpush1.bf16.msra.mxu0 %v609
        %675 = vmatprep.subr.bf16.mxu0 %v612
        %676 = vmatpush1.bf16.msra.mxu0 %v611
        %677 = vmatprep.subr.bf16.mxu0 %v614
        %678 = vmatpush1.bf16.msra.mxu0 %v613
        %679 = vmatprep.subr.bf16.mxu0 %v616
        %680 = vmatpush1.bf16.msra.mxu0 %v615
        %681 = vmatprep.subr.bf16.mxu0 %v618
        %682 = vmatpush1.bf16.msra.mxu0 %v617
        %683 = vmatprep.subr.bf16.mxu0 %v620
        %684 = vmatpush1.bf16.msra.mxu0 %v619
        %685 = vmatprep.subr.bf16.mxu0 %v622
        %686 = vmatpush1.bf16.msra.mxu0 %v621
        %687 = vmatprep.subr.bf16.mxu0 %v624
        %688 = vmatpush1.bf16.msra.mxu0 %v623
        %689 = vmatprep.subr.bf16.mxu0 %v626
        %690 = vmatpush1.bf16.msra.mxu0 %v625
        %691 = vmatprep.mubr.bf16.mxu0 %v496
        %692 = vmatmul.mubr.bf16.gmra.mrb[0].mxu0 %v489
        %v693 = vpop.f32.mrb[0].mxu0
        %v694 = vadd.f32 %v467, %v693
        %v695 = vpop.f32.mrb[0].mxu0
        %v696 = vadd.f32 %v471, %v695
        %v697 = vpop.f32.mrb[0].mxu0
        %v698 = vpop.f32.mrb[0].mxu0
        %699 = vdwg.mxu0
        %v702 = vcombine.low %v694, %v696
        %v704 = vunpack.c.l.s4 1983009808
        %v705 = vunpack.c.0.s8 %v704
        %v706 = vlaneseq
        %v707 = vshrl.u32 %v706, 7
        %v708 = vsub.s32 %v705, %v707
        %v709 = vrot.slane %v702, %v708
        %711 = vst [vmem:[%s398] sm:$0xf] %v709
        %v712 = vmax.f32 %v694, 0.0
        %v713 = vmax.f32 %v696, 0.0
        %v714 = vpack.c.bf16 %v712, %v712
        %v715 = vpack.c.bf16 %v713, %v713
        %v718 = vcombine.low %v714, %v715
        %v720 = vunpack.c.l.s4 1966171168
        %v721 = vunpack.c.0.s8 %v720
        %v722 = vlaneseq
        %v723 = vshrl.u32 %v722, 7
        %v724 = vsub.s32 %v721, %v723
        %v725 = vrot.slane %v718, %v724
        %v727 = vunpack.c.l.s4 1966171168
        %v728 = vunpack.c.0.s8 %v727
        %v729 = vlaneseq
        %v730 = vshrl.u32 %v729, 7
        %v731 = vsub.s32 %v728, %v730
        %v732 = vrot.slane %v725, %v731
        %734 = vst [vmem:[%s427] sm:$0x3] %v732
        %s735 = sand.u32 %s119, 1
        %s736 = scalar_lea.sflag [#allocation4], %s735
        %s737 = sand.u32 %s119, 1
        %s738 = smul.addr %s737, 4
        %s739 = scalar_lea.vmem [#allocation3], %s738
        %s740 = smul.u32 2, %s24
        %p741 = scmp.lt.s32.totalorder %s23, 0
        %s742 = scalar_select %p741, %s23, 0
        %p743 = scmp.lt.s32.totalorder %s740, 7
        %s744 = scalar_select %p743, %s740, 7
        %s745 = smul.addr %s742, 8
        %s746 = sadd.s32 %s744, %s745
        %s747 = scalar_lea.vmem %s4, %s746
        // Predicated region
        $region71: #{gabor_cnn7_forward.14} parent=65 // pred_check
          %p748 = pneg %p129
        $region72: #{gabor_cnn7_forward.14} parent=65 // pred_check_branch
          %750 = sbr.rel (%p748) target = $region74
        $region73: #{gabor_cnn7_forward.14} parent=65 // pred_region
          %s751 = smul.u32 2, %s24
          %s753 = ssub.s32 64, 64
          %754 = vsyncadd %s736, %s753
          %s755 = smul.addr %s23, 8
          %s756 = sadd.s32 %s751, %s755
          %s757 = smul.addr %s756, 32
          %s758 = scalar_lea.hbm %s3, %s757
          %s760 = sshll.u32 %s739, 4
          %s761 = int_to_ptr.vmem [resolvable:$true] %s760
          %763 = dma.vmem_to_hbm [thread:$0]  %s761, 64, %s758, %s736
        $region74: #{gabor_cnn7_forward.14} parent=65 // pred_fallthru
          _
        // Predicated region
        $region75: #{gabor_cnn7_forward.14} parent=65 // pred_check
          %p764 = pneg %p157
        $region76: #{gabor_cnn7_forward.14} parent=65 // pred_check_branch
          %766 = sbr.rel (%p764) target = $region78
        $region77: #{gabor_cnn7_forward.14} parent=65 // pred_region
          %s767 = smul.u32 2, %s24
        $region78: #{gabor_cnn7_forward.14} parent=65 // pred_fallthru
          _
      $region66: #{gabor_cnn7_forward.14} parent=5 // pred_fallthru
        _
      %p768 = scmp.le.s32.totalorder 2, %s14
      // Predicated region
      $region79: #{gabor_cnn7_forward.14} parent=5 // pred_check
        %p769 = pneg %p768
      $region80: #{gabor_cnn7_forward.14} parent=5 // pred_check_branch
        %771 = sbr.rel (%p769) target = $region82
      $region81: #{gabor_cnn7_forward.14} parent=5 // pred_region
        %s772 = ssub.s32 %s14, 2
        // Predicated region
        $region83: #{gabor_cnn7_forward.14} parent=81 // pred_check
          %p773 = pneg %p135
        $region84: #{gabor_cnn7_forward.14} parent=81 // pred_check_branch
          %775 = sbr.rel (%p773) target = $region86
        $region85: #{gabor_cnn7_forward.14} parent=81 // pred_region
          %s776 = sand.u32 %s120, 1
          %s777 = scalar_lea.sflag [#allocation4], %s776
          %s778 = sand.u32 %s120, 1
          %s779 = smul.addr %s778, 4
          %s780 = scalar_lea.vmem [#allocation3], %s779
          %781 = dma.done %s777, 64
        $region86: #{gabor_cnn7_forward.14} parent=81 // pred_fallthru
          _
        // Predicated region
        $region87: #{gabor_cnn7_forward.14} parent=81 // pred_check
          %p782 = pneg %p163
        $region88: #{gabor_cnn7_forward.14} parent=81 // pred_check_branch
          %784 = sbr.rel (%p782) target = $region90
        $region89: #{gabor_cnn7_forward.14} parent=81 // pred_region
          %s785 = smul.u32 2, %s26
          %p786 = scmp.lt.s32.totalorder %s25, 0
          %s787 = scalar_select %p786, %s25, 0
          %p788 = scmp.lt.s32.totalorder %s785, 7
          %s789 = scalar_select %p788, %s785, 7
          %s790 = smul.addr %s787, 8
          %s791 = sadd.s32 %s789, %s790
          %s792 = scalar_lea.vmem %s4, %s791
        $region90: #{gabor_cnn7_forward.14} parent=81 // pred_fallthru
          _
      $region82: #{gabor_cnn7_forward.14} parent=5 // pred_fallthru
        _
    $region6: #{gabor_cnn7_forward.14} parent=1 // loop_footer
      %s18 = sadd.s32 1, %s14
    $region7: #{gabor_cnn7_forward.14} parent=1 // loop_footer_branch
      %13 = sbr.rel target = $region3
    $region8: #{gabor_cnn7_forward.14} parent=1 // loop_exit
      _
    %793 = vsyncpa [#allocation4], 1
    %s794 = scalar_lea.sflag [#allocation4], 1
    %795 = vsyncpa %s794, 1

// kernel: gabor_cnn7_forward.13
$region0: #{gabor_cnn7_forward.13}
  #allocation0 [shape = 'u32[]', space=smem, size = 0x4, offset = 0x4, fixed_abs, tag = 'smem constant byte address 0x4 - core index']
  #allocation1 [shape = 'u32[144,128]{1,0:T(1,128)}', space=vmem, size = 0x12000, scoped, tag = 'internal scratch']
  #allocation2 [shape = 'f32[2,256]{1,0:T(2,128)}', space=vmem, size = 0x800, scoped, tag = 'scratch operand']
  %s0 = inlined_call_operand.vmem [shape: bf16[2,4096], index: 0, kind: input, shape index: {}]
  %s1 = inlined_call_operand.vmem [shape: bf16[4096,256], index: 1, kind: input, shape index: {}]
  %s2 = inlined_call_operand.vmem [shape: bf16[2,256], index: 2, kind: output, shape index: {}]
  %s3 = sld [smem:[#allocation0]]
  $region49: #{gabor_cnn7_forward.13} parent=0
    _
  %s5 = ssub.s32 1, %s3
  %s6 = scalar_select 0, %s5, %s3
  loop: start=0, step=1, limit=6
  $region2: #{gabor_cnn7_forward.13} parent=0 // loop_pre_header
    _
  $region3: #{gabor_cnn7_forward.13} parent=0 // loop_header
    %s8 = sphi 0, %s12
    %p9 = scmp.ge.s32.totalorder %s8, 6
    %s15 = sphi 0, %s34
    %s16 = sphi 0, %s30
    %s17 = sphi 0, %s26
    %s18 = sphi 0, %s15
    %s19 = sphi 0, %s16
    %s20 = sphi 0, %s17
    %s21 = sphi 0, %s18
    %s22 = sphi 0, %s19
    %s23 = sphi 0, %s20
    %s39 = sphi 0, %s41
    %s42 = sphi 0, %s39
    %s43 = sphi 0, %s42
    %s59 = sphi 0, %s43
    %s67 = sphi 0, %s69
    %s70 = sphi 0, %s67
    %s71 = sphi 0, %s70
    %s87 = sphi 0, %s71
    %s95 = sphi 0, %s97
    %s98 = sphi 0, %s95
    %s99 = sphi 0, %s98
    %s115 = sphi 0, %s99
  $region4: #{gabor_cnn7_forward.13} parent=0 // loop_header_branch
    %11 = sbr.rel (%p9) target = $region8
  $region5: #{gabor_cnn7_forward.13} parent=0 // loop_body
    %s13 = ssub.s32 %s8, 1
    %s14 = ssub.s32 %s8, 2
    %s24 = sadd.s32 1, %s17
    %p25 = scmp.ge.s32.totalorder %s24, 4
    %s26 = scalar_select %p25, 0, %s24
    %s27 = sadd.s32 1, %s16
    %s28 = scalar_select %p25, %s27, %s16
    %p29 = scmp.ge.s32.totalorder %s28, 1
    %s30 = scalar_select %p29, 0, %s28
    %s31 = sadd.s32 1, %s15
    %s32 = scalar_select %p29, %s31, %s15
    %p33 = scmp.ge.s32.totalorder %s32, 1
    %s34 = scalar_select %p33, 0, %s32
    %s35 = ssub.s32 %s15, %s34
    %s36 = ssub.s32 %s17, %s26
    %s37 = sor.u32 %s35, %s36
    %p38 = scmp.eq.s32.totalorder %s37, 0
    %s40 = sadd.s32 %s39, 1
    %s41 = scalar_select %p38, %s39, %s40
    %p44 = pneg %p38
    %p45 = scmp.eq.s32.totalorder %s8, 3
    %p46 = por %p44, %p45
    %p47 = scmp.ne.s32.totalorder %s39, %s42
    %p48 = scmp.eq.s32.totalorder %s8, 0
    %p49 = por %p47, %p48
    %p50 = scmp.ne.s32.totalorder %s39, %s42
    %p51 = scmp.eq.s32.totalorder %s13, 3
    %p52 = por %p50, %p51
    %p53 = scmp.ne.s32.totalorder %s42, %s43
    %p54 = scmp.eq.s32.totalorder %s13, 0
    %p55 = por %p53, %p54
    %p56 = scmp.ne.s32.totalorder %s42, %s43
    %p57 = scmp.eq.s32.totalorder %s14, 3
    %p58 = por %p56, %p57
    %p60 = scmp.ne.s32.totalorder %s43, %s59
    %p61 = scmp.eq.s32.totalorder %s14, 0
    %p62 = por %p60, %p61
    %s63 = ssub.s32 %s17, %s26
    %s64 = ssub.s32 %s16, %s30
    %s65 = sor.u32 %s63, %s64
    %p66 = scmp.eq.s32.totalorder %s65, 0
    %s68 = sadd.s32 %s67, 1
    %s69 = scalar_select %p66, %s67, %s68
    %p72 = pneg %p66
    %p73 = scmp.eq.s32.totalorder %s8, 3
    %p74 = por %p72, %p73
    %p75 = scmp.ne.s32.totalorder %s67, %s70
    %p76 = scmp.eq.s32.totalorder %s8, 0
    %p77 = por %p75, %p76
    %p78 = scmp.ne.s32.totalorder %s67, %s70
    %p79 = scmp.eq.s32.totalorder %s13, 3
    %p80 = por %p78, %p79
    %p81 = scmp.ne.s32.totalorder %s70, %s71
    %p82 = scmp.eq.s32.totalorder %s13, 0
    %p83 = por %p81, %p82
    %p84 = scmp.ne.s32.totalorder %s70, %s71
    %p85 = scmp.eq.s32.totalorder %s14, 3
    %p86 = por %p84, %p85
    %p88 = scmp.ne.s32.totalorder %s71, %s87
    %p89 = scmp.eq.s32.totalorder %s14, 0
    %p90 = por %p88, %p89
    %s91 = ssub.s32 %s15, %s34
    %s92 = ssub.s32 %s16, %s30
    %s93 = sor.u32 %s91, %s92
    %p94 = scmp.eq.s32.totalorder %s93, 0
    %s96 = sadd.s32 %s95, 1
    %s97 = scalar_select %p94, %s95, %s96
    %p100 = pneg %p94
    %p101 = scmp.eq.s32.totalorder %s8, 3
    %p102 = por %p100, %p101
    %p103 = scmp.ne.s32.totalorder %s95, %s98
    %p104 = scmp.eq.s32.totalorder %s8, 0
    %p105 = por %p103, %p104
    %p106 = scmp.ne.s32.totalorder %s95, %s98
    %p107 = scmp.eq.s32.totalorder %s13, 3
    %p108 = por %p106, %p107
    %p109 = scmp.ne.s32.totalorder %s98, %s99
    %p110 = scmp.eq.s32.totalorder %s13, 0
    %p111 = por %p109, %p110
    %p112 = scmp.ne.s32.totalorder %s98, %s99
    %p113 = scmp.eq.s32.totalorder %s14, 3
    %p114 = por %p112, %p113
    %p116 = scmp.ne.s32.totalorder %s99, %s115
    %p117 = scmp.eq.s32.totalorder %s14, 0
    %p118 = por %p116, %p117
    %p119 = scmp.le.s32.totalorder 1, %s8
    %p120 = scmp.lt.s32.totalorder %s8, 5
    %p121 = pnand %p119, %p120
    %p122 = pneg %p121
    // Predicated region
    $region9: #{gabor_cnn7_forward.13} parent=5 // pred_check
      _
    $region10: #{gabor_cnn7_forward.13} parent=5 // pred_check_branch
      %124 = sbr.rel (%p121) target = $region12
    $region11: #{gabor_cnn7_forward.13} parent=5 // pred_region
      %s125 = ssub.s32 %s8, 1
    $region12: #{gabor_cnn7_forward.13} parent=5 // pred_fallthru
      _
    %p126 = scmp.lt.s32.totalorder %s8, 4
    // Predicated region
    $region13: #{gabor_cnn7_forward.13} parent=5 // pred_check
      %p127 = pneg %p126
    $region14: #{gabor_cnn7_forward.13} parent=5 // pred_check_branch
      %129 = sbr.rel (%p127) target = $region16
    $region15: #{gabor_cnn7_forward.13} parent=5 // pred_region
      // Predicated region
      $region17: #{gabor_cnn7_forward.13} parent=15 // pred_check
        %p130 = pneg %p49
      $region18: #{gabor_cnn7_forward.13} parent=15 // pred_check_branch
        %132 = sbr.rel (%p130) target = $region20
      $region19: #{gabor_cnn7_forward.13} parent=15 // pred_region
        %s133 = smul.u32 8, %s17
        %p134 = scmp.lt.s32.totalorder %s15, 0
        %s135 = scalar_select %p134, %s15, 0
        %p136 = scmp.lt.s32.totalorder %s133, 31
        %s137 = scalar_select %p136, %s133, 31
        %s138 = smul.addr %s135, 32
        %s139 = sadd.s32 %s137, %s138
        %s140 = scalar_lea.vmem %s0, %s139
        %s141 = smul.u32 8, %s17
      $region20: #{gabor_cnn7_forward.13} parent=15 // pred_fallthru
        _
      // Predicated region
      $region21: #{gabor_cnn7_forward.13} parent=15 // pred_check
        %p142 = pneg %p77
      $region22: #{gabor_cnn7_forward.13} parent=15 // pred_check_branch
        %144 = sbr.rel (%p142) target = $region24
      $region23: #{gabor_cnn7_forward.13} parent=15 // pred_region
        %s145 = smul.u32 128, %s17
        %s146 = smul.u32 2, %s16
        %p147 = scmp.lt.s32.totalorder %s145, 511
        %s148 = scalar_select %p147, %s145, 511
        %p149 = scmp.lt.s32.totalorder %s146, 1
        %s150 = scalar_select %p149, %s146, 1
        %s151 = smul.addr %s148, 2
        %s152 = sadd.s32 %s150, %s151
        %s153 = smul.addr %s152, 4
        %s154 = scalar_lea.vmem %s1, %s153
        %s155 = smul.u32 128, %s17
        %s156 = smul.u32 2, %s16
      $region24: #{gabor_cnn7_forward.13} parent=15 // pred_fallthru
        _
    $region16: #{gabor_cnn7_forward.13} parent=5 // pred_fallthru
      _
    %p157 = scmp.le.s32.totalorder 1, %s8
    %p158 = scmp.lt.s32.totalorder %s8, 5
    %p159 = pnand %p157, %p158
    %p160 = pneg %p159
    // Predicated region
    $region25: #{gabor_cnn7_forward.13} parent=5 // pred_check
      _
    $region26: #{gabor_cnn7_forward.13} parent=5 // pred_check_branch
      %162 = sbr.rel (%p159) target = $region28
    $region27: #{gabor_cnn7_forward.13} parent=5 // pred_region
      %s163 = ssub.s32 %s8, 1
      %s164 = smul.u32 8, %s20
      %p165 = scmp.lt.s32.totalorder %s18, 0
      %s166 = scalar_select %p165, %s18, 0
      %p167 = scmp.lt.s32.totalorder %s164, 31
      %s168 = scalar_select %p167, %s164, 31
      %s169 = smul.addr %s166, 32
      %s170 = sadd.s32 %s168, %s169
      %s171 = scalar_lea.vmem %s0, %s170
      %p172 = pneg %p55
      %p173 = pneg %p52
      %s174 = smul.u32 128, %s20
      %s175 = smul.u32 2, %s19
      %p176 = scmp.lt.s32.totalorder %s174, 511
      %s177 = scalar_select %p176, %s174, 511
      %p178 = scmp.lt.s32.totalorder %s175, 1
      %s179 = scalar_select %p178, %s175, 1
      %s180 = smul.addr %s177, 2
      %s181 = sadd.s32 %s179, %s180
      %s182 = smul.addr %s181, 4
      %s183 = scalar_lea.vmem %s1, %s182
      %p184 = pneg %p83
      %p185 = pneg %p80
      %p186 = pneg %p111
      %p187 = pneg %p108
      %s188 = smul.u32 2, %s19
      %p189 = scmp.lt.s32.totalorder %s18, 0
      %s190 = scalar_select %p189, %s18, 0
      %p191 = scmp.lt.s32.totalorder %s188, 1
      %s192 = scalar_select %p191, %s188, 1
      %s193 = smul.addr %s190, 2
      %s194 = sadd.s32 %s192, %s193
      %s195 = scalar_lea.vmem %s2, %s194
      %s196 = smul.u32 8, %s20
      %p197 = scmp.lt.s32.totalorder %s18, 0
      %s198 = scalar_select %p197, %s18, 0
      %p199 = scmp.lt.s32.totalorder %s196, 31
      %s200 = scalar_select %p199, %s196, 31
      %s201 = smul.addr %s198, 32
      %s202 = sadd.s32 %s200, %s201
      %s203 = scalar_lea.vmem %s0, %s202
      %s204 = smul.u32 8, %s20
      %s205 = smul.u32 128, %s20
      %s206 = smul.u32 2, %s19
      %p207 = scmp.lt.s32.totalorder %s205, 511
      %s208 = scalar_select %p207, %s205, 511
      %p209 = scmp.lt.s32.totalorder %s206, 1
      %s210 = scalar_select %p209, %s206, 1
      %s211 = smul.addr %s208, 2
      %s212 = sadd.s32 %s210, %s211
      %s213 = smul.addr %s212, 4
      %s214 = scalar_lea.vmem %s1, %s213
      %s215 = smul.u32 128, %s20
      %s216 = smul.u32 2, %s19
      %s217 = smul.u32 2, %s19
      %p218 = scmp.lt.s32.totalorder %s18, 0
      %s219 = scalar_select %p218, %s18, 0
      %p220 = scmp.lt.s32.totalorder %s217, 1
      %s221 = scalar_select %p220, %s217, 1
      %s222 = smul.addr %s219, 2
      %s223 = sadd.s32 %s221, %s222
      %s224 = scalar_lea.vmem %s2, %s223
      %s225 = smul.u32 2, %s19
      %p226 = scmp.eq.s32.totalorder %s20, 0
      // Predicated region
      $region29: #{gabor_cnn7_forward.13} parent=27 // pred_check
        %p227 = pneg %p226
      $region30: #{gabor_cnn7_forward.13} parent=27 // pred_check_branch
        %229 = sbr.rel (%p227) target = $region32
      $region31: #{gabor_cnn7_forward.13} parent=27 // pred_region
        %230 = vst [vmem:[#allocation2] sm:$0xf] 0.0
      $region32: #{gabor_cnn7_forward.13} parent=27 // pred_fallthru
        _
      %v231 = vld [vmem:[#allocation2] sm:$0xf]
      %v232 = vld [vmem:[%s203] sm:$0xff]
      %v233 = vld [vmem:[%s214] sm:$0xff]
      %v234 = vld [vmem:[%s214 + $0x8] sm:$0xff]
      %v235 = vld [vmem:[%s214 + $0x10] sm:$0xff]
      %v236 = vld [vmem:[%s214 + $0x18] sm:$0xff]
      %v237 = vld [vmem:[%s214 + $0x20] sm:$0xff]
      %v238 = vld [vmem:[%s214 + $0x28] sm:$0xff]
      %v239 = vld [vmem:[%s214 + $0x30] sm:$0xff]
      %v240 = vld [vmem:[%s214 + $0x38] sm:$0xff]
      %v241 = vld [vmem:[%s214 + $0x40] sm:$0xff]
      %v242 = vld [vmem:[%s214 + $0x48] sm:$0xff]
      %v243 = vld [vmem:[%s214 + $0x50] sm:$0xff]
      %v244 = vld [vmem:[%s214 + $0x58] sm:$0xff]
      %v245 = vld [vmem:[%s214 + $0x60] sm:$0xff]
      %v246 = vld [vmem:[%s214 + $0x68] sm:$0xff]
      %v247 = vld [vmem:[%s214 + $0x70] sm:$0xff]
      %v248 = vld [vmem:[%s214 + $0x78] sm:$0xff]
      %v249 = vld [vmem:[%s214 + $0x80] sm:$0xff]
      %v250 = vld [vmem:[%s214 + $0x88] sm:$0xff]
      %v251 = vld [vmem:[%s214 + $0x90] sm:$0xff]
      %v252 = vld [vmem:[%s214 + $0x98] sm:$0xff]
      %v253 = vld [vmem:[%s214 + $0xa0] sm:$0xff]
      %v254 = vld [vmem:[%s214 + $0xa8] sm:$0xff]
      %v255 = vld [vmem:[%s214 + $0xb0] sm:$0xff]
      %v256 = vld [vmem:[%s214 + $0xb8] sm:$0xff]
      %v257 = vld [vmem:[%s214 + $0xc0] sm:$0xff]
      %v258 = vld [vmem:[%s214 + $0xc8] sm:$0xff]
      %v259 = vld [vmem:[%s214 + $0xd0] sm:$0xff]
      %v260 = vld [vmem:[%s214 + $0xd8] sm:$0xff]
      %v261 = vld [vmem:[%s214 + $0xe0] sm:$0xff]
      %v262 = vld [vmem:[%s214 + $0xe8] sm:$0xff]
      %v263 = vld [vmem:[%s214 + $0xf0] sm:$0xff]
      %v264 = vld [vmem:[%s214 + $0xf8] sm:$0xff]
      %v265 = vld [vmem:[%s214 + $0x100] sm:$0xff]
      %v266 = vld [vmem:[%s214 + $0x108] sm:$0xff]
      %v267 = vld [vmem:[%s214 + $0x110] sm:$0xff]
      %v268 = vld [vmem:[%s214 + $0x118] sm:$0xff]
      %v269 = vld [vmem:[%s214 + $0x120] sm:$0xff]
      %v270 = vld [vmem:[%s214 + $0x128] sm:$0xff]
      %v271 = vld [vmem:[%s214 + $0x130] sm:$0xff]
      %v272 = vld [vmem:[%s214 + $0x138] sm:$0xff]
      %v273 = vld [vmem:[%s214 + $0x140] sm:$0xff]
      %v274 = vld [vmem:[%s214 + $0x148] sm:$0xff]
      %v275 = vld [vmem:[%s214 + $0x150] sm:$0xff]
      %v276 = vld [vmem:[%s214 + $0x158] sm:$0xff]
      %v277 = vld [vmem:[%s214 + $0x160] sm:$0xff]
      %v278 = vld [vmem:[%s214 + $0x168] sm:$0xff]
      %v279 = vld [vmem:[%s214 + $0x170] sm:$0xff]
      %v280 = vld [vmem:[%s214 + $0x178] sm:$0xff]
      %v281 = vld [vmem:[%s214 + $0x180] sm:$0xff]
      %v282 = vld [vmem:[%s214 + $0x188] sm:$0xff]
      %v283 = vld [vmem:[%s214 + $0x190] sm:$0xff]
      %v284 = vld [vmem:[%s214 + $0x198] sm:$0xff]
      %v285 = vld [vmem:[%s214 + $0x1a0] sm:$0xff]
      %v286 = vld [vmem:[%s214 + $0x1a8] sm:$0xff]
      %v287 = vld [vmem:[%s214 + $0x1b0] sm:$0xff]
      %v288 = vld [vmem:[%s214 + $0x1b8] sm:$0xff]
      %v289 = vld [vmem:[%s214 + $0x1c0] sm:$0xff]
      %v290 = vld [vmem:[%s214 + $0x1c8] sm:$0xff]
      %v291 = vld [vmem:[%s214 + $0x1d0] sm:$0xff]
      %v292 = vld [vmem:[%s214 + $0x1d8] sm:$0xff]
      %v293 = vld [vmem:[%s214 + $0x1e0] sm:$0xff]
      %v294 = vld [vmem:[%s214 + $0x1e8] sm:$0xff]
      %v295 = vld [vmem:[%s214 + $0x1f0] sm:$0xff]
      %v296 = vld [vmem:[%s214 + $0x1f8] sm:$0xff]
      %v297 = vld [vmem:[%s214 + $0x200] sm:$0xff]
      %v298 = vld [vmem:[%s214 + $0x208] sm:$0xff]
      %v299 = vld [vmem:[%s214 + $0x210] sm:$0xff]
      %v300 = vld [vmem:[%s214 + $0x218] sm:$0xff]
      %v301 = vld [vmem:[%s214 + $0x220] sm:$0xff]
      %v302 = vld [vmem:[%s214 + $0x228] sm:$0xff]
      %v303 = vld [vmem:[%s214 + $0x230] sm:$0xff]
      %v304 = vld [vmem:[%s214 + $0x238] sm:$0xff]
      %v305 = vld [vmem:[%s214 + $0x240] sm:$0xff]
      %v306 = vld [vmem:[%s214 + $0x248] sm:$0xff]
      %v307 = vld [vmem:[%s214 + $0x250] sm:$0xff]
      %v308 = vld [vmem:[%s214 + $0x258] sm:$0xff]
      %v309 = vld [vmem:[%s214 + $0x260] sm:$0xff]
      %v310 = vld [vmem:[%s214 + $0x268] sm:$0xff]
      %v311 = vld [vmem:[%s214 + $0x270] sm:$0xff]
      %v312 = vld [vmem:[%s214 + $0x278] sm:$0xff]
      %v313 = vld [vmem:[%s214 + $0x280] sm:$0xff]
      %v314 = vld [vmem:[%s214 + $0x288] sm:$0xff]
      %v315 = vld [vmem:[%s214 + $0x290] sm:$0xff]
      %v316 = vld [vmem:[%s214 + $0x298] sm:$0xff]
      %v317 = vld [vmem:[%s214 + $0x2a0] sm:$0xff]
      %v318 = vld [vmem:[%s214 + $0x2a8] sm:$0xff]
      %v319 = vld [vmem:[%s214 + $0x2b0] sm:$0xff]
      %v320 = vld [vmem:[%s214 + $0x2b8] sm:$0xff]
      %v321 = vld [vmem:[%s214 + $0x2c0] sm:$0xff]
      %v322 = vld [vmem:[%s214 + $0x2c8] sm:$0xff]
      %v323 = vld [vmem:[%s214 + $0x2d0] sm:$0xff]
      %v324 = vld [vmem:[%s214 + $0x2d8] sm:$0xff]
      %v325 = vld [vmem:[%s214 + $0x2e0] sm:$0xff]
      %v326 = vld [vmem:[%s214 + $0x2e8] sm:$0xff]
      %v327 = vld [vmem:[%s214 + $0x2f0] sm:$0xff]
      %v328 = vld [vmem:[%s214 + $0x2f8] sm:$0xff]
      %v329 = vld [vmem:[%s214 + $0x300] sm:$0xff]
      %v330 = vld [vmem:[%s214 + $0x308] sm:$0xff]
      %v331 = vld [vmem:[%s214 + $0x310] sm:$0xff]
      %v332 = vld [vmem:[%s214 + $0x318] sm:$0xff]
      %v333 = vld [vmem:[%s214 + $0x320] sm:$0xff]
      %v334 = vld [vmem:[%s214 + $0x328] sm:$0xff]
      %v335 = vld [vmem:[%s214 + $0x330] sm:$0xff]
      %v336 = vld [vmem:[%s214 + $0x338] sm:$0xff]
      %v337 = vld [vmem:[%s214 + $0x340] sm:$0xff]
      %v338 = vld [vmem:[%s214 + $0x348] sm:$0xff]
      %v339 = vld [vmem:[%s214 + $0x350] sm:$0xff]
      %v340 = vld [vmem:[%s214 + $0x358] sm:$0xff]
      %v341 = vld [vmem:[%s214 + $0x360] sm:$0xff]
      %v342 = vld [vmem:[%s214 + $0x368] sm:$0xff]
      %v343 = vld [vmem:[%s214 + $0x370] sm:$0xff]
      %v344 = vld [vmem:[%s214 + $0x378] sm:$0xff]
      %v345 = vld [vmem:[%s214 + $0x380] sm:$0xff]
      %v346 = vld [vmem:[%s214 + $0x388] sm:$0xff]
      %v347 = vld [vmem:[%s214 + $0x390] sm:$0xff]
      %v348 = vld [vmem:[%s214 + $0x398] sm:$0xff]
      %v349 = vld [vmem:[%s214 + $0x3a0] sm:$0xff]
      %v350 = vld [vmem:[%s214 + $0x3a8] sm:$0xff]
      %v351 = vld [vmem:[%s214 + $0x3b0] sm:$0xff]
      %v352 = vld [vmem:[%s214 + $0x3b8] sm:$0xff]
      %v353 = vld [vmem:[%s214 + $0x3c0] sm:$0xff]
      %v354 = vld [vmem:[%s214 + $0x3c8] sm:$0xff]
      %v355 = vld [vmem:[%s214 + $0x3d0] sm:$0xff]
      %v356 = vld [vmem:[%s214 + $0x3d8] sm:$0xff]
      %v357 = vld [vmem:[%s214 + $0x3e0] sm:$0xff]
      %v358 = vld [vmem:[%s214 + $0x3e8] sm:$0xff]
      %v359 = vld [vmem:[%s214 + $0x3f0] sm:$0xff]
      %v360 = vld [vmem:[%s214 + $0x3f8] sm:$0xff]
      %v362 = vcombine.high %v232, %v232
      %v364 = vunpack.c.l.s4 1966171168
      %v365 = vunpack.c.0.s8 %v364
      %v366 = vlaneseq
      %v367 = vshrl.u32 %v366, 7
      %v368 = vsub.s32 %v365, %v367
      %v369 = vrot.slane %v232, %v368
      %v371 = vunpack.c.l.s4 1966171168
      %v372 = vunpack.c.0.s8 %v371
      %v373 = vlaneseq
      %v374 = vshrl.u32 %v373, 7
      %v375 = vsub.s32 %v372, %v374
      %v376 = vrot.slane %v362, %v375
      %v377 = vcombine.high %v369, %v369
      %v378 = vcombine.high %v376, %v376
      %v380 = vunpack.c.l.s4 1966171168
      %v381 = vunpack.c.0.s8 %v380
      %v382 = vlaneseq
      %v383 = vshrl.u32 %v382, 7
      %v384 = vsub.s32 %v381, %v383
      %v385 = vrot.slane %v369, %v384
      %v387 = vunpack.c.l.s4 1966171168
      %v388 = vunpack.c.0.s8 %v387
      %v389 = vlaneseq
      %v390 = vshrl.u32 %v389, 7
      %v391 = vsub.s32 %v388, %v390
      %v392 = vrot.slane %v376, %v391
      %v394 = vunpack.c.l.s4 1966171168
      %v395 = vunpack.c.0.s8 %v394
      %v396 = vlaneseq
      %v397 = vshrl.u32 %v396, 7
      %v398 = vsub.s32 %v395, %v397
      %v399 = vrot.slane %v377, %v398
      %v401 = vunpack.c.l.s4 1966171168
      %v402 = vunpack.c.0.s8 %v401
      %v403 = vlaneseq
      %v404 = vshrl.u32 %v403, 7
      %v405 = vsub.s32 %v402, %v404
      %v406 = vrot.slane %v378, %v405
      %v407 = vcombine.high %v385, %v385
      %v408 = vcombine.high %v392, %v392
      %v409 = vcombine.high %v399, %v399
      %v410 = vcombine.high %v406, %v406
      %v547 = vunpack.c.l.b16 %v233
      %v548 = vunpack.c.h.b16 %v233
      %v549 = vunpack.c.l.b16 %v234
      %v550 = vunpack.c.h.b16 %v234
      %v551 = vunpack.c.l.b16 %v235
      %v552 = vunpack.c.h.b16 %v235
      %v553 = vunpack.c.l.b16 %v236
      %v554 = vunpack.c.h.b16 %v236
      %v555 = vunpack.c.l.b16 %v237
      %v556 = vunpack.c.h.b16 %v237
      %v557 = vunpack.c.l.b16 %v238
      %v558 = vunpack.c.h.b16 %v238
      %v559 = vunpack.c.l.b16 %v239
      %v560 = vunpack.c.h.b16 %v239
      %v561 = vunpack.c.l.b16 %v240
      %v562 = vunpack.c.h.b16 %v240
      %v563 = vunpack.c.l.b16 %v241
      %v564 = vunpack.c.h.b16 %v241
      %v565 = vunpack.c.l.b16 %v242
      %v566 = vunpack.c.h.b16 %v242
      %v567 = vunpack.c.l.b16 %v243
      %v568 = vunpack.c.h.b16 %v243
      %v569 = vunpack.c.l.b16 %v244
      %v570 = vunpack.c.h.b16 %v244
      %v571 = vunpack.c.l.b16 %v245
      %v572 = vunpack.c.h.b16 %v245
      %v573 = vunpack.c.l.b16 %v246
      %v574 = vunpack.c.h.b16 %v246
      %v575 = vunpack.c.l.b16 %v247
      %v576 = vunpack.c.h.b16 %v247
      %v577 = vunpack.c.l.b16 %v248
      %v578 = vunpack.c.h.b16 %v248
      %v579 = vunpack.c.l.b16 %v249
      %v580 = vunpack.c.h.b16 %v249
      %v581 = vunpack.c.l.b16 %v250
      %v582 = vunpack.c.h.b16 %v250
      %v583 = vunpack.c.l.b16 %v251
      %v584 = vunpack.c.h.b16 %v251
      %v585 = vunpack.c.l.b16 %v252
      %v586 = vunpack.c.h.b16 %v252
      %v587 = vunpack.c.l.b16 %v253
      %v588 = vunpack.c.h.b16 %v253
      %v589 = vunpack.c.l.b16 %v254
      %v590 = vunpack.c.h.b16 %v254
      %v591 = vunpack.c.l.b16 %v255
      %v592 = vunpack.c.h.b16 %v255
      %v593 = vunpack.c.l.b16 %v256
      %v594 = vunpack.c.h.b16 %v256
      %v595 = vunpack.c.l.b16 %v257
      %v596 = vunpack.c.h.b16 %v257
      %v597 = vunpack.c.l.b16 %v258
      %v598 = vunpack.c.h.b16 %v258
      %v599 = vunpack.c.l.b16 %v259
      %v600 = vunpack.c.h.b16 %v259
      %v601 = vunpack.c.l.b16 %v260
      %v602 = vunpack.c.h.b16 %v260
      %v603 = vunpack.c.l.b16 %v261
      %v604 = vunpack.c.h.b16 %v261
      %v605 = vunpack.c.l.b16 %v262
      %v606 = vunpack.c.h.b16 %v262
      %v607 = vunpack.c.l.b16 %v263
      %v608 = vunpack.c.h.b16 %v263
      %v609 = vunpack.c.l.b16 %v264
      %v610 = vunpack.c.h.b16 %v264
      %v611 = vunpack.c.l.b16 %v265
      %v612 = vunpack.c.h.b16 %v265
      %v613 = vunpack.c.l.b16 %v266
      %v614 = vunpack.c.h.b16 %v266
      %v615 = vunpack.c.l.b16 %v267
      %v616 = vunpack.c.h.b16 %v267
      %v617 = vunpack.c.l.b16 %v268
      %v618 = vunpack.c.h.b16 %v268
      %v619 = vunpack.c.l.b16 %v269
      %v620 = vunpack.c.h.b16 %v269
      %v621 = vunpack.c.l.b16 %v270
      %v622 = vunpack.c.h.b16 %v270
      %v623 = vunpack.c.l.b16 %v271
      %v624 = vunpack.c.h.b16 %v271
      %v625 = vunpack.c.l.b16 %v272
      %v626 = vunpack.c.h.b16 %v272
      %v627 = vunpack.c.l.b16 %v273
      %v628 = vunpack.c.h.b16 %v273
      %v629 = vunpack.c.l.b16 %v274
      %v630 = vunpack.c.h.b16 %v274
      %v631 = vunpack.c.l.b16 %v275
      %v632 = vunpack.c.h.b16 %v275
      %v633 = vunpack.c.l.b16 %v276
      %v634 = vunpack.c.h.b16 %v276
      %v635 = vunpack.c.l.b16 %v277
      %v636 = vunpack.c.h.b16 %v277
      %v637 = vunpack.c.l.b16 %v278
      %v638 = vunpack.c.h.b16 %v278
      %v639 = vunpack.c.l.b16 %v279
      %v640 = vunpack.c.h.b16 %v279
      %v641 = vunpack.c.l.b16 %v280
      %v642 = vunpack.c.h.b16 %v280
      %v643 = vunpack.c.l.b16 %v281
      %v644 = vunpack.c.h.b16 %v281
      %v645 = vunpack.c.l.b16 %v282
      %v646 = vunpack.c.h.b16 %v282
      %v647 = vunpack.c.l.b16 %v283
      %v648 = vunpack.c.h.b16 %v283
      %v649 = vunpack.c.l.b16 %v284
      %v650 = vunpack.c.h.b16 %v284
      %v651 = vunpack.c.l.b16 %v285
      %v652 = vunpack.c.h.b16 %v285
      %v653 = vunpack.c.l.b16 %v286
      %v654 = vunpack.c.h.b16 %v286
      %v655 = vunpack.c.l.b16 %v287
      %v656 = vunpack.c.h.b16 %v287
      %v657 = vunpack.c.l.b16 %v288
      %v658 = vunpack.c.h.b16 %v288
      %v659 = vunpack.c.l.b16 %v289
      %v660 = vunpack.c.h.b16 %v289
      %v661 = vunpack.c.l.b16 %v290
      %v662 = vunpack.c.h.b16 %v290
      %v663 = vunpack.c.l.b16 %v291
      %v664 = vunpack.c.h.b16 %v291
      %v665 = vunpack.c.l.b16 %v292
      %v666 = vunpack.c.h.b16 %v292
      %v667 = vunpack.c.l.b16 %v293
      %v668 = vunpack.c.h.b16 %v293
      %v669 = vunpack.c.l.b16 %v294
      %v670 = vunpack.c.h.b16 %v294
      %v671 = vunpack.c.l.b16 %v295
      %v672 = vunpack.c.h.b16 %v295
      %v673 = vunpack.c.l.b16 %v296
      %v674 = vunpack.c.h.b16 %v296
      %v675 = vunpack.c.l.b16 %v297
      %v676 = vunpack.c.h.b16 %v297
      %v677 = vunpack.c.l.b16 %v298
      %v678 = vunpack.c.h.b16 %v298
      %v679 = vunpack.c.l.b16 %v299
      %v680 = vunpack.c.h.b16 %v299
      %v681 = vunpack.c.l.b16 %v300
      %v682 = vunpack.c.h.b16 %v300
      %v683 = vunpack.c.l.b16 %v301
      %v684 = vunpack.c.h.b16 %v301
      %v685 = vunpack.c.l.b16 %v302
      %v686 = vunpack.c.h.b16 %v302
      %v687 = vunpack.c.l.b16 %v303
      %v688 = vunpack.c.h.b16 %v303
      %v689 = vunpack.c.l.b16 %v304
      %v690 = vunpack.c.h.b16 %v304
      %v691 = vunpack.c.l.b16 %v305
      %v692 = vunpack.c.h.b16 %v305
      %v693 = vunpack.c.l.b16 %v306
      %v694 = vunpack.c.h.b16 %v306
      %v695 = vunpack.c.l.b16 %v307
      %v696 = vunpack.c.h.b16 %v307
      %v697 = vunpack.c.l.b16 %v308
      %v698 = vunpack.c.h.b16 %v308
      %v699 = vunpack.c.l.b16 %v309
      %v700 = vunpack.c.h.b16 %v309
      %v701 = vunpack.c.l.b16 %v310
      %v702 = vunpack.c.h.b16 %v310
      %v703 = vunpack.c.l.b16 %v311
      %v704 = vunpack.c.h.b16 %v311
      %v705 = vunpack.c.l.b16 %v312
      %v706 = vunpack.c.h.b16 %v312
      %v707 = vunpack.c.l.b16 %v313
      %v708 = vunpack.c.h.b16 %v313
      %v709 = vunpack.c.l.b16 %v314
      %v710 = vunpack.c.h.b16 %v314
      %v711 = vunpack.c.l.b16 %v315
      %v712 = vunpack.c.h.b16 %v315
      %v713 = vunpack.c.l.b16 %v316
      %v714 = vunpack.c.h.b16 %v316
      %v715 = vunpack.c.l.b16 %v317
      %v716 = vunpack.c.h.b16 %v317
      %v717 = vunpack.c.l.b16 %v318
      %v718 = vunpack.c.h.b16 %v318
      %v719 = vunpack.c.l.b16 %v319
      %v720 = vunpack.c.h.b16 %v319
      %v721 = vunpack.c.l.b16 %v320
      %v722 = vunpack.c.h.b16 %v320
      %v723 = vunpack.c.l.b16 %v321
      %v724 = vunpack.c.h.b16 %v321
      %v725 = vunpack.c.l.b16 %v322
      %v726 = vunpack.c.h.b16 %v322
      %v727 = vunpack.c.l.b16 %v323
      %v728 = vunpack.c.h.b16 %v323
      %v729 = vunpack.c.l.b16 %v324
      %v730 = vunpack.c.h.b16 %v324
      %v731 = vunpack.c.l.b16 %v325
      %v732 = vunpack.c.h.b16 %v325
      %v733 = vunpack.c.l.b16 %v326
      %v734 = vunpack.c.h.b16 %v326
      %v735 = vunpack.c.l.b16 %v327
      %v736 = vunpack.c.h.b16 %v327
      %v737 = vunpack.c.l.b16 %v328
      %v738 = vunpack.c.h.b16 %v328
      %v739 = vunpack.c.l.b16 %v329
      %v740 = vunpack.c.h.b16 %v329
      %v741 = vunpack.c.l.b16 %v330
      %v742 = vunpack.c.h.b16 %v330
      %v743 = vunpack.c.l.b16 %v331
      %v744 = vunpack.c.h.b16 %v331
      %v745 = vunpack.c.l.b16 %v332
      %v746 = vunpack.c.h.b16 %v332
      %v747 = vunpack.c.l.b16 %v333
      %v748 = vunpack.c.h.b16 %v333
      %v749 = vunpack.c.l.b16 %v334
      %v750 = vunpack.c.h.b16 %v334
      %v751 = vunpack.c.l.b16 %v335
      %v752 = vunpack.c.h.b16 %v335
      %v753 = vunpack.c.l.b16 %v336
      %v754 = vunpack.c.h.b16 %v336
      %v755 = vunpack.c.l.b16 %v337
      %v756 = vunpack.c.h.b16 %v337
      %v757 = vunpack.c.l.b16 %v338
      %v758 = vunpack.c.h.b16 %v338
      %v759 = vunpack.c.l.b16 %v339
      %v760 = vunpack.c.h.b16 %v339
      %v761 = vunpack.c.l.b16 %v340
      %v762 = vunpack.c.h.b16 %v340
      %v763 = vunpack.c.l.b16 %v341
      %v764 = vunpack.c.h.b16 %v341
      %v765 = vunpack.c.l.b16 %v342
      %v766 = vunpack.c.h.b16 %v342
      %v767 = vunpack.c.l.b16 %v343
      %v768 = vunpack.c.h.b16 %v343
      %v769 = vunpack.c.l.b16 %v344
      %v770 = vunpack.c.h.b16 %v344
      %v771 = vunpack.c.l.b16 %v345
      %v772 = vunpack.c.h.b16 %v345
      %v773 = vunpack.c.l.b16 %v346
      %v774 = vunpack.c.h.b16 %v346
      %v775 = vunpack.c.l.b16 %v347
      %v776 = vunpack.c.h.b16 %v347
      %v777 = vunpack.c.l.b16 %v348
      %v778 = vunpack.c.h.b16 %v348
      %v779 = vunpack.c.l.b16 %v349
      %v780 = vunpack.c.h.b16 %v349
      %v781 = vunpack.c.l.b16 %v350
      %v782 = vunpack.c.h.b16 %v350
      %v783 = vunpack.c.l.b16 %v351
      %v784 = vunpack.c.h.b16 %v351
      %v785 = vunpack.c.l.b16 %v352
      %v786 = vunpack.c.h.b16 %v352
      %v787 = vunpack.c.l.b16 %v353
      %v788 = vunpack.c.h.b16 %v353
      %v789 = vunpack.c.l.b16 %v354
      %v790 = vunpack.c.h.b16 %v354
      %v791 = vunpack.c.l.b16 %v355
      %v792 = vunpack.c.h.b16 %v355
      %v793 = vunpack.c.l.b16 %v356
      %v794 = vunpack.c.h.b16 %v356
      %v795 = vunpack.c.l.b16 %v357
      %v796 = vunpack.c.h.b16 %v357
      %v797 = vunpack.c.l.b16 %v358
      %v798 = vunpack.c.h.b16 %v358
      %v799 = vunpack.c.l.b16 %v359
      %v800 = vunpack.c.h.b16 %v359
      %v801 = vunpack.c.l.b16 %v360
      %v802 = vunpack.c.h.b16 %v360
      %v803 = vpack.c.b16 %v549, %v547
      %v804 = vpack.c.b16 %v550, %v548
      %v805 = vpack.c.b16 %v553, %v551
      %v806 = vpack.c.b16 %v554, %v552
      %v807 = vpack.c.b16 %v557, %v555
      %v808 = vpack.c.b16 %v558, %v556
      %v809 = vpack.c.b16 %v561, %v559
      %v810 = vpack.c.b16 %v562, %v560
      %v811 = vpack.c.b16 %v565, %v563
      %v812 = vpack.c.b16 %v566, %v564
      %v813 = vpack.c.b16 %v569, %v567
      %v814 = vpack.c.b16 %v570, %v568
      %v815 = vpack.c.b16 %v573, %v571
      %v816 = vpack.c.b16 %v574, %v572
      %v817 = vpack.c.b16 %v577, %v575
      %v818 = vpack.c.b16 %v578, %v576
      %v819 = vpack.c.b16 %v581, %v579
      %v820 = vpack.c.b16 %v582, %v580
      %v821 = vpack.c.b16 %v585, %v583
      %v822 = vpack.c.b16 %v586, %v584
      %v823 = vpack.c.b16 %v589, %v587
      %v824 = vpack.c.b16 %v590, %v588
      %v825 = vpack.c.b16 %v593, %v591
      %v826 = vpack.c.b16 %v594, %v592
      %v827 = vpack.c.b16 %v597, %v595
      %v828 = vpack.c.b16 %v598, %v596
      %v829 = vpack.c.b16 %v601, %v599
      %v830 = vpack.c.b16 %v602, %v600
      %v831 = vpack.c.b16 %v605, %v603
      %v832 = vpack.c.b16 %v606, %v604
      %v833 = vpack.c.b16 %v609, %v607
      %v834 = vpack.c.b16 %v610, %v608
      %v835 = vpack.c.b16 %v613, %v611
      %v836 = vpack.c.b16 %v614, %v612
      %v837 = vpack.c.b16 %v617, %v615
      %v838 = vpack.c.b16 %v618, %v616
      %v839 = vpack.c.b16 %v621, %v619
      %v840 = vpack.c.b16 %v622, %v620
      %v841 = vpack.c.b16 %v625, %v623
      %v842 = vpack.c.b16 %v626, %v624
      %v843 = vpack.c.b16 %v629, %v627
      %v844 = vpack.c.b16 %v630, %v628
      %v845 = vpack.c.b16 %v633, %v631
      %v846 = vpack.c.b16 %v634, %v632
      %v847 = vpack.c.b16 %v637, %v635
      %v848 = vpack.c.b16 %v638, %v636
      %v849 = vpack.c.b16 %v641, %v639
      %v850 = vpack.c.b16 %v642, %v640
      %v851 = vpack.c.b16 %v645, %v643
      %v852 = vpack.c.b16 %v646, %v644
      %v853 = vpack.c.b16 %v649, %v647
      %v854 = vpack.c.b16 %v650, %v648
      %v855 = vpack.c.b16 %v653, %v651
      %v856 = vpack.c.b16 %v654, %v652
      %v857 = vpack.c.b16 %v657, %v655
      %v858 = vpack.c.b16 %v658, %v656
      %v859 = vpack.c.b16 %v661, %v659
      %v860 = vpack.c.b16 %v662, %v660
      %v861 = vpack.c.b16 %v665, %v663
      %v862 = vpack.c.b16 %v666, %v664
      %v863 = vpack.c.b16 %v669, %v667
      %v864 = vpack.c.b16 %v670, %v668
      %v865 = vpack.c.b16 %v673, %v671
      %v866 = vpack.c.b16 %v674, %v672
      %v867 = vpack.c.b16 %v677, %v675
      %v868 = vpack.c.b16 %v678, %v676
      %v869 = vpack.c.b16 %v681, %v679
      %v870 = vpack.c.b16 %v682, %v680
      %v871 = vpack.c.b16 %v685, %v683
      %v872 = vpack.c.b16 %v686, %v684
      %v873 = vpack.c.b16 %v689, %v687
      %v874 = vpack.c.b16 %v690, %v688
      %v875 = vpack.c.b16 %v693, %v691
      %v876 = vpack.c.b16 %v694, %v692
      %v877 = vpack.c.b16 %v697, %v695
      %v878 = vpack.c.b16 %v698, %v696
      %v879 = vpack.c.b16 %v701, %v699
      %v880 = vpack.c.b16 %v702, %v700
      %v881 = vpack.c.b16 %v705, %v703
      %v882 = vpack.c.b16 %v706, %v704
      %v883 = vpack.c.b16 %v709, %v707
      %v884 = vpack.c.b16 %v710, %v708
      %v885 = vpack.c.b16 %v713, %v711
      %v886 = vpack.c.b16 %v714, %v712
      %v887 = vpack.c.b16 %v717, %v715
      %v888 = vpack.c.b16 %v718, %v716
      %v889 = vpack.c.b16 %v721, %v719
      %v890 = vpack.c.b16 %v722, %v720
      %v891 = vpack.c.b16 %v725, %v723
      %v892 = vpack.c.b16 %v726, %v724
      %v893 = vpack.c.b16 %v729, %v727
      %v894 = vpack.c.b16 %v730, %v728
      %v895 = vpack.c.b16 %v733, %v731
      %v896 = vpack.c.b16 %v734, %v732
      %v897 = vpack.c.b16 %v737, %v735
      %v898 = vpack.c.b16 %v738, %v736
      %v899 = vpack.c.b16 %v741, %v739
      %v900 = vpack.c.b16 %v742, %v740
      %v901 = vpack.c.b16 %v745, %v743
      %v902 = vpack.c.b16 %v746, %v744
      %v903 = vpack.c.b16 %v749, %v747
      %v904 = vpack.c.b16 %v750, %v748
      %v905 = vpack.c.b16 %v753, %v751
      %v906 = vpack.c.b16 %v754, %v752
      %v907 = vpack.c.b16 %v757, %v755
      %v908 = vpack.c.b16 %v758, %v756
      %v909 = vpack.c.b16 %v761, %v759
      %v910 = vpack.c.b16 %v762, %v760
      %v911 = vpack.c.b16 %v765, %v763
      %v912 = vpack.c.b16 %v766, %v764
      %v913 = vpack.c.b16 %v769, %v767
      %v914 = vpack.c.b16 %v770, %v768
      %v915 = vpack.c.b16 %v773, %v771
      %v916 = vpack.c.b16 %v774, %v772
      %v917 = vpack.c.b16 %v777, %v775
      %v918 = vpack.c.b16 %v778, %v776
      %v919 = vpack.c.b16 %v781, %v779
      %v920 = vpack.c.b16 %v782, %v780
      %v921 = vpack.c.b16 %v785, %v783
      %v922 = vpack.c.b16 %v786, %v784
      %v923 = vpack.c.b16 %v789, %v787
      %v924 = vpack.c.b16 %v790, %v788
      %v925 = vpack.c.b16 %v793, %v791
      %v926 = vpack.c.b16 %v794, %v792
      %v927 = vpack.c.b16 %v797, %v795
      %v928 = vpack.c.b16 %v798, %v796
      %v929 = vpack.c.b16 %v801, %v799
      %v930 = vpack.c.b16 %v802, %v800
      %1059 = vmatprep.subr.bf16.mxu0 %v804
      %1060 = vmatpush1.bf16.msra.mxu0 %v803
      %1061 = vmatprep.subr.bf16.mxu0 %v806
      %1062 = vmatpush1.bf16.msra.mxu0 %v805
      %1063 = vmatprep.subr.bf16.mxu0 %v808
      %1064 = vmatpush1.bf16.msra.mxu0 %v807
      %1065 = vmatprep.subr.bf16.mxu0 %v810
      %1066 = vmatpush1.bf16.msra.mxu0 %v809
      %1067 = vmatprep.subr.bf16.mxu0 %v812
      %1068 = vmatpush1.bf16.msra.mxu0 %v811
      %1069 = vmatprep.subr.bf16.mxu0 %v814
      %1070 = vmatpush1.bf16.msra.mxu0 %v813
      %1071 = vmatprep.subr.bf16.mxu0 %v816
      %1072 = vmatpush1.bf16.msra.mxu0 %v815
      %1073 = vmatprep.subr.bf16.mxu0 %v818
      %1074 = vmatpush1.bf16.msra.mxu0 %v817
      %1075 = vmatprep.subr.bf16.mxu0 %v820
      %1076 = vmatpush1.bf16.msra.mxu0 %v819
      %1077 = vmatprep.subr.bf16.mxu0 %v822
      %1078 = vmatpush1.bf16.msra.mxu0 %v821
      %1079 = vmatprep.subr.bf16.mxu0 %v824
      %1080 = vmatpush1.bf16.msra.mxu0 %v823
      %1081 = vmatprep.subr.bf16.mxu0 %v826
      %1082 = vmatpush1.bf16.msra.mxu0 %v825
      %1083 = vmatprep.subr.bf16.mxu0 %v828
      %1084 = vmatpush1.bf16.msra.mxu0 %v827
      %1085 = vmatprep.subr.bf16.mxu0 %v830
      %1086 = vmatpush1.bf16.msra.mxu0 %v829
      %1087 = vmatprep.subr.bf16.mxu0 %v832
      %1088 = vmatpush1.bf16.msra.mxu0 %v831
      %1089 = vmatprep.subr.bf16.mxu0 %v834
      %1090 = vmatpush1.bf16.msra.mxu0 %v833
      %1091 = vmatprep.mubr.bf16.mxu0 %v399
      %1092 = vmatmul.mubr.bf16.gmra.mrb[0].mxu0 %v385
      %v1093 = vpop.f32.mrb[0].mxu0
      %v1094 = vadd.f32 0.0, %v1093
      %v1095 = vpop.f32.mrb[0].mxu0
      %v1096 = vadd.f32 0.0, %v1095
      %v1097 = vpop.f32.mrb[0].mxu0
      %v1098 = vpop.f32.mrb[0].mxu0
      %1099 = vdwg.mxu0
      %1100 = vmatprep.subr.bf16.mxu0 %v836
      %1101 = vmatpush1.bf16.msra.mxu0 %v835
      %1102 = vmatprep.subr.bf16.mxu0 %v838
      %1103 = vmatpush1.bf16.msra.mxu0 %v837
      %1104 = vmatprep.subr.bf16.mxu0 %v840
      %1105 = vmatpush1.bf16.msra.mxu0 %v839
      %1106 = vmatprep.subr.bf16.mxu0 %v842
      %1107 = vmatpush1.bf16.msra.mxu0 %v841
      %1108 = vmatprep.subr.bf16.mxu0 %v844
      %1109 = vmatpush1.bf16.msra.mxu0 %v843
      %1110 = vmatprep.subr.bf16.mxu0 %v846
      %1111 = vmatpush1.bf16.msra.mxu0 %v845
      %1112 = vmatprep.subr.bf16.mxu0 %v848
      %1113 = vmatpush1.bf16.msra.mxu0 %v847
      %1114 = vmatprep.subr.bf16.mxu0 %v850
      %1115 = vmatpush1.bf16.msra.mxu0 %v849
      %1116 = vmatprep.subr.bf16.mxu0 %v852
      %1117 = vmatpush1.bf16.msra.mxu0 %v851
      %1118 = vmatprep.subr.bf16.mxu0 %v854
      %1119 = vmatpush1.bf16.msra.mxu0 %v853
      %1120 = vmatprep.subr.bf16.mxu0 %v856
      %1121 = vmatpush1.bf16.msra.mxu0 %v855
      %1122 = vmatprep.subr.bf16.mxu0 %v858
      %1123 = vmatpush1.bf16.msra.mxu0 %v857
      %1124 = vmatprep.subr.bf16.mxu0 %v860
      %1125 = vmatpush1.bf16.msra.mxu0 %v859
      %1126 = vmatprep.subr.bf16.mxu0 %v862
      %1127 = vmatpush1.bf16.msra.mxu0 %v861
      %1128 = vmatprep.subr.bf16.mxu0 %v864
      %1129 = vmatpush1.bf16.msra.mxu0 %v863
      %1130 = vmatprep.subr.bf16.mxu0 %v866
      %1131 = vmatpush1.bf16.msra.mxu0 %v865
      %1132 = vmatprep.mubr.bf16.mxu0 %v409
      %1133 = vmatmul.mubr.bf16.gmra.mrb[0].mxu0 %v407
      %v1134 = vpop.f32.mrb[0].mxu0
      %v1135 = vadd.f32 %v1094, %v1134
      %v1136 = vpop.f32.mrb[0].mxu0
      %v1137 = vadd.f32 %v1096, %v1136
      %v1138 = vpop.f32.mrb[0].mxu0
      %v1139 = vpop.f32.mrb[0].mxu0
      %1140 = vdwg.mxu0
      %1141 = vmatprep.subr.bf16.mxu0 %v868
      %1142 = vmatpush1.bf16.msra.mxu0 %v867
      %1143 = vmatprep.subr.bf16.mxu0 %v870
      %1144 = vmatpush1.bf16.msra.mxu0 %v869
      %1145 = vmatprep.subr.bf16.mxu0 %v872
      %1146 = vmatpush1.bf16.msra.mxu0 %v871
      %1147 = vmatprep.subr.bf16.mxu0 %v874
      %1148 = vmatpush1.bf16.msra.mxu0 %v873
      %1149 = vmatprep.subr.bf16.mxu0 %v876
      %1150 = vmatpush1.bf16.msra.mxu0 %v875
      %1151 = vmatprep.subr.bf16.mxu0 %v878
      %1152 = vmatpush1.bf16.msra.mxu0 %v877
      %1153 = vmatprep.subr.bf16.mxu0 %v880
      %1154 = vmatpush1.bf16.msra.mxu0 %v879
      %1155 = vmatprep.subr.bf16.mxu0 %v882
      %1156 = vmatpush1.bf16.msra.mxu0 %v881
      %1157 = vmatprep.subr.bf16.mxu0 %v884
      %1158 = vmatpush1.bf16.msra.mxu0 %v883
      %1159 = vmatprep.subr.bf16.mxu0 %v886
      %1160 = vmatpush1.bf16.msra.mxu0 %v885
      %1161 = vmatprep.subr.bf16.mxu0 %v888
      %1162 = vmatpush1.bf16.msra.mxu0 %v887
      %1163 = vmatprep.subr.bf16.mxu0 %v890
      %1164 = vmatpush1.bf16.msra.mxu0 %v889
      %1165 = vmatprep.subr.bf16.mxu0 %v892
      %1166 = vmatpush1.bf16.msra.mxu0 %v891
      %1167 = vmatprep.subr.bf16.mxu0 %v894
      %1168 = vmatpush1.bf16.msra.mxu0 %v893
      %1169 = vmatprep.subr.bf16.mxu0 %v896
      %1170 = vmatpush1.bf16.msra.mxu0 %v895
      %1171 = vmatprep.subr.bf16.mxu0 %v898
      %1172 = vmatpush1.bf16.msra.mxu0 %v897
      %1173 = vmatprep.mubr.bf16.mxu0 %v406
      %1174 = vmatmul.mubr.bf16.gmra.mrb[0].mxu0 %v392
      %v1175 = vpop.f32.mrb[0].mxu0
      %v1176 = vadd.f32 %v1135, %v1175
      %v1177 = vpop.f32.mrb[0].mxu0
      %v1178 = vadd.f32 %v1137, %v1177
      %v1179 = vpop.f32.mrb[0].mxu0
      %v1180 = vpop.f32.mrb[0].mxu0
      %1181 = vdwg.mxu0
      %1182 = vmatprep.subr.bf16.mxu0 %v900
      %1183 = vmatpush1.bf16.msra.mxu0 %v899
      %1184 = vmatprep.subr.bf16.mxu0 %v902
      %1185 = vmatpush1.bf16.msra.mxu0 %v901
      %1186 = vmatprep.subr.bf16.mxu0 %v904
      %1187 = vmatpush1.bf16.msra.mxu0 %v903
      %1188 = vmatprep.subr.bf16.mxu0 %v906
      %1189 = vmatpush1.bf16.msra.mxu0 %v905
      %1190 = vmatprep.subr.bf16.mxu0 %v908
      %1191 = vmatpush1.bf16.msra.mxu0 %v907
      %1192 = vmatprep.subr.bf16.mxu0 %v910
      %1193 = vmatpush1.bf16.msra.mxu0 %v909
      %1194 = vmatprep.subr.bf16.mxu0 %v912
      %1195 = vmatpush1.bf16.msra.mxu0 %v911
      %1196 = vmatprep.subr.bf16.mxu0 %v914
      %1197 = vmatpush1.bf16.msra.mxu0 %v913
      %1198 = vmatprep.subr.bf16.mxu0 %v916
      %1199 = vmatpush1.bf16.msra.mxu0 %v915
      %1200 = vmatprep.subr.bf16.mxu0 %v918
      %1201 = vmatpush1.bf16.msra.mxu0 %v917
      %1202 = vmatprep.subr.bf16.mxu0 %v920
      %1203 = vmatpush1.bf16.msra.mxu0 %v919
      %1204 = vmatprep.subr.bf16.mxu0 %v922
      %1205 = vmatpush1.bf16.msra.mxu0 %v921
      %1206 = vmatprep.subr.bf16.mxu0 %v924
      %1207 = vmatpush1.bf16.msra.mxu0 %v923
      %1208 = vmatprep.subr.bf16.mxu0 %v926
      %1209 = vmatpush1.bf16.msra.mxu0 %v925
      %1210 = vmatprep.subr.bf16.mxu0 %v928
      %1211 = vmatpush1.bf16.msra.mxu0 %v927
      %1212 = vmatprep.subr.bf16.mxu0 %v930
      %1213 = vmatpush1.bf16.msra.mxu0 %v929
      %1214 = vmatprep.mubr.bf16.mxu0 %v410
      %1215 = vmatmul.mubr.bf16.gmra.mrb[0].mxu0 %v408
      %v1216 = vpop.f32.mrb[0].mxu0
      %v1217 = vadd.f32 %v1176, %v1216
      %v1218 = vpop.f32.mrb[0].mxu0
      %v1219 = vadd.f32 %v1178, %v1218
      %v1220 = vpop.f32.mrb[0].mxu0
      %v1221 = vpop.f32.mrb[0].mxu0
      %1222 = vdwg.mxu0
      %v1225 = vcombine.low %v1217, %v1219
      %v1227 = vunpack.c.l.s4 1983009808
      %v1228 = vunpack.c.0.s8 %v1227
      %v1229 = vlaneseq
      %v1230 = vshrl.u32 %v1229, 7
      %v1231 = vsub.s32 %v1228, %v1230
      %v1232 = vrot.slane %v1225, %v1231
      %v1234 = vadd.f32 %v231, %v1232
      %1235 = vst [vmem:[#allocation2] sm:$0xf] %v1234
      %p1236 = scmp.eq.s32.totalorder %s20, 3
      // Predicated region
      $region33: #{gabor_cnn7_forward.13} parent=27 // pred_check
        %p1237 = pneg %p1236
      $region34: #{gabor_cnn7_forward.13} parent=27 // pred_check_branch
        %1239 = sbr.rel (%p1237) target = $region36
      $region35: #{gabor_cnn7_forward.13} parent=27 // pred_region
        %v1240 = vld [vmem:[#allocation2] sm:$0xf]
        %v1241 = vmax.f32 %v1240, 0.0
        %v1244 = vunpack.c.l.s4 1983009808
        %v1245 = vunpack.c.0.s8 %v1244
        %v1246 = vlaneseq
        %v1247 = vshrl.u32 %v1246, 7
        %v1248 = vsub.s32 %v1245, %v1247
        %v1249 = vrot.slane %v1241, %v1248
        %v1250 = vcombine.high %v1249, %v1249
        %v1253 = vpack.c.bf16 %v1249, %v1249
        %v1254 = vpack.c.bf16 %v1250, %v1250
        %v1257 = vcombine.low %v1253, %v1254
        %v1259 = vunpack.c.l.s4 1966171168
        %v1260 = vunpack.c.0.s8 %v1259
        %v1261 = vlaneseq
        %v1262 = vshrl.u32 %v1261, 7
        %v1263 = vsub.s32 %v1260, %v1262
        %v1264 = vrot.slane %v1257, %v1263
        %v1266 = vunpack.c.l.s4 1966171168
        %v1267 = vunpack.c.0.s8 %v1266
        %v1268 = vlaneseq
        %v1269 = vshrl.u32 %v1268, 7
        %v1270 = vsub.s32 %v1267, %v1269
        %v1271 = vrot.slane %v1264, %v1270
        %1273 = vst [vmem:[%s224] sm:$0x3] %v1271
      $region36: #{gabor_cnn7_forward.13} parent=27 // pred_fallthru
        _
      %s1274 = smul.u32 2, %s19
      %p1275 = scmp.lt.s32.totalorder %s18, 0
      %s1276 = scalar_select %p1275, %s18, 0
      %p1277 = scmp.lt.s32.totalorder %s1274, 1
      %s1278 = scalar_select %p1277, %s1274, 1
      %s1279 = smul.addr %s1276, 2
      %s1280 = sadd.s32 %s1278, %s1279
      %s1281 = scalar_lea.vmem %s2, %s1280
      // Predicated region
      $region37: #{gabor_cnn7_forward.13} parent=27 // pred_check
        %p1282 = pneg %p108
      $region38: #{gabor_cnn7_forward.13} parent=27 // pred_check_branch
        %1284 = sbr.rel (%p1282) target = $region40
      $region39: #{gabor_cnn7_forward.13} parent=27 // pred_region
        %s1285 = smul.u32 2, %s19
      $region40: #{gabor_cnn7_forward.13} parent=27 // pred_fallthru
        _
      // Predicated region
      $region41: #{gabor_cnn7_forward.13} parent=27 // pred_check
        %p1286 = pneg %p108
      $region42: #{gabor_cnn7_forward.13} parent=27 // pred_check_branch
        %1288 = sbr.rel (%p1286) target = $region44
      $region43: #{gabor_cnn7_forward.13} parent=27 // pred_region
        %s1289 = smul.u32 2, %s19
        %p1290 = scmp.lt.s32.totalorder %s18, 0
        %s1291 = scalar_select %p1290, %s18, 0
        %p1292 = scmp.lt.s32.totalorder %s1289, 1
        %s1293 = scalar_select %p1292, %s1289, 1
        %s1294 = smul.addr %s1291, 2
        %s1295 = sadd.s32 %s1293, %s1294
        %s1296 = scalar_lea.vmem %s2, %s1295
      $region44: #{gabor_cnn7_forward.13} parent=27 // pred_fallthru
        _
    $region28: #{gabor_cnn7_forward.13} parent=5 // pred_fallthru
      _
    %p1297 = scmp.le.s32.totalorder 2, %s8
    // Predicated region
    $region45: #{gabor_cnn7_forward.13} parent=5 // pred_check
      %p1298 = pneg %p1297
    $region46: #{gabor_cnn7_forward.13} parent=5 // pred_check_branch
      %1300 = sbr.rel (%p1298) target = $region48
    $region47: #{gabor_cnn7_forward.13} parent=5 // pred_region
      %s1301 = ssub.s32 %s8, 2
    $region48: #{gabor_cnn7_forward.13} parent=5 // pred_fallthru
      _
  $region6: #{gabor_cnn7_forward.13} parent=0 // loop_footer
    %s12 = sadd.s32 1, %s8
  $region7: #{gabor_cnn7_forward.13} parent=0 // loop_footer_branch
    %7 = sbr.rel target = $region3
  $region8: #{gabor_cnn7_forward.13} parent=0 // loop_exit
    _

// kernel: gabor_cnn7_forward.15
$region0: #{gabor_cnn7_forward.15}
  #allocation0 [shape = 'u32[]', space=smem, size = 0x4, offset = 0x4, fixed_abs, tag = 'smem constant byte address 0x4 - core index']
  #allocation1 [shape = 'u32[144,128]{1,0:T(1,128)}', space=vmem, size = 0x12000, scoped, tag = 'internal scratch']
  %s0 = inlined_call_operand.vmem [shape: bf16[2,1024], index: 0, kind: input, shape index: {}]
  %s1 = inlined_call_operand.vmem [shape: bf16[1024,128], index: 1, kind: input, shape index: {}]
  %s2 = inlined_call_operand.vmem [shape: f32[1,128], index: 2, kind: input, shape index: {}]
  %s3 = inlined_call_operand.hbm [shape: f32[2,128], index: 3, kind: output, shape index: {}]
  %s4 = sld [smem:[#allocation0]]
  $region22: #{gabor_cnn7_forward.15} parent=0
    _
  %s6 = ssub.s32 1, %s4
  %s7 = scalar_select 0, %s6, %s4
  $region1: #{gabor_cnn7_forward.15} parent=0
    #allocation2 [shape = 'u8[1024]{0}', space=vmem, size = 0x400, scoped, tag = 'output window, operand 0, single buffered']
    #allocation3 [shape = 's32[1]{0}', space=sflag, size = 0x4, scoped, tag = 'scoped memory for gabor_cnn7_forward.15']
    %8 = vsyncpa [#allocation3], 0
    // Predicated region
    $region2: #{gabor_cnn7_forward.15} parent=1 // pred_check
      _
    $region3: #{gabor_cnn7_forward.15} parent=1 // pred_check_branch
      %10 = sbr.rel (0) target = $region5
    $region4: #{gabor_cnn7_forward.15} parent=1 // pred_region
      _
    $region5: #{gabor_cnn7_forward.15} parent=1 // pred_fallthru
      _
    // Predicated region
    $region6: #{gabor_cnn7_forward.15} parent=1 // pred_check
      _
    $region7: #{gabor_cnn7_forward.15} parent=1 // pred_check_branch
      %12 = sbr.rel (0) target = $region9
    $region8: #{gabor_cnn7_forward.15} parent=1 // pred_region
      _
    $region9: #{gabor_cnn7_forward.15} parent=1 // pred_fallthru
      _
    // Predicated region
    $region10: #{gabor_cnn7_forward.15} parent=1 // pred_check
      _
    $region11: #{gabor_cnn7_forward.15} parent=1 // pred_check_branch
      %14 = sbr.rel (0) target = $region13
    $region12: #{gabor_cnn7_forward.15} parent=1 // pred_region
      _
    $region13: #{gabor_cnn7_forward.15} parent=1 // pred_fallthru
      _
    %v16 = vld [vmem:[%s0] sm:$0xff]
    %v17 = vld [vmem:[%s1] sm:$0xf]
    %v18 = vld [vmem:[%s1 + $0x4] sm:$0xf]
    %v19 = vld [vmem:[%s1 + $0x8] sm:$0xf]
    %v20 = vld [vmem:[%s1 + $0xc] sm:$0xf]
    %v21 = vld [vmem:[%s1 + $0x10] sm:$0xf]
    %v22 = vld [vmem:[%s1 + $0x14] sm:$0xf]
    %v23 = vld [vmem:[%s1 + $0x18] sm:$0xf]
    %v24 = vld [vmem:[%s1 + $0x1c] sm:$0xf]
    %v25 = vld [vmem:[%s1 + $0x20] sm:$0xf]
    %v26 = vld [vmem:[%s1 + $0x24] sm:$0xf]
    %v27 = vld [vmem:[%s1 + $0x28] sm:$0xf]
    %v28 = vld [vmem:[%s1 + $0x2c] sm:$0xf]
    %v29 = vld [vmem:[%s1 + $0x30] sm:$0xf]
    %v30 = vld [vmem:[%s1 + $0x34] sm:$0xf]
    %v31 = vld [vmem:[%s1 + $0x38] sm:$0xf]
    %v32 = vld [vmem:[%s1 + $0x3c] sm:$0xf]
    %v33 = vld [vmem:[%s1 + $0x40] sm:$0xf]
    %v34 = vld [vmem:[%s1 + $0x44] sm:$0xf]
    %v35 = vld [vmem:[%s1 + $0x48] sm:$0xf]
    %v36 = vld [vmem:[%s1 + $0x4c] sm:$0xf]
    %v37 = vld [vmem:[%s1 + $0x50] sm:$0xf]
    %v38 = vld [vmem:[%s1 + $0x54] sm:$0xf]
    %v39 = vld [vmem:[%s1 + $0x58] sm:$0xf]
    %v40 = vld [vmem:[%s1 + $0x5c] sm:$0xf]
    %v41 = vld [vmem:[%s1 + $0x60] sm:$0xf]
    %v42 = vld [vmem:[%s1 + $0x64] sm:$0xf]
    %v43 = vld [vmem:[%s1 + $0x68] sm:$0xf]
    %v44 = vld [vmem:[%s1 + $0x6c] sm:$0xf]
    %v45 = vld [vmem:[%s1 + $0x70] sm:$0xf]
    %v46 = vld [vmem:[%s1 + $0x74] sm:$0xf]
    %v47 = vld [vmem:[%s1 + $0x78] sm:$0xf]
    %v48 = vld [vmem:[%s1 + $0x7c] sm:$0xf]
    %v49 = vld [vmem:[%s1 + $0x80] sm:$0xf]
    %v50 = vld [vmem:[%s1 + $0x84] sm:$0xf]
    %v51 = vld [vmem:[%s1 + $0x88] sm:$0xf]
    %v52 = vld [vmem:[%s1 + $0x8c] sm:$0xf]
    %v53 = vld [vmem:[%s1 + $0x90] sm:$0xf]
    %v54 = vld [vmem:[%s1 + $0x94] sm:$0xf]
    %v55 = vld [vmem:[%s1 + $0x98] sm:$0xf]
    %v56 = vld [vmem:[%s1 + $0x9c] sm:$0xf]
    %v57 = vld [vmem:[%s1 + $0xa0] sm:$0xf]
    %v58 = vld [vmem:[%s1 + $0xa4] sm:$0xf]
    %v59 = vld [vmem:[%s1 + $0xa8] sm:$0xf]
    %v60 = vld [vmem:[%s1 + $0xac] sm:$0xf]
    %v61 = vld [vmem:[%s1 + $0xb0] sm:$0xf]
    %v62 = vld [vmem:[%s1 + $0xb4] sm:$0xf]
    %v63 = vld [vmem:[%s1 + $0xb8] sm:$0xf]
    %v64 = vld [vmem:[%s1 + $0xbc] sm:$0xf]
    %v65 = vld [vmem:[%s1 + $0xc0] sm:$0xf]
    %v66 = vld [vmem:[%s1 + $0xc4] sm:$0xf]
    %v67 = vld [vmem:[%s1 + $0xc8] sm:$0xf]
    %v68 = vld [vmem:[%s1 + $0xcc] sm:$0xf]
    %v69 = vld [vmem:[%s1 + $0xd0] sm:$0xf]
    %v70 = vld [vmem:[%s1 + $0xd4] sm:$0xf]
    %v71 = vld [vmem:[%s1 + $0xd8] sm:$0xf]
    %v72 = vld [vmem:[%s1 + $0xdc] sm:$0xf]
    %v73 = vld [vmem:[%s1 + $0xe0] sm:$0xf]
    %v74 = vld [vmem:[%s1 + $0xe4] sm:$0xf]
    %v75 = vld [vmem:[%s1 + $0xe8] sm:$0xf]
    %v76 = vld [vmem:[%s1 + $0xec] sm:$0xf]
    %v77 = vld [vmem:[%s1 + $0xf0] sm:$0xf]
    %v78 = vld [vmem:[%s1 + $0xf4] sm:$0xf]
    %v79 = vld [vmem:[%s1 + $0xf8] sm:$0xf]
    %v80 = vld [vmem:[%s1 + $0xfc] sm:$0xf]
    %v81 = vld [vmem:[%s1 + $0x100] sm:$0xf]
    %v82 = vld [vmem:[%s1 + $0x104] sm:$0xf]
    %v83 = vld [vmem:[%s1 + $0x108] sm:$0xf]
    %v84 = vld [vmem:[%s1 + $0x10c] sm:$0xf]
    %v85 = vld [vmem:[%s1 + $0x110] sm:$0xf]
    %v86 = vld [vmem:[%s1 + $0x114] sm:$0xf]
    %v87 = vld [vmem:[%s1 + $0x118] sm:$0xf]
    %v88 = vld [vmem:[%s1 + $0x11c] sm:$0xf]
    %v89 = vld [vmem:[%s1 + $0x120] sm:$0xf]
    %v90 = vld [vmem:[%s1 + $0x124] sm:$0xf]
    %v91 = vld [vmem:[%s1 + $0x128] sm:$0xf]
    %v92 = vld [vmem:[%s1 + $0x12c] sm:$0xf]
    %v93 = vld [vmem:[%s1 + $0x130] sm:$0xf]
    %v94 = vld [vmem:[%s1 + $0x134] sm:$0xf]
    %v95 = vld [vmem:[%s1 + $0x138] sm:$0xf]
    %v96 = vld [vmem:[%s1 + $0x13c] sm:$0xf]
    %v97 = vld [vmem:[%s1 + $0x140] sm:$0xf]
    %v98 = vld [vmem:[%s1 + $0x144] sm:$0xf]
    %v99 = vld [vmem:[%s1 + $0x148] sm:$0xf]
    %v100 = vld [vmem:[%s1 + $0x14c] sm:$0xf]
    %v101 = vld [vmem:[%s1 + $0x150] sm:$0xf]
    %v102 = vld [vmem:[%s1 + $0x154] sm:$0xf]
    %v103 = vld [vmem:[%s1 + $0x158] sm:$0xf]
    %v104 = vld [vmem:[%s1 + $0x15c] sm:$0xf]
    %v105 = vld [vmem:[%s1 + $0x160] sm:$0xf]
    %v106 = vld [vmem:[%s1 + $0x164] sm:$0xf]
    %v107 = vld [vmem:[%s1 + $0x168] sm:$0xf]
    %v108 = vld [vmem:[%s1 + $0x16c] sm:$0xf]
    %v109 = vld [vmem:[%s1 + $0x170] sm:$0xf]
    %v110 = vld [vmem:[%s1 + $0x174] sm:$0xf]
    %v111 = vld [vmem:[%s1 + $0x178] sm:$0xf]
    %v112 = vld [vmem:[%s1 + $0x17c] sm:$0xf]
    %v113 = vld [vmem:[%s1 + $0x180] sm:$0xf]
    %v114 = vld [vmem:[%s1 + $0x184] sm:$0xf]
    %v115 = vld [vmem:[%s1 + $0x188] sm:$0xf]
    %v116 = vld [vmem:[%s1 + $0x18c] sm:$0xf]
    %v117 = vld [vmem:[%s1 + $0x190] sm:$0xf]
    %v118 = vld [vmem:[%s1 + $0x194] sm:$0xf]
    %v119 = vld [vmem:[%s1 + $0x198] sm:$0xf]
    %v120 = vld [vmem:[%s1 + $0x19c] sm:$0xf]
    %v121 = vld [vmem:[%s1 + $0x1a0] sm:$0xf]
    %v122 = vld [vmem:[%s1 + $0x1a4] sm:$0xf]
    %v123 = vld [vmem:[%s1 + $0x1a8] sm:$0xf]
    %v124 = vld [vmem:[%s1 + $0x1ac] sm:$0xf]
    %v125 = vld [vmem:[%s1 + $0x1b0] sm:$0xf]
    %v126 = vld [vmem:[%s1 + $0x1b4] sm:$0xf]
    %v127 = vld [vmem:[%s1 + $0x1b8] sm:$0xf]
    %v128 = vld [vmem:[%s1 + $0x1bc] sm:$0xf]
    %v129 = vld [vmem:[%s1 + $0x1c0] sm:$0xf]
    %v130 = vld [vmem:[%s1 + $0x1c4] sm:$0xf]
    %v131 = vld [vmem:[%s1 + $0x1c8] sm:$0xf]
    %v132 = vld [vmem:[%s1 + $0x1cc] sm:$0xf]
    %v133 = vld [vmem:[%s1 + $0x1d0] sm:$0xf]
    %v134 = vld [vmem:[%s1 + $0x1d4] sm:$0xf]
    %v135 = vld [vmem:[%s1 + $0x1d8] sm:$0xf]
    %v136 = vld [vmem:[%s1 + $0x1dc] sm:$0xf]
    %v137 = vld [vmem:[%s1 + $0x1e0] sm:$0xf]
    %v138 = vld [vmem:[%s1 + $0x1e4] sm:$0xf]
    %v139 = vld [vmem:[%s1 + $0x1e8] sm:$0xf]
    %v140 = vld [vmem:[%s1 + $0x1ec] sm:$0xf]
    %v141 = vld [vmem:[%s1 + $0x1f0] sm:$0xf]
    %v142 = vld [vmem:[%s1 + $0x1f4] sm:$0xf]
    %v143 = vld [vmem:[%s1 + $0x1f8] sm:$0xf]
    %v144 = vld [vmem:[%s1 + $0x1fc] sm:$0xf]
    %v145 = vld [vmem:[%s2] sm:$0x1]
    %v147 = vlaneseq
    %v148 = vshrl.u32 %v147, 7
    %v149 = vsub.s32 0, %v148
    %v150 = vrot.slane %v145, %v149
    %v153 = vcombine.high %v16, %v16
    %v155 = vunpack.c.l.s4 1966171168
    %v156 = vunpack.c.0.s8 %v155
    %v157 = vlaneseq
    %v158 = vshrl.u32 %v157, 7
    %v159 = vsub.s32 %v156, %v158
    %v160 = vrot.slane %v16, %v159
    %v162 = vunpack.c.l.s4 1966171168
    %v163 = vunpack.c.0.s8 %v162
    %v164 = vlaneseq
    %v165 = vshrl.u32 %v164, 7
    %v166 = vsub.s32 %v163, %v165
    %v167 = vrot.slane %v153, %v166
    %v168 = vcombine.high %v160, %v160
    %v169 = vcombine.high %v167, %v167
    %v171 = vunpack.c.l.s4 1966171168
    %v172 = vunpack.c.0.s8 %v171
    %v173 = vlaneseq
    %v174 = vshrl.u32 %v173, 7
    %v175 = vsub.s32 %v172, %v174
    %v176 = vrot.slane %v160, %v175
    %v178 = vunpack.c.l.s4 1966171168
    %v179 = vunpack.c.0.s8 %v178
    %v180 = vlaneseq
    %v181 = vshrl.u32 %v180, 7
    %v182 = vsub.s32 %v179, %v181
    %v183 = vrot.slane %v167, %v182
    %v185 = vunpack.c.l.s4 1966171168
    %v186 = vunpack.c.0.s8 %v185
    %v187 = vlaneseq
    %v188 = vshrl.u32 %v187, 7
    %v189 = vsub.s32 %v186, %v188
    %v190 = vrot.slane %v168, %v189
    %v192 = vunpack.c.l.s4 1966171168
    %v193 = vunpack.c.0.s8 %v192
    %v194 = vlaneseq
    %v195 = vshrl.u32 %v194, 7
    %v196 = vsub.s32 %v193, %v195
    %v197 = vrot.slane %v169, %v196
    %v198 = vcombine.high %v176, %v176
    %v199 = vcombine.high %v183, %v183
    %v200 = vcombine.high %v190, %v190
    %v201 = vcombine.high %v197, %v197
    %v338 = vunpack.c.l.b16 %v17
    %v339 = vunpack.c.l.b16 %v18
    %v340 = vunpack.c.l.b16 %v19
    %v341 = vunpack.c.l.b16 %v20
    %v342 = vunpack.c.l.b16 %v21
    %v343 = vunpack.c.l.b16 %v22
    %v344 = vunpack.c.l.b16 %v23
    %v345 = vunpack.c.l.b16 %v24
    %v346 = vunpack.c.l.b16 %v25
    %v347 = vunpack.c.l.b16 %v26
    %v348 = vunpack.c.l.b16 %v27
    %v349 = vunpack.c.l.b16 %v28
    %v350 = vunpack.c.l.b16 %v29
    %v351 = vunpack.c.l.b16 %v30
    %v352 = vunpack.c.l.b16 %v31
    %v353 = vunpack.c.l.b16 %v32
    %v354 = vunpack.c.l.b16 %v33
    %v355 = vunpack.c.l.b16 %v34
    %v356 = vunpack.c.l.b16 %v35
    %v357 = vunpack.c.l.b16 %v36
    %v358 = vunpack.c.l.b16 %v37
    %v359 = vunpack.c.l.b16 %v38
    %v360 = vunpack.c.l.b16 %v39
    %v361 = vunpack.c.l.b16 %v40
    %v362 = vunpack.c.l.b16 %v41
    %v363 = vunpack.c.l.b16 %v42
    %v364 = vunpack.c.l.b16 %v43
    %v365 = vunpack.c.l.b16 %v44
    %v366 = vunpack.c.l.b16 %v45
    %v367 = vunpack.c.l.b16 %v46
    %v368 = vunpack.c.l.b16 %v47
    %v369 = vunpack.c.l.b16 %v48
    %v370 = vunpack.c.l.b16 %v49
    %v371 = vunpack.c.l.b16 %v50
    %v372 = vunpack.c.l.b16 %v51
    %v373 = vunpack.c.l.b16 %v52
    %v374 = vunpack.c.l.b16 %v53
    %v375 = vunpack.c.l.b16 %v54
    %v376 = vunpack.c.l.b16 %v55
    %v377 = vunpack.c.l.b16 %v56
    %v378 = vunpack.c.l.b16 %v57
    %v379 = vunpack.c.l.b16 %v58
    %v380 = vunpack.c.l.b16 %v59
    %v381 = vunpack.c.l.b16 %v60
    %v382 = vunpack.c.l.b16 %v61
    %v383 = vunpack.c.l.b16 %v62
    %v384 = vunpack.c.l.b16 %v63
    %v385 = vunpack.c.l.b16 %v64
    %v386 = vunpack.c.l.b16 %v65
    %v387 = vunpack.c.l.b16 %v66
    %v388 = vunpack.c.l.b16 %v67
    %v389 = vunpack.c.l.b16 %v68
    %v390 = vunpack.c.l.b16 %v69
    %v391 = vunpack.c.l.b16 %v70
    %v392 = vunpack.c.l.b16 %v71
    %v393 = vunpack.c.l.b16 %v72
    %v394 = vunpack.c.l.b16 %v73
    %v395 = vunpack.c.l.b16 %v74
    %v396 = vunpack.c.l.b16 %v75
    %v397 = vunpack.c.l.b16 %v76
    %v398 = vunpack.c.l.b16 %v77
    %v399 = vunpack.c.l.b16 %v78
    %v400 = vunpack.c.l.b16 %v79
    %v401 = vunpack.c.l.b16 %v80
    %v402 = vunpack.c.l.b16 %v81
    %v403 = vunpack.c.l.b16 %v82
    %v404 = vunpack.c.l.b16 %v83
    %v405 = vunpack.c.l.b16 %v84
    %v406 = vunpack.c.l.b16 %v85
    %v407 = vunpack.c.l.b16 %v86
    %v408 = vunpack.c.l.b16 %v87
    %v409 = vunpack.c.l.b16 %v88
    %v410 = vunpack.c.l.b16 %v89
    %v411 = vunpack.c.l.b16 %v90
    %v412 = vunpack.c.l.b16 %v91
    %v413 = vunpack.c.l.b16 %v92
    %v414 = vunpack.c.l.b16 %v93
    %v415 = vunpack.c.l.b16 %v94
    %v416 = vunpack.c.l.b16 %v95
    %v417 = vunpack.c.l.b16 %v96
    %v418 = vunpack.c.l.b16 %v97
    %v419 = vunpack.c.l.b16 %v98
    %v420 = vunpack.c.l.b16 %v99
    %v421 = vunpack.c.l.b16 %v100
    %v422 = vunpack.c.l.b16 %v101
    %v423 = vunpack.c.l.b16 %v102
    %v424 = vunpack.c.l.b16 %v103
    %v425 = vunpack.c.l.b16 %v104
    %v426 = vunpack.c.l.b16 %v105
    %v427 = vunpack.c.l.b16 %v106
    %v428 = vunpack.c.l.b16 %v107
    %v429 = vunpack.c.l.b16 %v108
    %v430 = vunpack.c.l.b16 %v109
    %v431 = vunpack.c.l.b16 %v110
    %v432 = vunpack.c.l.b16 %v111
    %v433 = vunpack.c.l.b16 %v112
    %v434 = vunpack.c.l.b16 %v113
    %v435 = vunpack.c.l.b16 %v114
    %v436 = vunpack.c.l.b16 %v115
    %v437 = vunpack.c.l.b16 %v116
    %v438 = vunpack.c.l.b16 %v117
    %v439 = vunpack.c.l.b16 %v118
    %v440 = vunpack.c.l.b16 %v119
    %v441 = vunpack.c.l.b16 %v120
    %v442 = vunpack.c.l.b16 %v121
    %v443 = vunpack.c.l.b16 %v122
    %v444 = vunpack.c.l.b16 %v123
    %v445 = vunpack.c.l.b16 %v124
    %v446 = vunpack.c.l.b16 %v125
    %v447 = vunpack.c.l.b16 %v126
    %v448 = vunpack.c.l.b16 %v127
    %v449 = vunpack.c.l.b16 %v128
    %v450 = vunpack.c.l.b16 %v129
    %v451 = vunpack.c.l.b16 %v130
    %v452 = vunpack.c.l.b16 %v131
    %v453 = vunpack.c.l.b16 %v132
    %v454 = vunpack.c.l.b16 %v133
    %v455 = vunpack.c.l.b16 %v134
    %v456 = vunpack.c.l.b16 %v135
    %v457 = vunpack.c.l.b16 %v136
    %v458 = vunpack.c.l.b16 %v137
    %v459 = vunpack.c.l.b16 %v138
    %v460 = vunpack.c.l.b16 %v139
    %v461 = vunpack.c.l.b16 %v140
    %v462 = vunpack.c.l.b16 %v141
    %v463 = vunpack.c.l.b16 %v142
    %v464 = vunpack.c.l.b16 %v143
    %v465 = vunpack.c.l.b16 %v144
    %v466 = vpack.c.b16 %v339, %v338
    %v467 = vpack.c.b16 %v341, %v340
    %v468 = vpack.c.b16 %v343, %v342
    %v469 = vpack.c.b16 %v345, %v344
    %v470 = vpack.c.b16 %v347, %v346
    %v471 = vpack.c.b16 %v349, %v348
    %v472 = vpack.c.b16 %v351, %v350
    %v473 = vpack.c.b16 %v353, %v352
    %v474 = vpack.c.b16 %v355, %v354
    %v475 = vpack.c.b16 %v357, %v356
    %v476 = vpack.c.b16 %v359, %v358
    %v477 = vpack.c.b16 %v361, %v360
    %v478 = vpack.c.b16 %v363, %v362
    %v479 = vpack.c.b16 %v365, %v364
    %v480 = vpack.c.b16 %v367, %v366
    %v481 = vpack.c.b16 %v369, %v368
    %v482 = vpack.c.b16 %v371, %v370
    %v483 = vpack.c.b16 %v373, %v372
    %v484 = vpack.c.b16 %v375, %v374
    %v485 = vpack.c.b16 %v377, %v376
    %v486 = vpack.c.b16 %v379, %v378
    %v487 = vpack.c.b16 %v381, %v380
    %v488 = vpack.c.b16 %v383, %v382
    %v489 = vpack.c.b16 %v385, %v384
    %v490 = vpack.c.b16 %v387, %v386
    %v491 = vpack.c.b16 %v389, %v388
    %v492 = vpack.c.b16 %v391, %v390
    %v493 = vpack.c.b16 %v393, %v392
    %v494 = vpack.c.b16 %v395, %v394
    %v495 = vpack.c.b16 %v397, %v396
    %v496 = vpack.c.b16 %v399, %v398
    %v497 = vpack.c.b16 %v401, %v400
    %v498 = vpack.c.b16 %v403, %v402
    %v499 = vpack.c.b16 %v405, %v404
    %v500 = vpack.c.b16 %v407, %v406
    %v501 = vpack.c.b16 %v409, %v408
    %v502 = vpack.c.b16 %v411, %v410
    %v503 = vpack.c.b16 %v413, %v412
    %v504 = vpack.c.b16 %v415, %v414
    %v505 = vpack.c.b16 %v417, %v416
    %v506 = vpack.c.b16 %v419, %v418
    %v507 = vpack.c.b16 %v421, %v420
    %v508 = vpack.c.b16 %v423, %v422
    %v509 = vpack.c.b16 %v425, %v424
    %v510 = vpack.c.b16 %v427, %v426
    %v511 = vpack.c.b16 %v429, %v428
    %v512 = vpack.c.b16 %v431, %v430
    %v513 = vpack.c.b16 %v433, %v432
    %v514 = vpack.c.b16 %v435, %v434
    %v515 = vpack.c.b16 %v437, %v436
    %v516 = vpack.c.b16 %v439, %v438
    %v517 = vpack.c.b16 %v441, %v440
    %v518 = vpack.c.b16 %v443, %v442
    %v519 = vpack.c.b16 %v445, %v444
    %v520 = vpack.c.b16 %v447, %v446
    %v521 = vpack.c.b16 %v449, %v448
    %v522 = vpack.c.b16 %v451, %v450
    %v523 = vpack.c.b16 %v453, %v452
    %v524 = vpack.c.b16 %v455, %v454
    %v525 = vpack.c.b16 %v457, %v456
    %v526 = vpack.c.b16 %v459, %v458
    %v527 = vpack.c.b16 %v461, %v460
    %v528 = vpack.c.b16 %v463, %v462
    %v529 = vpack.c.b16 %v465, %v464
    %594 = vmatprep.subr.bf16.mxu0 0
    %595 = vmatpush1.bf16.msra.mxu0 %v466
    %596 = vmatprep.subr.bf16.mxu0 0
    %597 = vmatpush1.bf16.msra.mxu0 %v467
    %598 = vmatprep.subr.bf16.mxu0 0
    %599 = vmatpush1.bf16.msra.mxu0 %v468
    %600 = vmatprep.subr.bf16.mxu0 0
    %601 = vmatpush1.bf16.msra.mxu0 %v469
    %602 = vmatprep.subr.bf16.mxu0 0
    %603 = vmatpush1.bf16.msra.mxu0 %v470
    %604 = vmatprep.subr.bf16.mxu0 0
    %605 = vmatpush1.bf16.msra.mxu0 %v471
    %606 = vmatprep.subr.bf16.mxu0 0
    %607 = vmatpush1.bf16.msra.mxu0 %v472
    %608 = vmatprep.subr.bf16.mxu0 0
    %609 = vmatpush1.bf16.msra.mxu0 %v473
    %610 = vmatprep.subr.bf16.mxu0 0
    %611 = vmatpush1.bf16.msra.mxu0 %v474
    %612 = vmatprep.subr.bf16.mxu0 0
    %613 = vmatpush1.bf16.msra.mxu0 %v475
    %614 = vmatprep.subr.bf16.mxu0 0
    %615 = vmatpush1.bf16.msra.mxu0 %v476
    %616 = vmatprep.subr.bf16.mxu0 0
    %617 = vmatpush1.bf16.msra.mxu0 %v477
    %618 = vmatprep.subr.bf16.mxu0 0
    %619 = vmatpush1.bf16.msra.mxu0 %v478
    %620 = vmatprep.subr.bf16.mxu0 0
    %621 = vmatpush1.bf16.msra.mxu0 %v479
    %622 = vmatprep.subr.bf16.mxu0 0
    %623 = vmatpush1.bf16.msra.mxu0 %v480
    %624 = vmatprep.subr.bf16.mxu0 0
    %625 = vmatpush1.bf16.msra.mxu0 %v481
    %626 = vmatprep.mubr.bf16.mxu0 %v190
    %627 = vmatmul.mubr.bf16.gmra.mrb[0].mxu0 %v176
    %v628 = vpop.f32.mrb[0].mxu0
    %v629 = vadd.f32 %v150, %v628
    %v630 = vpop.f32.mrb[0].mxu0
    %v631 = vpop.f32.mrb[0].mxu0
    %v632 = vpop.f32.mrb[0].mxu0
    %633 = vdwg.mxu0
    %634 = vmatprep.subr.bf16.mxu0 0
    %635 = vmatpush1.bf16.msra.mxu0 %v482
    %636 = vmatprep.subr.bf16.mxu0 0
    %637 = vmatpush1.bf16.msra.mxu0 %v483
    %638 = vmatprep.subr.bf16.mxu0 0
    %639 = vmatpush1.bf16.msra.mxu0 %v484
    %640 = vmatprep.subr.bf16.mxu0 0
    %641 = vmatpush1.bf16.msra.mxu0 %v485
    %642 = vmatprep.subr.bf16.mxu0 0
    %643 = vmatpush1.bf16.msra.mxu0 %v486
    %644 = vmatprep.subr.bf16.mxu0 0
    %645 = vmatpush1.bf16.msra.mxu0 %v487
    %646 = vmatprep.subr.bf16.mxu0 0
    %647 = vmatpush1.bf16.msra.mxu0 %v488
    %648 = vmatprep.subr.bf16.mxu0 0
    %649 = vmatpush1.bf16.msra.mxu0 %v489
    %650 = vmatprep.subr.bf16.mxu0 0
    %651 = vmatpush1.bf16.msra.mxu0 %v490
    %652 = vmatprep.subr.bf16.mxu0 0
    %653 = vmatpush1.bf16.msra.mxu0 %v491
    %654 = vmatprep.subr.bf16.mxu0 0
    %655 = vmatpush1.bf16.msra.mxu0 %v492
    %656 = vmatprep.subr.bf16.mxu0 0
    %657 = vmatpush1.bf16.msra.mxu0 %v493
    %658 = vmatprep.subr.bf16.mxu0 0
    %659 = vmatpush1.bf16.msra.mxu0 %v494
    %660 = vmatprep.subr.bf16.mxu0 0
    %661 = vmatpush1.bf16.msra.mxu0 %v495
    %662 = vmatprep.subr.bf16.mxu0 0
    %663 = vmatpush1.bf16.msra.mxu0 %v496
    %664 = vmatprep.subr.bf16.mxu0 0
    %665 = vmatpush1.bf16.msra.mxu0 %v497
    %666 = vmatprep.mubr.bf16.mxu0 %v200
    %667 = vmatmul.mubr.bf16.gmra.mrb[0].mxu0 %v198
    %v668 = vpop.f32.mrb[0].mxu0
    %v669 = vadd.f32 %v629, %v668
    %v670 = vpop.f32.mrb[0].mxu0
    %v671 = vpop.f32.mrb[0].mxu0
    %v672 = vpop.f32.mrb[0].mxu0
    %673 = vdwg.mxu0
    %674 = vmatprep.subr.bf16.mxu0 0
    %675 = vmatpush1.bf16.msra.mxu0 %v498
    %676 = vmatprep.subr.bf16.mxu0 0
    %677 = vmatpush1.bf16.msra.mxu0 %v499
    %678 = vmatprep.subr.bf16.mxu0 0
    %679 = vmatpush1.bf16.msra.mxu0 %v500
    %680 = vmatprep.subr.bf16.mxu0 0
    %681 = vmatpush1.bf16.msra.mxu0 %v501
    %682 = vmatprep.subr.bf16.mxu0 0
    %683 = vmatpush1.bf16.msra.mxu0 %v502
    %684 = vmatprep.subr.bf16.mxu0 0
    %685 = vmatpush1.bf16.msra.mxu0 %v503
    %686 = vmatprep.subr.bf16.mxu0 0
    %687 = vmatpush1.bf16.msra.mxu0 %v504
    %688 = vmatprep.subr.bf16.mxu0 0
    %689 = vmatpush1.bf16.msra.mxu0 %v505
    %690 = vmatprep.subr.bf16.mxu0 0
    %691 = vmatpush1.bf16.msra.mxu0 %v506
    %692 = vmatprep.subr.bf16.mxu0 0
    %693 = vmatpush1.bf16.msra.mxu0 %v507
    %694 = vmatprep.subr.bf16.mxu0 0
    %695 = vmatpush1.bf16.msra.mxu0 %v508
    %696 = vmatprep.subr.bf16.mxu0 0
    %697 = vmatpush1.bf16.msra.mxu0 %v509
    %698 = vmatprep.subr.bf16.mxu0 0
    %699 = vmatpush1.bf16.msra.mxu0 %v510
    %700 = vmatprep.subr.bf16.mxu0 0
    %701 = vmatpush1.bf16.msra.mxu0 %v511
    %702 = vmatprep.subr.bf16.mxu0 0
    %703 = vmatpush1.bf16.msra.mxu0 %v512
    %704 = vmatprep.subr.bf16.mxu0 0
    %705 = vmatpush1.bf16.msra.mxu0 %v513
    %706 = vmatprep.mubr.bf16.mxu0 %v197
    %707 = vmatmul.mubr.bf16.gmra.mrb[0].mxu0 %v183
    %v708 = vpop.f32.mrb[0].mxu0
    %v709 = vadd.f32 %v669, %v708
    %v710 = vpop.f32.mrb[0].mxu0
    %v711 = vpop.f32.mrb[0].mxu0
    %v712 = vpop.f32.mrb[0].mxu0
    %713 = vdwg.mxu0
    %714 = vmatprep.subr.bf16.mxu0 0
    %715 = vmatpush1.bf16.msra.mxu0 %v514
    %716 = vmatprep.subr.bf16.mxu0 0
    %717 = vmatpush1.bf16.msra.mxu0 %v515
    %718 = vmatprep.subr.bf16.mxu0 0
    %719 = vmatpush1.bf16.msra.mxu0 %v516
    %720 = vmatprep.subr.bf16.mxu0 0
    %721 = vmatpush1.bf16.msra.mxu0 %v517
    %722 = vmatprep.subr.bf16.mxu0 0
    %723 = vmatpush1.bf16.msra.mxu0 %v518
    %724 = vmatprep.subr.bf16.mxu0 0
    %725 = vmatpush1.bf16.msra.mxu0 %v519
    %726 = vmatprep.subr.bf16.mxu0 0
    %727 = vmatpush1.bf16.msra.mxu0 %v520
    %728 = vmatprep.subr.bf16.mxu0 0
    %729 = vmatpush1.bf16.msra.mxu0 %v521
    %730 = vmatprep.subr.bf16.mxu0 0
    %731 = vmatpush1.bf16.msra.mxu0 %v522
    %732 = vmatprep.subr.bf16.mxu0 0
    %733 = vmatpush1.bf16.msra.mxu0 %v523
    %734 = vmatprep.subr.bf16.mxu0 0
    %735 = vmatpush1.bf16.msra.mxu0 %v524
    %736 = vmatprep.subr.bf16.mxu0 0
    %737 = vmatpush1.bf16.msra.mxu0 %v525
    %738 = vmatprep.subr.bf16.mxu0 0
    %739 = vmatpush1.bf16.msra.mxu0 %v526
    %740 = vmatprep.subr.bf16.mxu0 0
    %741 = vmatpush1.bf16.msra.mxu0 %v527
    %742 = vmatprep.subr.bf16.mxu0 0
    %743 = vmatpush1.bf16.msra.mxu0 %v528
    %744 = vmatprep.subr.bf16.mxu0 0
    %745 = vmatpush1.bf16.msra.mxu0 %v529
    %746 = vmatprep.mubr.bf16.mxu0 %v201
    %747 = vmatmul.mubr.bf16.gmra.mrb[0].mxu0 %v199
    %v748 = vpop.f32.mrb[0].mxu0
    %v749 = vadd.f32 %v709, %v748
    %v750 = vpop.f32.mrb[0].mxu0
    %v751 = vpop.f32.mrb[0].mxu0
    %v752 = vpop.f32.mrb[0].mxu0
    %753 = vdwg.mxu0
    %754 = vst [vmem:[#allocation2] sm:$0x3] %v749
    // Predicated region
    $region14: #{gabor_cnn7_forward.15} parent=1 // pred_check
      _
    $region15: #{gabor_cnn7_forward.15} parent=1 // pred_check_branch
      %756 = sbr.rel (0) target = $region17
    $region16: #{gabor_cnn7_forward.15} parent=1 // pred_region
      %s758 = ssub.s32 32, 32
      %759 = vsyncadd [#allocation3], %s758
      %s761 = sshll.u32 [#allocation2], 4
      %s762 = int_to_ptr.vmem [resolvable:$true] %s761
      %764 = dma.vmem_to_hbm [thread:$0]  %s762, 32, %s3, [#allocation3]
    $region17: #{gabor_cnn7_forward.15} parent=1 // pred_fallthru
      _
    // Predicated region
    $region18: #{gabor_cnn7_forward.15} parent=1 // pred_check
      _
    $region19: #{gabor_cnn7_forward.15} parent=1 // pred_check_branch
      %766 = sbr.rel (0) target = $region21
    $region20: #{gabor_cnn7_forward.15} parent=1 // pred_region
      %767 = dma.done [#allocation3], 32
    $region21: #{gabor_cnn7_forward.15} parent=1 // pred_fallthru
      _
    %768 = vsyncpa [#allocation3], 1

</llo_original>
